<compile_context>
chip_gen: v7x
topology: tpu7x:2x2x1
jax: 0.10.0
libtpu: 0.0.40
codegen_flags: <defaults>
</compile_context>

<pallas_src>
import math
import jax
import jax.numpy as jnp
from jax import lax
from jax.experimental import pallas as pl
from jax.experimental.pallas import tpu as pltpu

# ---- small, deterministic config ----
B, T, D = 2, 8, 32          # batch, seq (== block_size), input_dim
N_LAYERS = 2
N_HEAD = 4
HEAD_DIM = D // N_HEAD
OUT_DIM = 16                # output_dim
BLOCK_SIZE = T
EPS = 1e-5
DTYPE = jnp.float32
PACK_W = 128                # lane-dense packed output width: [out | feat | att | pad]
ATT_W = N_LAYERS * N_HEAD * T   # 64 attention lanes per (b, t_query) row


# ---------------- in-kernel helpers (traced inside the Pallas body) ----------------
def _layer_norm(x, w, b):
    mu = jnp.mean(x, axis=-1, keepdims=True)
    xc = x - mu
    var = jnp.mean(xc * xc, axis=-1, keepdims=True)
    return xc * lax.rsqrt(var + EPS) * w + b


def _gelu(x):
    # tanh-approximate GELU (nanoGPT "new gelu")
    # TODO(synk): use exact erf GELU if the reference DecoderBlock uses nn.GELU(approximate='none')
    c = math.sqrt(2.0 / math.pi)
    return 0.5 * x * (1.0 + jnp.tanh(c * (x + 0.044715 * x * x * x)))


def _mm(a, b):
    """a: (N, K), b: (K, M) -> (N, M) in f32 on the MXU."""
    return lax.dot_general(a, b, (((1,), (0,)), ((), ())),
                           preferred_element_type=jnp.float32)


# ---------------- single fused Pallas kernel ----------------
def fused_decoder_kernel(x_ref, pos_ref, qkv_wb_ref, projw_ref, fcw_ref,
                         mprojw_ref, vecs_ref, out_ref):
    # positional embedding add; x stays resident in VMEM/vregs for the whole network
    x = x_ref[...] + pos_ref[...][None, :, :]                    # (B, T, D)

    # causal mask computed ONCE, (1, T, T), broadcast per use
    row = lax.broadcasted_iota(jnp.int32, (T, T), 0)
    col = lax.broadcasted_iota(jnp.int32, (T, T), 1)
    causal = (col <= row)[None, :, :]

    scale = 1.0 / math.sqrt(HEAD_DIM)
    att_chunks = []                                              # L*H chunks of (B, T, T)

    for l in range(N_LAYERS):                                    # static unroll over layers
        # --- per-layer vectors from the packed (3L+1, 128) slab (static slices) ---
        vrow0 = vecs_ref[3 * l]                                  # ln1_w|ln1_b|ln2_w|ln2_b
        vrow1 = vecs_ref[3 * l + 1]                              # proj_b|mproj_b|0
        fc_b = vecs_ref[3 * l + 2]                               # (128,)
        ln1_w, ln1_b = vrow0[0:D], vrow0[D:2 * D]
        ln2_w, ln2_b = vrow0[2 * D:3 * D], vrow0[3 * D:4 * D]
        proj_b, mproj_b = vrow1[0:D], vrow1[D:2 * D]

        # --- causal self-attention ---
        h2 = _layer_norm(x, ln1_w, ln1_b).reshape(B * T, D)      # (B*T, D)
        y_acc = jnp.zeros((B * T, D), jnp.float32)               # c_proj accumulator (f32)
        for hh in range(N_HEAD):                                 # static unroll over heads
            # per-head Q/K/V GEMMs: weights indexed on leading dims -> lane-0 aligned,
            # no lane-offset slicing of any activation.
            qh = _mm(h2, qkv_wb_ref[l, 0, hh, :D, :]) + qkv_wb_ref[l, 0, hh, D, :]
            kh = _mm(h2, qkv_wb_ref[l, 1, hh, :D, :]) + qkv_wb_ref[l, 1, hh, D, :]
            vh = _mm(h2, qkv_wb_ref[l, 2, hh, :D, :]) + qkv_wb_ref[l, 2, hh, D, :]
            qh = qh.reshape(B, T, HEAD_DIM)
            kh = kh.reshape(B, T, HEAD_DIM)
            vh = vh.reshape(B, T, HEAD_DIM)

            s = jnp.einsum('btd,bsd->bts', qh, kh,
                           preferred_element_type=jnp.float32) * scale
            s = jnp.where(causal, s, -1e30)
            s = s - jnp.max(s, axis=-1, keepdims=True)
            e = jnp.exp(s)
            a = e * pl.reciprocal(jnp.sum(e, axis=-1, keepdims=True), approx=False)
            att_chunks.append(a)                                 # packed into the slab later

            yh = jnp.einsum('bts,bsd->btd', a, vh,
                            preferred_element_type=jnp.float32)  # (B, T, hd)
            # accumulate directly through the per-head slice of c_proj
            y_acc = y_acc + _mm(yh.reshape(B * T, HEAD_DIM), projw_ref[l, hh])

        x = x + (y_acc + proj_b).reshape(B, T, D)

        # --- MLP ---
        h3 = _layer_norm(x, ln2_w, ln2_b).reshape(B * T, D)
        m = _gelu(_mm(h3, fcw_ref[l]) + fc_b)                    # (B*T, 4D)
        x = x + (_mm(m, mprojw_ref[l]) + mproj_b).reshape(B, T, D)

    # --- head: feat = LN(x), out = fc(x) (fc applied to pre-norm x, as in reference) ---
    vlast = vecs_ref[3 * N_LAYERS]                               # norm_w|norm_b|head_b|0
    norm_w, norm_b = vlast[0:D], vlast[D:2 * D]
    head_b = vlast[2 * D:2 * D + OUT_DIM]
    feat = _layer_norm(x, norm_w, norm_b)                        # (B, T, D)
    out = (_mm(x.reshape(B * T, D), fcw_ref[N_LAYERS, :, :OUT_DIM])
           + head_b).reshape(B, T, OUT_DIM)

    # single lane-dense full-width store: [out | feat | all attention maps | zero pad]
    pad = jnp.zeros((B, T, PACK_W - OUT_DIM - D - ATT_W), jnp.float32)
    out_ref[...] = jnp.concatenate([out, feat] + att_chunks + [pad],
                                   axis=-1).astype(out_ref.dtype)


# ---------------- wrapper ----------------
_VMEM = pl.BlockSpec(memory_space=pltpu.MemorySpace.VMEM)


def prepare_params(params):
    """One-time re-layout (outside jit): pre-transpose every linear weight from PyTorch
    (Dout, Din) to (Din, Dout), stack per-layer/per-head weights along leading axes, and
    pack all small vectors into one lane-aligned slab."""
    blocks = params['blocks']

    # per-head Q/K/V weights (L, 3, H, D, hd) with bias appended as row D -> (L,3,H,D+1,hd)
    qkv_w = jnp.stack([
        blk['attn_w'].T.reshape(D, 3, N_HEAD, HEAD_DIM).transpose(1, 2, 0, 3)
        for blk in blocks])
    qkv_b = jnp.stack([blk['attn_b'].reshape(3, N_HEAD, HEAD_DIM) for blk in blocks])
    qkv_wb = jnp.concatenate([qkv_w, qkv_b[:, :, :, None, :]], axis=3)

    # per-head c_proj weight slices: (L, H, hd, D)
    proj_w = jnp.stack([blk['proj_w'].T.reshape(N_HEAD, HEAD_DIM, D) for blk in blocks])

    # MLP weights; head fc weight folded into an extra slot of the fc slab (lanes 0:OUT_DIM)
    fc_w = jnp.stack([blk['fc_w'].T for blk in blocks])          # (L, D, 4D)
    mproj_w = jnp.stack([blk['mproj_w'].T for blk in blocks])    # (L, 4D, D)
    head_slab = jnp.zeros((1, D, 4 * D), DTYPE).at[0, :, :OUT_DIM].set(params['fc_w'].T)
    fcw_ext = jnp.concatenate([fc_w, head_slab], axis=0)         # (L+1, D, 4D)

    # all small vectors in one (3L+1, 128) lane-aligned slab
    rows = []
    for blk in blocks:
        rows.append(jnp.concatenate([blk['ln1_w'], blk['ln1_b'],
                                     blk['ln2_w'], blk['ln2_b']]))
        rows.append(jnp.concatenate([blk['proj_b'], blk['mproj_b'],
                                     jnp.zeros((128 - 2 * D,), DTYPE)]))
        rows.append(blk['fc_b'])
    rows.append(jnp.concatenate([params['norm_w'], params['norm_b'], params['fc_b'],
                                 jnp.zeros((128 - 2 * D - OUT_DIM,), DTYPE)]))
    vecs = jnp.stack(rows)                                       # (3L+1, 128)

    return {'pos_enc': params['pos_enc'], 'qkv_wb': qkv_wb, 'proj_w': proj_w,
            'fcw_ext': fcw_ext, 'mproj_w': mproj_w, 'vecs': vecs}


@jax.jit
def trans_decoder_forward(x, prep):
    pos_emb = prep['pos_enc'][:x.shape[1]]        # pos = arange(T) lookup == table[:T]
    packed = pl.pallas_call(
        fused_decoder_kernel,
        out_shape=jax.ShapeDtypeStruct((B, T, PACK_W), DTYPE),
        in_specs=[_VMEM] * 7,
        out_specs=_VMEM,
        compiler_params=pltpu.CompilerParams(),
        cost_estimate=pl.CostEstimate(flops=850_000, transcendentals=5_500,
                                      bytes_accessed=200_000),
    )(x, pos_emb, prep['qkv_wb'], prep['proj_w'], prep['fcw_ext'],
      prep['mproj_w'], prep['vecs'])

    # unpack the lane-dense slab in the wrapper (free XLA slicing/reshape/transpose)
    out = packed[:, :, :OUT_DIM]
    feat = packed[:, :, OUT_DIM:OUT_DIM + D]
    att = packed[:, :, OUT_DIM + D:OUT_DIM + D + ATT_W]
    att = att.reshape(B, T, N_LAYERS, N_HEAD, T).transpose(2, 0, 3, 1, 4)  # (L,B,H,Tq,Tk)
    all_att = [att[l] for l in range(N_LAYERS)]   # keep reference's list-of-layers API
    return out, feat, all_att


# ---------------- deterministic parameter init (matches _init_weights) ----------------
def init_params(key):
    keys = iter(jax.random.split(key, 4 + 4 * N_LAYERS))
    std = 0.02
    proj_std = 0.02 / math.sqrt(2 * N_LAYERS)   # c_proj.weight special init

    def lin_w(k, out_f, in_f, s=std):
        return jax.random.normal(k, (out_f, in_f), DTYPE) * s   # PyTorch (Dout, Din) layout

    params = {
        'pos_enc': jax.random.normal(next(keys), (BLOCK_SIZE, D), DTYPE) * std,
        'norm_w': jnp.ones((D,), DTYPE),
        'norm_b': jnp.zeros((D,), DTYPE),
        'fc_w': lin_w(next(keys), OUT_DIM, D),
        'fc_b': jnp.zeros((OUT_DIM,), DTYPE),
        'blocks': [],
    }
    for _ in range(N_LAYERS):
        params['blocks'].append({
            'ln1_w': jnp.ones((D,), DTYPE), 'ln1_b': jnp.zeros((D,), DTYPE),
            'attn_w': lin_w(next(keys), 3 * D, D), 'attn_b': jnp.zeros((3 * D,), DTYPE),
            'proj_w': lin_w(next(keys), D, D, proj_std), 'proj_b': jnp.zeros((D,), DTYPE),
            'ln2_w': jnp.ones((D,), DTYPE), 'ln2_b': jnp.zeros((D,), DTYPE),
            'fc_w': lin_w(next(keys), 4 * D, D), 'fc_b': jnp.zeros((4 * D,), DTYPE),
            'mproj_w': lin_w(next(keys), D, 4 * D, proj_std), 'mproj_b': jnp.zeros((D,), DTYPE),
        })
    return params


if __name__ == "__main__":
    key = jax.random.PRNGKey(0)
    kx, kp = jax.random.split(key)
    x = jax.random.normal(kx, (B, T, D), DTYPE)
    params = init_params(kp)
    prep = prepare_params(params)     # one-time weight re-layout (transpose + stack + pack)

    out, feat, all_att = trans_decoder_forward(x, prep)
    jax.block_until_ready((out, feat, all_att))

    assert out.shape == (B, T, OUT_DIM)
    assert feat.shape == (B, T, D)
    assert len(all_att) == N_LAYERS and all_att[0].shape == (B, N_HEAD, T, T)
    print("KERNEL_OK")
</pallas_src>

<mosaic_0001>
module attributes {stable_mosaic.version = 11 : i64} {
  func.func @fused_decoder_kernel(%arg0: memref<2x8x32xf32, #tpu.memory_space<vmem>>, %arg1: memref<8x32xf32, #tpu.memory_space<vmem>>, %arg2: memref<2x3x4x33x8xf32, #tpu.memory_space<vmem>>, %arg3: memref<2x4x8x32xf32, #tpu.memory_space<vmem>>, %arg4: memref<3x32x128xf32, #tpu.memory_space<vmem>>, %arg5: memref<2x128x32xf32, #tpu.memory_space<vmem>>, %arg6: memref<7x128xf32, #tpu.memory_space<vmem>>, %arg7: memref<2x8x128xf32, #tpu.memory_space<vmem>>) attributes {dimension_semantics = [], scalar_prefetch = 0 : i64, scratch_operands = 0 : i64, tpu.core_type = #tpu.core_type<tc>} {
    %c0 = arith.constant 0 : index
    %c0_0 = arith.constant 0 : index
    %c0_1 = arith.constant 0 : index
    %0 = vector.load %arg0[%c0, %c0_0, %c0_1] : memref<2x8x32xf32, #tpu.memory_space<vmem>>, vector<2x8x32xf32>
    %c0_2 = arith.constant 0 : index
    %c0_3 = arith.constant 0 : index
    %1 = vector.load %arg1[%c0_2, %c0_3] : memref<8x32xf32, #tpu.memory_space<vmem>>, vector<8x32xf32>
    %2 = vector.shape_cast %1 : vector<8x32xf32> to vector<1x8x32xf32>
    %3 = vector.broadcast %2 : vector<1x8x32xf32> to vector<2x8x32xf32>
    %4 = arith.addf %0, %3 : vector<2x8x32xf32>
    %5 = tpu.iota {dimensions = array<i32: 0>} : vector<8x8xi32>
    %6 = tpu.iota {dimensions = array<i32: 1>} : vector<8x8xi32>
    %7 = arith.cmpi sle, %6, %5 : vector<8x8xi32>
    %8 = vector.shape_cast %7 : vector<8x8xi1> to vector<1x8x8xi1>
    %c0_4 = arith.constant 0 : index
    %c0_5 = arith.constant 0 : index
    %9 = vector.load %arg6[%c0_4, %c0_5] : memref<7x128xf32, #tpu.memory_space<vmem>>, vector<1x128xf32>
    %10 = vector.shape_cast %9 : vector<1x128xf32> to vector<128xf32>
    %c1 = arith.constant 1 : index
    %c0_6 = arith.constant 0 : index
    %11 = vector.load %arg6[%c1, %c0_6] : memref<7x128xf32, #tpu.memory_space<vmem>>, vector<1x128xf32>
    %12 = vector.shape_cast %11 : vector<1x128xf32> to vector<128xf32>
    %c2 = arith.constant 2 : index
    %c0_7 = arith.constant 0 : index
    %13 = vector.load %arg6[%c2, %c0_7] : memref<7x128xf32, #tpu.memory_space<vmem>>, vector<1x128xf32>
    %14 = vector.shape_cast %13 : vector<1x128xf32> to vector<128xf32>
    %15 = vector.extract_strided_slice %10 {offsets = [0], sizes = [32], strides = [1]} : vector<128xf32> to vector<32xf32>
    %16 = vector.extract_strided_slice %10 {offsets = [32], sizes = [32], strides = [1]} : vector<128xf32> to vector<32xf32>
    %17 = vector.extract_strided_slice %10 {offsets = [64], sizes = [32], strides = [1]} : vector<128xf32> to vector<32xf32>
    %18 = vector.extract_strided_slice %10 {offsets = [96], sizes = [32], strides = [1]} : vector<128xf32> to vector<32xf32>
    %19 = vector.extract_strided_slice %12 {offsets = [0], sizes = [32], strides = [1]} : vector<128xf32> to vector<32xf32>
    %20 = vector.extract_strided_slice %12 {offsets = [32], sizes = [32], strides = [1]} : vector<128xf32> to vector<32xf32>
    %cst = arith.constant dense<0.000000e+00> : vector<2x8xf32>
    %21 = vector.multi_reduction <add>, %4, %cst [2] : vector<2x8x32xf32> to vector<2x8xf32>
    %22 = vector.shape_cast %21 : vector<2x8xf32> to vector<2x8x1xf32>
    %cst_8 = arith.constant 3.200000e+01 : f32
    %23 = vector.broadcast %cst_8 : f32 to vector<2x8x1xf32>
    %24 = arith.divf %22, %23 : vector<2x8x1xf32>
    %25 = vector.broadcast %24 : vector<2x8x1xf32> to vector<2x8x32xf32>
    %26 = arith.subf %4, %25 : vector<2x8x32xf32>
    %27 = arith.mulf %26, %26 : vector<2x8x32xf32>
    %cst_9 = arith.constant dense<0.000000e+00> : vector<2x8xf32>
    %28 = vector.multi_reduction <add>, %27, %cst_9 [2] : vector<2x8x32xf32> to vector<2x8xf32>
    %29 = vector.shape_cast %28 : vector<2x8xf32> to vector<2x8x1xf32>
    %cst_10 = arith.constant 3.200000e+01 : f32
    %30 = vector.broadcast %cst_10 : f32 to vector<2x8x1xf32>
    %31 = arith.divf %29, %30 : vector<2x8x1xf32>
    %cst_11 = arith.constant 9.99999974E-6 : f32
    %32 = vector.broadcast %cst_11 : f32 to vector<2x8x1xf32>
    %33 = arith.addf %31, %32 : vector<2x8x1xf32>
    %34 = math.rsqrt %33 : vector<2x8x1xf32>
    %35 = vector.broadcast %34 : vector<2x8x1xf32> to vector<2x8x32xf32>
    %36 = arith.mulf %26, %35 : vector<2x8x32xf32>
    %37 = vector.shape_cast %15 : vector<32xf32> to vector<1x1x32xf32>
    %38 = vector.broadcast %37 : vector<1x1x32xf32> to vector<2x8x32xf32>
    %39 = arith.mulf %36, %38 : vector<2x8x32xf32>
    %40 = vector.shape_cast %16 : vector<32xf32> to vector<1x1x32xf32>
    %41 = vector.broadcast %40 : vector<1x1x32xf32> to vector<2x8x32xf32>
    %42 = arith.addf %39, %41 : vector<2x8x32xf32>
    %43 = vector.shape_cast %42 : vector<2x8x32xf32> to vector<16x32xf32>
    %cst_12 = arith.constant 0.000000e+00 : f32
    %44 = vector.broadcast %cst_12 : f32 to vector<16x32xf32>
    %c0_13 = arith.constant 0 : index
    %c0_14 = arith.constant 0 : index
    %c0_15 = arith.constant 0 : index
    %c0_16 = arith.constant 0 : index
    %c0_17 = arith.constant 0 : index
    %45 = vector.load %arg2[%c0_13, %c0_14, %c0_15, %c0_16, %c0_17] : memref<2x3x4x33x8xf32, #tpu.memory_space<vmem>>, vector<1x1x1x32x8xf32>
    %46 = vector.shape_cast %45 : vector<1x1x1x32x8xf32> to vector<32x8xf32>
    %cst_18 = arith.constant dense<0.000000e+00> : vector<16x8xf32>
    %47 = tpu.matmul %43, %46, %cst_18 {dimension_numbers = #tpu.dot_dimension_numbers<[1], [0], [0], [1], [0, 0, 1, 1], [], []>} : vector<16x32xf32>, vector<32x8xf32>, vector<16x8xf32> -> vector<16x8xf32>
    %c0_19 = arith.constant 0 : index
    %c0_20 = arith.constant 0 : index
    %c0_21 = arith.constant 0 : index
    %c32 = arith.constant 32 : index
    %c0_22 = arith.constant 0 : index
    %48 = vector.load %arg2[%c0_19, %c0_20, %c0_21, %c32, %c0_22] : memref<2x3x4x33x8xf32, #tpu.memory_space<vmem>>, vector<1x1x1x1x8xf32>
    %49 = vector.shape_cast %48 : vector<1x1x1x1x8xf32> to vector<8xf32>
    %50 = vector.shape_cast %49 : vector<8xf32> to vector<1x8xf32>
    %51 = vector.broadcast %50 : vector<1x8xf32> to vector<16x8xf32>
    %52 = arith.addf %47, %51 : vector<16x8xf32>
    %c0_23 = arith.constant 0 : index
    %c1_24 = arith.constant 1 : index
    %c0_25 = arith.constant 0 : index
    %c0_26 = arith.constant 0 : index
    %c0_27 = arith.constant 0 : index
    %53 = vector.load %arg2[%c0_23, %c1_24, %c0_25, %c0_26, %c0_27] : memref<2x3x4x33x8xf32, #tpu.memory_space<vmem>>, vector<1x1x1x32x8xf32>
    %54 = vector.shape_cast %53 : vector<1x1x1x32x8xf32> to vector<32x8xf32>
    %cst_28 = arith.constant dense<0.000000e+00> : vector<16x8xf32>
    %55 = tpu.matmul %43, %54, %cst_28 {dimension_numbers = #tpu.dot_dimension_numbers<[1], [0], [0], [1], [0, 0, 1, 1], [], []>} : vector<16x32xf32>, vector<32x8xf32>, vector<16x8xf32> -> vector<16x8xf32>
    %c0_29 = arith.constant 0 : index
    %c1_30 = arith.constant 1 : index
    %c0_31 = arith.constant 0 : index
    %c32_32 = arith.constant 32 : index
    %c0_33 = arith.constant 0 : index
    %56 = vector.load %arg2[%c0_29, %c1_30, %c0_31, %c32_32, %c0_33] : memref<2x3x4x33x8xf32, #tpu.memory_space<vmem>>, vector<1x1x1x1x8xf32>
    %57 = vector.shape_cast %56 : vector<1x1x1x1x8xf32> to vector<8xf32>
    %58 = vector.shape_cast %57 : vector<8xf32> to vector<1x8xf32>
    %59 = vector.broadcast %58 : vector<1x8xf32> to vector<16x8xf32>
    %60 = arith.addf %55, %59 : vector<16x8xf32>
    %c0_34 = arith.constant 0 : index
    %c2_35 = arith.constant 2 : index
    %c0_36 = arith.constant 0 : index
    %c0_37 = arith.constant 0 : index
    %c0_38 = arith.constant 0 : index
    %61 = vector.load %arg2[%c0_34, %c2_35, %c0_36, %c0_37, %c0_38] : memref<2x3x4x33x8xf32, #tpu.memory_space<vmem>>, vector<1x1x1x32x8xf32>
    %62 = vector.shape_cast %61 : vector<1x1x1x32x8xf32> to vector<32x8xf32>
    %cst_39 = arith.constant dense<0.000000e+00> : vector<16x8xf32>
    %63 = tpu.matmul %43, %62, %cst_39 {dimension_numbers = #tpu.dot_dimension_numbers<[1], [0], [0], [1], [0, 0, 1, 1], [], []>} : vector<16x32xf32>, vector<32x8xf32>, vector<16x8xf32> -> vector<16x8xf32>
    %c0_40 = arith.constant 0 : index
    %c2_41 = arith.constant 2 : index
    %c0_42 = arith.constant 0 : index
    %c32_43 = arith.constant 32 : index
    %c0_44 = arith.constant 0 : index
    %64 = vector.load %arg2[%c0_40, %c2_41, %c0_42, %c32_43, %c0_44] : memref<2x3x4x33x8xf32, #tpu.memory_space<vmem>>, vector<1x1x1x1x8xf32>
    %65 = vector.shape_cast %64 : vector<1x1x1x1x8xf32> to vector<8xf32>
    %66 = vector.shape_cast %65 : vector<8xf32> to vector<1x8xf32>
    %67 = vector.broadcast %66 : vector<1x8xf32> to vector<16x8xf32>
    %68 = arith.addf %63, %67 : vector<16x8xf32>
    %69 = vector.shape_cast %52 : vector<16x8xf32> to vector<2x8x8xf32>
    %70 = vector.shape_cast %60 : vector<16x8xf32> to vector<2x8x8xf32>
    %71 = vector.shape_cast %68 : vector<16x8xf32> to vector<2x8x8xf32>
    "tpu.trace_start"() <{level = 10 : i32, message = "btd,bsd->bts"}> : () -> ()
    %cst_45 = arith.constant dense<0.000000e+00> : vector<2x8x8xf32>
    %72 = tpu.matmul %69, %70, %cst_45 {dimension_numbers = #tpu.dot_dimension_numbers<[2], [2], [1], [1], [0, 0, 0, 1, 1, 1], [0], [0]>} : vector<2x8x8xf32>, vector<2x8x8xf32>, vector<2x8x8xf32> -> vector<2x8x8xf32>
    "tpu.trace_stop"() : () -> ()
    %cst_46 = arith.constant 0.353553385 : f32
    %73 = vector.broadcast %cst_46 : f32 to vector<2x8x8xf32>
    %74 = arith.mulf %72, %73 : vector<2x8x8xf32>
    %cst_47 = arith.constant -1.000000e+30 : f32
    %75 = vector.shape_cast %8 : vector<1x8x8xi1> to vector<1x8x8xi1>
    %76 = vector.broadcast %75 : vector<1x8x8xi1> to vector<2x8x8xi1>
    %77 = vector.broadcast %cst_47 : f32 to vector<2x8x8xf32>
    %78 = arith.select %76, %74, %77 : vector<2x8x8xi1>, vector<2x8x8xf32>
    %cst_48 = arith.constant dense<0xFF800000> : vector<2x8xf32>
    %79 = vector.multi_reduction <maximumf>, %78, %cst_48 [2] : vector<2x8x8xf32> to vector<2x8xf32>
    %80 = vector.shape_cast %79 : vector<2x8xf32> to vector<2x8x1xf32>
    %81 = vector.broadcast %80 : vector<2x8x1xf32> to vector<2x8x8xf32>
    %82 = arith.subf %78, %81 : vector<2x8x8xf32>
    %83 = math.exp %82 : vector<2x8x8xf32>
    %cst_49 = arith.constant dense<0.000000e+00> : vector<2x8xf32>
    %84 = vector.multi_reduction <add>, %83, %cst_49 [2] : vector<2x8x8xf32> to vector<2x8xf32>
    %85 = vector.shape_cast %84 : vector<2x8xf32> to vector<2x8x1xf32>
    %86 = tpu.reciprocal %85 : vector<2x8x1xf32> -> vector<2x8x1xf32>
    %87 = vector.broadcast %86 : vector<2x8x1xf32> to vector<2x8x8xf32>
    %88 = arith.mulf %83, %87 : vector<2x8x8xf32>
    "tpu.trace_start"() <{level = 10 : i32, message = "bts,bsd->btd"}> : () -> ()
    %cst_50 = arith.constant dense<0.000000e+00> : vector<2x8x8xf32>
    %89 = tpu.matmul %88, %71, %cst_50 {dimension_numbers = #tpu.dot_dimension_numbers<[2], [1], [1], [2], [0, 0, 0, 1, 1, 2], [0], [0]>} : vector<2x8x8xf32>, vector<2x8x8xf32>, vector<2x8x8xf32> -> vector<2x8x8xf32>
    "tpu.trace_stop"() : () -> ()
    %90 = vector.shape_cast %89 : vector<2x8x8xf32> to vector<16x8xf32>
    %c0_51 = arith.constant 0 : index
    %c0_52 = arith.constant 0 : index
    %c0_53 = arith.constant 0 : index
    %c0_54 = arith.constant 0 : index
    %91 = vector.load %arg3[%c0_51, %c0_52, %c0_53, %c0_54] : memref<2x4x8x32xf32, #tpu.memory_space<vmem>>, vector<1x1x8x32xf32>
    %92 = vector.shape_cast %91 : vector<1x1x8x32xf32> to vector<8x32xf32>
    %cst_55 = arith.constant dense<0.000000e+00> : vector<16x32xf32>
    %93 = tpu.matmul %90, %92, %cst_55 {dimension_numbers = #tpu.dot_dimension_numbers<[1], [0], [0], [1], [0, 0, 1, 1], [], []>} : vector<16x8xf32>, vector<8x32xf32>, vector<16x32xf32> -> vector<16x32xf32>
    %94 = arith.addf %44, %93 : vector<16x32xf32>
    %c0_56 = arith.constant 0 : index
    %c0_57 = arith.constant 0 : index
    %c1_58 = arith.constant 1 : index
    %c0_59 = arith.constant 0 : index
    %c0_60 = arith.constant 0 : index
    %95 = vector.load %arg2[%c0_56, %c0_57, %c1_58, %c0_59, %c0_60] : memref<2x3x4x33x8xf32, #tpu.memory_space<vmem>>, vector<1x1x1x32x8xf32>
    %96 = vector.shape_cast %95 : vector<1x1x1x32x8xf32> to vector<32x8xf32>
    %cst_61 = arith.constant dense<0.000000e+00> : vector<16x8xf32>
    %97 = tpu.matmul %43, %96, %cst_61 {dimension_numbers = #tpu.dot_dimension_numbers<[1], [0], [0], [1], [0, 0, 1, 1], [], []>} : vector<16x32xf32>, vector<32x8xf32>, vector<16x8xf32> -> vector<16x8xf32>
    %c0_62 = arith.constant 0 : index
    %c0_63 = arith.constant 0 : index
    %c1_64 = arith.constant 1 : index
    %c32_65 = arith.constant 32 : index
    %c0_66 = arith.constant 0 : index
    %98 = vector.load %arg2[%c0_62, %c0_63, %c1_64, %c32_65, %c0_66] : memref<2x3x4x33x8xf32, #tpu.memory_space<vmem>>, vector<1x1x1x1x8xf32>
    %99 = vector.shape_cast %98 : vector<1x1x1x1x8xf32> to vector<8xf32>
    %100 = vector.shape_cast %99 : vector<8xf32> to vector<1x8xf32>
    %101 = vector.broadcast %100 : vector<1x8xf32> to vector<16x8xf32>
    %102 = arith.addf %97, %101 : vector<16x8xf32>
    %c0_67 = arith.constant 0 : index
    %c1_68 = arith.constant 1 : index
    %c1_69 = arith.constant 1 : index
    %c0_70 = arith.constant 0 : index
    %c0_71 = arith.constant 0 : index
    %103 = vector.load %arg2[%c0_67, %c1_68, %c1_69, %c0_70, %c0_71] : memref<2x3x4x33x8xf32, #tpu.memory_space<vmem>>, vector<1x1x1x32x8xf32>
    %104 = vector.shape_cast %103 : vector<1x1x1x32x8xf32> to vector<32x8xf32>
    %cst_72 = arith.constant dense<0.000000e+00> : vector<16x8xf32>
    %105 = tpu.matmul %43, %104, %cst_72 {dimension_numbers = #tpu.dot_dimension_numbers<[1], [0], [0], [1], [0, 0, 1, 1], [], []>} : vector<16x32xf32>, vector<32x8xf32>, vector<16x8xf32> -> vector<16x8xf32>
    %c0_73 = arith.constant 0 : index
    %c1_74 = arith.constant 1 : index
    %c1_75 = arith.constant 1 : index
    %c32_76 = arith.constant 32 : index
    %c0_77 = arith.constant 0 : index
    %106 = vector.load %arg2[%c0_73, %c1_74, %c1_75, %c32_76, %c0_77] : memref<2x3x4x33x8xf32, #tpu.memory_space<vmem>>, vector<1x1x1x1x8xf32>
    %107 = vector.shape_cast %106 : vector<1x1x1x1x8xf32> to vector<8xf32>
    %108 = vector.shape_cast %107 : vector<8xf32> to vector<1x8xf32>
    %109 = vector.broadcast %108 : vector<1x8xf32> to vector<16x8xf32>
    %110 = arith.addf %105, %109 : vector<16x8xf32>
    %c0_78 = arith.constant 0 : index
    %c2_79 = arith.constant 2 : index
    %c1_80 = arith.constant 1 : index
    %c0_81 = arith.constant 0 : index
    %c0_82 = arith.constant 0 : index
    %111 = vector.load %arg2[%c0_78, %c2_79, %c1_80, %c0_81, %c0_82] : memref<2x3x4x33x8xf32, #tpu.memory_space<vmem>>, vector<1x1x1x32x8xf32>
    %112 = vector.shape_cast %111 : vector<1x1x1x32x8xf32> to vector<32x8xf32>
    %cst_83 = arith.constant dense<0.000000e+00> : vector<16x8xf32>
    %113 = tpu.matmul %43, %112, %cst_83 {dimension_numbers = #tpu.dot_dimension_numbers<[1], [0], [0], [1], [0, 0, 1, 1], [], []>} : vector<16x32xf32>, vector<32x8xf32>, vector<16x8xf32> -> vector<16x8xf32>
    %c0_84 = arith.constant 0 : index
    %c2_85 = arith.constant 2 : index
    %c1_86 = arith.constant 1 : index
    %c32_87 = arith.constant 32 : index
    %c0_88 = arith.constant 0 : index
    %114 = vector.load %arg2[%c0_84, %c2_85, %c1_86, %c32_87, %c0_88] : memref<2x3x4x33x8xf32, #tpu.memory_space<vmem>>, vector<1x1x1x1x8xf32>
    %115 = vector.shape_cast %114 : vector<1x1x1x1x8xf32> to vector<8xf32>
    %116 = vector.shape_cast %115 : vector<8xf32> to vector<1x8xf32>
    %117 = vector.broadcast %116 : vector<1x8xf32> to vector<16x8xf32>
    %118 = arith.addf %113, %117 : vector<16x8xf32>
    %119 = vector.shape_cast %102 : vector<16x8xf32> to vector<2x8x8xf32>
    %120 = vector.shape_cast %110 : vector<16x8xf32> to vector<2x8x8xf32>
    %121 = vector.shape_cast %118 : vector<16x8xf32> to vector<2x8x8xf32>
    "tpu.trace_start"() <{level = 10 : i32, message = "btd,bsd->bts"}> : () -> ()
    %cst_89 = arith.constant dense<0.000000e+00> : vector<2x8x8xf32>
    %122 = tpu.matmul %119, %120, %cst_89 {dimension_numbers = #tpu.dot_dimension_numbers<[2], [2], [1], [1], [0, 0, 0, 1, 1, 1], [0], [0]>} : vector<2x8x8xf32>, vector<2x8x8xf32>, vector<2x8x8xf32> -> vector<2x8x8xf32>
    "tpu.trace_stop"() : () -> ()
    %cst_90 = arith.constant 0.353553385 : f32
    %123 = vector.broadcast %cst_90 : f32 to vector<2x8x8xf32>
    %124 = arith.mulf %122, %123 : vector<2x8x8xf32>
    %cst_91 = arith.constant -1.000000e+30 : f32
    %125 = vector.shape_cast %8 : vector<1x8x8xi1> to vector<1x8x8xi1>
    %126 = vector.broadcast %125 : vector<1x8x8xi1> to vector<2x8x8xi1>
    %127 = vector.broadcast %cst_91 : f32 to vector<2x8x8xf32>
    %128 = arith.select %126, %124, %127 : vector<2x8x8xi1>, vector<2x8x8xf32>
    %cst_92 = arith.constant dense<0xFF800000> : vector<2x8xf32>
    %129 = vector.multi_reduction <maximumf>, %128, %cst_92 [2] : vector<2x8x8xf32> to vector<2x8xf32>
    %130 = vector.shape_cast %129 : vector<2x8xf32> to vector<2x8x1xf32>
    %131 = vector.broadcast %130 : vector<2x8x1xf32> to vector<2x8x8xf32>
    %132 = arith.subf %128, %131 : vector<2x8x8xf32>
    %133 = math.exp %132 : vector<2x8x8xf32>
    %cst_93 = arith.constant dense<0.000000e+00> : vector<2x8xf32>
    %134 = vector.multi_reduction <add>, %133, %cst_93 [2] : vector<2x8x8xf32> to vector<2x8xf32>
    %135 = vector.shape_cast %134 : vector<2x8xf32> to vector<2x8x1xf32>
    %136 = tpu.reciprocal %135 : vector<2x8x1xf32> -> vector<2x8x1xf32>
    %137 = vector.broadcast %136 : vector<2x8x1xf32> to vector<2x8x8xf32>
    %138 = arith.mulf %133, %137 : vector<2x8x8xf32>
    "tpu.trace_start"() <{level = 10 : i32, message = "bts,bsd->btd"}> : () -> ()
    %cst_94 = arith.constant dense<0.000000e+00> : vector<2x8x8xf32>
    %139 = tpu.matmul %138, %121, %cst_94 {dimension_numbers = #tpu.dot_dimension_numbers<[2], [1], [1], [2], [0, 0, 0, 1, 1, 2], [0], [0]>} : vector<2x8x8xf32>, vector<2x8x8xf32>, vector<2x8x8xf32> -> vector<2x8x8xf32>
    "tpu.trace_stop"() : () -> ()
    %140 = vector.shape_cast %139 : vector<2x8x8xf32> to vector<16x8xf32>
    %c0_95 = arith.constant 0 : index
    %c1_96 = arith.constant 1 : index
    %c0_97 = arith.constant 0 : index
    %c0_98 = arith.constant 0 : index
    %141 = vector.load %arg3[%c0_95, %c1_96, %c0_97, %c0_98] : memref<2x4x8x32xf32, #tpu.memory_space<vmem>>, vector<1x1x8x32xf32>
    %142 = vector.shape_cast %141 : vector<1x1x8x32xf32> to vector<8x32xf32>
    %cst_99 = arith.constant dense<0.000000e+00> : vector<16x32xf32>
    %143 = tpu.matmul %140, %142, %cst_99 {dimension_numbers = #tpu.dot_dimension_numbers<[1], [0], [0], [1], [0, 0, 1, 1], [], []>} : vector<16x8xf32>, vector<8x32xf32>, vector<16x32xf32> -> vector<16x32xf32>
    %144 = arith.addf %94, %143 : vector<16x32xf32>
    %c0_100 = arith.constant 0 : index
    %c0_101 = arith.constant 0 : index
    %c2_102 = arith.constant 2 : index
    %c0_103 = arith.constant 0 : index
    %c0_104 = arith.constant 0 : index
    %145 = vector.load %arg2[%c0_100, %c0_101, %c2_102, %c0_103, %c0_104] : memref<2x3x4x33x8xf32, #tpu.memory_space<vmem>>, vector<1x1x1x32x8xf32>
    %146 = vector.shape_cast %145 : vector<1x1x1x32x8xf32> to vector<32x8xf32>
    %cst_105 = arith.constant dense<0.000000e+00> : vector<16x8xf32>
    %147 = tpu.matmul %43, %146, %cst_105 {dimension_numbers = #tpu.dot_dimension_numbers<[1], [0], [0], [1], [0, 0, 1, 1], [], []>} : vector<16x32xf32>, vector<32x8xf32>, vector<16x8xf32> -> vector<16x8xf32>
    %c0_106 = arith.constant 0 : index
    %c0_107 = arith.constant 0 : index
    %c2_108 = arith.constant 2 : index
    %c32_109 = arith.constant 32 : index
    %c0_110 = arith.constant 0 : index
    %148 = vector.load %arg2[%c0_106, %c0_107, %c2_108, %c32_109, %c0_110] : memref<2x3x4x33x8xf32, #tpu.memory_space<vmem>>, vector<1x1x1x1x8xf32>
    %149 = vector.shape_cast %148 : vector<1x1x1x1x8xf32> to vector<8xf32>
    %150 = vector.shape_cast %149 : vector<8xf32> to vector<1x8xf32>
    %151 = vector.broadcast %150 : vector<1x8xf32> to vector<16x8xf32>
    %152 = arith.addf %147, %151 : vector<16x8xf32>
    %c0_111 = arith.constant 0 : index
    %c1_112 = arith.constant 1 : index
    %c2_113 = arith.constant 2 : index
    %c0_114 = arith.constant 0 : index
    %c0_115 = arith.constant 0 : index
    %153 = vector.load %arg2[%c0_111, %c1_112, %c2_113, %c0_114, %c0_115] : memref<2x3x4x33x8xf32, #tpu.memory_space<vmem>>, vector<1x1x1x32x8xf32>
    %154 = vector.shape_cast %153 : vector<1x1x1x32x8xf32> to vector<32x8xf32>
    %cst_116 = arith.constant dense<0.000000e+00> : vector<16x8xf32>
    %155 = tpu.matmul %43, %154, %cst_116 {dimension_numbers = #tpu.dot_dimension_numbers<[1], [0], [0], [1], [0, 0, 1, 1], [], []>} : vector<16x32xf32>, vector<32x8xf32>, vector<16x8xf32> -> vector<16x8xf32>
    %c0_117 = arith.constant 0 : index
    %c1_118 = arith.constant 1 : index
    %c2_119 = arith.constant 2 : index
    %c32_120 = arith.constant 32 : index
    %c0_121 = arith.constant 0 : index
    %156 = vector.load %arg2[%c0_117, %c1_118, %c2_119, %c32_120, %c0_121] : memref<2x3x4x33x8xf32, #tpu.memory_space<vmem>>, vector<1x1x1x1x8xf32>
    %157 = vector.shape_cast %156 : vector<1x1x1x1x8xf32> to vector<8xf32>
    %158 = vector.shape_cast %157 : vector<8xf32> to vector<1x8xf32>
    %159 = vector.broadcast %158 : vector<1x8xf32> to vector<16x8xf32>
    %160 = arith.addf %155, %159 : vector<16x8xf32>
    %c0_122 = arith.constant 0 : index
    %c2_123 = arith.constant 2 : index
    %c2_124 = arith.constant 2 : index
    %c0_125 = arith.constant 0 : index
    %c0_126 = arith.constant 0 : index
    %161 = vector.load %arg2[%c0_122, %c2_123, %c2_124, %c0_125, %c0_126] : memref<2x3x4x33x8xf32, #tpu.memory_space<vmem>>, vector<1x1x1x32x8xf32>
    %162 = vector.shape_cast %161 : vector<1x1x1x32x8xf32> to vector<32x8xf32>
    %cst_127 = arith.constant dense<0.000000e+00> : vector<16x8xf32>
    %163 = tpu.matmul %43, %162, %cst_127 {dimension_numbers = #tpu.dot_dimension_numbers<[1], [0], [0], [1], [0, 0, 1, 1], [], []>} : vector<16x32xf32>, vector<32x8xf32>, vector<16x8xf32> -> vector<16x8xf32>
    %c0_128 = arith.constant 0 : index
    %c2_129 = arith.constant 2 : index
    %c2_130 = arith.constant 2 : index
    %c32_131 = arith.constant 32 : index
    %c0_132 = arith.constant 0 : index
    %164 = vector.load %arg2[%c0_128, %c2_129, %c2_130, %c32_131, %c0_132] : memref<2x3x4x33x8xf32, #tpu.memory_space<vmem>>, vector<1x1x1x1x8xf32>
    %165 = vector.shape_cast %164 : vector<1x1x1x1x8xf32> to vector<8xf32>
    %166 = vector.shape_cast %165 : vector<8xf32> to vector<1x8xf32>
    %167 = vector.broadcast %166 : vector<1x8xf32> to vector<16x8xf32>
    %168 = arith.addf %163, %167 : vector<16x8xf32>
    %169 = vector.shape_cast %152 : vector<16x8xf32> to vector<2x8x8xf32>
    %170 = vector.shape_cast %160 : vector<16x8xf32> to vector<2x8x8xf32>
    %171 = vector.shape_cast %168 : vector<16x8xf32> to vector<2x8x8xf32>
    "tpu.trace_start"() <{level = 10 : i32, message = "btd,bsd->bts"}> : () -> ()
    %cst_133 = arith.constant dense<0.000000e+00> : vector<2x8x8xf32>
    %172 = tpu.matmul %169, %170, %cst_133 {dimension_numbers = #tpu.dot_dimension_numbers<[2], [2], [1], [1], [0, 0, 0, 1, 1, 1], [0], [0]>} : vector<2x8x8xf32>, vector<2x8x8xf32>, vector<2x8x8xf32> -> vector<2x8x8xf32>
    "tpu.trace_stop"() : () -> ()
    %cst_134 = arith.constant 0.353553385 : f32
    %173 = vector.broadcast %cst_134 : f32 to vector<2x8x8xf32>
    %174 = arith.mulf %172, %173 : vector<2x8x8xf32>
    %cst_135 = arith.constant -1.000000e+30 : f32
    %175 = vector.shape_cast %8 : vector<1x8x8xi1> to vector<1x8x8xi1>
    %176 = vector.broadcast %175 : vector<1x8x8xi1> to vector<2x8x8xi1>
    %177 = vector.broadcast %cst_135 : f32 to vector<2x8x8xf32>
    %178 = arith.select %176, %174, %177 : vector<2x8x8xi1>, vector<2x8x8xf32>
    %cst_136 = arith.constant dense<0xFF800000> : vector<2x8xf32>
    %179 = vector.multi_reduction <maximumf>, %178, %cst_136 [2] : vector<2x8x8xf32> to vector<2x8xf32>
    %180 = vector.shape_cast %179 : vector<2x8xf32> to vector<2x8x1xf32>
    %181 = vector.broadcast %180 : vector<2x8x1xf32> to vector<2x8x8xf32>
    %182 = arith.subf %178, %181 : vector<2x8x8xf32>
    %183 = math.exp %182 : vector<2x8x8xf32>
    %cst_137 = arith.constant dense<0.000000e+00> : vector<2x8xf32>
    %184 = vector.multi_reduction <add>, %183, %cst_137 [2] : vector<2x8x8xf32> to vector<2x8xf32>
    %185 = vector.shape_cast %184 : vector<2x8xf32> to vector<2x8x1xf32>
    %186 = tpu.reciprocal %185 : vector<2x8x1xf32> -> vector<2x8x1xf32>
    %187 = vector.broadcast %186 : vector<2x8x1xf32> to vector<2x8x8xf32>
    %188 = arith.mulf %183, %187 : vector<2x8x8xf32>
    "tpu.trace_start"() <{level = 10 : i32, message = "bts,bsd->btd"}> : () -> ()
    %cst_138 = arith.constant dense<0.000000e+00> : vector<2x8x8xf32>
    %189 = tpu.matmul %188, %171, %cst_138 {dimension_numbers = #tpu.dot_dimension_numbers<[2], [1], [1], [2], [0, 0, 0, 1, 1, 2], [0], [0]>} : vector<2x8x8xf32>, vector<2x8x8xf32>, vector<2x8x8xf32> -> vector<2x8x8xf32>
    "tpu.trace_stop"() : () -> ()
    %190 = vector.shape_cast %189 : vector<2x8x8xf32> to vector<16x8xf32>
    %c0_139 = arith.constant 0 : index
    %c2_140 = arith.constant 2 : index
    %c0_141 = arith.constant 0 : index
    %c0_142 = arith.constant 0 : index
    %191 = vector.load %arg3[%c0_139, %c2_140, %c0_141, %c0_142] : memref<2x4x8x32xf32, #tpu.memory_space<vmem>>, vector<1x1x8x32xf32>
    %192 = vector.shape_cast %191 : vector<1x1x8x32xf32> to vector<8x32xf32>
    %cst_143 = arith.constant dense<0.000000e+00> : vector<16x32xf32>
    %193 = tpu.matmul %190, %192, %cst_143 {dimension_numbers = #tpu.dot_dimension_numbers<[1], [0], [0], [1], [0, 0, 1, 1], [], []>} : vector<16x8xf32>, vector<8x32xf32>, vector<16x32xf32> -> vector<16x32xf32>
    %194 = arith.addf %144, %193 : vector<16x32xf32>
    %c0_144 = arith.constant 0 : index
    %c0_145 = arith.constant 0 : index
    %c3 = arith.constant 3 : index
    %c0_146 = arith.constant 0 : index
    %c0_147 = arith.constant 0 : index
    %195 = vector.load %arg2[%c0_144, %c0_145, %c3, %c0_146, %c0_147] : memref<2x3x4x33x8xf32, #tpu.memory_space<vmem>>, vector<1x1x1x32x8xf32>
    %196 = vector.shape_cast %195 : vector<1x1x1x32x8xf32> to vector<32x8xf32>
    %cst_148 = arith.constant dense<0.000000e+00> : vector<16x8xf32>
    %197 = tpu.matmul %43, %196, %cst_148 {dimension_numbers = #tpu.dot_dimension_numbers<[1], [0], [0], [1], [0, 0, 1, 1], [], []>} : vector<16x32xf32>, vector<32x8xf32>, vector<16x8xf32> -> vector<16x8xf32>
    %c0_149 = arith.constant 0 : index
    %c0_150 = arith.constant 0 : index
    %c3_151 = arith.constant 3 : index
    %c32_152 = arith.constant 32 : index
    %c0_153 = arith.constant 0 : index
    %198 = vector.load %arg2[%c0_149, %c0_150, %c3_151, %c32_152, %c0_153] : memref<2x3x4x33x8xf32, #tpu.memory_space<vmem>>, vector<1x1x1x1x8xf32>
    %199 = vector.shape_cast %198 : vector<1x1x1x1x8xf32> to vector<8xf32>
    %200 = vector.shape_cast %199 : vector<8xf32> to vector<1x8xf32>
    %201 = vector.broadcast %200 : vector<1x8xf32> to vector<16x8xf32>
    %202 = arith.addf %197, %201 : vector<16x8xf32>
    %c0_154 = arith.constant 0 : index
    %c1_155 = arith.constant 1 : index
    %c3_156 = arith.constant 3 : index
    %c0_157 = arith.constant 0 : index
    %c0_158 = arith.constant 0 : index
    %203 = vector.load %arg2[%c0_154, %c1_155, %c3_156, %c0_157, %c0_158] : memref<2x3x4x33x8xf32, #tpu.memory_space<vmem>>, vector<1x1x1x32x8xf32>
    %204 = vector.shape_cast %203 : vector<1x1x1x32x8xf32> to vector<32x8xf32>
    %cst_159 = arith.constant dense<0.000000e+00> : vector<16x8xf32>
    %205 = tpu.matmul %43, %204, %cst_159 {dimension_numbers = #tpu.dot_dimension_numbers<[1], [0], [0], [1], [0, 0, 1, 1], [], []>} : vector<16x32xf32>, vector<32x8xf32>, vector<16x8xf32> -> vector<16x8xf32>
    %c0_160 = arith.constant 0 : index
    %c1_161 = arith.constant 1 : index
    %c3_162 = arith.constant 3 : index
    %c32_163 = arith.constant 32 : index
    %c0_164 = arith.constant 0 : index
    %206 = vector.load %arg2[%c0_160, %c1_161, %c3_162, %c32_163, %c0_164] : memref<2x3x4x33x8xf32, #tpu.memory_space<vmem>>, vector<1x1x1x1x8xf32>
    %207 = vector.shape_cast %206 : vector<1x1x1x1x8xf32> to vector<8xf32>
    %208 = vector.shape_cast %207 : vector<8xf32> to vector<1x8xf32>
    %209 = vector.broadcast %208 : vector<1x8xf32> to vector<16x8xf32>
    %210 = arith.addf %205, %209 : vector<16x8xf32>
    %c0_165 = arith.constant 0 : index
    %c2_166 = arith.constant 2 : index
    %c3_167 = arith.constant 3 : index
    %c0_168 = arith.constant 0 : index
    %c0_169 = arith.constant 0 : index
    %211 = vector.load %arg2[%c0_165, %c2_166, %c3_167, %c0_168, %c0_169] : memref<2x3x4x33x8xf32, #tpu.memory_space<vmem>>, vector<1x1x1x32x8xf32>
    %212 = vector.shape_cast %211 : vector<1x1x1x32x8xf32> to vector<32x8xf32>
    %cst_170 = arith.constant dense<0.000000e+00> : vector<16x8xf32>
    %213 = tpu.matmul %43, %212, %cst_170 {dimension_numbers = #tpu.dot_dimension_numbers<[1], [0], [0], [1], [0, 0, 1, 1], [], []>} : vector<16x32xf32>, vector<32x8xf32>, vector<16x8xf32> -> vector<16x8xf32>
    %c0_171 = arith.constant 0 : index
    %c2_172 = arith.constant 2 : index
    %c3_173 = arith.constant 3 : index
    %c32_174 = arith.constant 32 : index
    %c0_175 = arith.constant 0 : index
    %214 = vector.load %arg2[%c0_171, %c2_172, %c3_173, %c32_174, %c0_175] : memref<2x3x4x33x8xf32, #tpu.memory_space<vmem>>, vector<1x1x1x1x8xf32>
    %215 = vector.shape_cast %214 : vector<1x1x1x1x8xf32> to vector<8xf32>
    %216 = vector.shape_cast %215 : vector<8xf32> to vector<1x8xf32>
    %217 = vector.broadcast %216 : vector<1x8xf32> to vector<16x8xf32>
    %218 = arith.addf %213, %217 : vector<16x8xf32>
    %219 = vector.shape_cast %202 : vector<16x8xf32> to vector<2x8x8xf32>
    %220 = vector.shape_cast %210 : vector<16x8xf32> to vector<2x8x8xf32>
    %221 = vector.shape_cast %218 : vector<16x8xf32> to vector<2x8x8xf32>
    "tpu.trace_start"() <{level = 10 : i32, message = "btd,bsd->bts"}> : () -> ()
    %cst_176 = arith.constant dense<0.000000e+00> : vector<2x8x8xf32>
    %222 = tpu.matmul %219, %220, %cst_176 {dimension_numbers = #tpu.dot_dimension_numbers<[2], [2], [1], [1], [0, 0, 0, 1, 1, 1], [0], [0]>} : vector<2x8x8xf32>, vector<2x8x8xf32>, vector<2x8x8xf32> -> vector<2x8x8xf32>
    "tpu.trace_stop"() : () -> ()
    %cst_177 = arith.constant 0.353553385 : f32
    %223 = vector.broadcast %cst_177 : f32 to vector<2x8x8xf32>
    %224 = arith.mulf %222, %223 : vector<2x8x8xf32>
    %cst_178 = arith.constant -1.000000e+30 : f32
    %225 = vector.shape_cast %8 : vector<1x8x8xi1> to vector<1x8x8xi1>
    %226 = vector.broadcast %225 : vector<1x8x8xi1> to vector<2x8x8xi1>
    %227 = vector.broadcast %cst_178 : f32 to vector<2x8x8xf32>
    %228 = arith.select %226, %224, %227 : vector<2x8x8xi1>, vector<2x8x8xf32>
    %cst_179 = arith.constant dense<0xFF800000> : vector<2x8xf32>
    %229 = vector.multi_reduction <maximumf>, %228, %cst_179 [2] : vector<2x8x8xf32> to vector<2x8xf32>
    %230 = vector.shape_cast %229 : vector<2x8xf32> to vector<2x8x1xf32>
    %231 = vector.broadcast %230 : vector<2x8x1xf32> to vector<2x8x8xf32>
    %232 = arith.subf %228, %231 : vector<2x8x8xf32>
    %233 = math.exp %232 : vector<2x8x8xf32>
    %cst_180 = arith.constant dense<0.000000e+00> : vector<2x8xf32>
    %234 = vector.multi_reduction <add>, %233, %cst_180 [2] : vector<2x8x8xf32> to vector<2x8xf32>
    %235 = vector.shape_cast %234 : vector<2x8xf32> to vector<2x8x1xf32>
    %236 = tpu.reciprocal %235 : vector<2x8x1xf32> -> vector<2x8x1xf32>
    %237 = vector.broadcast %236 : vector<2x8x1xf32> to vector<2x8x8xf32>
    %238 = arith.mulf %233, %237 : vector<2x8x8xf32>
    "tpu.trace_start"() <{level = 10 : i32, message = "bts,bsd->btd"}> : () -> ()
    %cst_181 = arith.constant dense<0.000000e+00> : vector<2x8x8xf32>
    %239 = tpu.matmul %238, %221, %cst_181 {dimension_numbers = #tpu.dot_dimension_numbers<[2], [1], [1], [2], [0, 0, 0, 1, 1, 2], [0], [0]>} : vector<2x8x8xf32>, vector<2x8x8xf32>, vector<2x8x8xf32> -> vector<2x8x8xf32>
    "tpu.trace_stop"() : () -> ()
    %240 = vector.shape_cast %239 : vector<2x8x8xf32> to vector<16x8xf32>
    %c0_182 = arith.constant 0 : index
    %c3_183 = arith.constant 3 : index
    %c0_184 = arith.constant 0 : index
    %c0_185 = arith.constant 0 : index
    %241 = vector.load %arg3[%c0_182, %c3_183, %c0_184, %c0_185] : memref<2x4x8x32xf32, #tpu.memory_space<vmem>>, vector<1x1x8x32xf32>
    %242 = vector.shape_cast %241 : vector<1x1x8x32xf32> to vector<8x32xf32>
    %cst_186 = arith.constant dense<0.000000e+00> : vector<16x32xf32>
    %243 = tpu.matmul %240, %242, %cst_186 {dimension_numbers = #tpu.dot_dimension_numbers<[1], [0], [0], [1], [0, 0, 1, 1], [], []>} : vector<16x8xf32>, vector<8x32xf32>, vector<16x32xf32> -> vector<16x32xf32>
    %244 = arith.addf %194, %243 : vector<16x32xf32>
    %245 = vector.shape_cast %19 : vector<32xf32> to vector<1x32xf32>
    %246 = vector.broadcast %245 : vector<1x32xf32> to vector<16x32xf32>
    %247 = arith.addf %244, %246 : vector<16x32xf32>
    %248 = vector.shape_cast %247 : vector<16x32xf32> to vector<2x8x32xf32>
    %249 = arith.addf %4, %248 : vector<2x8x32xf32>
    %cst_187 = arith.constant dense<0.000000e+00> : vector<2x8xf32>
    %250 = vector.multi_reduction <add>, %249, %cst_187 [2] : vector<2x8x32xf32> to vector<2x8xf32>
    %251 = vector.shape_cast %250 : vector<2x8xf32> to vector<2x8x1xf32>
    %cst_188 = arith.constant 3.200000e+01 : f32
    %252 = vector.broadcast %cst_188 : f32 to vector<2x8x1xf32>
    %253 = arith.divf %251, %252 : vector<2x8x1xf32>
    %254 = vector.broadcast %253 : vector<2x8x1xf32> to vector<2x8x32xf32>
    %255 = arith.subf %249, %254 : vector<2x8x32xf32>
    %256 = arith.mulf %255, %255 : vector<2x8x32xf32>
    %cst_189 = arith.constant dense<0.000000e+00> : vector<2x8xf32>
    %257 = vector.multi_reduction <add>, %256, %cst_189 [2] : vector<2x8x32xf32> to vector<2x8xf32>
    %258 = vector.shape_cast %257 : vector<2x8xf32> to vector<2x8x1xf32>
    %cst_190 = arith.constant 3.200000e+01 : f32
    %259 = vector.broadcast %cst_190 : f32 to vector<2x8x1xf32>
    %260 = arith.divf %258, %259 : vector<2x8x1xf32>
    %cst_191 = arith.constant 9.99999974E-6 : f32
    %261 = vector.broadcast %cst_191 : f32 to vector<2x8x1xf32>
    %262 = arith.addf %260, %261 : vector<2x8x1xf32>
    %263 = math.rsqrt %262 : vector<2x8x1xf32>
    %264 = vector.broadcast %263 : vector<2x8x1xf32> to vector<2x8x32xf32>
    %265 = arith.mulf %255, %264 : vector<2x8x32xf32>
    %266 = vector.shape_cast %17 : vector<32xf32> to vector<1x1x32xf32>
    %267 = vector.broadcast %266 : vector<1x1x32xf32> to vector<2x8x32xf32>
    %268 = arith.mulf %265, %267 : vector<2x8x32xf32>
    %269 = vector.shape_cast %18 : vector<32xf32> to vector<1x1x32xf32>
    %270 = vector.broadcast %269 : vector<1x1x32xf32> to vector<2x8x32xf32>
    %271 = arith.addf %268, %270 : vector<2x8x32xf32>
    %272 = vector.shape_cast %271 : vector<2x8x32xf32> to vector<16x32xf32>
    %c0_192 = arith.constant 0 : index
    %c0_193 = arith.constant 0 : index
    %c0_194 = arith.constant 0 : index
    %273 = vector.load %arg4[%c0_192, %c0_193, %c0_194] : memref<3x32x128xf32, #tpu.memory_space<vmem>>, vector<1x32x128xf32>
    %274 = vector.shape_cast %273 : vector<1x32x128xf32> to vector<32x128xf32>
    %cst_195 = arith.constant dense<0.000000e+00> : vector<16x128xf32>
    %275 = tpu.matmul %272, %274, %cst_195 {dimension_numbers = #tpu.dot_dimension_numbers<[1], [0], [0], [1], [0, 0, 1, 1], [], []>} : vector<16x32xf32>, vector<32x128xf32>, vector<16x128xf32> -> vector<16x128xf32>
    %276 = vector.shape_cast %14 : vector<128xf32> to vector<1x128xf32>
    %277 = vector.broadcast %276 : vector<1x128xf32> to vector<16x128xf32>
    %278 = arith.addf %275, %277 : vector<16x128xf32>
    %cst_196 = arith.constant 5.000000e-01 : f32
    %279 = vector.broadcast %cst_196 : f32 to vector<16x128xf32>
    %280 = arith.mulf %279, %278 : vector<16x128xf32>
    %cst_197 = arith.constant 4.471500e-02 : f32
    %281 = vector.broadcast %cst_197 : f32 to vector<16x128xf32>
    %282 = arith.mulf %281, %278 : vector<16x128xf32>
    %283 = arith.mulf %282, %278 : vector<16x128xf32>
    %284 = arith.mulf %283, %278 : vector<16x128xf32>
    %285 = arith.addf %278, %284 : vector<16x128xf32>
    %cst_198 = arith.constant 0.797884583 : f32
    %286 = vector.broadcast %cst_198 : f32 to vector<16x128xf32>
    %287 = arith.mulf %286, %285 : vector<16x128xf32>
    %288 = math.tanh %287 : vector<16x128xf32>
    %cst_199 = arith.constant 1.000000e+00 : f32
    %289 = vector.broadcast %cst_199 : f32 to vector<16x128xf32>
    %290 = arith.addf %289, %288 : vector<16x128xf32>
    %291 = arith.mulf %280, %290 : vector<16x128xf32>
    %c0_200 = arith.constant 0 : index
    %c0_201 = arith.constant 0 : index
    %c0_202 = arith.constant 0 : index
    %292 = vector.load %arg5[%c0_200, %c0_201, %c0_202] : memref<2x128x32xf32, #tpu.memory_space<vmem>>, vector<1x128x32xf32>
    %293 = vector.shape_cast %292 : vector<1x128x32xf32> to vector<128x32xf32>
    %cst_203 = arith.constant dense<0.000000e+00> : vector<16x32xf32>
    %294 = tpu.matmul %291, %293, %cst_203 {dimension_numbers = #tpu.dot_dimension_numbers<[1], [0], [0], [1], [0, 0, 1, 1], [], []>} : vector<16x128xf32>, vector<128x32xf32>, vector<16x32xf32> -> vector<16x32xf32>
    %295 = vector.shape_cast %20 : vector<32xf32> to vector<1x32xf32>
    %296 = vector.broadcast %295 : vector<1x32xf32> to vector<16x32xf32>
    %297 = arith.addf %294, %296 : vector<16x32xf32>
    %298 = vector.shape_cast %297 : vector<16x32xf32> to vector<2x8x32xf32>
    %299 = arith.addf %249, %298 : vector<2x8x32xf32>
    %c3_204 = arith.constant 3 : index
    %c0_205 = arith.constant 0 : index
    %300 = vector.load %arg6[%c3_204, %c0_205] : memref<7x128xf32, #tpu.memory_space<vmem>>, vector<1x128xf32>
    %301 = vector.shape_cast %300 : vector<1x128xf32> to vector<128xf32>
    %c4 = arith.constant 4 : index
    %c0_206 = arith.constant 0 : index
    %302 = vector.load %arg6[%c4, %c0_206] : memref<7x128xf32, #tpu.memory_space<vmem>>, vector<1x128xf32>
    %303 = vector.shape_cast %302 : vector<1x128xf32> to vector<128xf32>
    %c5 = arith.constant 5 : index
    %c0_207 = arith.constant 0 : index
    %304 = vector.load %arg6[%c5, %c0_207] : memref<7x128xf32, #tpu.memory_space<vmem>>, vector<1x128xf32>
    %305 = vector.shape_cast %304 : vector<1x128xf32> to vector<128xf32>
    %306 = vector.extract_strided_slice %301 {offsets = [0], sizes = [32], strides = [1]} : vector<128xf32> to vector<32xf32>
    %307 = vector.extract_strided_slice %301 {offsets = [32], sizes = [32], strides = [1]} : vector<128xf32> to vector<32xf32>
    %308 = vector.extract_strided_slice %301 {offsets = [64], sizes = [32], strides = [1]} : vector<128xf32> to vector<32xf32>
    %309 = vector.extract_strided_slice %301 {offsets = [96], sizes = [32], strides = [1]} : vector<128xf32> to vector<32xf32>
    %310 = vector.extract_strided_slice %303 {offsets = [0], sizes = [32], strides = [1]} : vector<128xf32> to vector<32xf32>
    %311 = vector.extract_strided_slice %303 {offsets = [32], sizes = [32], strides = [1]} : vector<128xf32> to vector<32xf32>
    %cst_208 = arith.constant dense<0.000000e+00> : vector<2x8xf32>
    %312 = vector.multi_reduction <add>, %299, %cst_208 [2] : vector<2x8x32xf32> to vector<2x8xf32>
    %313 = vector.shape_cast %312 : vector<2x8xf32> to vector<2x8x1xf32>
    %cst_209 = arith.constant 3.200000e+01 : f32
    %314 = vector.broadcast %cst_209 : f32 to vector<2x8x1xf32>
    %315 = arith.divf %313, %314 : vector<2x8x1xf32>
    %316 = vector.broadcast %315 : vector<2x8x1xf32> to vector<2x8x32xf32>
    %317 = arith.subf %299, %316 : vector<2x8x32xf32>
    %318 = arith.mulf %317, %317 : vector<2x8x32xf32>
    %cst_210 = arith.constant dense<0.000000e+00> : vector<2x8xf32>
    %319 = vector.multi_reduction <add>, %318, %cst_210 [2] : vector<2x8x32xf32> to vector<2x8xf32>
    %320 = vector.shape_cast %319 : vector<2x8xf32> to vector<2x8x1xf32>
    %cst_211 = arith.constant 3.200000e+01 : f32
    %321 = vector.broadcast %cst_211 : f32 to vector<2x8x1xf32>
    %322 = arith.divf %320, %321 : vector<2x8x1xf32>
    %cst_212 = arith.constant 9.99999974E-6 : f32
    %323 = vector.broadcast %cst_212 : f32 to vector<2x8x1xf32>
    %324 = arith.addf %322, %323 : vector<2x8x1xf32>
    %325 = math.rsqrt %324 : vector<2x8x1xf32>
    %326 = vector.broadcast %325 : vector<2x8x1xf32> to vector<2x8x32xf32>
    %327 = arith.mulf %317, %326 : vector<2x8x32xf32>
    %328 = vector.shape_cast %306 : vector<32xf32> to vector<1x1x32xf32>
    %329 = vector.broadcast %328 : vector<1x1x32xf32> to vector<2x8x32xf32>
    %330 = arith.mulf %327, %329 : vector<2x8x32xf32>
    %331 = vector.shape_cast %307 : vector<32xf32> to vector<1x1x32xf32>
    %332 = vector.broadcast %331 : vector<1x1x32xf32> to vector<2x8x32xf32>
    %333 = arith.addf %330, %332 : vector<2x8x32xf32>
    %334 = vector.shape_cast %333 : vector<2x8x32xf32> to vector<16x32xf32>
    %cst_213 = arith.constant 0.000000e+00 : f32
    %335 = vector.broadcast %cst_213 : f32 to vector<16x32xf32>
    %c1_214 = arith.constant 1 : index
    %c0_215 = arith.constant 0 : index
    %c0_216 = arith.constant 0 : index
    %c0_217 = arith.constant 0 : index
    %c0_218 = arith.constant 0 : index
    %336 = vector.load %arg2[%c1_214, %c0_215, %c0_216, %c0_217, %c0_218] : memref<2x3x4x33x8xf32, #tpu.memory_space<vmem>>, vector<1x1x1x32x8xf32>
    %337 = vector.shape_cast %336 : vector<1x1x1x32x8xf32> to vector<32x8xf32>
    %cst_219 = arith.constant dense<0.000000e+00> : vector<16x8xf32>
    %338 = tpu.matmul %334, %337, %cst_219 {dimension_numbers = #tpu.dot_dimension_numbers<[1], [0], [0], [1], [0, 0, 1, 1], [], []>} : vector<16x32xf32>, vector<32x8xf32>, vector<16x8xf32> -> vector<16x8xf32>
    %c1_220 = arith.constant 1 : index
    %c0_221 = arith.constant 0 : index
    %c0_222 = arith.constant 0 : index
    %c32_223 = arith.constant 32 : index
    %c0_224 = arith.constant 0 : index
    %339 = vector.load %arg2[%c1_220, %c0_221, %c0_222, %c32_223, %c0_224] : memref<2x3x4x33x8xf32, #tpu.memory_space<vmem>>, vector<1x1x1x1x8xf32>
    %340 = vector.shape_cast %339 : vector<1x1x1x1x8xf32> to vector<8xf32>
    %341 = vector.shape_cast %340 : vector<8xf32> to vector<1x8xf32>
    %342 = vector.broadcast %341 : vector<1x8xf32> to vector<16x8xf32>
    %343 = arith.addf %338, %342 : vector<16x8xf32>
    %c1_225 = arith.constant 1 : index
    %c1_226 = arith.constant 1 : index
    %c0_227 = arith.constant 0 : index
    %c0_228 = arith.constant 0 : index
    %c0_229 = arith.constant 0 : index
    %344 = vector.load %arg2[%c1_225, %c1_226, %c0_227, %c0_228, %c0_229] : memref<2x3x4x33x8xf32, #tpu.memory_space<vmem>>, vector<1x1x1x32x8xf32>
    %345 = vector.shape_cast %344 : vector<1x1x1x32x8xf32> to vector<32x8xf32>
    %cst_230 = arith.constant dense<0.000000e+00> : vector<16x8xf32>
    %346 = tpu.matmul %334, %345, %cst_230 {dimension_numbers = #tpu.dot_dimension_numbers<[1], [0], [0], [1], [0, 0, 1, 1], [], []>} : vector<16x32xf32>, vector<32x8xf32>, vector<16x8xf32> -> vector<16x8xf32>
    %c1_231 = arith.constant 1 : index
    %c1_232 = arith.constant 1 : index
    %c0_233 = arith.constant 0 : index
    %c32_234 = arith.constant 32 : index
    %c0_235 = arith.constant 0 : index
    %347 = vector.load %arg2[%c1_231, %c1_232, %c0_233, %c32_234, %c0_235] : memref<2x3x4x33x8xf32, #tpu.memory_space<vmem>>, vector<1x1x1x1x8xf32>
    %348 = vector.shape_cast %347 : vector<1x1x1x1x8xf32> to vector<8xf32>
    %349 = vector.shape_cast %348 : vector<8xf32> to vector<1x8xf32>
    %350 = vector.broadcast %349 : vector<1x8xf32> to vector<16x8xf32>
    %351 = arith.addf %346, %350 : vector<16x8xf32>
    %c1_236 = arith.constant 1 : index
    %c2_237 = arith.constant 2 : index
    %c0_238 = arith.constant 0 : index
    %c0_239 = arith.constant 0 : index
    %c0_240 = arith.constant 0 : index
    %352 = vector.load %arg2[%c1_236, %c2_237, %c0_238, %c0_239, %c0_240] : memref<2x3x4x33x8xf32, #tpu.memory_space<vmem>>, vector<1x1x1x32x8xf32>
    %353 = vector.shape_cast %352 : vector<1x1x1x32x8xf32> to vector<32x8xf32>
    %cst_241 = arith.constant dense<0.000000e+00> : vector<16x8xf32>
    %354 = tpu.matmul %334, %353, %cst_241 {dimension_numbers = #tpu.dot_dimension_numbers<[1], [0], [0], [1], [0, 0, 1, 1], [], []>} : vector<16x32xf32>, vector<32x8xf32>, vector<16x8xf32> -> vector<16x8xf32>
    %c1_242 = arith.constant 1 : index
    %c2_243 = arith.constant 2 : index
    %c0_244 = arith.constant 0 : index
    %c32_245 = arith.constant 32 : index
    %c0_246 = arith.constant 0 : index
    %355 = vector.load %arg2[%c1_242, %c2_243, %c0_244, %c32_245, %c0_246] : memref<2x3x4x33x8xf32, #tpu.memory_space<vmem>>, vector<1x1x1x1x8xf32>
    %356 = vector.shape_cast %355 : vector<1x1x1x1x8xf32> to vector<8xf32>
    %357 = vector.shape_cast %356 : vector<8xf32> to vector<1x8xf32>
    %358 = vector.broadcast %357 : vector<1x8xf32> to vector<16x8xf32>
    %359 = arith.addf %354, %358 : vector<16x8xf32>
    %360 = vector.shape_cast %343 : vector<16x8xf32> to vector<2x8x8xf32>
    %361 = vector.shape_cast %351 : vector<16x8xf32> to vector<2x8x8xf32>
    %362 = vector.shape_cast %359 : vector<16x8xf32> to vector<2x8x8xf32>
    "tpu.trace_start"() <{level = 10 : i32, message = "btd,bsd->bts"}> : () -> ()
    %cst_247 = arith.constant dense<0.000000e+00> : vector<2x8x8xf32>
    %363 = tpu.matmul %360, %361, %cst_247 {dimension_numbers = #tpu.dot_dimension_numbers<[2], [2], [1], [1], [0, 0, 0, 1, 1, 1], [0], [0]>} : vector<2x8x8xf32>, vector<2x8x8xf32>, vector<2x8x8xf32> -> vector<2x8x8xf32>
    "tpu.trace_stop"() : () -> ()
    %cst_248 = arith.constant 0.353553385 : f32
    %364 = vector.broadcast %cst_248 : f32 to vector<2x8x8xf32>
    %365 = arith.mulf %363, %364 : vector<2x8x8xf32>
    %cst_249 = arith.constant -1.000000e+30 : f32
    %366 = vector.shape_cast %8 : vector<1x8x8xi1> to vector<1x8x8xi1>
    %367 = vector.broadcast %366 : vector<1x8x8xi1> to vector<2x8x8xi1>
    %368 = vector.broadcast %cst_249 : f32 to vector<2x8x8xf32>
    %369 = arith.select %367, %365, %368 : vector<2x8x8xi1>, vector<2x8x8xf32>
    %cst_250 = arith.constant dense<0xFF800000> : vector<2x8xf32>
    %370 = vector.multi_reduction <maximumf>, %369, %cst_250 [2] : vector<2x8x8xf32> to vector<2x8xf32>
    %371 = vector.shape_cast %370 : vector<2x8xf32> to vector<2x8x1xf32>
    %372 = vector.broadcast %371 : vector<2x8x1xf32> to vector<2x8x8xf32>
    %373 = arith.subf %369, %372 : vector<2x8x8xf32>
    %374 = math.exp %373 : vector<2x8x8xf32>
    %cst_251 = arith.constant dense<0.000000e+00> : vector<2x8xf32>
    %375 = vector.multi_reduction <add>, %374, %cst_251 [2] : vector<2x8x8xf32> to vector<2x8xf32>
    %376 = vector.shape_cast %375 : vector<2x8xf32> to vector<2x8x1xf32>
    %377 = tpu.reciprocal %376 : vector<2x8x1xf32> -> vector<2x8x1xf32>
    %378 = vector.broadcast %377 : vector<2x8x1xf32> to vector<2x8x8xf32>
    %379 = arith.mulf %374, %378 : vector<2x8x8xf32>
    "tpu.trace_start"() <{level = 10 : i32, message = "bts,bsd->btd"}> : () -> ()
    %cst_252 = arith.constant dense<0.000000e+00> : vector<2x8x8xf32>
    %380 = tpu.matmul %379, %362, %cst_252 {dimension_numbers = #tpu.dot_dimension_numbers<[2], [1], [1], [2], [0, 0, 0, 1, 1, 2], [0], [0]>} : vector<2x8x8xf32>, vector<2x8x8xf32>, vector<2x8x8xf32> -> vector<2x8x8xf32>
    "tpu.trace_stop"() : () -> ()
    %381 = vector.shape_cast %380 : vector<2x8x8xf32> to vector<16x8xf32>
    %c1_253 = arith.constant 1 : index
    %c0_254 = arith.constant 0 : index
    %c0_255 = arith.constant 0 : index
    %c0_256 = arith.constant 0 : index
    %382 = vector.load %arg3[%c1_253, %c0_254, %c0_255, %c0_256] : memref<2x4x8x32xf32, #tpu.memory_space<vmem>>, vector<1x1x8x32xf32>
    %383 = vector.shape_cast %382 : vector<1x1x8x32xf32> to vector<8x32xf32>
    %cst_257 = arith.constant dense<0.000000e+00> : vector<16x32xf32>
    %384 = tpu.matmul %381, %383, %cst_257 {dimension_numbers = #tpu.dot_dimension_numbers<[1], [0], [0], [1], [0, 0, 1, 1], [], []>} : vector<16x8xf32>, vector<8x32xf32>, vector<16x32xf32> -> vector<16x32xf32>
    %385 = arith.addf %335, %384 : vector<16x32xf32>
    %c1_258 = arith.constant 1 : index
    %c0_259 = arith.constant 0 : index
    %c1_260 = arith.constant 1 : index
    %c0_261 = arith.constant 0 : index
    %c0_262 = arith.constant 0 : index
    %386 = vector.load %arg2[%c1_258, %c0_259, %c1_260, %c0_261, %c0_262] : memref<2x3x4x33x8xf32, #tpu.memory_space<vmem>>, vector<1x1x1x32x8xf32>
    %387 = vector.shape_cast %386 : vector<1x1x1x32x8xf32> to vector<32x8xf32>
    %cst_263 = arith.constant dense<0.000000e+00> : vector<16x8xf32>
    %388 = tpu.matmul %334, %387, %cst_263 {dimension_numbers = #tpu.dot_dimension_numbers<[1], [0], [0], [1], [0, 0, 1, 1], [], []>} : vector<16x32xf32>, vector<32x8xf32>, vector<16x8xf32> -> vector<16x8xf32>
    %c1_264 = arith.constant 1 : index
    %c0_265 = arith.constant 0 : index
    %c1_266 = arith.constant 1 : index
    %c32_267 = arith.constant 32 : index
    %c0_268 = arith.constant 0 : index
    %389 = vector.load %arg2[%c1_264, %c0_265, %c1_266, %c32_267, %c0_268] : memref<2x3x4x33x8xf32, #tpu.memory_space<vmem>>, vector<1x1x1x1x8xf32>
    %390 = vector.shape_cast %389 : vector<1x1x1x1x8xf32> to vector<8xf32>
    %391 = vector.shape_cast %390 : vector<8xf32> to vector<1x8xf32>
    %392 = vector.broadcast %391 : vector<1x8xf32> to vector<16x8xf32>
    %393 = arith.addf %388, %392 : vector<16x8xf32>
    %c1_269 = arith.constant 1 : index
    %c1_270 = arith.constant 1 : index
    %c1_271 = arith.constant 1 : index
    %c0_272 = arith.constant 0 : index
    %c0_273 = arith.constant 0 : index
    %394 = vector.load %arg2[%c1_269, %c1_270, %c1_271, %c0_272, %c0_273] : memref<2x3x4x33x8xf32, #tpu.memory_space<vmem>>, vector<1x1x1x32x8xf32>
    %395 = vector.shape_cast %394 : vector<1x1x1x32x8xf32> to vector<32x8xf32>
    %cst_274 = arith.constant dense<0.000000e+00> : vector<16x8xf32>
    %396 = tpu.matmul %334, %395, %cst_274 {dimension_numbers = #tpu.dot_dimension_numbers<[1], [0], [0], [1], [0, 0, 1, 1], [], []>} : vector<16x32xf32>, vector<32x8xf32>, vector<16x8xf32> -> vector<16x8xf32>
    %c1_275 = arith.constant 1 : index
    %c1_276 = arith.constant 1 : index
    %c1_277 = arith.constant 1 : index
    %c32_278 = arith.constant 32 : index
    %c0_279 = arith.constant 0 : index
    %397 = vector.load %arg2[%c1_275, %c1_276, %c1_277, %c32_278, %c0_279] : memref<2x3x4x33x8xf32, #tpu.memory_space<vmem>>, vector<1x1x1x1x8xf32>
    %398 = vector.shape_cast %397 : vector<1x1x1x1x8xf32> to vector<8xf32>
    %399 = vector.shape_cast %398 : vector<8xf32> to vector<1x8xf32>
    %400 = vector.broadcast %399 : vector<1x8xf32> to vector<16x8xf32>
    %401 = arith.addf %396, %400 : vector<16x8xf32>
    %c1_280 = arith.constant 1 : index
    %c2_281 = arith.constant 2 : index
    %c1_282 = arith.constant 1 : index
    %c0_283 = arith.constant 0 : index
    %c0_284 = arith.constant 0 : index
    %402 = vector.load %arg2[%c1_280, %c2_281, %c1_282, %c0_283, %c0_284] : memref<2x3x4x33x8xf32, #tpu.memory_space<vmem>>, vector<1x1x1x32x8xf32>
    %403 = vector.shape_cast %402 : vector<1x1x1x32x8xf32> to vector<32x8xf32>
    %cst_285 = arith.constant dense<0.000000e+00> : vector<16x8xf32>
    %404 = tpu.matmul %334, %403, %cst_285 {dimension_numbers = #tpu.dot_dimension_numbers<[1], [0], [0], [1], [0, 0, 1, 1], [], []>} : vector<16x32xf32>, vector<32x8xf32>, vector<16x8xf32> -> vector<16x8xf32>
    %c1_286 = arith.constant 1 : index
    %c2_287 = arith.constant 2 : index
    %c1_288 = arith.constant 1 : index
    %c32_289 = arith.constant 32 : index
    %c0_290 = arith.constant 0 : index
    %405 = vector.load %arg2[%c1_286, %c2_287, %c1_288, %c32_289, %c0_290] : memref<2x3x4x33x8xf32, #tpu.memory_space<vmem>>, vector<1x1x1x1x8xf32>
    %406 = vector.shape_cast %405 : vector<1x1x1x1x8xf32> to vector<8xf32>
    %407 = vector.shape_cast %406 : vector<8xf32> to vector<1x8xf32>
    %408 = vector.broadcast %407 : vector<1x8xf32> to vector<16x8xf32>
    %409 = arith.addf %404, %408 : vector<16x8xf32>
    %410 = vector.shape_cast %393 : vector<16x8xf32> to vector<2x8x8xf32>
    %411 = vector.shape_cast %401 : vector<16x8xf32> to vector<2x8x8xf32>
    %412 = vector.shape_cast %409 : vector<16x8xf32> to vector<2x8x8xf32>
    "tpu.trace_start"() <{level = 10 : i32, message = "btd,bsd->bts"}> : () -> ()
    %cst_291 = arith.constant dense<0.000000e+00> : vector<2x8x8xf32>
    %413 = tpu.matmul %410, %411, %cst_291 {dimension_numbers = #tpu.dot_dimension_numbers<[2], [2], [1], [1], [0, 0, 0, 1, 1, 1], [0], [0]>} : vector<2x8x8xf32>, vector<2x8x8xf32>, vector<2x8x8xf32> -> vector<2x8x8xf32>
    "tpu.trace_stop"() : () -> ()
    %cst_292 = arith.constant 0.353553385 : f32
    %414 = vector.broadcast %cst_292 : f32 to vector<2x8x8xf32>
    %415 = arith.mulf %413, %414 : vector<2x8x8xf32>
    %cst_293 = arith.constant -1.000000e+30 : f32
    %416 = vector.shape_cast %8 : vector<1x8x8xi1> to vector<1x8x8xi1>
    %417 = vector.broadcast %416 : vector<1x8x8xi1> to vector<2x8x8xi1>
    %418 = vector.broadcast %cst_293 : f32 to vector<2x8x8xf32>
    %419 = arith.select %417, %415, %418 : vector<2x8x8xi1>, vector<2x8x8xf32>
    %cst_294 = arith.constant dense<0xFF800000> : vector<2x8xf32>
    %420 = vector.multi_reduction <maximumf>, %419, %cst_294 [2] : vector<2x8x8xf32> to vector<2x8xf32>
    %421 = vector.shape_cast %420 : vector<2x8xf32> to vector<2x8x1xf32>
    %422 = vector.broadcast %421 : vector<2x8x1xf32> to vector<2x8x8xf32>
    %423 = arith.subf %419, %422 : vector<2x8x8xf32>
    %424 = math.exp %423 : vector<2x8x8xf32>
    %cst_295 = arith.constant dense<0.000000e+00> : vector<2x8xf32>
    %425 = vector.multi_reduction <add>, %424, %cst_295 [2] : vector<2x8x8xf32> to vector<2x8xf32>
    %426 = vector.shape_cast %425 : vector<2x8xf32> to vector<2x8x1xf32>
    %427 = tpu.reciprocal %426 : vector<2x8x1xf32> -> vector<2x8x1xf32>
    %428 = vector.broadcast %427 : vector<2x8x1xf32> to vector<2x8x8xf32>
    %429 = arith.mulf %424, %428 : vector<2x8x8xf32>
    "tpu.trace_start"() <{level = 10 : i32, message = "bts,bsd->btd"}> : () -> ()
    %cst_296 = arith.constant dense<0.000000e+00> : vector<2x8x8xf32>
    %430 = tpu.matmul %429, %412, %cst_296 {dimension_numbers = #tpu.dot_dimension_numbers<[2], [1], [1], [2], [0, 0, 0, 1, 1, 2], [0], [0]>} : vector<2x8x8xf32>, vector<2x8x8xf32>, vector<2x8x8xf32> -> vector<2x8x8xf32>
    "tpu.trace_stop"() : () -> ()
    %431 = vector.shape_cast %430 : vector<2x8x8xf32> to vector<16x8xf32>
    %c1_297 = arith.constant 1 : index
    %c1_298 = arith.constant 1 : index
    %c0_299 = arith.constant 0 : index
    %c0_300 = arith.constant 0 : index
    %432 = vector.load %arg3[%c1_297, %c1_298, %c0_299, %c0_300] : memref<2x4x8x32xf32, #tpu.memory_space<vmem>>, vector<1x1x8x32xf32>
    %433 = vector.shape_cast %432 : vector<1x1x8x32xf32> to vector<8x32xf32>
    %cst_301 = arith.constant dense<0.000000e+00> : vector<16x32xf32>
    %434 = tpu.matmul %431, %433, %cst_301 {dimension_numbers = #tpu.dot_dimension_numbers<[1], [0], [0], [1], [0, 0, 1, 1], [], []>} : vector<16x8xf32>, vector<8x32xf32>, vector<16x32xf32> -> vector<16x32xf32>
    %435 = arith.addf %385, %434 : vector<16x32xf32>
    %c1_302 = arith.constant 1 : index
    %c0_303 = arith.constant 0 : index
    %c2_304 = arith.constant 2 : index
    %c0_305 = arith.constant 0 : index
    %c0_306 = arith.constant 0 : index
    %436 = vector.load %arg2[%c1_302, %c0_303, %c2_304, %c0_305, %c0_306] : memref<2x3x4x33x8xf32, #tpu.memory_space<vmem>>, vector<1x1x1x32x8xf32>
    %437 = vector.shape_cast %436 : vector<1x1x1x32x8xf32> to vector<32x8xf32>
    %cst_307 = arith.constant dense<0.000000e+00> : vector<16x8xf32>
    %438 = tpu.matmul %334, %437, %cst_307 {dimension_numbers = #tpu.dot_dimension_numbers<[1], [0], [0], [1], [0, 0, 1, 1], [], []>} : vector<16x32xf32>, vector<32x8xf32>, vector<16x8xf32> -> vector<16x8xf32>
    %c1_308 = arith.constant 1 : index
    %c0_309 = arith.constant 0 : index
    %c2_310 = arith.constant 2 : index
    %c32_311 = arith.constant 32 : index
    %c0_312 = arith.constant 0 : index
    %439 = vector.load %arg2[%c1_308, %c0_309, %c2_310, %c32_311, %c0_312] : memref<2x3x4x33x8xf32, #tpu.memory_space<vmem>>, vector<1x1x1x1x8xf32>
    %440 = vector.shape_cast %439 : vector<1x1x1x1x8xf32> to vector<8xf32>
    %441 = vector.shape_cast %440 : vector<8xf32> to vector<1x8xf32>
    %442 = vector.broadcast %441 : vector<1x8xf32> to vector<16x8xf32>
    %443 = arith.addf %438, %442 : vector<16x8xf32>
    %c1_313 = arith.constant 1 : index
    %c1_314 = arith.constant 1 : index
    %c2_315 = arith.constant 2 : index
    %c0_316 = arith.constant 0 : index
    %c0_317 = arith.constant 0 : index
    %444 = vector.load %arg2[%c1_313, %c1_314, %c2_315, %c0_316, %c0_317] : memref<2x3x4x33x8xf32, #tpu.memory_space<vmem>>, vector<1x1x1x32x8xf32>
    %445 = vector.shape_cast %444 : vector<1x1x1x32x8xf32> to vector<32x8xf32>
    %cst_318 = arith.constant dense<0.000000e+00> : vector<16x8xf32>
    %446 = tpu.matmul %334, %445, %cst_318 {dimension_numbers = #tpu.dot_dimension_numbers<[1], [0], [0], [1], [0, 0, 1, 1], [], []>} : vector<16x32xf32>, vector<32x8xf32>, vector<16x8xf32> -> vector<16x8xf32>
    %c1_319 = arith.constant 1 : index
    %c1_320 = arith.constant 1 : index
    %c2_321 = arith.constant 2 : index
    %c32_322 = arith.constant 32 : index
    %c0_323 = arith.constant 0 : index
    %447 = vector.load %arg2[%c1_319, %c1_320, %c2_321, %c32_322, %c0_323] : memref<2x3x4x33x8xf32, #tpu.memory_space<vmem>>, vector<1x1x1x1x8xf32>
    %448 = vector.shape_cast %447 : vector<1x1x1x1x8xf32> to vector<8xf32>
    %449 = vector.shape_cast %448 : vector<8xf32> to vector<1x8xf32>
    %450 = vector.broadcast %449 : vector<1x8xf32> to vector<16x8xf32>
    %451 = arith.addf %446, %450 : vector<16x8xf32>
    %c1_324 = arith.constant 1 : index
    %c2_325 = arith.constant 2 : index
    %c2_326 = arith.constant 2 : index
    %c0_327 = arith.constant 0 : index
    %c0_328 = arith.constant 0 : index
    %452 = vector.load %arg2[%c1_324, %c2_325, %c2_326, %c0_327, %c0_328] : memref<2x3x4x33x8xf32, #tpu.memory_space<vmem>>, vector<1x1x1x32x8xf32>
    %453 = vector.shape_cast %452 : vector<1x1x1x32x8xf32> to vector<32x8xf32>
    %cst_329 = arith.constant dense<0.000000e+00> : vector<16x8xf32>
    %454 = tpu.matmul %334, %453, %cst_329 {dimension_numbers = #tpu.dot_dimension_numbers<[1], [0], [0], [1], [0, 0, 1, 1], [], []>} : vector<16x32xf32>, vector<32x8xf32>, vector<16x8xf32> -> vector<16x8xf32>
    %c1_330 = arith.constant 1 : index
    %c2_331 = arith.constant 2 : index
    %c2_332 = arith.constant 2 : index
    %c32_333 = arith.constant 32 : index
    %c0_334 = arith.constant 0 : index
    %455 = vector.load %arg2[%c1_330, %c2_331, %c2_332, %c32_333, %c0_334] : memref<2x3x4x33x8xf32, #tpu.memory_space<vmem>>, vector<1x1x1x1x8xf32>
    %456 = vector.shape_cast %455 : vector<1x1x1x1x8xf32> to vector<8xf32>
    %457 = vector.shape_cast %456 : vector<8xf32> to vector<1x8xf32>
    %458 = vector.broadcast %457 : vector<1x8xf32> to vector<16x8xf32>
    %459 = arith.addf %454, %458 : vector<16x8xf32>
    %460 = vector.shape_cast %443 : vector<16x8xf32> to vector<2x8x8xf32>
    %461 = vector.shape_cast %451 : vector<16x8xf32> to vector<2x8x8xf32>
    %462 = vector.shape_cast %459 : vector<16x8xf32> to vector<2x8x8xf32>
    "tpu.trace_start"() <{level = 10 : i32, message = "btd,bsd->bts"}> : () -> ()
    %cst_335 = arith.constant dense<0.000000e+00> : vector<2x8x8xf32>
    %463 = tpu.matmul %460, %461, %cst_335 {dimension_numbers = #tpu.dot_dimension_numbers<[2], [2], [1], [1], [0, 0, 0, 1, 1, 1], [0], [0]>} : vector<2x8x8xf32>, vector<2x8x8xf32>, vector<2x8x8xf32> -> vector<2x8x8xf32>
    "tpu.trace_stop"() : () -> ()
    %cst_336 = arith.constant 0.353553385 : f32
    %464 = vector.broadcast %cst_336 : f32 to vector<2x8x8xf32>
    %465 = arith.mulf %463, %464 : vector<2x8x8xf32>
    %cst_337 = arith.constant -1.000000e+30 : f32
    %466 = vector.shape_cast %8 : vector<1x8x8xi1> to vector<1x8x8xi1>
    %467 = vector.broadcast %466 : vector<1x8x8xi1> to vector<2x8x8xi1>
    %468 = vector.broadcast %cst_337 : f32 to vector<2x8x8xf32>
    %469 = arith.select %467, %465, %468 : vector<2x8x8xi1>, vector<2x8x8xf32>
    %cst_338 = arith.constant dense<0xFF800000> : vector<2x8xf32>
    %470 = vector.multi_reduction <maximumf>, %469, %cst_338 [2] : vector<2x8x8xf32> to vector<2x8xf32>
    %471 = vector.shape_cast %470 : vector<2x8xf32> to vector<2x8x1xf32>
    %472 = vector.broadcast %471 : vector<2x8x1xf32> to vector<2x8x8xf32>
    %473 = arith.subf %469, %472 : vector<2x8x8xf32>
    %474 = math.exp %473 : vector<2x8x8xf32>
    %cst_339 = arith.constant dense<0.000000e+00> : vector<2x8xf32>
    %475 = vector.multi_reduction <add>, %474, %cst_339 [2] : vector<2x8x8xf32> to vector<2x8xf32>
    %476 = vector.shape_cast %475 : vector<2x8xf32> to vector<2x8x1xf32>
    %477 = tpu.reciprocal %476 : vector<2x8x1xf32> -> vector<2x8x1xf32>
    %478 = vector.broadcast %477 : vector<2x8x1xf32> to vector<2x8x8xf32>
    %479 = arith.mulf %474, %478 : vector<2x8x8xf32>
    "tpu.trace_start"() <{level = 10 : i32, message = "bts,bsd->btd"}> : () -> ()
    %cst_340 = arith.constant dense<0.000000e+00> : vector<2x8x8xf32>
    %480 = tpu.matmul %479, %462, %cst_340 {dimension_numbers = #tpu.dot_dimension_numbers<[2], [1], [1], [2], [0, 0, 0, 1, 1, 2], [0], [0]>} : vector<2x8x8xf32>, vector<2x8x8xf32>, vector<2x8x8xf32> -> vector<2x8x8xf32>
    "tpu.trace_stop"() : () -> ()
    %481 = vector.shape_cast %480 : vector<2x8x8xf32> to vector<16x8xf32>
    %c1_341 = arith.constant 1 : index
    %c2_342 = arith.constant 2 : index
    %c0_343 = arith.constant 0 : index
    %c0_344 = arith.constant 0 : index
    %482 = vector.load %arg3[%c1_341, %c2_342, %c0_343, %c0_344] : memref<2x4x8x32xf32, #tpu.memory_space<vmem>>, vector<1x1x8x32xf32>
    %483 = vector.shape_cast %482 : vector<1x1x8x32xf32> to vector<8x32xf32>
    %cst_345 = arith.constant dense<0.000000e+00> : vector<16x32xf32>
    %484 = tpu.matmul %481, %483, %cst_345 {dimension_numbers = #tpu.dot_dimension_numbers<[1], [0], [0], [1], [0, 0, 1, 1], [], []>} : vector<16x8xf32>, vector<8x32xf32>, vector<16x32xf32> -> vector<16x32xf32>
    %485 = arith.addf %435, %484 : vector<16x32xf32>
    %c1_346 = arith.constant 1 : index
    %c0_347 = arith.constant 0 : index
    %c3_348 = arith.constant 3 : index
    %c0_349 = arith.constant 0 : index
    %c0_350 = arith.constant 0 : index
    %486 = vector.load %arg2[%c1_346, %c0_347, %c3_348, %c0_349, %c0_350] : memref<2x3x4x33x8xf32, #tpu.memory_space<vmem>>, vector<1x1x1x32x8xf32>
    %487 = vector.shape_cast %486 : vector<1x1x1x32x8xf32> to vector<32x8xf32>
    %cst_351 = arith.constant dense<0.000000e+00> : vector<16x8xf32>
    %488 = tpu.matmul %334, %487, %cst_351 {dimension_numbers = #tpu.dot_dimension_numbers<[1], [0], [0], [1], [0, 0, 1, 1], [], []>} : vector<16x32xf32>, vector<32x8xf32>, vector<16x8xf32> -> vector<16x8xf32>
    %c1_352 = arith.constant 1 : index
    %c0_353 = arith.constant 0 : index
    %c3_354 = arith.constant 3 : index
    %c32_355 = arith.constant 32 : index
    %c0_356 = arith.constant 0 : index
    %489 = vector.load %arg2[%c1_352, %c0_353, %c3_354, %c32_355, %c0_356] : memref<2x3x4x33x8xf32, #tpu.memory_space<vmem>>, vector<1x1x1x1x8xf32>
    %490 = vector.shape_cast %489 : vector<1x1x1x1x8xf32> to vector<8xf32>
    %491 = vector.shape_cast %490 : vector<8xf32> to vector<1x8xf32>
    %492 = vector.broadcast %491 : vector<1x8xf32> to vector<16x8xf32>
    %493 = arith.addf %488, %492 : vector<16x8xf32>
    %c1_357 = arith.constant 1 : index
    %c1_358 = arith.constant 1 : index
    %c3_359 = arith.constant 3 : index
    %c0_360 = arith.constant 0 : index
    %c0_361 = arith.constant 0 : index
    %494 = vector.load %arg2[%c1_357, %c1_358, %c3_359, %c0_360, %c0_361] : memref<2x3x4x33x8xf32, #tpu.memory_space<vmem>>, vector<1x1x1x32x8xf32>
    %495 = vector.shape_cast %494 : vector<1x1x1x32x8xf32> to vector<32x8xf32>
    %cst_362 = arith.constant dense<0.000000e+00> : vector<16x8xf32>
    %496 = tpu.matmul %334, %495, %cst_362 {dimension_numbers = #tpu.dot_dimension_numbers<[1], [0], [0], [1], [0, 0, 1, 1], [], []>} : vector<16x32xf32>, vector<32x8xf32>, vector<16x8xf32> -> vector<16x8xf32>
    %c1_363 = arith.constant 1 : index
    %c1_364 = arith.constant 1 : index
    %c3_365 = arith.constant 3 : index
    %c32_366 = arith.constant 32 : index
    %c0_367 = arith.constant 0 : index
    %497 = vector.load %arg2[%c1_363, %c1_364, %c3_365, %c32_366, %c0_367] : memref<2x3x4x33x8xf32, #tpu.memory_space<vmem>>, vector<1x1x1x1x8xf32>
    %498 = vector.shape_cast %497 : vector<1x1x1x1x8xf32> to vector<8xf32>
    %499 = vector.shape_cast %498 : vector<8xf32> to vector<1x8xf32>
    %500 = vector.broadcast %499 : vector<1x8xf32> to vector<16x8xf32>
    %501 = arith.addf %496, %500 : vector<16x8xf32>
    %c1_368 = arith.constant 1 : index
    %c2_369 = arith.constant 2 : index
    %c3_370 = arith.constant 3 : index
    %c0_371 = arith.constant 0 : index
    %c0_372 = arith.constant 0 : index
    %502 = vector.load %arg2[%c1_368, %c2_369, %c3_370, %c0_371, %c0_372] : memref<2x3x4x33x8xf32, #tpu.memory_space<vmem>>, vector<1x1x1x32x8xf32>
    %503 = vector.shape_cast %502 : vector<1x1x1x32x8xf32> to vector<32x8xf32>
    %cst_373 = arith.constant dense<0.000000e+00> : vector<16x8xf32>
    %504 = tpu.matmul %334, %503, %cst_373 {dimension_numbers = #tpu.dot_dimension_numbers<[1], [0], [0], [1], [0, 0, 1, 1], [], []>} : vector<16x32xf32>, vector<32x8xf32>, vector<16x8xf32> -> vector<16x8xf32>
    %c1_374 = arith.constant 1 : index
    %c2_375 = arith.constant 2 : index
    %c3_376 = arith.constant 3 : index
    %c32_377 = arith.constant 32 : index
    %c0_378 = arith.constant 0 : index
    %505 = vector.load %arg2[%c1_374, %c2_375, %c3_376, %c32_377, %c0_378] : memref<2x3x4x33x8xf32, #tpu.memory_space<vmem>>, vector<1x1x1x1x8xf32>
    %506 = vector.shape_cast %505 : vector<1x1x1x1x8xf32> to vector<8xf32>
    %507 = vector.shape_cast %506 : vector<8xf32> to vector<1x8xf32>
    %508 = vector.broadcast %507 : vector<1x8xf32> to vector<16x8xf32>
    %509 = arith.addf %504, %508 : vector<16x8xf32>
    %510 = vector.shape_cast %493 : vector<16x8xf32> to vector<2x8x8xf32>
    %511 = vector.shape_cast %501 : vector<16x8xf32> to vector<2x8x8xf32>
    %512 = vector.shape_cast %509 : vector<16x8xf32> to vector<2x8x8xf32>
    "tpu.trace_start"() <{level = 10 : i32, message = "btd,bsd->bts"}> : () -> ()
    %cst_379 = arith.constant dense<0.000000e+00> : vector<2x8x8xf32>
    %513 = tpu.matmul %510, %511, %cst_379 {dimension_numbers = #tpu.dot_dimension_numbers<[2], [2], [1], [1], [0, 0, 0, 1, 1, 1], [0], [0]>} : vector<2x8x8xf32>, vector<2x8x8xf32>, vector<2x8x8xf32> -> vector<2x8x8xf32>
    "tpu.trace_stop"() : () -> ()
    %cst_380 = arith.constant 0.353553385 : f32
    %514 = vector.broadcast %cst_380 : f32 to vector<2x8x8xf32>
    %515 = arith.mulf %513, %514 : vector<2x8x8xf32>
    %cst_381 = arith.constant -1.000000e+30 : f32
    %516 = vector.shape_cast %8 : vector<1x8x8xi1> to vector<1x8x8xi1>
    %517 = vector.broadcast %516 : vector<1x8x8xi1> to vector<2x8x8xi1>
    %518 = vector.broadcast %cst_381 : f32 to vector<2x8x8xf32>
    %519 = arith.select %517, %515, %518 : vector<2x8x8xi1>, vector<2x8x8xf32>
    %cst_382 = arith.constant dense<0xFF800000> : vector<2x8xf32>
    %520 = vector.multi_reduction <maximumf>, %519, %cst_382 [2] : vector<2x8x8xf32> to vector<2x8xf32>
    %521 = vector.shape_cast %520 : vector<2x8xf32> to vector<2x8x1xf32>
    %522 = vector.broadcast %521 : vector<2x8x1xf32> to vector<2x8x8xf32>
    %523 = arith.subf %519, %522 : vector<2x8x8xf32>
    %524 = math.exp %523 : vector<2x8x8xf32>
    %cst_383 = arith.constant dense<0.000000e+00> : vector<2x8xf32>
    %525 = vector.multi_reduction <add>, %524, %cst_383 [2] : vector<2x8x8xf32> to vector<2x8xf32>
    %526 = vector.shape_cast %525 : vector<2x8xf32> to vector<2x8x1xf32>
    %527 = tpu.reciprocal %526 : vector<2x8x1xf32> -> vector<2x8x1xf32>
    %528 = vector.broadcast %527 : vector<2x8x1xf32> to vector<2x8x8xf32>
    %529 = arith.mulf %524, %528 : vector<2x8x8xf32>
    "tpu.trace_start"() <{level = 10 : i32, message = "bts,bsd->btd"}> : () -> ()
    %cst_384 = arith.constant dense<0.000000e+00> : vector<2x8x8xf32>
    %530 = tpu.matmul %529, %512, %cst_384 {dimension_numbers = #tpu.dot_dimension_numbers<[2], [1], [1], [2], [0, 0, 0, 1, 1, 2], [0], [0]>} : vector<2x8x8xf32>, vector<2x8x8xf32>, vector<2x8x8xf32> -> vector<2x8x8xf32>
    "tpu.trace_stop"() : () -> ()
    %531 = vector.shape_cast %530 : vector<2x8x8xf32> to vector<16x8xf32>
    %c1_385 = arith.constant 1 : index
    %c3_386 = arith.constant 3 : index
    %c0_387 = arith.constant 0 : index
    %c0_388 = arith.constant 0 : index
    %532 = vector.load %arg3[%c1_385, %c3_386, %c0_387, %c0_388] : memref<2x4x8x32xf32, #tpu.memory_space<vmem>>, vector<1x1x8x32xf32>
    %533 = vector.shape_cast %532 : vector<1x1x8x32xf32> to vector<8x32xf32>
    %cst_389 = arith.constant dense<0.000000e+00> : vector<16x32xf32>
    %534 = tpu.matmul %531, %533, %cst_389 {dimension_numbers = #tpu.dot_dimension_numbers<[1], [0], [0], [1], [0, 0, 1, 1], [], []>} : vector<16x8xf32>, vector<8x32xf32>, vector<16x32xf32> -> vector<16x32xf32>
    %535 = arith.addf %485, %534 : vector<16x32xf32>
    %536 = vector.shape_cast %310 : vector<32xf32> to vector<1x32xf32>
    %537 = vector.broadcast %536 : vector<1x32xf32> to vector<16x32xf32>
    %538 = arith.addf %535, %537 : vector<16x32xf32>
    %539 = vector.shape_cast %538 : vector<16x32xf32> to vector<2x8x32xf32>
    %540 = arith.addf %299, %539 : vector<2x8x32xf32>
    %cst_390 = arith.constant dense<0.000000e+00> : vector<2x8xf32>
    %541 = vector.multi_reduction <add>, %540, %cst_390 [2] : vector<2x8x32xf32> to vector<2x8xf32>
    %542 = vector.shape_cast %541 : vector<2x8xf32> to vector<2x8x1xf32>
    %cst_391 = arith.constant 3.200000e+01 : f32
    %543 = vector.broadcast %cst_391 : f32 to vector<2x8x1xf32>
    %544 = arith.divf %542, %543 : vector<2x8x1xf32>
    %545 = vector.broadcast %544 : vector<2x8x1xf32> to vector<2x8x32xf32>
    %546 = arith.subf %540, %545 : vector<2x8x32xf32>
    %547 = arith.mulf %546, %546 : vector<2x8x32xf32>
    %cst_392 = arith.constant dense<0.000000e+00> : vector<2x8xf32>
    %548 = vector.multi_reduction <add>, %547, %cst_392 [2] : vector<2x8x32xf32> to vector<2x8xf32>
    %549 = vector.shape_cast %548 : vector<2x8xf32> to vector<2x8x1xf32>
    %cst_393 = arith.constant 3.200000e+01 : f32
    %550 = vector.broadcast %cst_393 : f32 to vector<2x8x1xf32>
    %551 = arith.divf %549, %550 : vector<2x8x1xf32>
    %cst_394 = arith.constant 9.99999974E-6 : f32
    %552 = vector.broadcast %cst_394 : f32 to vector<2x8x1xf32>
    %553 = arith.addf %551, %552 : vector<2x8x1xf32>
    %554 = math.rsqrt %553 : vector<2x8x1xf32>
    %555 = vector.broadcast %554 : vector<2x8x1xf32> to vector<2x8x32xf32>
    %556 = arith.mulf %546, %555 : vector<2x8x32xf32>
    %557 = vector.shape_cast %308 : vector<32xf32> to vector<1x1x32xf32>
    %558 = vector.broadcast %557 : vector<1x1x32xf32> to vector<2x8x32xf32>
    %559 = arith.mulf %556, %558 : vector<2x8x32xf32>
    %560 = vector.shape_cast %309 : vector<32xf32> to vector<1x1x32xf32>
    %561 = vector.broadcast %560 : vector<1x1x32xf32> to vector<2x8x32xf32>
    %562 = arith.addf %559, %561 : vector<2x8x32xf32>
    %563 = vector.shape_cast %562 : vector<2x8x32xf32> to vector<16x32xf32>
    %c1_395 = arith.constant 1 : index
    %c0_396 = arith.constant 0 : index
    %c0_397 = arith.constant 0 : index
    %564 = vector.load %arg4[%c1_395, %c0_396, %c0_397] : memref<3x32x128xf32, #tpu.memory_space<vmem>>, vector<1x32x128xf32>
    %565 = vector.shape_cast %564 : vector<1x32x128xf32> to vector<32x128xf32>
    %cst_398 = arith.constant dense<0.000000e+00> : vector<16x128xf32>
    %566 = tpu.matmul %563, %565, %cst_398 {dimension_numbers = #tpu.dot_dimension_numbers<[1], [0], [0], [1], [0, 0, 1, 1], [], []>} : vector<16x32xf32>, vector<32x128xf32>, vector<16x128xf32> -> vector<16x128xf32>
    %567 = vector.shape_cast %305 : vector<128xf32> to vector<1x128xf32>
    %568 = vector.broadcast %567 : vector<1x128xf32> to vector<16x128xf32>
    %569 = arith.addf %566, %568 : vector<16x128xf32>
    %cst_399 = arith.constant 5.000000e-01 : f32
    %570 = vector.broadcast %cst_399 : f32 to vector<16x128xf32>
    %571 = arith.mulf %570, %569 : vector<16x128xf32>
    %cst_400 = arith.constant 4.471500e-02 : f32
    %572 = vector.broadcast %cst_400 : f32 to vector<16x128xf32>
    %573 = arith.mulf %572, %569 : vector<16x128xf32>
    %574 = arith.mulf %573, %569 : vector<16x128xf32>
    %575 = arith.mulf %574, %569 : vector<16x128xf32>
    %576 = arith.addf %569, %575 : vector<16x128xf32>
    %cst_401 = arith.constant 0.797884583 : f32
    %577 = vector.broadcast %cst_401 : f32 to vector<16x128xf32>
    %578 = arith.mulf %577, %576 : vector<16x128xf32>
    %579 = math.tanh %578 : vector<16x128xf32>
    %cst_402 = arith.constant 1.000000e+00 : f32
    %580 = vector.broadcast %cst_402 : f32 to vector<16x128xf32>
    %581 = arith.addf %580, %579 : vector<16x128xf32>
    %582 = arith.mulf %571, %581 : vector<16x128xf32>
    %c1_403 = arith.constant 1 : index
    %c0_404 = arith.constant 0 : index
    %c0_405 = arith.constant 0 : index
    %583 = vector.load %arg5[%c1_403, %c0_404, %c0_405] : memref<2x128x32xf32, #tpu.memory_space<vmem>>, vector<1x128x32xf32>
    %584 = vector.shape_cast %583 : vector<1x128x32xf32> to vector<128x32xf32>
    %cst_406 = arith.constant dense<0.000000e+00> : vector<16x32xf32>
    %585 = tpu.matmul %582, %584, %cst_406 {dimension_numbers = #tpu.dot_dimension_numbers<[1], [0], [0], [1], [0, 0, 1, 1], [], []>} : vector<16x128xf32>, vector<128x32xf32>, vector<16x32xf32> -> vector<16x32xf32>
    %586 = vector.shape_cast %311 : vector<32xf32> to vector<1x32xf32>
    %587 = vector.broadcast %586 : vector<1x32xf32> to vector<16x32xf32>
    %588 = arith.addf %585, %587 : vector<16x32xf32>
    %589 = vector.shape_cast %588 : vector<16x32xf32> to vector<2x8x32xf32>
    %590 = arith.addf %540, %589 : vector<2x8x32xf32>
    %c6 = arith.constant 6 : index
    %c0_407 = arith.constant 0 : index
    %591 = vector.load %arg6[%c6, %c0_407] : memref<7x128xf32, #tpu.memory_space<vmem>>, vector<1x128xf32>
    %592 = vector.shape_cast %591 : vector<1x128xf32> to vector<128xf32>
    %593 = vector.extract_strided_slice %592 {offsets = [0], sizes = [32], strides = [1]} : vector<128xf32> to vector<32xf32>
    %594 = vector.extract_strided_slice %592 {offsets = [32], sizes = [32], strides = [1]} : vector<128xf32> to vector<32xf32>
    %595 = vector.extract_strided_slice %592 {offsets = [64], sizes = [16], strides = [1]} : vector<128xf32> to vector<16xf32>
    %cst_408 = arith.constant dense<0.000000e+00> : vector<2x8xf32>
    %596 = vector.multi_reduction <add>, %590, %cst_408 [2] : vector<2x8x32xf32> to vector<2x8xf32>
    %597 = vector.shape_cast %596 : vector<2x8xf32> to vector<2x8x1xf32>
    %cst_409 = arith.constant 3.200000e+01 : f32
    %598 = vector.broadcast %cst_409 : f32 to vector<2x8x1xf32>
    %599 = arith.divf %597, %598 : vector<2x8x1xf32>
    %600 = vector.broadcast %599 : vector<2x8x1xf32> to vector<2x8x32xf32>
    %601 = arith.subf %590, %600 : vector<2x8x32xf32>
    %602 = arith.mulf %601, %601 : vector<2x8x32xf32>
    %cst_410 = arith.constant dense<0.000000e+00> : vector<2x8xf32>
    %603 = vector.multi_reduction <add>, %602, %cst_410 [2] : vector<2x8x32xf32> to vector<2x8xf32>
    %604 = vector.shape_cast %603 : vector<2x8xf32> to vector<2x8x1xf32>
    %cst_411 = arith.constant 3.200000e+01 : f32
    %605 = vector.broadcast %cst_411 : f32 to vector<2x8x1xf32>
    %606 = arith.divf %604, %605 : vector<2x8x1xf32>
    %cst_412 = arith.constant 9.99999974E-6 : f32
    %607 = vector.broadcast %cst_412 : f32 to vector<2x8x1xf32>
    %608 = arith.addf %606, %607 : vector<2x8x1xf32>
    %609 = math.rsqrt %608 : vector<2x8x1xf32>
    %610 = vector.broadcast %609 : vector<2x8x1xf32> to vector<2x8x32xf32>
    %611 = arith.mulf %601, %610 : vector<2x8x32xf32>
    %612 = vector.shape_cast %593 : vector<32xf32> to vector<1x1x32xf32>
    %613 = vector.broadcast %612 : vector<1x1x32xf32> to vector<2x8x32xf32>
    %614 = arith.mulf %611, %613 : vector<2x8x32xf32>
    %615 = vector.shape_cast %594 : vector<32xf32> to vector<1x1x32xf32>
    %616 = vector.broadcast %615 : vector<1x1x32xf32> to vector<2x8x32xf32>
    %617 = arith.addf %614, %616 : vector<2x8x32xf32>
    %618 = vector.shape_cast %590 : vector<2x8x32xf32> to vector<16x32xf32>
    %c2_413 = arith.constant 2 : index
    %c0_414 = arith.constant 0 : index
    %c0_415 = arith.constant 0 : index
    %619 = vector.load %arg4[%c2_413, %c0_414, %c0_415] : memref<3x32x128xf32, #tpu.memory_space<vmem>>, vector<1x32x16xf32>
    %620 = vector.shape_cast %619 : vector<1x32x16xf32> to vector<32x16xf32>
    %cst_416 = arith.constant dense<0.000000e+00> : vector<16x16xf32>
    %621 = tpu.matmul %618, %620, %cst_416 {dimension_numbers = #tpu.dot_dimension_numbers<[1], [0], [0], [1], [0, 0, 1, 1], [], []>} : vector<16x32xf32>, vector<32x16xf32>, vector<16x16xf32> -> vector<16x16xf32>
    %622 = vector.shape_cast %595 : vector<16xf32> to vector<1x16xf32>
    %623 = vector.broadcast %622 : vector<1x16xf32> to vector<16x16xf32>
    %624 = arith.addf %621, %623 : vector<16x16xf32>
    %625 = vector.shape_cast %624 : vector<16x16xf32> to vector<2x8x16xf32>
    %cst_417 = arith.constant 0.000000e+00 : f32
    %626 = vector.broadcast %cst_417 : f32 to vector<2x8x16xf32>
    %627 = tpu.concatenate %625, %617, %88, %138, %188, %238, %379, %429, %479, %529, %626 in 2 : vector<2x8x16xf32>, vector<2x8x32xf32>, vector<2x8x8xf32>, vector<2x8x8xf32>, vector<2x8x8xf32>, vector<2x8x8xf32>, vector<2x8x8xf32>, vector<2x8x8xf32>, vector<2x8x8xf32>, vector<2x8x8xf32>, vector<2x8x16xf32> -> vector<2x8x128xf32>
    %c0_418 = arith.constant 0 : index
    %c0_419 = arith.constant 0 : index
    %c0_420 = arith.constant 0 : index
    %628 = vector.load %arg7[%c0_418, %c0_419, %c0_420] : memref<2x8x128xf32, #tpu.memory_space<vmem>>, vector<2x8x128xf32>
    tpu.vector_store %arg7[%c0_418, %c0_419, %c0_420], %627 {strides = array<i32>} : memref<2x8x128xf32, #tpu.memory_space<vmem>>, vector<2x8x128xf32>,
    return
  }
}

</mosaic_0001>

<llo_original>
// kernel: trans_decoder_forward.1
$region0: #{trans_decoder_forward.1}
  #allocation0 [shape = 'u32[]', space=smem, size = 0x4, offset = 0x4, fixed_abs, tag = 'smem constant byte address 0x4 - core index']
  #allocation1 [shape = 'u32[144,128]{1,0:T(1,128)}', space=vmem, size = 0x12000, scoped, tag = 'internal scratch']
  %s0 = inlined_call_operand.vmem [shape: f32[2,8,32], index: 0, kind: input, shape index: {}]
  %s1 = inlined_call_operand.vmem [shape: f32[8,32], index: 1, kind: input, shape index: {}]
  %s2 = inlined_call_operand.vmem [shape: f32[2,3,4,33,8], index: 2, kind: input, shape index: {}]
  %s3 = inlined_call_operand.vmem [shape: f32[2,4,8,32], index: 3, kind: input, shape index: {}]
  %s4 = inlined_call_operand.vmem [shape: f32[3,32,128], index: 4, kind: input, shape index: {}]
  %s5 = inlined_call_operand.vmem [shape: f32[2,128,32], index: 5, kind: input, shape index: {}]
  %s6 = inlined_call_operand.vmem [shape: f32[7,128], index: 6, kind: input, shape index: {}]
  %s7 = inlined_call_operand.vmem [shape: f32[2,8,128], index: 7, kind: output, shape index: {}]
  %s8 = sld [smem:[#allocation0]]
  $region38: #{trans_decoder_forward.1} parent=0
    _
  %s10 = ssub.s32 1, %s8
  %s11 = scalar_select 0, %s10, %s8
  // Predicated region
  $region2: #{trans_decoder_forward.1} parent=0 // pred_check
    _
  $region3: #{trans_decoder_forward.1} parent=0 // pred_check_branch
    %13 = sbr.rel (0) target = $region5
  $region4: #{trans_decoder_forward.1} parent=0 // pred_region
    _
  $region5: #{trans_decoder_forward.1} parent=0 // pred_fallthru
    _
  // Predicated region
  $region6: #{trans_decoder_forward.1} parent=0 // pred_check
    _
  $region7: #{trans_decoder_forward.1} parent=0 // pred_check_branch
    %15 = sbr.rel (0) target = $region9
  $region8: #{trans_decoder_forward.1} parent=0 // pred_region
    _
  $region9: #{trans_decoder_forward.1} parent=0 // pred_fallthru
    _
  // Predicated region
  $region10: #{trans_decoder_forward.1} parent=0 // pred_check
    _
  $region11: #{trans_decoder_forward.1} parent=0 // pred_check_branch
    %17 = sbr.rel (0) target = $region13
  $region12: #{trans_decoder_forward.1} parent=0 // pred_region
    _
  $region13: #{trans_decoder_forward.1} parent=0 // pred_fallthru
    _
  // Predicated region
  $region14: #{trans_decoder_forward.1} parent=0 // pred_check
    _
  $region15: #{trans_decoder_forward.1} parent=0 // pred_check_branch
    %19 = sbr.rel (0) target = $region17
  $region16: #{trans_decoder_forward.1} parent=0 // pred_region
    _
  $region17: #{trans_decoder_forward.1} parent=0 // pred_fallthru
    _
  // Predicated region
  $region18: #{trans_decoder_forward.1} parent=0 // pred_check
    _
  $region19: #{trans_decoder_forward.1} parent=0 // pred_check_branch
    %21 = sbr.rel (0) target = $region21
  $region20: #{trans_decoder_forward.1} parent=0 // pred_region
    _
  $region21: #{trans_decoder_forward.1} parent=0 // pred_fallthru
    _
  // Predicated region
  $region22: #{trans_decoder_forward.1} parent=0 // pred_check
    _
  $region23: #{trans_decoder_forward.1} parent=0 // pred_check_branch
    %23 = sbr.rel (0) target = $region25
  $region24: #{trans_decoder_forward.1} parent=0 // pred_region
    _
  $region25: #{trans_decoder_forward.1} parent=0 // pred_fallthru
    _
  // Predicated region
  $region26: #{trans_decoder_forward.1} parent=0 // pred_check
    _
  $region27: #{trans_decoder_forward.1} parent=0 // pred_check_branch
    %25 = sbr.rel (0) target = $region29
  $region28: #{trans_decoder_forward.1} parent=0 // pred_region
    _
  $region29: #{trans_decoder_forward.1} parent=0 // pred_fallthru
    _
  %v26 = vld [vmem:[%s0] sm:$0xff]
  %v27 = vld [vmem:[%s0 + $0x8] sm:$0xff]
  %v28 = vld [vmem:[%s1] sm:$0xff]
  %v29 = vadd.f32 %v26, %v28
  %v30 = vadd.f32 %v27, %v28
  %v31 = vlaneseq
  %v32 = vshrl.u32 %v31, 7
  %v33 = vlaneseq
  %v34 = vand.u32 %v33, 127
  %vm35 = vcmp.le.s32.totalorder %v34, %v32
  %v36 = vld [vmem:[%s6] sm:$0x1]
  %v37 = vld [vmem:[%s6 + $0x1] sm:$0x1]
  %v38 = vld [vmem:[%s6 + $0x2] sm:$0x1]
  %vm39 = vcmask 261120
  %v40 = vsel %vm39, %v29, 0.0
  %41 = vadd.xlane.f32.xlu0 %v40
  %v42 = vpop.xlane.xlu0 %41
  %v43 = vsel %vm39, %v30, 0.0
  %44 = vadd.xlane.f32.xlu0 %v43
  %v45 = vpop.xlane.xlu0 %44
  %v46 = vrcp.pop 32.0
  %v47 = vmul.f32 %v42, %v46
  %v48 = vmul.f32 %v45, %v46
  %v49 = vsub.f32 %v29, %v47
  %v50 = vsub.f32 %v30, %v48
  %v51 = vmul.f32 %v49, %v49
  %v52 = vmul.f32 %v50, %v50
  %v53 = vsel %vm39, %v51, 0.0
  %54 = vadd.xlane.f32.xlu0 %v53
  %v55 = vpop.xlane.xlu0 %54
  %v56 = vsel %vm39, %v52, 0.0
  %57 = vadd.xlane.f32.xlu0 %v56
  %v58 = vpop.xlane.xlu0 %57
  %v59 = vmul.f32 %v55, %v46
  %v60 = vmul.f32 %v58, %v46
  %v61 = vadd.f32 %v59, 1e-05
  %v62 = vadd.f32 %v60, 1e-05
  %v63 = vrsqrt.pop %v61
  %v64 = vrsqrt.pop %v62
  %v65 = vmul.f32 %v49, %v63
  %v66 = vmul.f32 %v50, %v64
  %v67 = vlaneseq
  %v68 = vshrl.u32 %v67, 7
  %v69 = vsub.s32 0, %v68
  %v70 = vrot.slane %v36, %v69
  %v71 = vmul.f32 %v65, %v70
  %v72 = vmul.f32 %v66, %v70
  %74 = vrot.lane.b32.xlu0 %v70, 96
  %v75 = vpop.permute.xlu0 %74
  %v77 = vadd.f32 %v71, %v75
  %v78 = vadd.f32 %v72, %v75
  %v79 = vld [vmem:[%s2] sm:$0xff]
  %v80 = vld [vmem:[%s2 + $0x8] sm:$0xff]
  %v81 = vld [vmem:[%s2 + $0x10] sm:$0xff]
  %v82 = vld [vmem:[%s2 + $0x18] sm:$0xff]
  %v83 = vld [vmem:[%s2 + $0x20] sm:$0x1]
  %v84 = vlaneseq
  %v85 = vshrl.u32 %v84, 7
  %v86 = vsub.s32 0, %v85
  %v87 = vrot.slane %v83, %v86
  %v89 = vsel %vm39, %v77, 0
  %v92 = vsel %vm39, %v78, 0
  %94 = vmatprep.subr.mxu0 0.0
  %95 = vmatpush1.msra.mxu0 %v79
  %96 = vmatprep.subr.mxu0 0.0
  %97 = vmatpush1.msra.mxu0 %v80
  %98 = vmatprep.subr.mxu0 0.0
  %99 = vmatpush1.msra.mxu0 %v81
  %100 = vmatprep.subr.mxu0 0.0
  %101 = vmatpush1.msra.mxu0 %v82
  %102 = vmatprep.subr.mxu0 0.0
  %103 = vmatpush1.msra.mxu0 0.0
  %104 = vmatprep.subr.mxu0 0.0
  %105 = vmatpush1.msra.mxu0 0.0
  %106 = vmatprep.subr.mxu0 0.0
  %107 = vmatpush1.msra.mxu0 0.0
  %108 = vmatprep.subr.mxu0 0.0
  %109 = vmatpush1.msra.mxu0 0.0
  %110 = vmatprep.subr.mxu0 0.0
  %111 = vmatpush1.msra.mxu0 0.0
  %112 = vmatprep.subr.mxu0 0.0
  %113 = vmatpush1.msra.mxu0 0.0
  %114 = vmatprep.subr.mxu0 0.0
  %115 = vmatpush1.msra.mxu0 0.0
  %116 = vmatprep.subr.mxu0 0.0
  %117 = vmatpush1.msra.mxu0 0.0
  %118 = vmatprep.subr.mxu0 0.0
  %119 = vmatpush1.msra.mxu0 0.0
  %120 = vmatprep.subr.mxu0 0.0
  %121 = vmatpush1.msra.mxu0 0.0
  %122 = vmatprep.subr.mxu0 0.0
  %123 = vmatpush1.msra.mxu0 0.0
  %124 = vmatprep.subr.mxu0 0.0
  %125 = vmatpush1.msra.mxu0 0.0
  %126 = vmatprep.subr.mxu0 0.0
  %127 = vmatpush1.msra.mxu0 0.0
  %128 = vmatprep.subr.mxu0 0.0
  %129 = vmatpush1.msra.mxu0 0.0
  %130 = vmatprep.subr.mxu0 0.0
  %131 = vmatpush1.msra.mxu0 0.0
  %132 = vmatprep.subr.mxu0 0.0
  %133 = vmatpush1.msra.mxu0 0.0
  %134 = vmatprep.subr.mxu0 0.0
  %135 = vmatpush1.msra.mxu0 0.0
  %136 = vmatprep.subr.mxu0 0.0
  %137 = vmatpush1.msra.mxu0 0.0
  %138 = vmatprep.subr.mxu0 0.0
  %139 = vmatpush1.msra.mxu0 0.0
  %140 = vmatprep.subr.mxu0 0.0
  %141 = vmatpush1.msra.mxu0 0.0
  %142 = vmatprep.subr.mxu0 0.0
  %143 = vmatpush1.msra.mxu0 0.0
  %144 = vmatprep.subr.mxu0 0.0
  %145 = vmatpush1.msra.mxu0 0.0
  %146 = vmatprep.subr.mxu0 0.0
  %147 = vmatpush1.msra.mxu0 0.0
  %148 = vmatprep.subr.mxu0 0.0
  %149 = vmatpush1.msra.mxu0 0.0
  %150 = vmatprep.subr.mxu0 0.0
  %151 = vmatpush1.msra.mxu0 0.0
  %152 = vmatprep.subr.mxu0 0.0
  %153 = vmatpush1.msra.mxu0 0.0
  %154 = vmatprep.subr.mxu0 0.0
  %155 = vmatpush1.msra.mxu0 0.0
  %156 = vmatprep.subr.mxu0 0.0
  %157 = vmatpush1.msra.mxu0 0.0
  %158 = vmatprep.mubr.f32.mxu0 0.0
  %159 = vmatmul.mubr.f32.gmra.mrb[0].mxu0 %v89
  %v160 = vpop.f32.mrb[0].mxu0
  %v161 = vadd.f32 %v87, %v160
  %v162 = vpop.f32.mrb[0].mxu0
  %163 = vmatprep.mubr.f32.mxu0 0.0
  %164 = vmatmul.mubr.f32.gmra.mrb[0].mxu0 %v92
  %v165 = vpop.f32.mrb[0].mxu0
  %v166 = vadd.f32 %v87, %v165
  %v167 = vpop.f32.mrb[0].mxu0
  %168 = vdwg.mxu0
  %s169 = scalar_lea.vmem %s2, 160
  %v170 = vld [vmem:[%s169] sm:$0xff]
  %v171 = vld [vmem:[%s169 + $0x8] sm:$0xff]
  %v172 = vld [vmem:[%s169 + $0x10] sm:$0xff]
  %v173 = vld [vmem:[%s169 + $0x18] sm:$0xff]
  %v174 = vld [vmem:[%s169 + $0x20] sm:$0x1]
  %v175 = vlaneseq
  %v176 = vshrl.u32 %v175, 7
  %v177 = vsub.s32 0, %v176
  %v178 = vrot.slane %v174, %v177
  %179 = vmatprep.subr.mxu0 0.0
  %180 = vmatpush1.msra.mxu0 %v170
  %181 = vmatprep.subr.mxu0 0.0
  %182 = vmatpush1.msra.mxu0 %v171
  %183 = vmatprep.subr.mxu0 0.0
  %184 = vmatpush1.msra.mxu0 %v172
  %185 = vmatprep.subr.mxu0 0.0
  %186 = vmatpush1.msra.mxu0 %v173
  %187 = vmatprep.subr.mxu0 0.0
  %188 = vmatpush1.msra.mxu0 0.0
  %189 = vmatprep.subr.mxu0 0.0
  %190 = vmatpush1.msra.mxu0 0.0
  %191 = vmatprep.subr.mxu0 0.0
  %192 = vmatpush1.msra.mxu0 0.0
  %193 = vmatprep.subr.mxu0 0.0
  %194 = vmatpush1.msra.mxu0 0.0
  %195 = vmatprep.subr.mxu0 0.0
  %196 = vmatpush1.msra.mxu0 0.0
  %197 = vmatprep.subr.mxu0 0.0
  %198 = vmatpush1.msra.mxu0 0.0
  %199 = vmatprep.subr.mxu0 0.0
  %200 = vmatpush1.msra.mxu0 0.0
  %201 = vmatprep.subr.mxu0 0.0
  %202 = vmatpush1.msra.mxu0 0.0
  %203 = vmatprep.subr.mxu0 0.0
  %204 = vmatpush1.msra.mxu0 0.0
  %205 = vmatprep.subr.mxu0 0.0
  %206 = vmatpush1.msra.mxu0 0.0
  %207 = vmatprep.subr.mxu0 0.0
  %208 = vmatpush1.msra.mxu0 0.0
  %209 = vmatprep.subr.mxu0 0.0
  %210 = vmatpush1.msra.mxu0 0.0
  %211 = vmatprep.subr.mxu0 0.0
  %212 = vmatpush1.msra.mxu0 0.0
  %213 = vmatprep.subr.mxu0 0.0
  %214 = vmatpush1.msra.mxu0 0.0
  %215 = vmatprep.subr.mxu0 0.0
  %216 = vmatpush1.msra.mxu0 0.0
  %217 = vmatprep.subr.mxu0 0.0
  %218 = vmatpush1.msra.mxu0 0.0
  %219 = vmatprep.subr.mxu0 0.0
  %220 = vmatpush1.msra.mxu0 0.0
  %221 = vmatprep.subr.mxu0 0.0
  %222 = vmatpush1.msra.mxu0 0.0
  %223 = vmatprep.subr.mxu0 0.0
  %224 = vmatpush1.msra.mxu0 0.0
  %225 = vmatprep.subr.mxu0 0.0
  %226 = vmatpush1.msra.mxu0 0.0
  %227 = vmatprep.subr.mxu0 0.0
  %228 = vmatpush1.msra.mxu0 0.0
  %229 = vmatprep.subr.mxu0 0.0
  %230 = vmatpush1.msra.mxu0 0.0
  %231 = vmatprep.subr.mxu0 0.0
  %232 = vmatpush1.msra.mxu0 0.0
  %233 = vmatprep.subr.mxu0 0.0
  %234 = vmatpush1.msra.mxu0 0.0
  %235 = vmatprep.subr.mxu0 0.0
  %236 = vmatpush1.msra.mxu0 0.0
  %237 = vmatprep.subr.mxu0 0.0
  %238 = vmatpush1.msra.mxu0 0.0
  %239 = vmatprep.subr.mxu0 0.0
  %240 = vmatpush1.msra.mxu0 0.0
  %241 = vmatprep.subr.mxu0 0.0
  %242 = vmatpush1.msra.mxu0 0.0
  %243 = vmatprep.mubr.f32.mxu0 0.0
  %244 = vmatmul.mubr.f32.gmra.mrb[0].mxu0 %v89
  %v245 = vpop.f32.mrb[0].mxu0
  %v246 = vadd.f32 %v178, %v245
  %v247 = vpop.f32.mrb[0].mxu0
  %248 = vmatprep.mubr.f32.mxu0 0.0
  %249 = vmatmul.mubr.f32.gmra.mrb[0].mxu0 %v92
  %v250 = vpop.f32.mrb[0].mxu0
  %v251 = vadd.f32 %v178, %v250
  %v252 = vpop.f32.mrb[0].mxu0
  %253 = vdwg.mxu0
  %s254 = scalar_lea.vmem %s2, 320
  %v255 = vld [vmem:[%s254] sm:$0xff]
  %v256 = vld [vmem:[%s254 + $0x8] sm:$0xff]
  %v257 = vld [vmem:[%s254 + $0x10] sm:$0xff]
  %v258 = vld [vmem:[%s254 + $0x18] sm:$0xff]
  %v259 = vld [vmem:[%s254 + $0x20] sm:$0x1]
  %v260 = vlaneseq
  %v261 = vshrl.u32 %v260, 7
  %v262 = vsub.s32 0, %v261
  %v263 = vrot.slane %v259, %v262
  %264 = vmatprep.subr.mxu0 0.0
  %265 = vmatpush1.msra.mxu0 %v255
  %266 = vmatprep.subr.mxu0 0.0
  %267 = vmatpush1.msra.mxu0 %v256
  %268 = vmatprep.subr.mxu0 0.0
  %269 = vmatpush1.msra.mxu0 %v257
  %270 = vmatprep.subr.mxu0 0.0
  %271 = vmatpush1.msra.mxu0 %v258
  %272 = vmatprep.subr.mxu0 0.0
  %273 = vmatpush1.msra.mxu0 0.0
  %274 = vmatprep.subr.mxu0 0.0
  %275 = vmatpush1.msra.mxu0 0.0
  %276 = vmatprep.subr.mxu0 0.0
  %277 = vmatpush1.msra.mxu0 0.0
  %278 = vmatprep.subr.mxu0 0.0
  %279 = vmatpush1.msra.mxu0 0.0
  %280 = vmatprep.subr.mxu0 0.0
  %281 = vmatpush1.msra.mxu0 0.0
  %282 = vmatprep.subr.mxu0 0.0
  %283 = vmatpush1.msra.mxu0 0.0
  %284 = vmatprep.subr.mxu0 0.0
  %285 = vmatpush1.msra.mxu0 0.0
  %286 = vmatprep.subr.mxu0 0.0
  %287 = vmatpush1.msra.mxu0 0.0
  %288 = vmatprep.subr.mxu0 0.0
  %289 = vmatpush1.msra.mxu0 0.0
  %290 = vmatprep.subr.mxu0 0.0
  %291 = vmatpush1.msra.mxu0 0.0
  %292 = vmatprep.subr.mxu0 0.0
  %293 = vmatpush1.msra.mxu0 0.0
  %294 = vmatprep.subr.mxu0 0.0
  %295 = vmatpush1.msra.mxu0 0.0
  %296 = vmatprep.subr.mxu0 0.0
  %297 = vmatpush1.msra.mxu0 0.0
  %298 = vmatprep.subr.mxu0 0.0
  %299 = vmatpush1.msra.mxu0 0.0
  %300 = vmatprep.subr.mxu0 0.0
  %301 = vmatpush1.msra.mxu0 0.0
  %302 = vmatprep.subr.mxu0 0.0
  %303 = vmatpush1.msra.mxu0 0.0
  %304 = vmatprep.subr.mxu0 0.0
  %305 = vmatpush1.msra.mxu0 0.0
  %306 = vmatprep.subr.mxu0 0.0
  %307 = vmatpush1.msra.mxu0 0.0
  %308 = vmatprep.subr.mxu0 0.0
  %309 = vmatpush1.msra.mxu0 0.0
  %310 = vmatprep.subr.mxu0 0.0
  %311 = vmatpush1.msra.mxu0 0.0
  %312 = vmatprep.subr.mxu0 0.0
  %313 = vmatpush1.msra.mxu0 0.0
  %314 = vmatprep.subr.mxu0 0.0
  %315 = vmatpush1.msra.mxu0 0.0
  %316 = vmatprep.subr.mxu0 0.0
  %317 = vmatpush1.msra.mxu0 0.0
  %318 = vmatprep.subr.mxu0 0.0
  %319 = vmatpush1.msra.mxu0 0.0
  %320 = vmatprep.subr.mxu0 0.0
  %321 = vmatpush1.msra.mxu0 0.0
  %322 = vmatprep.subr.mxu0 0.0
  %323 = vmatpush1.msra.mxu0 0.0
  %324 = vmatprep.subr.mxu0 0.0
  %325 = vmatpush1.msra.mxu0 0.0
  %326 = vmatprep.subr.mxu0 0.0
  %327 = vmatpush1.msra.mxu0 0.0
  %328 = vmatprep.mubr.f32.mxu0 0.0
  %329 = vmatmul.mubr.f32.gmra.mrb[0].mxu0 %v89
  %v330 = vpop.f32.mrb[0].mxu0
  %v331 = vadd.f32 %v263, %v330
  %v332 = vpop.f32.mrb[0].mxu0
  %333 = vmatprep.mubr.f32.mxu0 0.0
  %334 = vmatmul.mubr.f32.gmra.mrb[0].mxu0 %v92
  %v335 = vpop.f32.mrb[0].mxu0
  %v336 = vadd.f32 %v263, %v335
  %v337 = vpop.f32.mrb[0].mxu0
  %338 = vdwg.mxu0
  %vm339 = vcmask 64512
  %v341 = vsel %vm339, %v161, 0
  %v344 = vsel %vm339, %v246, 0
  %346 = vmatprep.subr.mxu0 0.0
  %347 = vmatpush1.xpose.msra.mxu0 %v344
  %348 = vmatprep.subr.mxu0 0.0
  %349 = vmatpush1.xpose.msra.mxu0 0.0
  %350 = vmatprep.subr.mxu0 0.0
  %351 = vmatpush1.xpose.msra.mxu0 0.0
  %352 = vmatprep.subr.mxu0 0.0
  %353 = vmatpush1.xpose.msra.mxu0 0.0
  %354 = vmatprep.subr.mxu0 0.0
  %355 = vmatpush1.xpose.msra.mxu0 0.0
  %356 = vmatprep.subr.mxu0 0.0
  %357 = vmatpush1.xpose.msra.mxu0 0.0
  %358 = vmatprep.subr.mxu0 0.0
  %359 = vmatpush1.xpose.msra.mxu0 0.0
  %360 = vmatprep.subr.mxu0 0.0
  %361 = vmatpush1.xpose.msra.mxu0 0.0
  %362 = vmatprep.subr.mxu0 0.0
  %363 = vmatpush1.xpose.msra.mxu0 0.0
  %364 = vmatprep.subr.mxu0 0.0
  %365 = vmatpush1.xpose.msra.mxu0 0.0
  %366 = vmatprep.subr.mxu0 0.0
  %367 = vmatpush1.xpose.msra.mxu0 0.0
  %368 = vmatprep.subr.mxu0 0.0
  %369 = vmatpush1.xpose.msra.mxu0 0.0
  %370 = vmatprep.subr.mxu0 0.0
  %371 = vmatpush1.xpose.msra.mxu0 0.0
  %372 = vmatprep.subr.mxu0 0.0
  %373 = vmatpush1.xpose.msra.mxu0 0.0
  %374 = vmatprep.subr.mxu0 0.0
  %375 = vmatpush1.xpose.msra.mxu0 0.0
  %376 = vmatprep.subr.mxu0 0.0
  %377 = vmatpush1.xpose.msra.mxu0 0.0
  %378 = vmatprep.subr.mxu0 0.0
  %379 = vmatpush1.xpose.msra.mxu0 0.0
  %380 = vmatprep.subr.mxu0 0.0
  %381 = vmatpush1.xpose.msra.mxu0 0.0
  %382 = vmatprep.subr.mxu0 0.0
  %383 = vmatpush1.xpose.msra.mxu0 0.0
  %384 = vmatprep.subr.mxu0 0.0
  %385 = vmatpush1.xpose.msra.mxu0 0.0
  %386 = vmatprep.subr.mxu0 0.0
  %387 = vmatpush1.xpose.msra.mxu0 0.0
  %388 = vmatprep.subr.mxu0 0.0
  %389 = vmatpush1.xpose.msra.mxu0 0.0
  %390 = vmatprep.subr.mxu0 0.0
  %391 = vmatpush1.xpose.msra.mxu0 0.0
  %392 = vmatprep.subr.mxu0 0.0
  %393 = vmatpush1.xpose.msra.mxu0 0.0
  %394 = vmatprep.subr.mxu0 0.0
  %395 = vmatpush1.xpose.msra.mxu0 0.0
  %396 = vmatprep.subr.mxu0 0.0
  %397 = vmatpush1.xpose.msra.mxu0 0.0
  %398 = vmatprep.subr.mxu0 0.0
  %399 = vmatpush1.xpose.msra.mxu0 0.0
  %400 = vmatprep.subr.mxu0 0.0
  %401 = vmatpush1.xpose.msra.mxu0 0.0
  %402 = vmatprep.subr.mxu0 0.0
  %403 = vmatpush1.xpose.msra.mxu0 0.0
  %404 = vmatprep.subr.mxu0 0.0
  %405 = vmatpush1.xpose.msra.mxu0 0.0
  %406 = vmatprep.subr.mxu0 0.0
  %407 = vmatpush1.xpose.msra.mxu0 0.0
  %408 = vmatprep.subr.mxu0 0.0
  %409 = vmatpush1.xpose.msra.mxu0 0.0
  %410 = vmatprep.mubr.f32.mxu0 0.0
  %411 = vmatmul.mubr.f32.gmra.mrb[0].mxu0 %v341
  %v412 = vpop.f32.mrb[0].mxu0
  %v413 = vadd.f32 0.0, %v412
  %v414 = vpop.f32.mrb[0].mxu0
  %415 = vdwg.mxu0
  %v417 = vsel %vm339, %v166, 0
  %v420 = vsel %vm339, %v251, 0
  %422 = vmatprep.subr.mxu0 0.0
  %423 = vmatpush1.xpose.msra.mxu0 %v420
  %424 = vmatprep.subr.mxu0 0.0
  %425 = vmatpush1.xpose.msra.mxu0 0.0
  %426 = vmatprep.subr.mxu0 0.0
  %427 = vmatpush1.xpose.msra.mxu0 0.0
  %428 = vmatprep.subr.mxu0 0.0
  %429 = vmatpush1.xpose.msra.mxu0 0.0
  %430 = vmatprep.subr.mxu0 0.0
  %431 = vmatpush1.xpose.msra.mxu0 0.0
  %432 = vmatprep.subr.mxu0 0.0
  %433 = vmatpush1.xpose.msra.mxu0 0.0
  %434 = vmatprep.subr.mxu0 0.0
  %435 = vmatpush1.xpose.msra.mxu0 0.0
  %436 = vmatprep.subr.mxu0 0.0
  %437 = vmatpush1.xpose.msra.mxu0 0.0
  %438 = vmatprep.subr.mxu0 0.0
  %439 = vmatpush1.xpose.msra.mxu0 0.0
  %440 = vmatprep.subr.mxu0 0.0
  %441 = vmatpush1.xpose.msra.mxu0 0.0
  %442 = vmatprep.subr.mxu0 0.0
  %443 = vmatpush1.xpose.msra.mxu0 0.0
  %444 = vmatprep.subr.mxu0 0.0
  %445 = vmatpush1.xpose.msra.mxu0 0.0
  %446 = vmatprep.subr.mxu0 0.0
  %447 = vmatpush1.xpose.msra.mxu0 0.0
  %448 = vmatprep.subr.mxu0 0.0
  %449 = vmatpush1.xpose.msra.mxu0 0.0
  %450 = vmatprep.subr.mxu0 0.0
  %451 = vmatpush1.xpose.msra.mxu0 0.0
  %452 = vmatprep.subr.mxu0 0.0
  %453 = vmatpush1.xpose.msra.mxu0 0.0
  %454 = vmatprep.subr.mxu0 0.0
  %455 = vmatpush1.xpose.msra.mxu0 0.0
  %456 = vmatprep.subr.mxu0 0.0
  %457 = vmatpush1.xpose.msra.mxu0 0.0
  %458 = vmatprep.subr.mxu0 0.0
  %459 = vmatpush1.xpose.msra.mxu0 0.0
  %460 = vmatprep.subr.mxu0 0.0
  %461 = vmatpush1.xpose.msra.mxu0 0.0
  %462 = vmatprep.subr.mxu0 0.0
  %463 = vmatpush1.xpose.msra.mxu0 0.0
  %464 = vmatprep.subr.mxu0 0.0
  %465 = vmatpush1.xpose.msra.mxu0 0.0
  %466 = vmatprep.subr.mxu0 0.0
  %467 = vmatpush1.xpose.msra.mxu0 0.0
  %468 = vmatprep.subr.mxu0 0.0
  %469 = vmatpush1.xpose.msra.mxu0 0.0
  %470 = vmatprep.subr.mxu0 0.0
  %471 = vmatpush1.xpose.msra.mxu0 0.0
  %472 = vmatprep.subr.mxu0 0.0
  %473 = vmatpush1.xpose.msra.mxu0 0.0
  %474 = vmatprep.subr.mxu0 0.0
  %475 = vmatpush1.xpose.msra.mxu0 0.0
  %476 = vmatprep.subr.mxu0 0.0
  %477 = vmatpush1.xpose.msra.mxu0 0.0
  %478 = vmatprep.subr.mxu0 0.0
  %479 = vmatpush1.xpose.msra.mxu0 0.0
  %480 = vmatprep.subr.mxu0 0.0
  %481 = vmatpush1.xpose.msra.mxu0 0.0
  %482 = vmatprep.subr.mxu0 0.0
  %483 = vmatpush1.xpose.msra.mxu0 0.0
  %484 = vmatprep.subr.mxu0 0.0
  %485 = vmatpush1.xpose.msra.mxu0 0.0
  %486 = vmatprep.mubr.f32.mxu0 0.0
  %487 = vmatmul.mubr.f32.gmra.mrb[0].mxu0 %v417
  %v488 = vpop.f32.mrb[0].mxu0
  %v489 = vadd.f32 0.0, %v488
  %v490 = vpop.f32.mrb[0].mxu0
  %491 = vdwg.mxu0
  %v492 = vmul.f32 %v413, 0.35355338
  %v493 = vmul.f32 %v489, 0.35355338
  %v494 = vsel %vm35, 1, 0
  %vm495 = vcmp.eq.s32.totalorder %v494, 1
  %v496 = vsel %vm495, %v492, -1e+30
  %v497 = vsel %vm495, %v493, -1e+30
  %v498 = vsel %vm339, %v496, -inf
  %499 = vmax.xlane.f32.xlu0 %v498
  %v500 = vpop.xlane.xlu0 %499
  %v501 = vsel %vm339, %v497, -inf
  %502 = vmax.xlane.f32.xlu0 %v501
  %v503 = vpop.xlane.xlu0 %502
  %v504 = vsub.f32 %v496, %v500
  %v505 = vsub.f32 %v497, %v503
  %v506 = vmul.f32 %v504, 1.442695
  %v507 = vpow.pop %v506
  %v508 = vmul.f32 %v505, 1.442695
  %v509 = vpow.pop %v508
  %v510 = vsel %vm339, %v507, 0.0
  %511 = vadd.xlane.f32.xlu0 %v510
  %v512 = vpop.xlane.xlu0 %511
  %v513 = vsel %vm339, %v509, 0.0
  %514 = vadd.xlane.f32.xlu0 %v513
  %v515 = vpop.xlane.xlu0 %514
  %v516 = vrcp.pop %v512
  %v517 = vrcp.pop %v515
  %v518 = vmul.f32 %v507, %v516
  %v519 = vmul.f32 %v509, %v517
  %v521 = vsel %vm339, %v518, 0
  %523 = vmatprep.subr.mxu0 0.0
  %524 = vmatpush1.msra.mxu0 %v331
  %525 = vmatprep.subr.mxu0 0.0
  %526 = vmatpush1.msra.mxu0 0.0
  %527 = vmatprep.subr.mxu0 0.0
  %528 = vmatpush1.msra.mxu0 0.0
  %529 = vmatprep.subr.mxu0 0.0
  %530 = vmatpush1.msra.mxu0 0.0
  %531 = vmatprep.subr.mxu0 0.0
  %532 = vmatpush1.msra.mxu0 0.0
  %533 = vmatprep.subr.mxu0 0.0
  %534 = vmatpush1.msra.mxu0 0.0
  %535 = vmatprep.subr.mxu0 0.0
  %536 = vmatpush1.msra.mxu0 0.0
  %537 = vmatprep.subr.mxu0 0.0
  %538 = vmatpush1.msra.mxu0 0.0
  %539 = vmatprep.subr.mxu0 0.0
  %540 = vmatpush1.msra.mxu0 0.0
  %541 = vmatprep.subr.mxu0 0.0
  %542 = vmatpush1.msra.mxu0 0.0
  %543 = vmatprep.subr.mxu0 0.0
  %544 = vmatpush1.msra.mxu0 0.0
  %545 = vmatprep.subr.mxu0 0.0
  %546 = vmatpush1.msra.mxu0 0.0
  %547 = vmatprep.subr.mxu0 0.0
  %548 = vmatpush1.msra.mxu0 0.0
  %549 = vmatprep.subr.mxu0 0.0
  %550 = vmatpush1.msra.mxu0 0.0
  %551 = vmatprep.subr.mxu0 0.0
  %552 = vmatpush1.msra.mxu0 0.0
  %553 = vmatprep.subr.mxu0 0.0
  %554 = vmatpush1.msra.mxu0 0.0
  %555 = vmatprep.subr.mxu0 0.0
  %556 = vmatpush1.msra.mxu0 0.0
  %557 = vmatprep.subr.mxu0 0.0
  %558 = vmatpush1.msra.mxu0 0.0
  %559 = vmatprep.subr.mxu0 0.0
  %560 = vmatpush1.msra.mxu0 0.0
  %561 = vmatprep.subr.mxu0 0.0
  %562 = vmatpush1.msra.mxu0 0.0
  %563 = vmatprep.subr.mxu0 0.0
  %564 = vmatpush1.msra.mxu0 0.0
  %565 = vmatprep.subr.mxu0 0.0
  %566 = vmatpush1.msra.mxu0 0.0
  %567 = vmatprep.subr.mxu0 0.0
  %568 = vmatpush1.msra.mxu0 0.0
  %569 = vmatprep.subr.mxu0 0.0
  %570 = vmatpush1.msra.mxu0 0.0
  %571 = vmatprep.subr.mxu0 0.0
  %572 = vmatpush1.msra.mxu0 0.0
  %573 = vmatprep.subr.mxu0 0.0
  %574 = vmatpush1.msra.mxu0 0.0
  %575 = vmatprep.subr.mxu0 0.0
  %576 = vmatpush1.msra.mxu0 0.0
  %577 = vmatprep.subr.mxu0 0.0
  %578 = vmatpush1.msra.mxu0 0.0
  %579 = vmatprep.subr.mxu0 0.0
  %580 = vmatpush1.msra.mxu0 0.0
  %581 = vmatprep.subr.mxu0 0.0
  %582 = vmatpush1.msra.mxu0 0.0
  %583 = vmatprep.subr.mxu0 0.0
  %584 = vmatpush1.msra.mxu0 0.0
  %585 = vmatprep.subr.mxu0 0.0
  %586 = vmatpush1.msra.mxu0 0.0
  %587 = vmatprep.mubr.f32.mxu0 0.0
  %588 = vmatmul.mubr.f32.gmra.mrb[0].mxu0 %v521
  %v589 = vpop.f32.mrb[0].mxu0
  %v590 = vadd.f32 0.0, %v589
  %v591 = vpop.f32.mrb[0].mxu0
  %592 = vdwg.mxu0
  %v594 = vsel %vm339, %v519, 0
  %596 = vmatprep.subr.mxu0 0.0
  %597 = vmatpush1.msra.mxu0 %v336
  %598 = vmatprep.subr.mxu0 0.0
  %599 = vmatpush1.msra.mxu0 0.0
  %600 = vmatprep.subr.mxu0 0.0
  %601 = vmatpush1.msra.mxu0 0.0
  %602 = vmatprep.subr.mxu0 0.0
  %603 = vmatpush1.msra.mxu0 0.0
  %604 = vmatprep.subr.mxu0 0.0
  %605 = vmatpush1.msra.mxu0 0.0
  %606 = vmatprep.subr.mxu0 0.0
  %607 = vmatpush1.msra.mxu0 0.0
  %608 = vmatprep.subr.mxu0 0.0
  %609 = vmatpush1.msra.mxu0 0.0
  %610 = vmatprep.subr.mxu0 0.0
  %611 = vmatpush1.msra.mxu0 0.0
  %612 = vmatprep.subr.mxu0 0.0
  %613 = vmatpush1.msra.mxu0 0.0
  %614 = vmatprep.subr.mxu0 0.0
  %615 = vmatpush1.msra.mxu0 0.0
  %616 = vmatprep.subr.mxu0 0.0
  %617 = vmatpush1.msra.mxu0 0.0
  %618 = vmatprep.subr.mxu0 0.0
  %619 = vmatpush1.msra.mxu0 0.0
  %620 = vmatprep.subr.mxu0 0.0
  %621 = vmatpush1.msra.mxu0 0.0
  %622 = vmatprep.subr.mxu0 0.0
  %623 = vmatpush1.msra.mxu0 0.0
  %624 = vmatprep.subr.mxu0 0.0
  %625 = vmatpush1.msra.mxu0 0.0
  %626 = vmatprep.subr.mxu0 0.0
  %627 = vmatpush1.msra.mxu0 0.0
  %628 = vmatprep.subr.mxu0 0.0
  %629 = vmatpush1.msra.mxu0 0.0
  %630 = vmatprep.subr.mxu0 0.0
  %631 = vmatpush1.msra.mxu0 0.0
  %632 = vmatprep.subr.mxu0 0.0
  %633 = vmatpush1.msra.mxu0 0.0
  %634 = vmatprep.subr.mxu0 0.0
  %635 = vmatpush1.msra.mxu0 0.0
  %636 = vmatprep.subr.mxu0 0.0
  %637 = vmatpush1.msra.mxu0 0.0
  %638 = vmatprep.subr.mxu0 0.0
  %639 = vmatpush1.msra.mxu0 0.0
  %640 = vmatprep.subr.mxu0 0.0
  %641 = vmatpush1.msra.mxu0 0.0
  %642 = vmatprep.subr.mxu0 0.0
  %643 = vmatpush1.msra.mxu0 0.0
  %644 = vmatprep.subr.mxu0 0.0
  %645 = vmatpush1.msra.mxu0 0.0
  %646 = vmatprep.subr.mxu0 0.0
  %647 = vmatpush1.msra.mxu0 0.0
  %648 = vmatprep.subr.mxu0 0.0
  %649 = vmatpush1.msra.mxu0 0.0
  %650 = vmatprep.subr.mxu0 0.0
  %651 = vmatpush1.msra.mxu0 0.0
  %652 = vmatprep.subr.mxu0 0.0
  %653 = vmatpush1.msra.mxu0 0.0
  %654 = vmatprep.subr.mxu0 0.0
  %655 = vmatpush1.msra.mxu0 0.0
  %656 = vmatprep.subr.mxu0 0.0
  %657 = vmatpush1.msra.mxu0 0.0
  %658 = vmatprep.subr.mxu0 0.0
  %659 = vmatpush1.msra.mxu0 0.0
  %660 = vmatprep.mubr.f32.mxu0 0.0
  %661 = vmatmul.mubr.f32.gmra.mrb[0].mxu0 %v594
  %v662 = vpop.f32.mrb[0].mxu0
  %v663 = vadd.f32 0.0, %v662
  %v664 = vpop.f32.mrb[0].mxu0
  %665 = vdwg.mxu0
  %v666 = vld [vmem:[%s3] sm:$0xff]
  %s667 = scalar_lea.vmem %s2, 40
  %v668 = vld [vmem:[%s667] sm:$0xff]
  %v669 = vld [vmem:[%s667 + $0x8] sm:$0xff]
  %v670 = vld [vmem:[%s667 + $0x10] sm:$0xff]
  %v671 = vld [vmem:[%s667 + $0x18] sm:$0xff]
  %v672 = vld [vmem:[%s667 + $0x20] sm:$0x1]
  %v673 = vlaneseq
  %v674 = vshrl.u32 %v673, 7
  %v675 = vsub.s32 0, %v674
  %v676 = vrot.slane %v672, %v675
  %677 = vmatprep.subr.mxu0 0.0
  %678 = vmatpush1.msra.mxu0 %v668
  %679 = vmatprep.subr.mxu0 0.0
  %680 = vmatpush1.msra.mxu0 %v669
  %681 = vmatprep.subr.mxu0 0.0
  %682 = vmatpush1.msra.mxu0 %v670
  %683 = vmatprep.subr.mxu0 0.0
  %684 = vmatpush1.msra.mxu0 %v671
  %685 = vmatprep.subr.mxu0 0.0
  %686 = vmatpush1.msra.mxu0 0.0
  %687 = vmatprep.subr.mxu0 0.0
  %688 = vmatpush1.msra.mxu0 0.0
  %689 = vmatprep.subr.mxu0 0.0
  %690 = vmatpush1.msra.mxu0 0.0
  %691 = vmatprep.subr.mxu0 0.0
  %692 = vmatpush1.msra.mxu0 0.0
  %693 = vmatprep.subr.mxu0 0.0
  %694 = vmatpush1.msra.mxu0 0.0
  %695 = vmatprep.subr.mxu0 0.0
  %696 = vmatpush1.msra.mxu0 0.0
  %697 = vmatprep.subr.mxu0 0.0
  %698 = vmatpush1.msra.mxu0 0.0
  %699 = vmatprep.subr.mxu0 0.0
  %700 = vmatpush1.msra.mxu0 0.0
  %701 = vmatprep.subr.mxu0 0.0
  %702 = vmatpush1.msra.mxu0 0.0
  %703 = vmatprep.subr.mxu0 0.0
  %704 = vmatpush1.msra.mxu0 0.0
  %705 = vmatprep.subr.mxu0 0.0
  %706 = vmatpush1.msra.mxu0 0.0
  %707 = vmatprep.subr.mxu0 0.0
  %708 = vmatpush1.msra.mxu0 0.0
  %709 = vmatprep.subr.mxu0 0.0
  %710 = vmatpush1.msra.mxu0 0.0
  %711 = vmatprep.subr.mxu0 0.0
  %712 = vmatpush1.msra.mxu0 0.0
  %713 = vmatprep.subr.mxu0 0.0
  %714 = vmatpush1.msra.mxu0 0.0
  %715 = vmatprep.subr.mxu0 0.0
  %716 = vmatpush1.msra.mxu0 0.0
  %717 = vmatprep.subr.mxu0 0.0
  %718 = vmatpush1.msra.mxu0 0.0
  %719 = vmatprep.subr.mxu0 0.0
  %720 = vmatpush1.msra.mxu0 0.0
  %721 = vmatprep.subr.mxu0 0.0
  %722 = vmatpush1.msra.mxu0 0.0
  %723 = vmatprep.subr.mxu0 0.0
  %724 = vmatpush1.msra.mxu0 0.0
  %725 = vmatprep.subr.mxu0 0.0
  %726 = vmatpush1.msra.mxu0 0.0
  %727 = vmatprep.subr.mxu0 0.0
  %728 = vmatpush1.msra.mxu0 0.0
  %729 = vmatprep.subr.mxu0 0.0
  %730 = vmatpush1.msra.mxu0 0.0
  %731 = vmatprep.subr.mxu0 0.0
  %732 = vmatpush1.msra.mxu0 0.0
  %733 = vmatprep.subr.mxu0 0.0
  %734 = vmatpush1.msra.mxu0 0.0
  %735 = vmatprep.subr.mxu0 0.0
  %736 = vmatpush1.msra.mxu0 0.0
  %737 = vmatprep.subr.mxu0 0.0
  %738 = vmatpush1.msra.mxu0 0.0
  %739 = vmatprep.subr.mxu0 0.0
  %740 = vmatpush1.msra.mxu0 0.0
  %741 = vmatprep.mubr.f32.mxu0 0.0
  %742 = vmatmul.mubr.f32.gmra.mrb[0].mxu0 %v89
  %v743 = vpop.f32.mrb[0].mxu0
  %v744 = vadd.f32 %v676, %v743
  %v745 = vpop.f32.mrb[0].mxu0
  %746 = vmatprep.mubr.f32.mxu0 0.0
  %747 = vmatmul.mubr.f32.gmra.mrb[0].mxu0 %v92
  %v748 = vpop.f32.mrb[0].mxu0
  %v749 = vadd.f32 %v676, %v748
  %v750 = vpop.f32.mrb[0].mxu0
  %751 = vdwg.mxu0
  %s752 = scalar_lea.vmem %s2, 200
  %v753 = vld [vmem:[%s752] sm:$0xff]
  %v754 = vld [vmem:[%s752 + $0x8] sm:$0xff]
  %v755 = vld [vmem:[%s752 + $0x10] sm:$0xff]
  %v756 = vld [vmem:[%s752 + $0x18] sm:$0xff]
  %v757 = vld [vmem:[%s752 + $0x20] sm:$0x1]
  %v758 = vlaneseq
  %v759 = vshrl.u32 %v758, 7
  %v760 = vsub.s32 0, %v759
  %v761 = vrot.slane %v757, %v760
  %762 = vmatprep.subr.mxu0 0.0
  %763 = vmatpush1.msra.mxu0 %v753
  %764 = vmatprep.subr.mxu0 0.0
  %765 = vmatpush1.msra.mxu0 %v754
  %766 = vmatprep.subr.mxu0 0.0
  %767 = vmatpush1.msra.mxu0 %v755
  %768 = vmatprep.subr.mxu0 0.0
  %769 = vmatpush1.msra.mxu0 %v756
  %770 = vmatprep.subr.mxu0 0.0
  %771 = vmatpush1.msra.mxu0 0.0
  %772 = vmatprep.subr.mxu0 0.0
  %773 = vmatpush1.msra.mxu0 0.0
  %774 = vmatprep.subr.mxu0 0.0
  %775 = vmatpush1.msra.mxu0 0.0
  %776 = vmatprep.subr.mxu0 0.0
  %777 = vmatpush1.msra.mxu0 0.0
  %778 = vmatprep.subr.mxu0 0.0
  %779 = vmatpush1.msra.mxu0 0.0
  %780 = vmatprep.subr.mxu0 0.0
  %781 = vmatpush1.msra.mxu0 0.0
  %782 = vmatprep.subr.mxu0 0.0
  %783 = vmatpush1.msra.mxu0 0.0
  %784 = vmatprep.subr.mxu0 0.0
  %785 = vmatpush1.msra.mxu0 0.0
  %786 = vmatprep.subr.mxu0 0.0
  %787 = vmatpush1.msra.mxu0 0.0
  %788 = vmatprep.subr.mxu0 0.0
  %789 = vmatpush1.msra.mxu0 0.0
  %790 = vmatprep.subr.mxu0 0.0
  %791 = vmatpush1.msra.mxu0 0.0
  %792 = vmatprep.subr.mxu0 0.0
  %793 = vmatpush1.msra.mxu0 0.0
  %794 = vmatprep.subr.mxu0 0.0
  %795 = vmatpush1.msra.mxu0 0.0
  %796 = vmatprep.subr.mxu0 0.0
  %797 = vmatpush1.msra.mxu0 0.0
  %798 = vmatprep.subr.mxu0 0.0
  %799 = vmatpush1.msra.mxu0 0.0
  %800 = vmatprep.subr.mxu0 0.0
  %801 = vmatpush1.msra.mxu0 0.0
  %802 = vmatprep.subr.mxu0 0.0
  %803 = vmatpush1.msra.mxu0 0.0
  %804 = vmatprep.subr.mxu0 0.0
  %805 = vmatpush1.msra.mxu0 0.0
  %806 = vmatprep.subr.mxu0 0.0
  %807 = vmatpush1.msra.mxu0 0.0
  %808 = vmatprep.subr.mxu0 0.0
  %809 = vmatpush1.msra.mxu0 0.0
  %810 = vmatprep.subr.mxu0 0.0
  %811 = vmatpush1.msra.mxu0 0.0
  %812 = vmatprep.subr.mxu0 0.0
  %813 = vmatpush1.msra.mxu0 0.0
  %814 = vmatprep.subr.mxu0 0.0
  %815 = vmatpush1.msra.mxu0 0.0
  %816 = vmatprep.subr.mxu0 0.0
  %817 = vmatpush1.msra.mxu0 0.0
  %818 = vmatprep.subr.mxu0 0.0
  %819 = vmatpush1.msra.mxu0 0.0
  %820 = vmatprep.subr.mxu0 0.0
  %821 = vmatpush1.msra.mxu0 0.0
  %822 = vmatprep.subr.mxu0 0.0
  %823 = vmatpush1.msra.mxu0 0.0
  %824 = vmatprep.subr.mxu0 0.0
  %825 = vmatpush1.msra.mxu0 0.0
  %826 = vmatprep.mubr.f32.mxu0 0.0
  %827 = vmatmul.mubr.f32.gmra.mrb[0].mxu0 %v89
  %v828 = vpop.f32.mrb[0].mxu0
  %v829 = vadd.f32 %v761, %v828
  %v830 = vpop.f32.mrb[0].mxu0
  %831 = vmatprep.mubr.f32.mxu0 0.0
  %832 = vmatmul.mubr.f32.gmra.mrb[0].mxu0 %v92
  %v833 = vpop.f32.mrb[0].mxu0
  %v834 = vadd.f32 %v761, %v833
  %v835 = vpop.f32.mrb[0].mxu0
  %836 = vdwg.mxu0
  %s837 = scalar_lea.vmem %s2, 360
  %v838 = vld [vmem:[%s837] sm:$0xff]
  %v839 = vld [vmem:[%s837 + $0x8] sm:$0xff]
  %v840 = vld [vmem:[%s837 + $0x10] sm:$0xff]
  %v841 = vld [vmem:[%s837 + $0x18] sm:$0xff]
  %v842 = vld [vmem:[%s837 + $0x20] sm:$0x1]
  %v843 = vlaneseq
  %v844 = vshrl.u32 %v843, 7
  %v845 = vsub.s32 0, %v844
  %v846 = vrot.slane %v842, %v845
  %847 = vmatprep.subr.mxu0 0.0
  %848 = vmatpush1.msra.mxu0 %v838
  %849 = vmatprep.subr.mxu0 0.0
  %850 = vmatpush1.msra.mxu0 %v839
  %851 = vmatprep.subr.mxu0 0.0
  %852 = vmatpush1.msra.mxu0 %v840
  %853 = vmatprep.subr.mxu0 0.0
  %854 = vmatpush1.msra.mxu0 %v841
  %855 = vmatprep.subr.mxu0 0.0
  %856 = vmatpush1.msra.mxu0 0.0
  %857 = vmatprep.subr.mxu0 0.0
  %858 = vmatpush1.msra.mxu0 0.0
  %859 = vmatprep.subr.mxu0 0.0
  %860 = vmatpush1.msra.mxu0 0.0
  %861 = vmatprep.subr.mxu0 0.0
  %862 = vmatpush1.msra.mxu0 0.0
  %863 = vmatprep.subr.mxu0 0.0
  %864 = vmatpush1.msra.mxu0 0.0
  %865 = vmatprep.subr.mxu0 0.0
  %866 = vmatpush1.msra.mxu0 0.0
  %867 = vmatprep.subr.mxu0 0.0
  %868 = vmatpush1.msra.mxu0 0.0
  %869 = vmatprep.subr.mxu0 0.0
  %870 = vmatpush1.msra.mxu0 0.0
  %871 = vmatprep.subr.mxu0 0.0
  %872 = vmatpush1.msra.mxu0 0.0
  %873 = vmatprep.subr.mxu0 0.0
  %874 = vmatpush1.msra.mxu0 0.0
  %875 = vmatprep.subr.mxu0 0.0
  %876 = vmatpush1.msra.mxu0 0.0
  %877 = vmatprep.subr.mxu0 0.0
  %878 = vmatpush1.msra.mxu0 0.0
  %879 = vmatprep.subr.mxu0 0.0
  %880 = vmatpush1.msra.mxu0 0.0
  %881 = vmatprep.subr.mxu0 0.0
  %882 = vmatpush1.msra.mxu0 0.0
  %883 = vmatprep.subr.mxu0 0.0
  %884 = vmatpush1.msra.mxu0 0.0
  %885 = vmatprep.subr.mxu0 0.0
  %886 = vmatpush1.msra.mxu0 0.0
  %887 = vmatprep.subr.mxu0 0.0
  %888 = vmatpush1.msra.mxu0 0.0
  %889 = vmatprep.subr.mxu0 0.0
  %890 = vmatpush1.msra.mxu0 0.0
  %891 = vmatprep.subr.mxu0 0.0
  %892 = vmatpush1.msra.mxu0 0.0
  %893 = vmatprep.subr.mxu0 0.0
  %894 = vmatpush1.msra.mxu0 0.0
  %895 = vmatprep.subr.mxu0 0.0
  %896 = vmatpush1.msra.mxu0 0.0
  %897 = vmatprep.subr.mxu0 0.0
  %898 = vmatpush1.msra.mxu0 0.0
  %899 = vmatprep.subr.mxu0 0.0
  %900 = vmatpush1.msra.mxu0 0.0
  %901 = vmatprep.subr.mxu0 0.0
  %902 = vmatpush1.msra.mxu0 0.0
  %903 = vmatprep.subr.mxu0 0.0
  %904 = vmatpush1.msra.mxu0 0.0
  %905 = vmatprep.subr.mxu0 0.0
  %906 = vmatpush1.msra.mxu0 0.0
  %907 = vmatprep.subr.mxu0 0.0
  %908 = vmatpush1.msra.mxu0 0.0
  %909 = vmatprep.subr.mxu0 0.0
  %910 = vmatpush1.msra.mxu0 0.0
  %911 = vmatprep.mubr.f32.mxu0 0.0
  %912 = vmatmul.mubr.f32.gmra.mrb[0].mxu0 %v89
  %v913 = vpop.f32.mrb[0].mxu0
  %v914 = vadd.f32 %v846, %v913
  %v915 = vpop.f32.mrb[0].mxu0
  %916 = vmatprep.mubr.f32.mxu0 0.0
  %917 = vmatmul.mubr.f32.gmra.mrb[0].mxu0 %v92
  %v918 = vpop.f32.mrb[0].mxu0
  %v919 = vadd.f32 %v846, %v918
  %v920 = vpop.f32.mrb[0].mxu0
  %921 = vdwg.mxu0
  %v923 = vsel %vm339, %v744, 0
  %v926 = vsel %vm339, %v829, 0
  %928 = vmatprep.subr.mxu0 0.0
  %929 = vmatpush1.xpose.msra.mxu0 %v926
  %930 = vmatprep.subr.mxu0 0.0
  %931 = vmatpush1.xpose.msra.mxu0 0.0
  %932 = vmatprep.subr.mxu0 0.0
  %933 = vmatpush1.xpose.msra.mxu0 0.0
  %934 = vmatprep.subr.mxu0 0.0
  %935 = vmatpush1.xpose.msra.mxu0 0.0
  %936 = vmatprep.subr.mxu0 0.0
  %937 = vmatpush1.xpose.msra.mxu0 0.0
  %938 = vmatprep.subr.mxu0 0.0
  %939 = vmatpush1.xpose.msra.mxu0 0.0
  %940 = vmatprep.subr.mxu0 0.0
  %941 = vmatpush1.xpose.msra.mxu0 0.0
  %942 = vmatprep.subr.mxu0 0.0
  %943 = vmatpush1.xpose.msra.mxu0 0.0
  %944 = vmatprep.subr.mxu0 0.0
  %945 = vmatpush1.xpose.msra.mxu0 0.0
  %946 = vmatprep.subr.mxu0 0.0
  %947 = vmatpush1.xpose.msra.mxu0 0.0
  %948 = vmatprep.subr.mxu0 0.0
  %949 = vmatpush1.xpose.msra.mxu0 0.0
  %950 = vmatprep.subr.mxu0 0.0
  %951 = vmatpush1.xpose.msra.mxu0 0.0
  %952 = vmatprep.subr.mxu0 0.0
  %953 = vmatpush1.xpose.msra.mxu0 0.0
  %954 = vmatprep.subr.mxu0 0.0
  %955 = vmatpush1.xpose.msra.mxu0 0.0
  %956 = vmatprep.subr.mxu0 0.0
  %957 = vmatpush1.xpose.msra.mxu0 0.0
  %958 = vmatprep.subr.mxu0 0.0
  %959 = vmatpush1.xpose.msra.mxu0 0.0
  %960 = vmatprep.subr.mxu0 0.0
  %961 = vmatpush1.xpose.msra.mxu0 0.0
  %962 = vmatprep.subr.mxu0 0.0
  %963 = vmatpush1.xpose.msra.mxu0 0.0
  %964 = vmatprep.subr.mxu0 0.0
  %965 = vmatpush1.xpose.msra.mxu0 0.0
  %966 = vmatprep.subr.mxu0 0.0
  %967 = vmatpush1.xpose.msra.mxu0 0.0
  %968 = vmatprep.subr.mxu0 0.0
  %969 = vmatpush1.xpose.msra.mxu0 0.0
  %970 = vmatprep.subr.mxu0 0.0
  %971 = vmatpush1.xpose.msra.mxu0 0.0
  %972 = vmatprep.subr.mxu0 0.0
  %973 = vmatpush1.xpose.msra.mxu0 0.0
  %974 = vmatprep.subr.mxu0 0.0
  %975 = vmatpush1.xpose.msra.mxu0 0.0
  %976 = vmatprep.subr.mxu0 0.0
  %977 = vmatpush1.xpose.msra.mxu0 0.0
  %978 = vmatprep.subr.mxu0 0.0
  %979 = vmatpush1.xpose.msra.mxu0 0.0
  %980 = vmatprep.subr.mxu0 0.0
  %981 = vmatpush1.xpose.msra.mxu0 0.0
  %982 = vmatprep.subr.mxu0 0.0
  %983 = vmatpush1.xpose.msra.mxu0 0.0
  %984 = vmatprep.subr.mxu0 0.0
  %985 = vmatpush1.xpose.msra.mxu0 0.0
  %986 = vmatprep.subr.mxu0 0.0
  %987 = vmatpush1.xpose.msra.mxu0 0.0
  %988 = vmatprep.subr.mxu0 0.0
  %989 = vmatpush1.xpose.msra.mxu0 0.0
  %990 = vmatprep.subr.mxu0 0.0
  %991 = vmatpush1.xpose.msra.mxu0 0.0
  %992 = vmatprep.mubr.f32.mxu0 0.0
  %993 = vmatmul.mubr.f32.gmra.mrb[0].mxu0 %v923
  %v994 = vpop.f32.mrb[0].mxu0
  %v995 = vadd.f32 0.0, %v994
  %v996 = vpop.f32.mrb[0].mxu0
  %997 = vdwg.mxu0
  %v999 = vsel %vm339, %v749, 0
  %v1002 = vsel %vm339, %v834, 0
  %1004 = vmatprep.subr.mxu0 0.0
  %1005 = vmatpush1.xpose.msra.mxu0 %v1002
  %1006 = vmatprep.subr.mxu0 0.0
  %1007 = vmatpush1.xpose.msra.mxu0 0.0
  %1008 = vmatprep.subr.mxu0 0.0
  %1009 = vmatpush1.xpose.msra.mxu0 0.0
  %1010 = vmatprep.subr.mxu0 0.0
  %1011 = vmatpush1.xpose.msra.mxu0 0.0
  %1012 = vmatprep.subr.mxu0 0.0
  %1013 = vmatpush1.xpose.msra.mxu0 0.0
  %1014 = vmatprep.subr.mxu0 0.0
  %1015 = vmatpush1.xpose.msra.mxu0 0.0
  %1016 = vmatprep.subr.mxu0 0.0
  %1017 = vmatpush1.xpose.msra.mxu0 0.0
  %1018 = vmatprep.subr.mxu0 0.0
  %1019 = vmatpush1.xpose.msra.mxu0 0.0
  %1020 = vmatprep.subr.mxu0 0.0
  %1021 = vmatpush1.xpose.msra.mxu0 0.0
  %1022 = vmatprep.subr.mxu0 0.0
  %1023 = vmatpush1.xpose.msra.mxu0 0.0
  %1024 = vmatprep.subr.mxu0 0.0
  %1025 = vmatpush1.xpose.msra.mxu0 0.0
  %1026 = vmatprep.subr.mxu0 0.0
  %1027 = vmatpush1.xpose.msra.mxu0 0.0
  %1028 = vmatprep.subr.mxu0 0.0
  %1029 = vmatpush1.xpose.msra.mxu0 0.0
  %1030 = vmatprep.subr.mxu0 0.0
  %1031 = vmatpush1.xpose.msra.mxu0 0.0
  %1032 = vmatprep.subr.mxu0 0.0
  %1033 = vmatpush1.xpose.msra.mxu0 0.0
  %1034 = vmatprep.subr.mxu0 0.0
  %1035 = vmatpush1.xpose.msra.mxu0 0.0
  %1036 = vmatprep.subr.mxu0 0.0
  %1037 = vmatpush1.xpose.msra.mxu0 0.0
  %1038 = vmatprep.subr.mxu0 0.0
  %1039 = vmatpush1.xpose.msra.mxu0 0.0
  %1040 = vmatprep.subr.mxu0 0.0
  %1041 = vmatpush1.xpose.msra.mxu0 0.0
  %1042 = vmatprep.subr.mxu0 0.0
  %1043 = vmatpush1.xpose.msra.mxu0 0.0
  %1044 = vmatprep.subr.mxu0 0.0
  %1045 = vmatpush1.xpose.msra.mxu0 0.0
  %1046 = vmatprep.subr.mxu0 0.0
  %1047 = vmatpush1.xpose.msra.mxu0 0.0
  %1048 = vmatprep.subr.mxu0 0.0
  %1049 = vmatpush1.xpose.msra.mxu0 0.0
  %1050 = vmatprep.subr.mxu0 0.0
  %1051 = vmatpush1.xpose.msra.mxu0 0.0
  %1052 = vmatprep.subr.mxu0 0.0
  %1053 = vmatpush1.xpose.msra.mxu0 0.0
  %1054 = vmatprep.subr.mxu0 0.0
  %1055 = vmatpush1.xpose.msra.mxu0 0.0
  %1056 = vmatprep.subr.mxu0 0.0
  %1057 = vmatpush1.xpose.msra.mxu0 0.0
  %1058 = vmatprep.subr.mxu0 0.0
  %1059 = vmatpush1.xpose.msra.mxu0 0.0
  %1060 = vmatprep.subr.mxu0 0.0
  %1061 = vmatpush1.xpose.msra.mxu0 0.0
  %1062 = vmatprep.subr.mxu0 0.0
  %1063 = vmatpush1.xpose.msra.mxu0 0.0
  %1064 = vmatprep.subr.mxu0 0.0
  %1065 = vmatpush1.xpose.msra.mxu0 0.0
  %1066 = vmatprep.subr.mxu0 0.0
  %1067 = vmatpush1.xpose.msra.mxu0 0.0
  %1068 = vmatprep.mubr.f32.mxu0 0.0
  %1069 = vmatmul.mubr.f32.gmra.mrb[0].mxu0 %v999
  %v1070 = vpop.f32.mrb[0].mxu0
  %v1071 = vadd.f32 0.0, %v1070
  %v1072 = vpop.f32.mrb[0].mxu0
  %1073 = vdwg.mxu0
  %v1074 = vmul.f32 %v995, 0.35355338
  %v1075 = vmul.f32 %v1071, 0.35355338
  %v1076 = vsel %vm495, %v1074, -1e+30
  %v1077 = vsel %vm495, %v1075, -1e+30
  %v1078 = vsel %vm339, %v1076, -inf
  %1079 = vmax.xlane.f32.xlu0 %v1078
  %v1080 = vpop.xlane.xlu0 %1079
  %v1081 = vsel %vm339, %v1077, -inf
  %1082 = vmax.xlane.f32.xlu0 %v1081
  %v1083 = vpop.xlane.xlu0 %1082
  %v1084 = vsub.f32 %v1076, %v1080
  %v1085 = vsub.f32 %v1077, %v1083
  %v1086 = vmul.f32 %v1084, 1.442695
  %v1087 = vpow.pop %v1086
  %v1088 = vmul.f32 %v1085, 1.442695
  %v1089 = vpow.pop %v1088
  %v1090 = vsel %vm339, %v1087, 0.0
  %1091 = vadd.xlane.f32.xlu0 %v1090
  %v1092 = vpop.xlane.xlu0 %1091
  %v1093 = vsel %vm339, %v1089, 0.0
  %1094 = vadd.xlane.f32.xlu0 %v1093
  %v1095 = vpop.xlane.xlu0 %1094
  %v1096 = vrcp.pop %v1092
  %v1097 = vrcp.pop %v1095
  %v1098 = vmul.f32 %v1087, %v1096
  %v1099 = vmul.f32 %v1089, %v1097
  %v1101 = vsel %vm339, %v1098, 0
  %1103 = vmatprep.subr.mxu0 0.0
  %1104 = vmatpush1.msra.mxu0 %v914
  %1105 = vmatprep.subr.mxu0 0.0
  %1106 = vmatpush1.msra.mxu0 0.0
  %1107 = vmatprep.subr.mxu0 0.0
  %1108 = vmatpush1.msra.mxu0 0.0
  %1109 = vmatprep.subr.mxu0 0.0
  %1110 = vmatpush1.msra.mxu0 0.0
  %1111 = vmatprep.subr.mxu0 0.0
  %1112 = vmatpush1.msra.mxu0 0.0
  %1113 = vmatprep.subr.mxu0 0.0
  %1114 = vmatpush1.msra.mxu0 0.0
  %1115 = vmatprep.subr.mxu0 0.0
  %1116 = vmatpush1.msra.mxu0 0.0
  %1117 = vmatprep.subr.mxu0 0.0
  %1118 = vmatpush1.msra.mxu0 0.0
  %1119 = vmatprep.subr.mxu0 0.0
  %1120 = vmatpush1.msra.mxu0 0.0
  %1121 = vmatprep.subr.mxu0 0.0
  %1122 = vmatpush1.msra.mxu0 0.0
  %1123 = vmatprep.subr.mxu0 0.0
  %1124 = vmatpush1.msra.mxu0 0.0
  %1125 = vmatprep.subr.mxu0 0.0
  %1126 = vmatpush1.msra.mxu0 0.0
  %1127 = vmatprep.subr.mxu0 0.0
  %1128 = vmatpush1.msra.mxu0 0.0
  %1129 = vmatprep.subr.mxu0 0.0
  %1130 = vmatpush1.msra.mxu0 0.0
  %1131 = vmatprep.subr.mxu0 0.0
  %1132 = vmatpush1.msra.mxu0 0.0
  %1133 = vmatprep.subr.mxu0 0.0
  %1134 = vmatpush1.msra.mxu0 0.0
  %1135 = vmatprep.subr.mxu0 0.0
  %1136 = vmatpush1.msra.mxu0 0.0
  %1137 = vmatprep.subr.mxu0 0.0
  %1138 = vmatpush1.msra.mxu0 0.0
  %1139 = vmatprep.subr.mxu0 0.0
  %1140 = vmatpush1.msra.mxu0 0.0
  %1141 = vmatprep.subr.mxu0 0.0
  %1142 = vmatpush1.msra.mxu0 0.0
  %1143 = vmatprep.subr.mxu0 0.0
  %1144 = vmatpush1.msra.mxu0 0.0
  %1145 = vmatprep.subr.mxu0 0.0
  %1146 = vmatpush1.msra.mxu0 0.0
  %1147 = vmatprep.subr.mxu0 0.0
  %1148 = vmatpush1.msra.mxu0 0.0
  %1149 = vmatprep.subr.mxu0 0.0
  %1150 = vmatpush1.msra.mxu0 0.0
  %1151 = vmatprep.subr.mxu0 0.0
  %1152 = vmatpush1.msra.mxu0 0.0
  %1153 = vmatprep.subr.mxu0 0.0
  %1154 = vmatpush1.msra.mxu0 0.0
  %1155 = vmatprep.subr.mxu0 0.0
  %1156 = vmatpush1.msra.mxu0 0.0
  %1157 = vmatprep.subr.mxu0 0.0
  %1158 = vmatpush1.msra.mxu0 0.0
  %1159 = vmatprep.subr.mxu0 0.0
  %1160 = vmatpush1.msra.mxu0 0.0
  %1161 = vmatprep.subr.mxu0 0.0
  %1162 = vmatpush1.msra.mxu0 0.0
  %1163 = vmatprep.subr.mxu0 0.0
  %1164 = vmatpush1.msra.mxu0 0.0
  %1165 = vmatprep.subr.mxu0 0.0
  %1166 = vmatpush1.msra.mxu0 0.0
  %1167 = vmatprep.mubr.f32.mxu0 0.0
  %1168 = vmatmul.mubr.f32.gmra.mrb[0].mxu0 %v1101
  %v1169 = vpop.f32.mrb[0].mxu0
  %v1170 = vadd.f32 0.0, %v1169
  %v1171 = vpop.f32.mrb[0].mxu0
  %1172 = vdwg.mxu0
  %v1174 = vsel %vm339, %v1099, 0
  %1176 = vmatprep.subr.mxu0 0.0
  %1177 = vmatpush1.msra.mxu0 %v919
  %1178 = vmatprep.subr.mxu0 0.0
  %1179 = vmatpush1.msra.mxu0 0.0
  %1180 = vmatprep.subr.mxu0 0.0
  %1181 = vmatpush1.msra.mxu0 0.0
  %1182 = vmatprep.subr.mxu0 0.0
  %1183 = vmatpush1.msra.mxu0 0.0
  %1184 = vmatprep.subr.mxu0 0.0
  %1185 = vmatpush1.msra.mxu0 0.0
  %1186 = vmatprep.subr.mxu0 0.0
  %1187 = vmatpush1.msra.mxu0 0.0
  %1188 = vmatprep.subr.mxu0 0.0
  %1189 = vmatpush1.msra.mxu0 0.0
  %1190 = vmatprep.subr.mxu0 0.0
  %1191 = vmatpush1.msra.mxu0 0.0
  %1192 = vmatprep.subr.mxu0 0.0
  %1193 = vmatpush1.msra.mxu0 0.0
  %1194 = vmatprep.subr.mxu0 0.0
  %1195 = vmatpush1.msra.mxu0 0.0
  %1196 = vmatprep.subr.mxu0 0.0
  %1197 = vmatpush1.msra.mxu0 0.0
  %1198 = vmatprep.subr.mxu0 0.0
  %1199 = vmatpush1.msra.mxu0 0.0
  %1200 = vmatprep.subr.mxu0 0.0
  %1201 = vmatpush1.msra.mxu0 0.0
  %1202 = vmatprep.subr.mxu0 0.0
  %1203 = vmatpush1.msra.mxu0 0.0
  %1204 = vmatprep.subr.mxu0 0.0
  %1205 = vmatpush1.msra.mxu0 0.0
  %1206 = vmatprep.subr.mxu0 0.0
  %1207 = vmatpush1.msra.mxu0 0.0
  %1208 = vmatprep.subr.mxu0 0.0
  %1209 = vmatpush1.msra.mxu0 0.0
  %1210 = vmatprep.subr.mxu0 0.0
  %1211 = vmatpush1.msra.mxu0 0.0
  %1212 = vmatprep.subr.mxu0 0.0
  %1213 = vmatpush1.msra.mxu0 0.0
  %1214 = vmatprep.subr.mxu0 0.0
  %1215 = vmatpush1.msra.mxu0 0.0
  %1216 = vmatprep.subr.mxu0 0.0
  %1217 = vmatpush1.msra.mxu0 0.0
  %1218 = vmatprep.subr.mxu0 0.0
  %1219 = vmatpush1.msra.mxu0 0.0
  %1220 = vmatprep.subr.mxu0 0.0
  %1221 = vmatpush1.msra.mxu0 0.0
  %1222 = vmatprep.subr.mxu0 0.0
  %1223 = vmatpush1.msra.mxu0 0.0
  %1224 = vmatprep.subr.mxu0 0.0
  %1225 = vmatpush1.msra.mxu0 0.0
  %1226 = vmatprep.subr.mxu0 0.0
  %1227 = vmatpush1.msra.mxu0 0.0
  %1228 = vmatprep.subr.mxu0 0.0
  %1229 = vmatpush1.msra.mxu0 0.0
  %1230 = vmatprep.subr.mxu0 0.0
  %1231 = vmatpush1.msra.mxu0 0.0
  %1232 = vmatprep.subr.mxu0 0.0
  %1233 = vmatpush1.msra.mxu0 0.0
  %1234 = vmatprep.subr.mxu0 0.0
  %1235 = vmatpush1.msra.mxu0 0.0
  %1236 = vmatprep.subr.mxu0 0.0
  %1237 = vmatpush1.msra.mxu0 0.0
  %1238 = vmatprep.subr.mxu0 0.0
  %1239 = vmatpush1.msra.mxu0 0.0
  %1240 = vmatprep.mubr.f32.mxu0 0.0
  %1241 = vmatmul.mubr.f32.gmra.mrb[0].mxu0 %v1174
  %v1242 = vpop.f32.mrb[0].mxu0
  %v1243 = vadd.f32 0.0, %v1242
  %v1244 = vpop.f32.mrb[0].mxu0
  %1245 = vdwg.mxu0
  %s1246 = scalar_lea.vmem %s3, 8
  %v1247 = vld [vmem:[%s1246] sm:$0xff]
  %v1249 = vsel %vm339, %v1170, 0
  %v1252 = vsel %vm339, %v1243, 0
  %1254 = vmatprep.subr.mxu0 0.0
  %1255 = vmatpush1.msra.mxu0 %v1247
  %1256 = vmatprep.subr.mxu0 0.0
  %1257 = vmatpush1.msra.mxu0 0.0
  %1258 = vmatprep.subr.mxu0 0.0
  %1259 = vmatpush1.msra.mxu0 0.0
  %1260 = vmatprep.subr.mxu0 0.0
  %1261 = vmatpush1.msra.mxu0 0.0
  %1262 = vmatprep.subr.mxu0 0.0
  %1263 = vmatpush1.msra.mxu0 0.0
  %1264 = vmatprep.subr.mxu0 0.0
  %1265 = vmatpush1.msra.mxu0 0.0
  %1266 = vmatprep.subr.mxu0 0.0
  %1267 = vmatpush1.msra.mxu0 0.0
  %1268 = vmatprep.subr.mxu0 0.0
  %1269 = vmatpush1.msra.mxu0 0.0
  %1270 = vmatprep.subr.mxu0 0.0
  %1271 = vmatpush1.msra.mxu0 0.0
  %1272 = vmatprep.subr.mxu0 0.0
  %1273 = vmatpush1.msra.mxu0 0.0
  %1274 = vmatprep.subr.mxu0 0.0
  %1275 = vmatpush1.msra.mxu0 0.0
  %1276 = vmatprep.subr.mxu0 0.0
  %1277 = vmatpush1.msra.mxu0 0.0
  %1278 = vmatprep.subr.mxu0 0.0
  %1279 = vmatpush1.msra.mxu0 0.0
  %1280 = vmatprep.subr.mxu0 0.0
  %1281 = vmatpush1.msra.mxu0 0.0
  %1282 = vmatprep.subr.mxu0 0.0
  %1283 = vmatpush1.msra.mxu0 0.0
  %1284 = vmatprep.subr.mxu0 0.0
  %1285 = vmatpush1.msra.mxu0 0.0
  %1286 = vmatprep.subr.mxu0 0.0
  %1287 = vmatpush1.msra.mxu0 0.0
  %1288 = vmatprep.subr.mxu0 0.0
  %1289 = vmatpush1.msra.mxu0 0.0
  %1290 = vmatprep.subr.mxu0 0.0
  %1291 = vmatpush1.msra.mxu0 0.0
  %1292 = vmatprep.subr.mxu0 0.0
  %1293 = vmatpush1.msra.mxu0 0.0
  %1294 = vmatprep.subr.mxu0 0.0
  %1295 = vmatpush1.msra.mxu0 0.0
  %1296 = vmatprep.subr.mxu0 0.0
  %1297 = vmatpush1.msra.mxu0 0.0
  %1298 = vmatprep.subr.mxu0 0.0
  %1299 = vmatpush1.msra.mxu0 0.0
  %1300 = vmatprep.subr.mxu0 0.0
  %1301 = vmatpush1.msra.mxu0 0.0
  %1302 = vmatprep.subr.mxu0 0.0
  %1303 = vmatpush1.msra.mxu0 0.0
  %1304 = vmatprep.subr.mxu0 0.0
  %1305 = vmatpush1.msra.mxu0 0.0
  %1306 = vmatprep.subr.mxu0 0.0
  %1307 = vmatpush1.msra.mxu0 0.0
  %1308 = vmatprep.subr.mxu0 0.0
  %1309 = vmatpush1.msra.mxu0 0.0
  %1310 = vmatprep.subr.mxu0 0.0
  %1311 = vmatpush1.msra.mxu0 0.0
  %1312 = vmatprep.subr.mxu0 0.0
  %1313 = vmatpush1.msra.mxu0 0.0
  %1314 = vmatprep.subr.mxu0 0.0
  %1315 = vmatpush1.msra.mxu0 0.0
  %1316 = vmatprep.subr.mxu0 0.0
  %1317 = vmatpush1.msra.mxu0 0.0
  %1318 = vmatprep.mubr.f32.mxu0 0.0
  %1319 = vmatmul.mubr.f32.gmra.mrb[0].mxu0 %v1249
  %v1320 = vpop.f32.mrb[0].mxu0
  %v1321 = vadd.f32 0.0, %v1320
  %v1322 = vpop.f32.mrb[0].mxu0
  %1323 = vmatprep.mubr.f32.mxu0 0.0
  %1324 = vmatmul.mubr.f32.gmra.mrb[0].mxu0 %v1252
  %v1325 = vpop.f32.mrb[0].mxu0
  %v1326 = vadd.f32 0.0, %v1325
  %v1327 = vpop.f32.mrb[0].mxu0
  %1328 = vdwg.mxu0
  %v1330 = vsel %vm339, %v590, 0
  %v1333 = vsel %vm339, %v663, 0
  %1335 = vmatprep.subr.mxu0 0.0
  %1336 = vmatpush1.msra.mxu0 %v666
  %1337 = vmatprep.subr.mxu0 0.0
  %1338 = vmatpush1.msra.mxu0 0.0
  %1339 = vmatprep.subr.mxu0 0.0
  %1340 = vmatpush1.msra.mxu0 0.0
  %1341 = vmatprep.subr.mxu0 0.0
  %1342 = vmatpush1.msra.mxu0 0.0
  %1343 = vmatprep.subr.mxu0 0.0
  %1344 = vmatpush1.msra.mxu0 0.0
  %1345 = vmatprep.subr.mxu0 0.0
  %1346 = vmatpush1.msra.mxu0 0.0
  %1347 = vmatprep.subr.mxu0 0.0
  %1348 = vmatpush1.msra.mxu0 0.0
  %1349 = vmatprep.subr.mxu0 0.0
  %1350 = vmatpush1.msra.mxu0 0.0
  %1351 = vmatprep.subr.mxu0 0.0
  %1352 = vmatpush1.msra.mxu0 0.0
  %1353 = vmatprep.subr.mxu0 0.0
  %1354 = vmatpush1.msra.mxu0 0.0
  %1355 = vmatprep.subr.mxu0 0.0
  %1356 = vmatpush1.msra.mxu0 0.0
  %1357 = vmatprep.subr.mxu0 0.0
  %1358 = vmatpush1.msra.mxu0 0.0
  %1359 = vmatprep.subr.mxu0 0.0
  %1360 = vmatpush1.msra.mxu0 0.0
  %1361 = vmatprep.subr.mxu0 0.0
  %1362 = vmatpush1.msra.mxu0 0.0
  %1363 = vmatprep.subr.mxu0 0.0
  %1364 = vmatpush1.msra.mxu0 0.0
  %1365 = vmatprep.subr.mxu0 0.0
  %1366 = vmatpush1.msra.mxu0 0.0
  %1367 = vmatprep.subr.mxu0 0.0
  %1368 = vmatpush1.msra.mxu0 0.0
  %1369 = vmatprep.subr.mxu0 0.0
  %1370 = vmatpush1.msra.mxu0 0.0
  %1371 = vmatprep.subr.mxu0 0.0
  %1372 = vmatpush1.msra.mxu0 0.0
  %1373 = vmatprep.subr.mxu0 0.0
  %1374 = vmatpush1.msra.mxu0 0.0
  %1375 = vmatprep.subr.mxu0 0.0
  %1376 = vmatpush1.msra.mxu0 0.0
  %1377 = vmatprep.subr.mxu0 0.0
  %1378 = vmatpush1.msra.mxu0 0.0
  %1379 = vmatprep.subr.mxu0 0.0
  %1380 = vmatpush1.msra.mxu0 0.0
  %1381 = vmatprep.subr.mxu0 0.0
  %1382 = vmatpush1.msra.mxu0 0.0
  %1383 = vmatprep.subr.mxu0 0.0
  %1384 = vmatpush1.msra.mxu0 0.0
  %1385 = vmatprep.subr.mxu0 0.0
  %1386 = vmatpush1.msra.mxu0 0.0
  %1387 = vmatprep.subr.mxu0 0.0
  %1388 = vmatpush1.msra.mxu0 0.0
  %1389 = vmatprep.subr.mxu0 0.0
  %1390 = vmatpush1.msra.mxu0 0.0
  %1391 = vmatprep.subr.mxu0 0.0
  %1392 = vmatpush1.msra.mxu0 0.0
  %1393 = vmatprep.subr.mxu0 0.0
  %1394 = vmatpush1.msra.mxu0 0.0
  %1395 = vmatprep.subr.mxu0 0.0
  %1396 = vmatpush1.msra.mxu0 0.0
  %1397 = vmatprep.subr.mxu0 0.0
  %1398 = vmatpush1.msra.mxu0 0.0
  %1399 = vmatprep.mubr.f32.mxu0 0.0
  %1400 = vmatmul.mubr.f32.gmra.mrb[0].mxu0 %v1330
  %v1401 = vpop.f32.mrb[0].mxu0
  %v1402 = vadd.f32 %v1321, %v1401
  %v1403 = vpop.f32.mrb[0].mxu0
  %1404 = vmatprep.mubr.f32.mxu0 0.0
  %1405 = vmatmul.mubr.f32.gmra.mrb[0].mxu0 %v1333
  %v1406 = vpop.f32.mrb[0].mxu0
  %v1407 = vadd.f32 %v1326, %v1406
  %v1408 = vpop.f32.mrb[0].mxu0
  %1409 = vdwg.mxu0
  %s1410 = scalar_lea.vmem %s2, 80
  %v1411 = vld [vmem:[%s1410] sm:$0xff]
  %v1412 = vld [vmem:[%s1410 + $0x8] sm:$0xff]
  %v1413 = vld [vmem:[%s1410 + $0x10] sm:$0xff]
  %v1414 = vld [vmem:[%s1410 + $0x18] sm:$0xff]
  %v1415 = vld [vmem:[%s1410 + $0x20] sm:$0x1]
  %v1416 = vlaneseq
  %v1417 = vshrl.u32 %v1416, 7
  %v1418 = vsub.s32 0, %v1417
  %v1419 = vrot.slane %v1415, %v1418
  %1420 = vmatprep.subr.mxu0 0.0
  %1421 = vmatpush1.msra.mxu0 %v1411
  %1422 = vmatprep.subr.mxu0 0.0
  %1423 = vmatpush1.msra.mxu0 %v1412
  %1424 = vmatprep.subr.mxu0 0.0
  %1425 = vmatpush1.msra.mxu0 %v1413
  %1426 = vmatprep.subr.mxu0 0.0
  %1427 = vmatpush1.msra.mxu0 %v1414
  %1428 = vmatprep.subr.mxu0 0.0
  %1429 = vmatpush1.msra.mxu0 0.0
  %1430 = vmatprep.subr.mxu0 0.0
  %1431 = vmatpush1.msra.mxu0 0.0
  %1432 = vmatprep.subr.mxu0 0.0
  %1433 = vmatpush1.msra.mxu0 0.0
  %1434 = vmatprep.subr.mxu0 0.0
  %1435 = vmatpush1.msra.mxu0 0.0
  %1436 = vmatprep.subr.mxu0 0.0
  %1437 = vmatpush1.msra.mxu0 0.0
  %1438 = vmatprep.subr.mxu0 0.0
  %1439 = vmatpush1.msra.mxu0 0.0
  %1440 = vmatprep.subr.mxu0 0.0
  %1441 = vmatpush1.msra.mxu0 0.0
  %1442 = vmatprep.subr.mxu0 0.0
  %1443 = vmatpush1.msra.mxu0 0.0
  %1444 = vmatprep.subr.mxu0 0.0
  %1445 = vmatpush1.msra.mxu0 0.0
  %1446 = vmatprep.subr.mxu0 0.0
  %1447 = vmatpush1.msra.mxu0 0.0
  %1448 = vmatprep.subr.mxu0 0.0
  %1449 = vmatpush1.msra.mxu0 0.0
  %1450 = vmatprep.subr.mxu0 0.0
  %1451 = vmatpush1.msra.mxu0 0.0
  %1452 = vmatprep.subr.mxu0 0.0
  %1453 = vmatpush1.msra.mxu0 0.0
  %1454 = vmatprep.subr.mxu0 0.0
  %1455 = vmatpush1.msra.mxu0 0.0
  %1456 = vmatprep.subr.mxu0 0.0
  %1457 = vmatpush1.msra.mxu0 0.0
  %1458 = vmatprep.subr.mxu0 0.0
  %1459 = vmatpush1.msra.mxu0 0.0
  %1460 = vmatprep.subr.mxu0 0.0
  %1461 = vmatpush1.msra.mxu0 0.0
  %1462 = vmatprep.subr.mxu0 0.0
  %1463 = vmatpush1.msra.mxu0 0.0
  %1464 = vmatprep.subr.mxu0 0.0
  %1465 = vmatpush1.msra.mxu0 0.0
  %1466 = vmatprep.subr.mxu0 0.0
  %1467 = vmatpush1.msra.mxu0 0.0
  %1468 = vmatprep.subr.mxu0 0.0
  %1469 = vmatpush1.msra.mxu0 0.0
  %1470 = vmatprep.subr.mxu0 0.0
  %1471 = vmatpush1.msra.mxu0 0.0
  %1472 = vmatprep.subr.mxu0 0.0
  %1473 = vmatpush1.msra.mxu0 0.0
  %1474 = vmatprep.subr.mxu0 0.0
  %1475 = vmatpush1.msra.mxu0 0.0
  %1476 = vmatprep.subr.mxu0 0.0
  %1477 = vmatpush1.msra.mxu0 0.0
  %1478 = vmatprep.subr.mxu0 0.0
  %1479 = vmatpush1.msra.mxu0 0.0
  %1480 = vmatprep.subr.mxu0 0.0
  %1481 = vmatpush1.msra.mxu0 0.0
  %1482 = vmatprep.subr.mxu0 0.0
  %1483 = vmatpush1.msra.mxu0 0.0
  %1484 = vmatprep.mubr.f32.mxu0 0.0
  %1485 = vmatmul.mubr.f32.gmra.mrb[0].mxu0 %v89
  %v1486 = vpop.f32.mrb[0].mxu0
  %v1487 = vadd.f32 %v1419, %v1486
  %v1488 = vpop.f32.mrb[0].mxu0
  %1489 = vmatprep.mubr.f32.mxu0 0.0
  %1490 = vmatmul.mubr.f32.gmra.mrb[0].mxu0 %v92
  %v1491 = vpop.f32.mrb[0].mxu0
  %v1492 = vadd.f32 %v1419, %v1491
  %v1493 = vpop.f32.mrb[0].mxu0
  %1494 = vdwg.mxu0
  %s1495 = scalar_lea.vmem %s2, 240
  %v1496 = vld [vmem:[%s1495] sm:$0xff]
  %v1497 = vld [vmem:[%s1495 + $0x8] sm:$0xff]
  %v1498 = vld [vmem:[%s1495 + $0x10] sm:$0xff]
  %v1499 = vld [vmem:[%s1495 + $0x18] sm:$0xff]
  %v1500 = vld [vmem:[%s1495 + $0x20] sm:$0x1]
  %v1501 = vlaneseq
  %v1502 = vshrl.u32 %v1501, 7
  %v1503 = vsub.s32 0, %v1502
  %v1504 = vrot.slane %v1500, %v1503
  %1505 = vmatprep.subr.mxu0 0.0
  %1506 = vmatpush1.msra.mxu0 %v1496
  %1507 = vmatprep.subr.mxu0 0.0
  %1508 = vmatpush1.msra.mxu0 %v1497
  %1509 = vmatprep.subr.mxu0 0.0
  %1510 = vmatpush1.msra.mxu0 %v1498
  %1511 = vmatprep.subr.mxu0 0.0
  %1512 = vmatpush1.msra.mxu0 %v1499
  %1513 = vmatprep.subr.mxu0 0.0
  %1514 = vmatpush1.msra.mxu0 0.0
  %1515 = vmatprep.subr.mxu0 0.0
  %1516 = vmatpush1.msra.mxu0 0.0
  %1517 = vmatprep.subr.mxu0 0.0
  %1518 = vmatpush1.msra.mxu0 0.0
  %1519 = vmatprep.subr.mxu0 0.0
  %1520 = vmatpush1.msra.mxu0 0.0
  %1521 = vmatprep.subr.mxu0 0.0
  %1522 = vmatpush1.msra.mxu0 0.0
  %1523 = vmatprep.subr.mxu0 0.0
  %1524 = vmatpush1.msra.mxu0 0.0
  %1525 = vmatprep.subr.mxu0 0.0
  %1526 = vmatpush1.msra.mxu0 0.0
  %1527 = vmatprep.subr.mxu0 0.0
  %1528 = vmatpush1.msra.mxu0 0.0
  %1529 = vmatprep.subr.mxu0 0.0
  %1530 = vmatpush1.msra.mxu0 0.0
  %1531 = vmatprep.subr.mxu0 0.0
  %1532 = vmatpush1.msra.mxu0 0.0
  %1533 = vmatprep.subr.mxu0 0.0
  %1534 = vmatpush1.msra.mxu0 0.0
  %1535 = vmatprep.subr.mxu0 0.0
  %1536 = vmatpush1.msra.mxu0 0.0
  %1537 = vmatprep.subr.mxu0 0.0
  %1538 = vmatpush1.msra.mxu0 0.0
  %1539 = vmatprep.subr.mxu0 0.0
  %1540 = vmatpush1.msra.mxu0 0.0
  %1541 = vmatprep.subr.mxu0 0.0
  %1542 = vmatpush1.msra.mxu0 0.0
  %1543 = vmatprep.subr.mxu0 0.0
  %1544 = vmatpush1.msra.mxu0 0.0
  %1545 = vmatprep.subr.mxu0 0.0
  %1546 = vmatpush1.msra.mxu0 0.0
  %1547 = vmatprep.subr.mxu0 0.0
  %1548 = vmatpush1.msra.mxu0 0.0
  %1549 = vmatprep.subr.mxu0 0.0
  %1550 = vmatpush1.msra.mxu0 0.0
  %1551 = vmatprep.subr.mxu0 0.0
  %1552 = vmatpush1.msra.mxu0 0.0
  %1553 = vmatprep.subr.mxu0 0.0
  %1554 = vmatpush1.msra.mxu0 0.0
  %1555 = vmatprep.subr.mxu0 0.0
  %1556 = vmatpush1.msra.mxu0 0.0
  %1557 = vmatprep.subr.mxu0 0.0
  %1558 = vmatpush1.msra.mxu0 0.0
  %1559 = vmatprep.subr.mxu0 0.0
  %1560 = vmatpush1.msra.mxu0 0.0
  %1561 = vmatprep.subr.mxu0 0.0
  %1562 = vmatpush1.msra.mxu0 0.0
  %1563 = vmatprep.subr.mxu0 0.0
  %1564 = vmatpush1.msra.mxu0 0.0
  %1565 = vmatprep.subr.mxu0 0.0
  %1566 = vmatpush1.msra.mxu0 0.0
  %1567 = vmatprep.subr.mxu0 0.0
  %1568 = vmatpush1.msra.mxu0 0.0
  %1569 = vmatprep.mubr.f32.mxu0 0.0
  %1570 = vmatmul.mubr.f32.gmra.mrb[0].mxu0 %v89
  %v1571 = vpop.f32.mrb[0].mxu0
  %v1572 = vadd.f32 %v1504, %v1571
  %v1573 = vpop.f32.mrb[0].mxu0
  %1574 = vmatprep.mubr.f32.mxu0 0.0
  %1575 = vmatmul.mubr.f32.gmra.mrb[0].mxu0 %v92
  %v1576 = vpop.f32.mrb[0].mxu0
  %v1577 = vadd.f32 %v1504, %v1576
  %v1578 = vpop.f32.mrb[0].mxu0
  %1579 = vdwg.mxu0
  %s1580 = scalar_lea.vmem %s2, 400
  %v1581 = vld [vmem:[%s1580] sm:$0xff]
  %v1582 = vld [vmem:[%s1580 + $0x8] sm:$0xff]
  %v1583 = vld [vmem:[%s1580 + $0x10] sm:$0xff]
  %v1584 = vld [vmem:[%s1580 + $0x18] sm:$0xff]
  %v1585 = vld [vmem:[%s1580 + $0x20] sm:$0x1]
  %v1586 = vlaneseq
  %v1587 = vshrl.u32 %v1586, 7
  %v1588 = vsub.s32 0, %v1587
  %v1589 = vrot.slane %v1585, %v1588
  %1590 = vmatprep.subr.mxu0 0.0
  %1591 = vmatpush1.msra.mxu0 %v1581
  %1592 = vmatprep.subr.mxu0 0.0
  %1593 = vmatpush1.msra.mxu0 %v1582
  %1594 = vmatprep.subr.mxu0 0.0
  %1595 = vmatpush1.msra.mxu0 %v1583
  %1596 = vmatprep.subr.mxu0 0.0
  %1597 = vmatpush1.msra.mxu0 %v1584
  %1598 = vmatprep.subr.mxu0 0.0
  %1599 = vmatpush1.msra.mxu0 0.0
  %1600 = vmatprep.subr.mxu0 0.0
  %1601 = vmatpush1.msra.mxu0 0.0
  %1602 = vmatprep.subr.mxu0 0.0
  %1603 = vmatpush1.msra.mxu0 0.0
  %1604 = vmatprep.subr.mxu0 0.0
  %1605 = vmatpush1.msra.mxu0 0.0
  %1606 = vmatprep.subr.mxu0 0.0
  %1607 = vmatpush1.msra.mxu0 0.0
  %1608 = vmatprep.subr.mxu0 0.0
  %1609 = vmatpush1.msra.mxu0 0.0
  %1610 = vmatprep.subr.mxu0 0.0
  %1611 = vmatpush1.msra.mxu0 0.0
  %1612 = vmatprep.subr.mxu0 0.0
  %1613 = vmatpush1.msra.mxu0 0.0
  %1614 = vmatprep.subr.mxu0 0.0
  %1615 = vmatpush1.msra.mxu0 0.0
  %1616 = vmatprep.subr.mxu0 0.0
  %1617 = vmatpush1.msra.mxu0 0.0
  %1618 = vmatprep.subr.mxu0 0.0
  %1619 = vmatpush1.msra.mxu0 0.0
  %1620 = vmatprep.subr.mxu0 0.0
  %1621 = vmatpush1.msra.mxu0 0.0
  %1622 = vmatprep.subr.mxu0 0.0
  %1623 = vmatpush1.msra.mxu0 0.0
  %1624 = vmatprep.subr.mxu0 0.0
  %1625 = vmatpush1.msra.mxu0 0.0
  %1626 = vmatprep.subr.mxu0 0.0
  %1627 = vmatpush1.msra.mxu0 0.0
  %1628 = vmatprep.subr.mxu0 0.0
  %1629 = vmatpush1.msra.mxu0 0.0
  %1630 = vmatprep.subr.mxu0 0.0
  %1631 = vmatpush1.msra.mxu0 0.0
  %1632 = vmatprep.subr.mxu0 0.0
  %1633 = vmatpush1.msra.mxu0 0.0
  %1634 = vmatprep.subr.mxu0 0.0
  %1635 = vmatpush1.msra.mxu0 0.0
  %1636 = vmatprep.subr.mxu0 0.0
  %1637 = vmatpush1.msra.mxu0 0.0
  %1638 = vmatprep.subr.mxu0 0.0
  %1639 = vmatpush1.msra.mxu0 0.0
  %1640 = vmatprep.subr.mxu0 0.0
  %1641 = vmatpush1.msra.mxu0 0.0
  %1642 = vmatprep.subr.mxu0 0.0
  %1643 = vmatpush1.msra.mxu0 0.0
  %1644 = vmatprep.subr.mxu0 0.0
  %1645 = vmatpush1.msra.mxu0 0.0
  %1646 = vmatprep.subr.mxu0 0.0
  %1647 = vmatpush1.msra.mxu0 0.0
  %1648 = vmatprep.subr.mxu0 0.0
  %1649 = vmatpush1.msra.mxu0 0.0
  %1650 = vmatprep.subr.mxu0 0.0
  %1651 = vmatpush1.msra.mxu0 0.0
  %1652 = vmatprep.subr.mxu0 0.0
  %1653 = vmatpush1.msra.mxu0 0.0
  %1654 = vmatprep.mubr.f32.mxu0 0.0
  %1655 = vmatmul.mubr.f32.gmra.mrb[0].mxu0 %v89
  %v1656 = vpop.f32.mrb[0].mxu0
  %v1657 = vadd.f32 %v1589, %v1656
  %v1658 = vpop.f32.mrb[0].mxu0
  %1659 = vmatprep.mubr.f32.mxu0 0.0
  %1660 = vmatmul.mubr.f32.gmra.mrb[0].mxu0 %v92
  %v1661 = vpop.f32.mrb[0].mxu0
  %v1662 = vadd.f32 %v1589, %v1661
  %v1663 = vpop.f32.mrb[0].mxu0
  %1664 = vdwg.mxu0
  %v1666 = vsel %vm339, %v1487, 0
  %v1669 = vsel %vm339, %v1572, 0
  %1671 = vmatprep.subr.mxu0 0.0
  %1672 = vmatpush1.xpose.msra.mxu0 %v1669
  %1673 = vmatprep.subr.mxu0 0.0
  %1674 = vmatpush1.xpose.msra.mxu0 0.0
  %1675 = vmatprep.subr.mxu0 0.0
  %1676 = vmatpush1.xpose.msra.mxu0 0.0
  %1677 = vmatprep.subr.mxu0 0.0
  %1678 = vmatpush1.xpose.msra.mxu0 0.0
  %1679 = vmatprep.subr.mxu0 0.0
  %1680 = vmatpush1.xpose.msra.mxu0 0.0
  %1681 = vmatprep.subr.mxu0 0.0
  %1682 = vmatpush1.xpose.msra.mxu0 0.0
  %1683 = vmatprep.subr.mxu0 0.0
  %1684 = vmatpush1.xpose.msra.mxu0 0.0
  %1685 = vmatprep.subr.mxu0 0.0
  %1686 = vmatpush1.xpose.msra.mxu0 0.0
  %1687 = vmatprep.subr.mxu0 0.0
  %1688 = vmatpush1.xpose.msra.mxu0 0.0
  %1689 = vmatprep.subr.mxu0 0.0
  %1690 = vmatpush1.xpose.msra.mxu0 0.0
  %1691 = vmatprep.subr.mxu0 0.0
  %1692 = vmatpush1.xpose.msra.mxu0 0.0
  %1693 = vmatprep.subr.mxu0 0.0
  %1694 = vmatpush1.xpose.msra.mxu0 0.0
  %1695 = vmatprep.subr.mxu0 0.0
  %1696 = vmatpush1.xpose.msra.mxu0 0.0
  %1697 = vmatprep.subr.mxu0 0.0
  %1698 = vmatpush1.xpose.msra.mxu0 0.0
  %1699 = vmatprep.subr.mxu0 0.0
  %1700 = vmatpush1.xpose.msra.mxu0 0.0
  %1701 = vmatprep.subr.mxu0 0.0
  %1702 = vmatpush1.xpose.msra.mxu0 0.0
  %1703 = vmatprep.subr.mxu0 0.0
  %1704 = vmatpush1.xpose.msra.mxu0 0.0
  %1705 = vmatprep.subr.mxu0 0.0
  %1706 = vmatpush1.xpose.msra.mxu0 0.0
  %1707 = vmatprep.subr.mxu0 0.0
  %1708 = vmatpush1.xpose.msra.mxu0 0.0
  %1709 = vmatprep.subr.mxu0 0.0
  %1710 = vmatpush1.xpose.msra.mxu0 0.0
  %1711 = vmatprep.subr.mxu0 0.0
  %1712 = vmatpush1.xpose.msra.mxu0 0.0
  %1713 = vmatprep.subr.mxu0 0.0
  %1714 = vmatpush1.xpose.msra.mxu0 0.0
  %1715 = vmatprep.subr.mxu0 0.0
  %1716 = vmatpush1.xpose.msra.mxu0 0.0
  %1717 = vmatprep.subr.mxu0 0.0
  %1718 = vmatpush1.xpose.msra.mxu0 0.0
  %1719 = vmatprep.subr.mxu0 0.0
  %1720 = vmatpush1.xpose.msra.mxu0 0.0
  %1721 = vmatprep.subr.mxu0 0.0
  %1722 = vmatpush1.xpose.msra.mxu0 0.0
  %1723 = vmatprep.subr.mxu0 0.0
  %1724 = vmatpush1.xpose.msra.mxu0 0.0
  %1725 = vmatprep.subr.mxu0 0.0
  %1726 = vmatpush1.xpose.msra.mxu0 0.0
  %1727 = vmatprep.subr.mxu0 0.0
  %1728 = vmatpush1.xpose.msra.mxu0 0.0
  %1729 = vmatprep.subr.mxu0 0.0
  %1730 = vmatpush1.xpose.msra.mxu0 0.0
  %1731 = vmatprep.subr.mxu0 0.0
  %1732 = vmatpush1.xpose.msra.mxu0 0.0
  %1733 = vmatprep.subr.mxu0 0.0
  %1734 = vmatpush1.xpose.msra.mxu0 0.0
  %1735 = vmatprep.mubr.f32.mxu0 0.0
  %1736 = vmatmul.mubr.f32.gmra.mrb[0].mxu0 %v1666
  %v1737 = vpop.f32.mrb[0].mxu0
  %v1738 = vadd.f32 0.0, %v1737
  %v1739 = vpop.f32.mrb[0].mxu0
  %1740 = vdwg.mxu0
  %v1742 = vsel %vm339, %v1492, 0
  %v1745 = vsel %vm339, %v1577, 0
  %1747 = vmatprep.subr.mxu0 0.0
  %1748 = vmatpush1.xpose.msra.mxu0 %v1745
  %1749 = vmatprep.subr.mxu0 0.0
  %1750 = vmatpush1.xpose.msra.mxu0 0.0
  %1751 = vmatprep.subr.mxu0 0.0
  %1752 = vmatpush1.xpose.msra.mxu0 0.0
  %1753 = vmatprep.subr.mxu0 0.0
  %1754 = vmatpush1.xpose.msra.mxu0 0.0
  %1755 = vmatprep.subr.mxu0 0.0
  %1756 = vmatpush1.xpose.msra.mxu0 0.0
  %1757 = vmatprep.subr.mxu0 0.0
  %1758 = vmatpush1.xpose.msra.mxu0 0.0
  %1759 = vmatprep.subr.mxu0 0.0
  %1760 = vmatpush1.xpose.msra.mxu0 0.0
  %1761 = vmatprep.subr.mxu0 0.0
  %1762 = vmatpush1.xpose.msra.mxu0 0.0
  %1763 = vmatprep.subr.mxu0 0.0
  %1764 = vmatpush1.xpose.msra.mxu0 0.0
  %1765 = vmatprep.subr.mxu0 0.0
  %1766 = vmatpush1.xpose.msra.mxu0 0.0
  %1767 = vmatprep.subr.mxu0 0.0
  %1768 = vmatpush1.xpose.msra.mxu0 0.0
  %1769 = vmatprep.subr.mxu0 0.0
  %1770 = vmatpush1.xpose.msra.mxu0 0.0
  %1771 = vmatprep.subr.mxu0 0.0
  %1772 = vmatpush1.xpose.msra.mxu0 0.0
  %1773 = vmatprep.subr.mxu0 0.0
  %1774 = vmatpush1.xpose.msra.mxu0 0.0
  %1775 = vmatprep.subr.mxu0 0.0
  %1776 = vmatpush1.xpose.msra.mxu0 0.0
  %1777 = vmatprep.subr.mxu0 0.0
  %1778 = vmatpush1.xpose.msra.mxu0 0.0
  %1779 = vmatprep.subr.mxu0 0.0
  %1780 = vmatpush1.xpose.msra.mxu0 0.0
  %1781 = vmatprep.subr.mxu0 0.0
  %1782 = vmatpush1.xpose.msra.mxu0 0.0
  %1783 = vmatprep.subr.mxu0 0.0
  %1784 = vmatpush1.xpose.msra.mxu0 0.0
  %1785 = vmatprep.subr.mxu0 0.0
  %1786 = vmatpush1.xpose.msra.mxu0 0.0
  %1787 = vmatprep.subr.mxu0 0.0
  %1788 = vmatpush1.xpose.msra.mxu0 0.0
  %1789 = vmatprep.subr.mxu0 0.0
  %1790 = vmatpush1.xpose.msra.mxu0 0.0
  %1791 = vmatprep.subr.mxu0 0.0
  %1792 = vmatpush1.xpose.msra.mxu0 0.0
  %1793 = vmatprep.subr.mxu0 0.0
  %1794 = vmatpush1.xpose.msra.mxu0 0.0
  %1795 = vmatprep.subr.mxu0 0.0
  %1796 = vmatpush1.xpose.msra.mxu0 0.0
  %1797 = vmatprep.subr.mxu0 0.0
  %1798 = vmatpush1.xpose.msra.mxu0 0.0
  %1799 = vmatprep.subr.mxu0 0.0
  %1800 = vmatpush1.xpose.msra.mxu0 0.0
  %1801 = vmatprep.subr.mxu0 0.0
  %1802 = vmatpush1.xpose.msra.mxu0 0.0
  %1803 = vmatprep.subr.mxu0 0.0
  %1804 = vmatpush1.xpose.msra.mxu0 0.0
  %1805 = vmatprep.subr.mxu0 0.0
  %1806 = vmatpush1.xpose.msra.mxu0 0.0
  %1807 = vmatprep.subr.mxu0 0.0
  %1808 = vmatpush1.xpose.msra.mxu0 0.0
  %1809 = vmatprep.subr.mxu0 0.0
  %1810 = vmatpush1.xpose.msra.mxu0 0.0
  %1811 = vmatprep.mubr.f32.mxu0 0.0
  %1812 = vmatmul.mubr.f32.gmra.mrb[0].mxu0 %v1742
  %v1813 = vpop.f32.mrb[0].mxu0
  %v1814 = vadd.f32 0.0, %v1813
  %v1815 = vpop.f32.mrb[0].mxu0
  %1816 = vdwg.mxu0
  %v1817 = vmul.f32 %v1738, 0.35355338
  %v1818 = vmul.f32 %v1814, 0.35355338
  %v1819 = vsel %vm495, %v1817, -1e+30
  %v1820 = vsel %vm495, %v1818, -1e+30
  %v1821 = vsel %vm339, %v1819, -inf
  %1822 = vmax.xlane.f32.xlu0 %v1821
  %v1823 = vpop.xlane.xlu0 %1822
  %v1824 = vsel %vm339, %v1820, -inf
  %1825 = vmax.xlane.f32.xlu0 %v1824
  %v1826 = vpop.xlane.xlu0 %1825
  %v1827 = vsub.f32 %v1819, %v1823
  %v1828 = vsub.f32 %v1820, %v1826
  %v1829 = vmul.f32 %v1827, 1.442695
  %v1830 = vpow.pop %v1829
  %v1831 = vmul.f32 %v1828, 1.442695
  %v1832 = vpow.pop %v1831
  %v1833 = vsel %vm339, %v1830, 0.0
  %1834 = vadd.xlane.f32.xlu0 %v1833
  %v1835 = vpop.xlane.xlu0 %1834
  %v1836 = vsel %vm339, %v1832, 0.0
  %1837 = vadd.xlane.f32.xlu0 %v1836
  %v1838 = vpop.xlane.xlu0 %1837
  %v1839 = vrcp.pop %v1835
  %v1840 = vrcp.pop %v1838
  %v1841 = vmul.f32 %v1830, %v1839
  %v1842 = vmul.f32 %v1832, %v1840
  %v1844 = vsel %vm339, %v1841, 0
  %1846 = vmatprep.subr.mxu0 0.0
  %1847 = vmatpush1.msra.mxu0 %v1657
  %1848 = vmatprep.subr.mxu0 0.0
  %1849 = vmatpush1.msra.mxu0 0.0
  %1850 = vmatprep.subr.mxu0 0.0
  %1851 = vmatpush1.msra.mxu0 0.0
  %1852 = vmatprep.subr.mxu0 0.0
  %1853 = vmatpush1.msra.mxu0 0.0
  %1854 = vmatprep.subr.mxu0 0.0
  %1855 = vmatpush1.msra.mxu0 0.0
  %1856 = vmatprep.subr.mxu0 0.0
  %1857 = vmatpush1.msra.mxu0 0.0
  %1858 = vmatprep.subr.mxu0 0.0
  %1859 = vmatpush1.msra.mxu0 0.0
  %1860 = vmatprep.subr.mxu0 0.0
  %1861 = vmatpush1.msra.mxu0 0.0
  %1862 = vmatprep.subr.mxu0 0.0
  %1863 = vmatpush1.msra.mxu0 0.0
  %1864 = vmatprep.subr.mxu0 0.0
  %1865 = vmatpush1.msra.mxu0 0.0
  %1866 = vmatprep.subr.mxu0 0.0
  %1867 = vmatpush1.msra.mxu0 0.0
  %1868 = vmatprep.subr.mxu0 0.0
  %1869 = vmatpush1.msra.mxu0 0.0
  %1870 = vmatprep.subr.mxu0 0.0
  %1871 = vmatpush1.msra.mxu0 0.0
  %1872 = vmatprep.subr.mxu0 0.0
  %1873 = vmatpush1.msra.mxu0 0.0
  %1874 = vmatprep.subr.mxu0 0.0
  %1875 = vmatpush1.msra.mxu0 0.0
  %1876 = vmatprep.subr.mxu0 0.0
  %1877 = vmatpush1.msra.mxu0 0.0
  %1878 = vmatprep.subr.mxu0 0.0
  %1879 = vmatpush1.msra.mxu0 0.0
  %1880 = vmatprep.subr.mxu0 0.0
  %1881 = vmatpush1.msra.mxu0 0.0
  %1882 = vmatprep.subr.mxu0 0.0
  %1883 = vmatpush1.msra.mxu0 0.0
  %1884 = vmatprep.subr.mxu0 0.0
  %1885 = vmatpush1.msra.mxu0 0.0
  %1886 = vmatprep.subr.mxu0 0.0
  %1887 = vmatpush1.msra.mxu0 0.0
  %1888 = vmatprep.subr.mxu0 0.0
  %1889 = vmatpush1.msra.mxu0 0.0
  %1890 = vmatprep.subr.mxu0 0.0
  %1891 = vmatpush1.msra.mxu0 0.0
  %1892 = vmatprep.subr.mxu0 0.0
  %1893 = vmatpush1.msra.mxu0 0.0
  %1894 = vmatprep.subr.mxu0 0.0
  %1895 = vmatpush1.msra.mxu0 0.0
  %1896 = vmatprep.subr.mxu0 0.0
  %1897 = vmatpush1.msra.mxu0 0.0
  %1898 = vmatprep.subr.mxu0 0.0
  %1899 = vmatpush1.msra.mxu0 0.0
  %1900 = vmatprep.subr.mxu0 0.0
  %1901 = vmatpush1.msra.mxu0 0.0
  %1902 = vmatprep.subr.mxu0 0.0
  %1903 = vmatpush1.msra.mxu0 0.0
  %1904 = vmatprep.subr.mxu0 0.0
  %1905 = vmatpush1.msra.mxu0 0.0
  %1906 = vmatprep.subr.mxu0 0.0
  %1907 = vmatpush1.msra.mxu0 0.0
  %1908 = vmatprep.subr.mxu0 0.0
  %1909 = vmatpush1.msra.mxu0 0.0
  %1910 = vmatprep.mubr.f32.mxu0 0.0
  %1911 = vmatmul.mubr.f32.gmra.mrb[0].mxu0 %v1844
  %v1912 = vpop.f32.mrb[0].mxu0
  %v1913 = vadd.f32 0.0, %v1912
  %v1914 = vpop.f32.mrb[0].mxu0
  %1915 = vdwg.mxu0
  %v1917 = vsel %vm339, %v1842, 0
  %1919 = vmatprep.subr.mxu0 0.0
  %1920 = vmatpush1.msra.mxu0 %v1662
  %1921 = vmatprep.subr.mxu0 0.0
  %1922 = vmatpush1.msra.mxu0 0.0
  %1923 = vmatprep.subr.mxu0 0.0
  %1924 = vmatpush1.msra.mxu0 0.0
  %1925 = vmatprep.subr.mxu0 0.0
  %1926 = vmatpush1.msra.mxu0 0.0
  %1927 = vmatprep.subr.mxu0 0.0
  %1928 = vmatpush1.msra.mxu0 0.0
  %1929 = vmatprep.subr.mxu0 0.0
  %1930 = vmatpush1.msra.mxu0 0.0
  %1931 = vmatprep.subr.mxu0 0.0
  %1932 = vmatpush1.msra.mxu0 0.0
  %1933 = vmatprep.subr.mxu0 0.0
  %1934 = vmatpush1.msra.mxu0 0.0
  %1935 = vmatprep.subr.mxu0 0.0
  %1936 = vmatpush1.msra.mxu0 0.0
  %1937 = vmatprep.subr.mxu0 0.0
  %1938 = vmatpush1.msra.mxu0 0.0
  %1939 = vmatprep.subr.mxu0 0.0
  %1940 = vmatpush1.msra.mxu0 0.0
  %1941 = vmatprep.subr.mxu0 0.0
  %1942 = vmatpush1.msra.mxu0 0.0
  %1943 = vmatprep.subr.mxu0 0.0
  %1944 = vmatpush1.msra.mxu0 0.0
  %1945 = vmatprep.subr.mxu0 0.0
  %1946 = vmatpush1.msra.mxu0 0.0
  %1947 = vmatprep.subr.mxu0 0.0
  %1948 = vmatpush1.msra.mxu0 0.0
  %1949 = vmatprep.subr.mxu0 0.0
  %1950 = vmatpush1.msra.mxu0 0.0
  %1951 = vmatprep.subr.mxu0 0.0
  %1952 = vmatpush1.msra.mxu0 0.0
  %1953 = vmatprep.subr.mxu0 0.0
  %1954 = vmatpush1.msra.mxu0 0.0
  %1955 = vmatprep.subr.mxu0 0.0
  %1956 = vmatpush1.msra.mxu0 0.0
  %1957 = vmatprep.subr.mxu0 0.0
  %1958 = vmatpush1.msra.mxu0 0.0
  %1959 = vmatprep.subr.mxu0 0.0
  %1960 = vmatpush1.msra.mxu0 0.0
  %1961 = vmatprep.subr.mxu0 0.0
  %1962 = vmatpush1.msra.mxu0 0.0
  %1963 = vmatprep.subr.mxu0 0.0
  %1964 = vmatpush1.msra.mxu0 0.0
  %1965 = vmatprep.subr.mxu0 0.0
  %1966 = vmatpush1.msra.mxu0 0.0
  %1967 = vmatprep.subr.mxu0 0.0
  %1968 = vmatpush1.msra.mxu0 0.0
  %1969 = vmatprep.subr.mxu0 0.0
  %1970 = vmatpush1.msra.mxu0 0.0
  %1971 = vmatprep.subr.mxu0 0.0
  %1972 = vmatpush1.msra.mxu0 0.0
  %1973 = vmatprep.subr.mxu0 0.0
  %1974 = vmatpush1.msra.mxu0 0.0
  %1975 = vmatprep.subr.mxu0 0.0
  %1976 = vmatpush1.msra.mxu0 0.0
  %1977 = vmatprep.subr.mxu0 0.0
  %1978 = vmatpush1.msra.mxu0 0.0
  %1979 = vmatprep.subr.mxu0 0.0
  %1980 = vmatpush1.msra.mxu0 0.0
  %1981 = vmatprep.subr.mxu0 0.0
  %1982 = vmatpush1.msra.mxu0 0.0
  %1983 = vmatprep.mubr.f32.mxu0 0.0
  %1984 = vmatmul.mubr.f32.gmra.mrb[0].mxu0 %v1917
  %v1985 = vpop.f32.mrb[0].mxu0
  %v1986 = vadd.f32 0.0, %v1985
  %v1987 = vpop.f32.mrb[0].mxu0
  %1988 = vdwg.mxu0
  %s1989 = scalar_lea.vmem %s3, 16
  %v1990 = vld [vmem:[%s1989] sm:$0xff]
  %v1992 = vsel %vm339, %v1913, 0
  %v1995 = vsel %vm339, %v1986, 0
  %1997 = vmatprep.subr.mxu0 0.0
  %1998 = vmatpush1.msra.mxu0 %v1990
  %1999 = vmatprep.subr.mxu0 0.0
  %2000 = vmatpush1.msra.mxu0 0.0
  %2001 = vmatprep.subr.mxu0 0.0
  %2002 = vmatpush1.msra.mxu0 0.0
  %2003 = vmatprep.subr.mxu0 0.0
  %2004 = vmatpush1.msra.mxu0 0.0
  %2005 = vmatprep.subr.mxu0 0.0
  %2006 = vmatpush1.msra.mxu0 0.0
  %2007 = vmatprep.subr.mxu0 0.0
  %2008 = vmatpush1.msra.mxu0 0.0
  %2009 = vmatprep.subr.mxu0 0.0
  %2010 = vmatpush1.msra.mxu0 0.0
  %2011 = vmatprep.subr.mxu0 0.0
  %2012 = vmatpush1.msra.mxu0 0.0
  %2013 = vmatprep.subr.mxu0 0.0
  %2014 = vmatpush1.msra.mxu0 0.0
  %2015 = vmatprep.subr.mxu0 0.0
  %2016 = vmatpush1.msra.mxu0 0.0
  %2017 = vmatprep.subr.mxu0 0.0
  %2018 = vmatpush1.msra.mxu0 0.0
  %2019 = vmatprep.subr.mxu0 0.0
  %2020 = vmatpush1.msra.mxu0 0.0
  %2021 = vmatprep.subr.mxu0 0.0
  %2022 = vmatpush1.msra.mxu0 0.0
  %2023 = vmatprep.subr.mxu0 0.0
  %2024 = vmatpush1.msra.mxu0 0.0
  %2025 = vmatprep.subr.mxu0 0.0
  %2026 = vmatpush1.msra.mxu0 0.0
  %2027 = vmatprep.subr.mxu0 0.0
  %2028 = vmatpush1.msra.mxu0 0.0
  %2029 = vmatprep.subr.mxu0 0.0
  %2030 = vmatpush1.msra.mxu0 0.0
  %2031 = vmatprep.subr.mxu0 0.0
  %2032 = vmatpush1.msra.mxu0 0.0
  %2033 = vmatprep.subr.mxu0 0.0
  %2034 = vmatpush1.msra.mxu0 0.0
  %2035 = vmatprep.subr.mxu0 0.0
  %2036 = vmatpush1.msra.mxu0 0.0
  %2037 = vmatprep.subr.mxu0 0.0
  %2038 = vmatpush1.msra.mxu0 0.0
  %2039 = vmatprep.subr.mxu0 0.0
  %2040 = vmatpush1.msra.mxu0 0.0
  %2041 = vmatprep.subr.mxu0 0.0
  %2042 = vmatpush1.msra.mxu0 0.0
  %2043 = vmatprep.subr.mxu0 0.0
  %2044 = vmatpush1.msra.mxu0 0.0
  %2045 = vmatprep.subr.mxu0 0.0
  %2046 = vmatpush1.msra.mxu0 0.0
  %2047 = vmatprep.subr.mxu0 0.0
  %2048 = vmatpush1.msra.mxu0 0.0
  %2049 = vmatprep.subr.mxu0 0.0
  %2050 = vmatpush1.msra.mxu0 0.0
  %2051 = vmatprep.subr.mxu0 0.0
  %2052 = vmatpush1.msra.mxu0 0.0
  %2053 = vmatprep.subr.mxu0 0.0
  %2054 = vmatpush1.msra.mxu0 0.0
  %2055 = vmatprep.subr.mxu0 0.0
  %2056 = vmatpush1.msra.mxu0 0.0
  %2057 = vmatprep.subr.mxu0 0.0
  %2058 = vmatpush1.msra.mxu0 0.0
  %2059 = vmatprep.subr.mxu0 0.0
  %2060 = vmatpush1.msra.mxu0 0.0
  %2061 = vmatprep.mubr.f32.mxu0 0.0
  %2062 = vmatmul.mubr.f32.gmra.mrb[0].mxu0 %v1992
  %v2063 = vpop.f32.mrb[0].mxu0
  %v2064 = vadd.f32 0.0, %v2063
  %v2065 = vpop.f32.mrb[0].mxu0
  %2066 = vmatprep.mubr.f32.mxu0 0.0
  %2067 = vmatmul.mubr.f32.gmra.mrb[0].mxu0 %v1995
  %v2068 = vpop.f32.mrb[0].mxu0
  %v2069 = vadd.f32 0.0, %v2068
  %v2070 = vpop.f32.mrb[0].mxu0
  %2071 = vdwg.mxu0
  %v2072 = vadd.f32 %v1402, %v2064
  %v2073 = vadd.f32 %v1407, %v2069
  %s2074 = scalar_lea.vmem %s2, 120
  %v2075 = vld [vmem:[%s2074] sm:$0xff]
  %v2076 = vld [vmem:[%s2074 + $0x8] sm:$0xff]
  %v2077 = vld [vmem:[%s2074 + $0x10] sm:$0xff]
  %v2078 = vld [vmem:[%s2074 + $0x18] sm:$0xff]
  %v2079 = vld [vmem:[%s2074 + $0x20] sm:$0x1]
  %v2080 = vlaneseq
  %v2081 = vshrl.u32 %v2080, 7
  %v2082 = vsub.s32 0, %v2081
  %v2083 = vrot.slane %v2079, %v2082
  %2084 = vmatprep.subr.mxu0 0.0
  %2085 = vmatpush1.msra.mxu0 %v2075
  %2086 = vmatprep.subr.mxu0 0.0
  %2087 = vmatpush1.msra.mxu0 %v2076
  %2088 = vmatprep.subr.mxu0 0.0
  %2089 = vmatpush1.msra.mxu0 %v2077
  %2090 = vmatprep.subr.mxu0 0.0
  %2091 = vmatpush1.msra.mxu0 %v2078
  %2092 = vmatprep.subr.mxu0 0.0
  %2093 = vmatpush1.msra.mxu0 0.0
  %2094 = vmatprep.subr.mxu0 0.0
  %2095 = vmatpush1.msra.mxu0 0.0
  %2096 = vmatprep.subr.mxu0 0.0
  %2097 = vmatpush1.msra.mxu0 0.0
  %2098 = vmatprep.subr.mxu0 0.0
  %2099 = vmatpush1.msra.mxu0 0.0
  %2100 = vmatprep.subr.mxu0 0.0
  %2101 = vmatpush1.msra.mxu0 0.0
  %2102 = vmatprep.subr.mxu0 0.0
  %2103 = vmatpush1.msra.mxu0 0.0
  %2104 = vmatprep.subr.mxu0 0.0
  %2105 = vmatpush1.msra.mxu0 0.0
  %2106 = vmatprep.subr.mxu0 0.0
  %2107 = vmatpush1.msra.mxu0 0.0
  %2108 = vmatprep.subr.mxu0 0.0
  %2109 = vmatpush1.msra.mxu0 0.0
  %2110 = vmatprep.subr.mxu0 0.0
  %2111 = vmatpush1.msra.mxu0 0.0
  %2112 = vmatprep.subr.mxu0 0.0
  %2113 = vmatpush1.msra.mxu0 0.0
  %2114 = vmatprep.subr.mxu0 0.0
  %2115 = vmatpush1.msra.mxu0 0.0
  %2116 = vmatprep.subr.mxu0 0.0
  %2117 = vmatpush1.msra.mxu0 0.0
  %2118 = vmatprep.subr.mxu0 0.0
  %2119 = vmatpush1.msra.mxu0 0.0
  %2120 = vmatprep.subr.mxu0 0.0
  %2121 = vmatpush1.msra.mxu0 0.0
  %2122 = vmatprep.subr.mxu0 0.0
  %2123 = vmatpush1.msra.mxu0 0.0
  %2124 = vmatprep.subr.mxu0 0.0
  %2125 = vmatpush1.msra.mxu0 0.0
  %2126 = vmatprep.subr.mxu0 0.0
  %2127 = vmatpush1.msra.mxu0 0.0
  %2128 = vmatprep.subr.mxu0 0.0
  %2129 = vmatpush1.msra.mxu0 0.0
  %2130 = vmatprep.subr.mxu0 0.0
  %2131 = vmatpush1.msra.mxu0 0.0
  %2132 = vmatprep.subr.mxu0 0.0
  %2133 = vmatpush1.msra.mxu0 0.0
  %2134 = vmatprep.subr.mxu0 0.0
  %2135 = vmatpush1.msra.mxu0 0.0
  %2136 = vmatprep.subr.mxu0 0.0
  %2137 = vmatpush1.msra.mxu0 0.0
  %2138 = vmatprep.subr.mxu0 0.0
  %2139 = vmatpush1.msra.mxu0 0.0
  %2140 = vmatprep.subr.mxu0 0.0
  %2141 = vmatpush1.msra.mxu0 0.0
  %2142 = vmatprep.subr.mxu0 0.0
  %2143 = vmatpush1.msra.mxu0 0.0
  %2144 = vmatprep.subr.mxu0 0.0
  %2145 = vmatpush1.msra.mxu0 0.0
  %2146 = vmatprep.subr.mxu0 0.0
  %2147 = vmatpush1.msra.mxu0 0.0
  %2148 = vmatprep.mubr.f32.mxu0 0.0
  %2149 = vmatmul.mubr.f32.gmra.mrb[0].mxu0 %v89
  %v2150 = vpop.f32.mrb[0].mxu0
  %v2151 = vadd.f32 %v2083, %v2150
  %v2152 = vpop.f32.mrb[0].mxu0
  %2153 = vmatprep.mubr.f32.mxu0 0.0
  %2154 = vmatmul.mubr.f32.gmra.mrb[0].mxu0 %v92
  %v2155 = vpop.f32.mrb[0].mxu0
  %v2156 = vadd.f32 %v2083, %v2155
  %v2157 = vpop.f32.mrb[0].mxu0
  %2158 = vdwg.mxu0
  %s2159 = scalar_lea.vmem %s2, 280
  %v2160 = vld [vmem:[%s2159] sm:$0xff]
  %v2161 = vld [vmem:[%s2159 + $0x8] sm:$0xff]
  %v2162 = vld [vmem:[%s2159 + $0x10] sm:$0xff]
  %v2163 = vld [vmem:[%s2159 + $0x18] sm:$0xff]
  %v2164 = vld [vmem:[%s2159 + $0x20] sm:$0x1]
  %v2165 = vlaneseq
  %v2166 = vshrl.u32 %v2165, 7
  %v2167 = vsub.s32 0, %v2166
  %v2168 = vrot.slane %v2164, %v2167
  %2169 = vmatprep.subr.mxu0 0.0
  %2170 = vmatpush1.msra.mxu0 %v2160
  %2171 = vmatprep.subr.mxu0 0.0
  %2172 = vmatpush1.msra.mxu0 %v2161
  %2173 = vmatprep.subr.mxu0 0.0
  %2174 = vmatpush1.msra.mxu0 %v2162
  %2175 = vmatprep.subr.mxu0 0.0
  %2176 = vmatpush1.msra.mxu0 %v2163
  %2177 = vmatprep.subr.mxu0 0.0
  %2178 = vmatpush1.msra.mxu0 0.0
  %2179 = vmatprep.subr.mxu0 0.0
  %2180 = vmatpush1.msra.mxu0 0.0
  %2181 = vmatprep.subr.mxu0 0.0
  %2182 = vmatpush1.msra.mxu0 0.0
  %2183 = vmatprep.subr.mxu0 0.0
  %2184 = vmatpush1.msra.mxu0 0.0
  %2185 = vmatprep.subr.mxu0 0.0
  %2186 = vmatpush1.msra.mxu0 0.0
  %2187 = vmatprep.subr.mxu0 0.0
  %2188 = vmatpush1.msra.mxu0 0.0
  %2189 = vmatprep.subr.mxu0 0.0
  %2190 = vmatpush1.msra.mxu0 0.0
  %2191 = vmatprep.subr.mxu0 0.0
  %2192 = vmatpush1.msra.mxu0 0.0
  %2193 = vmatprep.subr.mxu0 0.0
  %2194 = vmatpush1.msra.mxu0 0.0
  %2195 = vmatprep.subr.mxu0 0.0
  %2196 = vmatpush1.msra.mxu0 0.0
  %2197 = vmatprep.subr.mxu0 0.0
  %2198 = vmatpush1.msra.mxu0 0.0
  %2199 = vmatprep.subr.mxu0 0.0
  %2200 = vmatpush1.msra.mxu0 0.0
  %2201 = vmatprep.subr.mxu0 0.0
  %2202 = vmatpush1.msra.mxu0 0.0
  %2203 = vmatprep.subr.mxu0 0.0
  %2204 = vmatpush1.msra.mxu0 0.0
  %2205 = vmatprep.subr.mxu0 0.0
  %2206 = vmatpush1.msra.mxu0 0.0
  %2207 = vmatprep.subr.mxu0 0.0
  %2208 = vmatpush1.msra.mxu0 0.0
  %2209 = vmatprep.subr.mxu0 0.0
  %2210 = vmatpush1.msra.mxu0 0.0
  %2211 = vmatprep.subr.mxu0 0.0
  %2212 = vmatpush1.msra.mxu0 0.0
  %2213 = vmatprep.subr.mxu0 0.0
  %2214 = vmatpush1.msra.mxu0 0.0
  %2215 = vmatprep.subr.mxu0 0.0
  %2216 = vmatpush1.msra.mxu0 0.0
  %2217 = vmatprep.subr.mxu0 0.0
  %2218 = vmatpush1.msra.mxu0 0.0
  %2219 = vmatprep.subr.mxu0 0.0
  %2220 = vmatpush1.msra.mxu0 0.0
  %2221 = vmatprep.subr.mxu0 0.0
  %2222 = vmatpush1.msra.mxu0 0.0
  %2223 = vmatprep.subr.mxu0 0.0
  %2224 = vmatpush1.msra.mxu0 0.0
  %2225 = vmatprep.subr.mxu0 0.0
  %2226 = vmatpush1.msra.mxu0 0.0
  %2227 = vmatprep.subr.mxu0 0.0
  %2228 = vmatpush1.msra.mxu0 0.0
  %2229 = vmatprep.subr.mxu0 0.0
  %2230 = vmatpush1.msra.mxu0 0.0
  %2231 = vmatprep.subr.mxu0 0.0
  %2232 = vmatpush1.msra.mxu0 0.0
  %2233 = vmatprep.mubr.f32.mxu0 0.0
  %2234 = vmatmul.mubr.f32.gmra.mrb[0].mxu0 %v89
  %v2235 = vpop.f32.mrb[0].mxu0
  %v2236 = vadd.f32 %v2168, %v2235
  %v2237 = vpop.f32.mrb[0].mxu0
  %2238 = vmatprep.mubr.f32.mxu0 0.0
  %2239 = vmatmul.mubr.f32.gmra.mrb[0].mxu0 %v92
  %v2240 = vpop.f32.mrb[0].mxu0
  %v2241 = vadd.f32 %v2168, %v2240
  %v2242 = vpop.f32.mrb[0].mxu0
  %2243 = vdwg.mxu0
  %s2244 = scalar_lea.vmem %s2, 440
  %v2245 = vld [vmem:[%s2244] sm:$0xff]
  %v2246 = vld [vmem:[%s2244 + $0x8] sm:$0xff]
  %v2247 = vld [vmem:[%s2244 + $0x10] sm:$0xff]
  %v2248 = vld [vmem:[%s2244 + $0x18] sm:$0xff]
  %v2249 = vld [vmem:[%s2244 + $0x20] sm:$0x1]
  %v2250 = vlaneseq
  %v2251 = vshrl.u32 %v2250, 7
  %v2252 = vsub.s32 0, %v2251
  %v2253 = vrot.slane %v2249, %v2252
  %2254 = vmatprep.subr.mxu0 0.0
  %2255 = vmatpush1.msra.mxu0 %v2245
  %2256 = vmatprep.subr.mxu0 0.0
  %2257 = vmatpush1.msra.mxu0 %v2246
  %2258 = vmatprep.subr.mxu0 0.0
  %2259 = vmatpush1.msra.mxu0 %v2247
  %2260 = vmatprep.subr.mxu0 0.0
  %2261 = vmatpush1.msra.mxu0 %v2248
  %2262 = vmatprep.subr.mxu0 0.0
  %2263 = vmatpush1.msra.mxu0 0.0
  %2264 = vmatprep.subr.mxu0 0.0
  %2265 = vmatpush1.msra.mxu0 0.0
  %2266 = vmatprep.subr.mxu0 0.0
  %2267 = vmatpush1.msra.mxu0 0.0
  %2268 = vmatprep.subr.mxu0 0.0
  %2269 = vmatpush1.msra.mxu0 0.0
  %2270 = vmatprep.subr.mxu0 0.0
  %2271 = vmatpush1.msra.mxu0 0.0
  %2272 = vmatprep.subr.mxu0 0.0
  %2273 = vmatpush1.msra.mxu0 0.0
  %2274 = vmatprep.subr.mxu0 0.0
  %2275 = vmatpush1.msra.mxu0 0.0
  %2276 = vmatprep.subr.mxu0 0.0
  %2277 = vmatpush1.msra.mxu0 0.0
  %2278 = vmatprep.subr.mxu0 0.0
  %2279 = vmatpush1.msra.mxu0 0.0
  %2280 = vmatprep.subr.mxu0 0.0
  %2281 = vmatpush1.msra.mxu0 0.0
  %2282 = vmatprep.subr.mxu0 0.0
  %2283 = vmatpush1.msra.mxu0 0.0
  %2284 = vmatprep.subr.mxu0 0.0
  %2285 = vmatpush1.msra.mxu0 0.0
  %2286 = vmatprep.subr.mxu0 0.0
  %2287 = vmatpush1.msra.mxu0 0.0
  %2288 = vmatprep.subr.mxu0 0.0
  %2289 = vmatpush1.msra.mxu0 0.0
  %2290 = vmatprep.subr.mxu0 0.0
  %2291 = vmatpush1.msra.mxu0 0.0
  %2292 = vmatprep.subr.mxu0 0.0
  %2293 = vmatpush1.msra.mxu0 0.0
  %2294 = vmatprep.subr.mxu0 0.0
  %2295 = vmatpush1.msra.mxu0 0.0
  %2296 = vmatprep.subr.mxu0 0.0
  %2297 = vmatpush1.msra.mxu0 0.0
  %2298 = vmatprep.subr.mxu0 0.0
  %2299 = vmatpush1.msra.mxu0 0.0
  %2300 = vmatprep.subr.mxu0 0.0
  %2301 = vmatpush1.msra.mxu0 0.0
  %2302 = vmatprep.subr.mxu0 0.0
  %2303 = vmatpush1.msra.mxu0 0.0
  %2304 = vmatprep.subr.mxu0 0.0
  %2305 = vmatpush1.msra.mxu0 0.0
  %2306 = vmatprep.subr.mxu0 0.0
  %2307 = vmatpush1.msra.mxu0 0.0
  %2308 = vmatprep.subr.mxu0 0.0
  %2309 = vmatpush1.msra.mxu0 0.0
  %2310 = vmatprep.subr.mxu0 0.0
  %2311 = vmatpush1.msra.mxu0 0.0
  %2312 = vmatprep.subr.mxu0 0.0
  %2313 = vmatpush1.msra.mxu0 0.0
  %2314 = vmatprep.subr.mxu0 0.0
  %2315 = vmatpush1.msra.mxu0 0.0
  %2316 = vmatprep.subr.mxu0 0.0
  %2317 = vmatpush1.msra.mxu0 0.0
  %2318 = vmatprep.mubr.f32.mxu0 0.0
  %2319 = vmatmul.mubr.f32.gmra.mrb[0].mxu0 %v89
  %v2320 = vpop.f32.mrb[0].mxu0
  %v2321 = vadd.f32 %v2253, %v2320
  %v2322 = vpop.f32.mrb[0].mxu0
  %2323 = vmatprep.mubr.f32.mxu0 0.0
  %2324 = vmatmul.mubr.f32.gmra.mrb[0].mxu0 %v92
  %v2325 = vpop.f32.mrb[0].mxu0
  %v2326 = vadd.f32 %v2253, %v2325
  %v2327 = vpop.f32.mrb[0].mxu0
  %2328 = vdwg.mxu0
  %v2330 = vsel %vm339, %v2151, 0
  %v2333 = vsel %vm339, %v2236, 0
  %2335 = vmatprep.subr.mxu0 0.0
  %2336 = vmatpush1.xpose.msra.mxu0 %v2333
  %2337 = vmatprep.subr.mxu0 0.0
  %2338 = vmatpush1.xpose.msra.mxu0 0.0
  %2339 = vmatprep.subr.mxu0 0.0
  %2340 = vmatpush1.xpose.msra.mxu0 0.0
  %2341 = vmatprep.subr.mxu0 0.0
  %2342 = vmatpush1.xpose.msra.mxu0 0.0
  %2343 = vmatprep.subr.mxu0 0.0
  %2344 = vmatpush1.xpose.msra.mxu0 0.0
  %2345 = vmatprep.subr.mxu0 0.0
  %2346 = vmatpush1.xpose.msra.mxu0 0.0
  %2347 = vmatprep.subr.mxu0 0.0
  %2348 = vmatpush1.xpose.msra.mxu0 0.0
  %2349 = vmatprep.subr.mxu0 0.0
  %2350 = vmatpush1.xpose.msra.mxu0 0.0
  %2351 = vmatprep.subr.mxu0 0.0
  %2352 = vmatpush1.xpose.msra.mxu0 0.0
  %2353 = vmatprep.subr.mxu0 0.0
  %2354 = vmatpush1.xpose.msra.mxu0 0.0
  %2355 = vmatprep.subr.mxu0 0.0
  %2356 = vmatpush1.xpose.msra.mxu0 0.0
  %2357 = vmatprep.subr.mxu0 0.0
  %2358 = vmatpush1.xpose.msra.mxu0 0.0
  %2359 = vmatprep.subr.mxu0 0.0
  %2360 = vmatpush1.xpose.msra.mxu0 0.0
  %2361 = vmatprep.subr.mxu0 0.0
  %2362 = vmatpush1.xpose.msra.mxu0 0.0
  %2363 = vmatprep.subr.mxu0 0.0
  %2364 = vmatpush1.xpose.msra.mxu0 0.0
  %2365 = vmatprep.subr.mxu0 0.0
  %2366 = vmatpush1.xpose.msra.mxu0 0.0
  %2367 = vmatprep.subr.mxu0 0.0
  %2368 = vmatpush1.xpose.msra.mxu0 0.0
  %2369 = vmatprep.subr.mxu0 0.0
  %2370 = vmatpush1.xpose.msra.mxu0 0.0
  %2371 = vmatprep.subr.mxu0 0.0
  %2372 = vmatpush1.xpose.msra.mxu0 0.0
  %2373 = vmatprep.subr.mxu0 0.0
  %2374 = vmatpush1.xpose.msra.mxu0 0.0
  %2375 = vmatprep.subr.mxu0 0.0
  %2376 = vmatpush1.xpose.msra.mxu0 0.0
  %2377 = vmatprep.subr.mxu0 0.0
  %2378 = vmatpush1.xpose.msra.mxu0 0.0
  %2379 = vmatprep.subr.mxu0 0.0
  %2380 = vmatpush1.xpose.msra.mxu0 0.0
  %2381 = vmatprep.subr.mxu0 0.0
  %2382 = vmatpush1.xpose.msra.mxu0 0.0
  %2383 = vmatprep.subr.mxu0 0.0
  %2384 = vmatpush1.xpose.msra.mxu0 0.0
  %2385 = vmatprep.subr.mxu0 0.0
  %2386 = vmatpush1.xpose.msra.mxu0 0.0
  %2387 = vmatprep.subr.mxu0 0.0
  %2388 = vmatpush1.xpose.msra.mxu0 0.0
  %2389 = vmatprep.subr.mxu0 0.0
  %2390 = vmatpush1.xpose.msra.mxu0 0.0
  %2391 = vmatprep.subr.mxu0 0.0
  %2392 = vmatpush1.xpose.msra.mxu0 0.0
  %2393 = vmatprep.subr.mxu0 0.0
  %2394 = vmatpush1.xpose.msra.mxu0 0.0
  %2395 = vmatprep.subr.mxu0 0.0
  %2396 = vmatpush1.xpose.msra.mxu0 0.0
  %2397 = vmatprep.subr.mxu0 0.0
  %2398 = vmatpush1.xpose.msra.mxu0 0.0
  %2399 = vmatprep.mubr.f32.mxu0 0.0
  %2400 = vmatmul.mubr.f32.gmra.mrb[0].mxu0 %v2330
  %v2401 = vpop.f32.mrb[0].mxu0
  %v2402 = vadd.f32 0.0, %v2401
  %v2403 = vpop.f32.mrb[0].mxu0
  %2404 = vdwg.mxu0
  %v2406 = vsel %vm339, %v2156, 0
  %v2409 = vsel %vm339, %v2241, 0
  %2411 = vmatprep.subr.mxu0 0.0
  %2412 = vmatpush1.xpose.msra.mxu0 %v2409
  %2413 = vmatprep.subr.mxu0 0.0
  %2414 = vmatpush1.xpose.msra.mxu0 0.0
  %2415 = vmatprep.subr.mxu0 0.0
  %2416 = vmatpush1.xpose.msra.mxu0 0.0
  %2417 = vmatprep.subr.mxu0 0.0
  %2418 = vmatpush1.xpose.msra.mxu0 0.0
  %2419 = vmatprep.subr.mxu0 0.0
  %2420 = vmatpush1.xpose.msra.mxu0 0.0
  %2421 = vmatprep.subr.mxu0 0.0
  %2422 = vmatpush1.xpose.msra.mxu0 0.0
  %2423 = vmatprep.subr.mxu0 0.0
  %2424 = vmatpush1.xpose.msra.mxu0 0.0
  %2425 = vmatprep.subr.mxu0 0.0
  %2426 = vmatpush1.xpose.msra.mxu0 0.0
  %2427 = vmatprep.subr.mxu0 0.0
  %2428 = vmatpush1.xpose.msra.mxu0 0.0
  %2429 = vmatprep.subr.mxu0 0.0
  %2430 = vmatpush1.xpose.msra.mxu0 0.0
  %2431 = vmatprep.subr.mxu0 0.0
  %2432 = vmatpush1.xpose.msra.mxu0 0.0
  %2433 = vmatprep.subr.mxu0 0.0
  %2434 = vmatpush1.xpose.msra.mxu0 0.0
  %2435 = vmatprep.subr.mxu0 0.0
  %2436 = vmatpush1.xpose.msra.mxu0 0.0
  %2437 = vmatprep.subr.mxu0 0.0
  %2438 = vmatpush1.xpose.msra.mxu0 0.0
  %2439 = vmatprep.subr.mxu0 0.0
  %2440 = vmatpush1.xpose.msra.mxu0 0.0
  %2441 = vmatprep.subr.mxu0 0.0
  %2442 = vmatpush1.xpose.msra.mxu0 0.0
  %2443 = vmatprep.subr.mxu0 0.0
  %2444 = vmatpush1.xpose.msra.mxu0 0.0
  %2445 = vmatprep.subr.mxu0 0.0
  %2446 = vmatpush1.xpose.msra.mxu0 0.0
  %2447 = vmatprep.subr.mxu0 0.0
  %2448 = vmatpush1.xpose.msra.mxu0 0.0
  %2449 = vmatprep.subr.mxu0 0.0
  %2450 = vmatpush1.xpose.msra.mxu0 0.0
  %2451 = vmatprep.subr.mxu0 0.0
  %2452 = vmatpush1.xpose.msra.mxu0 0.0
  %2453 = vmatprep.subr.mxu0 0.0
  %2454 = vmatpush1.xpose.msra.mxu0 0.0
  %2455 = vmatprep.subr.mxu0 0.0
  %2456 = vmatpush1.xpose.msra.mxu0 0.0
  %2457 = vmatprep.subr.mxu0 0.0
  %2458 = vmatpush1.xpose.msra.mxu0 0.0
  %2459 = vmatprep.subr.mxu0 0.0
  %2460 = vmatpush1.xpose.msra.mxu0 0.0
  %2461 = vmatprep.subr.mxu0 0.0
  %2462 = vmatpush1.xpose.msra.mxu0 0.0
  %2463 = vmatprep.subr.mxu0 0.0
  %2464 = vmatpush1.xpose.msra.mxu0 0.0
  %2465 = vmatprep.subr.mxu0 0.0
  %2466 = vmatpush1.xpose.msra.mxu0 0.0
  %2467 = vmatprep.subr.mxu0 0.0
  %2468 = vmatpush1.xpose.msra.mxu0 0.0
  %2469 = vmatprep.subr.mxu0 0.0
  %2470 = vmatpush1.xpose.msra.mxu0 0.0
  %2471 = vmatprep.subr.mxu0 0.0
  %2472 = vmatpush1.xpose.msra.mxu0 0.0
  %2473 = vmatprep.subr.mxu0 0.0
  %2474 = vmatpush1.xpose.msra.mxu0 0.0
  %2475 = vmatprep.mubr.f32.mxu0 0.0
  %2476 = vmatmul.mubr.f32.gmra.mrb[0].mxu0 %v2406
  %v2477 = vpop.f32.mrb[0].mxu0
  %v2478 = vadd.f32 0.0, %v2477
  %v2479 = vpop.f32.mrb[0].mxu0
  %2480 = vdwg.mxu0
  %v2481 = vmul.f32 %v2402, 0.35355338
  %v2482 = vmul.f32 %v2478, 0.35355338
  %v2483 = vsel %vm495, %v2481, -1e+30
  %v2484 = vsel %vm495, %v2482, -1e+30
  %v2485 = vsel %vm339, %v2483, -inf
  %2486 = vmax.xlane.f32.xlu0 %v2485
  %v2487 = vpop.xlane.xlu0 %2486
  %v2488 = vsel %vm339, %v2484, -inf
  %2489 = vmax.xlane.f32.xlu0 %v2488
  %v2490 = vpop.xlane.xlu0 %2489
  %v2491 = vsub.f32 %v2483, %v2487
  %v2492 = vsub.f32 %v2484, %v2490
  %v2493 = vmul.f32 %v2491, 1.442695
  %v2494 = vpow.pop %v2493
  %v2495 = vmul.f32 %v2492, 1.442695
  %v2496 = vpow.pop %v2495
  %v2497 = vsel %vm339, %v2494, 0.0
  %2498 = vadd.xlane.f32.xlu0 %v2497
  %v2499 = vpop.xlane.xlu0 %2498
  %v2500 = vsel %vm339, %v2496, 0.0
  %2501 = vadd.xlane.f32.xlu0 %v2500
  %v2502 = vpop.xlane.xlu0 %2501
  %v2503 = vrcp.pop %v2499
  %v2504 = vrcp.pop %v2502
  %v2505 = vmul.f32 %v2494, %v2503
  %v2506 = vmul.f32 %v2496, %v2504
  %v2508 = vsel %vm339, %v2505, 0
  %2510 = vmatprep.subr.mxu0 0.0
  %2511 = vmatpush1.msra.mxu0 %v2321
  %2512 = vmatprep.subr.mxu0 0.0
  %2513 = vmatpush1.msra.mxu0 0.0
  %2514 = vmatprep.subr.mxu0 0.0
  %2515 = vmatpush1.msra.mxu0 0.0
  %2516 = vmatprep.subr.mxu0 0.0
  %2517 = vmatpush1.msra.mxu0 0.0
  %2518 = vmatprep.subr.mxu0 0.0
  %2519 = vmatpush1.msra.mxu0 0.0
  %2520 = vmatprep.subr.mxu0 0.0
  %2521 = vmatpush1.msra.mxu0 0.0
  %2522 = vmatprep.subr.mxu0 0.0
  %2523 = vmatpush1.msra.mxu0 0.0
  %2524 = vmatprep.subr.mxu0 0.0
  %2525 = vmatpush1.msra.mxu0 0.0
  %2526 = vmatprep.subr.mxu0 0.0
  %2527 = vmatpush1.msra.mxu0 0.0
  %2528 = vmatprep.subr.mxu0 0.0
  %2529 = vmatpush1.msra.mxu0 0.0
  %2530 = vmatprep.subr.mxu0 0.0
  %2531 = vmatpush1.msra.mxu0 0.0
  %2532 = vmatprep.subr.mxu0 0.0
  %2533 = vmatpush1.msra.mxu0 0.0
  %2534 = vmatprep.subr.mxu0 0.0
  %2535 = vmatpush1.msra.mxu0 0.0
  %2536 = vmatprep.subr.mxu0 0.0
  %2537 = vmatpush1.msra.mxu0 0.0
  %2538 = vmatprep.subr.mxu0 0.0
  %2539 = vmatpush1.msra.mxu0 0.0
  %2540 = vmatprep.subr.mxu0 0.0
  %2541 = vmatpush1.msra.mxu0 0.0
  %2542 = vmatprep.subr.mxu0 0.0
  %2543 = vmatpush1.msra.mxu0 0.0
  %2544 = vmatprep.subr.mxu0 0.0
  %2545 = vmatpush1.msra.mxu0 0.0
  %2546 = vmatprep.subr.mxu0 0.0
  %2547 = vmatpush1.msra.mxu0 0.0
  %2548 = vmatprep.subr.mxu0 0.0
  %2549 = vmatpush1.msra.mxu0 0.0
  %2550 = vmatprep.subr.mxu0 0.0
  %2551 = vmatpush1.msra.mxu0 0.0
  %2552 = vmatprep.subr.mxu0 0.0
  %2553 = vmatpush1.msra.mxu0 0.0
  %2554 = vmatprep.subr.mxu0 0.0
  %2555 = vmatpush1.msra.mxu0 0.0
  %2556 = vmatprep.subr.mxu0 0.0
  %2557 = vmatpush1.msra.mxu0 0.0
  %2558 = vmatprep.subr.mxu0 0.0
  %2559 = vmatpush1.msra.mxu0 0.0
  %2560 = vmatprep.subr.mxu0 0.0
  %2561 = vmatpush1.msra.mxu0 0.0
  %2562 = vmatprep.subr.mxu0 0.0
  %2563 = vmatpush1.msra.mxu0 0.0
  %2564 = vmatprep.subr.mxu0 0.0
  %2565 = vmatpush1.msra.mxu0 0.0
  %2566 = vmatprep.subr.mxu0 0.0
  %2567 = vmatpush1.msra.mxu0 0.0
  %2568 = vmatprep.subr.mxu0 0.0
  %2569 = vmatpush1.msra.mxu0 0.0
  %2570 = vmatprep.subr.mxu0 0.0
  %2571 = vmatpush1.msra.mxu0 0.0
  %2572 = vmatprep.subr.mxu0 0.0
  %2573 = vmatpush1.msra.mxu0 0.0
  %2574 = vmatprep.mubr.f32.mxu0 0.0
  %2575 = vmatmul.mubr.f32.gmra.mrb[0].mxu0 %v2508
  %v2576 = vpop.f32.mrb[0].mxu0
  %v2577 = vadd.f32 0.0, %v2576
  %v2578 = vpop.f32.mrb[0].mxu0
  %2579 = vdwg.mxu0
  %v2581 = vsel %vm339, %v2506, 0
  %2583 = vmatprep.subr.mxu0 0.0
  %2584 = vmatpush1.msra.mxu0 %v2326
  %2585 = vmatprep.subr.mxu0 0.0
  %2586 = vmatpush1.msra.mxu0 0.0
  %2587 = vmatprep.subr.mxu0 0.0
  %2588 = vmatpush1.msra.mxu0 0.0
  %2589 = vmatprep.subr.mxu0 0.0
  %2590 = vmatpush1.msra.mxu0 0.0
  %2591 = vmatprep.subr.mxu0 0.0
  %2592 = vmatpush1.msra.mxu0 0.0
  %2593 = vmatprep.subr.mxu0 0.0
  %2594 = vmatpush1.msra.mxu0 0.0
  %2595 = vmatprep.subr.mxu0 0.0
  %2596 = vmatpush1.msra.mxu0 0.0
  %2597 = vmatprep.subr.mxu0 0.0
  %2598 = vmatpush1.msra.mxu0 0.0
  %2599 = vmatprep.subr.mxu0 0.0
  %2600 = vmatpush1.msra.mxu0 0.0
  %2601 = vmatprep.subr.mxu0 0.0
  %2602 = vmatpush1.msra.mxu0 0.0
  %2603 = vmatprep.subr.mxu0 0.0
  %2604 = vmatpush1.msra.mxu0 0.0
  %2605 = vmatprep.subr.mxu0 0.0
  %2606 = vmatpush1.msra.mxu0 0.0
  %2607 = vmatprep.subr.mxu0 0.0
  %2608 = vmatpush1.msra.mxu0 0.0
  %2609 = vmatprep.subr.mxu0 0.0
  %2610 = vmatpush1.msra.mxu0 0.0
  %2611 = vmatprep.subr.mxu0 0.0
  %2612 = vmatpush1.msra.mxu0 0.0
  %2613 = vmatprep.subr.mxu0 0.0
  %2614 = vmatpush1.msra.mxu0 0.0
  %2615 = vmatprep.subr.mxu0 0.0
  %2616 = vmatpush1.msra.mxu0 0.0
  %2617 = vmatprep.subr.mxu0 0.0
  %2618 = vmatpush1.msra.mxu0 0.0
  %2619 = vmatprep.subr.mxu0 0.0
  %2620 = vmatpush1.msra.mxu0 0.0
  %2621 = vmatprep.subr.mxu0 0.0
  %2622 = vmatpush1.msra.mxu0 0.0
  %2623 = vmatprep.subr.mxu0 0.0
  %2624 = vmatpush1.msra.mxu0 0.0
  %2625 = vmatprep.subr.mxu0 0.0
  %2626 = vmatpush1.msra.mxu0 0.0
  %2627 = vmatprep.subr.mxu0 0.0
  %2628 = vmatpush1.msra.mxu0 0.0
  %2629 = vmatprep.subr.mxu0 0.0
  %2630 = vmatpush1.msra.mxu0 0.0
  %2631 = vmatprep.subr.mxu0 0.0
  %2632 = vmatpush1.msra.mxu0 0.0
  %2633 = vmatprep.subr.mxu0 0.0
  %2634 = vmatpush1.msra.mxu0 0.0
  %2635 = vmatprep.subr.mxu0 0.0
  %2636 = vmatpush1.msra.mxu0 0.0
  %2637 = vmatprep.subr.mxu0 0.0
  %2638 = vmatpush1.msra.mxu0 0.0
  %2639 = vmatprep.subr.mxu0 0.0
  %2640 = vmatpush1.msra.mxu0 0.0
  %2641 = vmatprep.subr.mxu0 0.0
  %2642 = vmatpush1.msra.mxu0 0.0
  %2643 = vmatprep.subr.mxu0 0.0
  %2644 = vmatpush1.msra.mxu0 0.0
  %2645 = vmatprep.subr.mxu0 0.0
  %2646 = vmatpush1.msra.mxu0 0.0
  %2647 = vmatprep.mubr.f32.mxu0 0.0
  %2648 = vmatmul.mubr.f32.gmra.mrb[0].mxu0 %v2581
  %v2649 = vpop.f32.mrb[0].mxu0
  %v2650 = vadd.f32 0.0, %v2649
  %v2651 = vpop.f32.mrb[0].mxu0
  %2652 = vdwg.mxu0
  %s2653 = scalar_lea.vmem %s3, 24
  %v2654 = vld [vmem:[%s2653] sm:$0xff]
  %v2656 = vsel %vm339, %v2577, 0
  %v2659 = vsel %vm339, %v2650, 0
  %2661 = vmatprep.subr.mxu0 0.0
  %2662 = vmatpush1.msra.mxu0 %v2654
  %2663 = vmatprep.subr.mxu0 0.0
  %2664 = vmatpush1.msra.mxu0 0.0
  %2665 = vmatprep.subr.mxu0 0.0
  %2666 = vmatpush1.msra.mxu0 0.0
  %2667 = vmatprep.subr.mxu0 0.0
  %2668 = vmatpush1.msra.mxu0 0.0
  %2669 = vmatprep.subr.mxu0 0.0
  %2670 = vmatpush1.msra.mxu0 0.0
  %2671 = vmatprep.subr.mxu0 0.0
  %2672 = vmatpush1.msra.mxu0 0.0
  %2673 = vmatprep.subr.mxu0 0.0
  %2674 = vmatpush1.msra.mxu0 0.0
  %2675 = vmatprep.subr.mxu0 0.0
  %2676 = vmatpush1.msra.mxu0 0.0
  %2677 = vmatprep.subr.mxu0 0.0
  %2678 = vmatpush1.msra.mxu0 0.0
  %2679 = vmatprep.subr.mxu0 0.0
  %2680 = vmatpush1.msra.mxu0 0.0
  %2681 = vmatprep.subr.mxu0 0.0
  %2682 = vmatpush1.msra.mxu0 0.0
  %2683 = vmatprep.subr.mxu0 0.0
  %2684 = vmatpush1.msra.mxu0 0.0
  %2685 = vmatprep.subr.mxu0 0.0
  %2686 = vmatpush1.msra.mxu0 0.0
  %2687 = vmatprep.subr.mxu0 0.0
  %2688 = vmatpush1.msra.mxu0 0.0
  %2689 = vmatprep.subr.mxu0 0.0
  %2690 = vmatpush1.msra.mxu0 0.0
  %2691 = vmatprep.subr.mxu0 0.0
  %2692 = vmatpush1.msra.mxu0 0.0
  %2693 = vmatprep.subr.mxu0 0.0
  %2694 = vmatpush1.msra.mxu0 0.0
  %2695 = vmatprep.subr.mxu0 0.0
  %2696 = vmatpush1.msra.mxu0 0.0
  %2697 = vmatprep.subr.mxu0 0.0
  %2698 = vmatpush1.msra.mxu0 0.0
  %2699 = vmatprep.subr.mxu0 0.0
  %2700 = vmatpush1.msra.mxu0 0.0
  %2701 = vmatprep.subr.mxu0 0.0
  %2702 = vmatpush1.msra.mxu0 0.0
  %2703 = vmatprep.subr.mxu0 0.0
  %2704 = vmatpush1.msra.mxu0 0.0
  %2705 = vmatprep.subr.mxu0 0.0
  %2706 = vmatpush1.msra.mxu0 0.0
  %2707 = vmatprep.subr.mxu0 0.0
  %2708 = vmatpush1.msra.mxu0 0.0
  %2709 = vmatprep.subr.mxu0 0.0
  %2710 = vmatpush1.msra.mxu0 0.0
  %2711 = vmatprep.subr.mxu0 0.0
  %2712 = vmatpush1.msra.mxu0 0.0
  %2713 = vmatprep.subr.mxu0 0.0
  %2714 = vmatpush1.msra.mxu0 0.0
  %2715 = vmatprep.subr.mxu0 0.0
  %2716 = vmatpush1.msra.mxu0 0.0
  %2717 = vmatprep.subr.mxu0 0.0
  %2718 = vmatpush1.msra.mxu0 0.0
  %2719 = vmatprep.subr.mxu0 0.0
  %2720 = vmatpush1.msra.mxu0 0.0
  %2721 = vmatprep.subr.mxu0 0.0
  %2722 = vmatpush1.msra.mxu0 0.0
  %2723 = vmatprep.subr.mxu0 0.0
  %2724 = vmatpush1.msra.mxu0 0.0
  %2725 = vmatprep.mubr.f32.mxu0 0.0
  %2726 = vmatmul.mubr.f32.gmra.mrb[0].mxu0 %v2656
  %v2727 = vpop.f32.mrb[0].mxu0
  %v2728 = vadd.f32 0.0, %v2727
  %v2729 = vpop.f32.mrb[0].mxu0
  %2730 = vmatprep.mubr.f32.mxu0 0.0
  %2731 = vmatmul.mubr.f32.gmra.mrb[0].mxu0 %v2659
  %v2732 = vpop.f32.mrb[0].mxu0
  %v2733 = vadd.f32 0.0, %v2732
  %v2734 = vpop.f32.mrb[0].mxu0
  %2735 = vdwg.mxu0
  %v2736 = vadd.f32 %v2072, %v2728
  %v2737 = vadd.f32 %v2073, %v2733
  %v2738 = vlaneseq
  %v2739 = vshrl.u32 %v2738, 7
  %v2740 = vsub.s32 0, %v2739
  %v2741 = vrot.slane %v37, %v2740
  %v2742 = vadd.f32 %v2736, %v2741
  %v2743 = vadd.f32 %v2737, %v2741
  %v2744 = vadd.f32 %v29, %v2742
  %v2745 = vadd.f32 %v30, %v2743
  %v2746 = vsel %vm39, %v2744, 0.0
  %2747 = vadd.xlane.f32.xlu0 %v2746
  %v2748 = vpop.xlane.xlu0 %2747
  %v2749 = vsel %vm39, %v2745, 0.0
  %2750 = vadd.xlane.f32.xlu0 %v2749
  %v2751 = vpop.xlane.xlu0 %2750
  %v2752 = vmul.f32 %v2748, %v46
  %v2753 = vmul.f32 %v2751, %v46
  %v2754 = vsub.f32 %v2744, %v2752
  %v2755 = vsub.f32 %v2745, %v2753
  %v2756 = vmul.f32 %v2754, %v2754
  %v2757 = vmul.f32 %v2755, %v2755
  %v2758 = vsel %vm39, %v2756, 0.0
  %2759 = vadd.xlane.f32.xlu0 %v2758
  %v2760 = vpop.xlane.xlu0 %2759
  %v2761 = vsel %vm39, %v2757, 0.0
  %2762 = vadd.xlane.f32.xlu0 %v2761
  %v2763 = vpop.xlane.xlu0 %2762
  %v2764 = vmul.f32 %v2760, %v46
  %v2765 = vmul.f32 %v2763, %v46
  %v2766 = vadd.f32 %v2764, 1e-05
  %v2767 = vadd.f32 %v2765, 1e-05
  %v2768 = vrsqrt.pop %v2766
  %v2769 = vrsqrt.pop %v2767
  %v2770 = vmul.f32 %v2754, %v2768
  %v2771 = vmul.f32 %v2755, %v2769
  %2772 = vrot.lane.b32.xlu0 %v70, 64
  %v2773 = vpop.permute.xlu0 %2772
  %v2775 = vmul.f32 %v2770, %v2773
  %v2776 = vmul.f32 %v2771, %v2773
  %2777 = vrot.lane.b32.xlu0 %v70, 32
  %v2778 = vpop.permute.xlu0 %2777
  %v2780 = vadd.f32 %v2775, %v2778
  %v2781 = vadd.f32 %v2776, %v2778
  %v2782 = vld [vmem:[%s4] sm:$0xff]
  %v2783 = vld [vmem:[%s4 + $0x8] sm:$0xff]
  %v2784 = vld [vmem:[%s4 + $0x10] sm:$0xff]
  %v2785 = vld [vmem:[%s4 + $0x18] sm:$0xff]
  %v2786 = vlaneseq
  %v2787 = vshrl.u32 %v2786, 7
  %v2788 = vsub.s32 0, %v2787
  %v2789 = vrot.slane %v38, %v2788
  %v2791 = vsel %vm39, %v2780, 0
  %v2794 = vsel %vm39, %v2781, 0
  %2796 = vmatprep.subr.mxu0 0.0
  %2797 = vmatpush1.msra.mxu0 %v2782
  %2798 = vmatprep.subr.mxu0 0.0
  %2799 = vmatpush1.msra.mxu0 %v2783
  %2800 = vmatprep.subr.mxu0 0.0
  %2801 = vmatpush1.msra.mxu0 %v2784
  %2802 = vmatprep.subr.mxu0 0.0
  %2803 = vmatpush1.msra.mxu0 %v2785
  %2804 = vmatprep.subr.mxu0 0.0
  %2805 = vmatpush1.msra.mxu0 0.0
  %2806 = vmatprep.subr.mxu0 0.0
  %2807 = vmatpush1.msra.mxu0 0.0
  %2808 = vmatprep.subr.mxu0 0.0
  %2809 = vmatpush1.msra.mxu0 0.0
  %2810 = vmatprep.subr.mxu0 0.0
  %2811 = vmatpush1.msra.mxu0 0.0
  %2812 = vmatprep.subr.mxu0 0.0
  %2813 = vmatpush1.msra.mxu0 0.0
  %2814 = vmatprep.subr.mxu0 0.0
  %2815 = vmatpush1.msra.mxu0 0.0
  %2816 = vmatprep.subr.mxu0 0.0
  %2817 = vmatpush1.msra.mxu0 0.0
  %2818 = vmatprep.subr.mxu0 0.0
  %2819 = vmatpush1.msra.mxu0 0.0
  %2820 = vmatprep.subr.mxu0 0.0
  %2821 = vmatpush1.msra.mxu0 0.0
  %2822 = vmatprep.subr.mxu0 0.0
  %2823 = vmatpush1.msra.mxu0 0.0
  %2824 = vmatprep.subr.mxu0 0.0
  %2825 = vmatpush1.msra.mxu0 0.0
  %2826 = vmatprep.subr.mxu0 0.0
  %2827 = vmatpush1.msra.mxu0 0.0
  %2828 = vmatprep.subr.mxu0 0.0
  %2829 = vmatpush1.msra.mxu0 0.0
  %2830 = vmatprep.subr.mxu0 0.0
  %2831 = vmatpush1.msra.mxu0 0.0
  %2832 = vmatprep.subr.mxu0 0.0
  %2833 = vmatpush1.msra.mxu0 0.0
  %2834 = vmatprep.subr.mxu0 0.0
  %2835 = vmatpush1.msra.mxu0 0.0
  %2836 = vmatprep.subr.mxu0 0.0
  %2837 = vmatpush1.msra.mxu0 0.0
  %2838 = vmatprep.subr.mxu0 0.0
  %2839 = vmatpush1.msra.mxu0 0.0
  %2840 = vmatprep.subr.mxu0 0.0
  %2841 = vmatpush1.msra.mxu0 0.0
  %2842 = vmatprep.subr.mxu0 0.0
  %2843 = vmatpush1.msra.mxu0 0.0
  %2844 = vmatprep.subr.mxu0 0.0
  %2845 = vmatpush1.msra.mxu0 0.0
  %2846 = vmatprep.subr.mxu0 0.0
  %2847 = vmatpush1.msra.mxu0 0.0
  %2848 = vmatprep.subr.mxu0 0.0
  %2849 = vmatpush1.msra.mxu0 0.0
  %2850 = vmatprep.subr.mxu0 0.0
  %2851 = vmatpush1.msra.mxu0 0.0
  %2852 = vmatprep.subr.mxu0 0.0
  %2853 = vmatpush1.msra.mxu0 0.0
  %2854 = vmatprep.subr.mxu0 0.0
  %2855 = vmatpush1.msra.mxu0 0.0
  %2856 = vmatprep.subr.mxu0 0.0
  %2857 = vmatpush1.msra.mxu0 0.0
  %2858 = vmatprep.subr.mxu0 0.0
  %2859 = vmatpush1.msra.mxu0 0.0
  %2860 = vmatprep.mubr.f32.mxu0 0.0
  %2861 = vmatmul.mubr.f32.gmra.mrb[0].mxu0 %v2791
  %v2862 = vpop.f32.mrb[0].mxu0
  %v2863 = vadd.f32 %v2789, %v2862
  %v2864 = vpop.f32.mrb[0].mxu0
  %2865 = vmatprep.mubr.f32.mxu0 0.0
  %2866 = vmatmul.mubr.f32.gmra.mrb[0].mxu0 %v2794
  %v2867 = vpop.f32.mrb[0].mxu0
  %v2868 = vadd.f32 %v2789, %v2867
  %v2869 = vpop.f32.mrb[0].mxu0
  %2870 = vdwg.mxu0
  %v2871 = vmul.f32 %v2863, 0.5
  %v2872 = vmul.f32 %v2868, 0.5
  %v2873 = vmul.f32 %v2863, 0.044715
  %v2874 = vmul.f32 %v2868, 0.044715
  %v2875 = vmul.f32 %v2873, %v2863
  %v2876 = vmul.f32 %v2874, %v2868
  %v2877 = vmul.f32 %v2875, %v2863
  %v2878 = vmul.f32 %v2876, %v2868
  %v2879 = vadd.f32 %v2863, %v2877
  %v2880 = vadd.f32 %v2868, %v2878
  %v2881 = vmul.f32 %v2879, 0.7978846
  %v2882 = vmul.f32 %v2880, 0.7978846
  %v2883 = vtanh.pop %v2881
  %v2884 = vtanh.pop %v2882
  %v2885 = vadd.f32 %v2883, 1.0
  %v2886 = vadd.f32 %v2884, 1.0
  %v2887 = vmul.f32 %v2871, %v2885
  %v2888 = vmul.f32 %v2872, %v2886
  %v2889 = vld [vmem:[%s5] sm:$0xff]
  %v2890 = vld [vmem:[%s5 + $0x8] sm:$0xff]
  %v2891 = vld [vmem:[%s5 + $0x10] sm:$0xff]
  %v2892 = vld [vmem:[%s5 + $0x18] sm:$0xff]
  %v2893 = vld [vmem:[%s5 + $0x20] sm:$0xff]
  %v2894 = vld [vmem:[%s5 + $0x28] sm:$0xff]
  %v2895 = vld [vmem:[%s5 + $0x30] sm:$0xff]
  %v2896 = vld [vmem:[%s5 + $0x38] sm:$0xff]
  %v2897 = vld [vmem:[%s5 + $0x40] sm:$0xff]
  %v2898 = vld [vmem:[%s5 + $0x48] sm:$0xff]
  %v2899 = vld [vmem:[%s5 + $0x50] sm:$0xff]
  %v2900 = vld [vmem:[%s5 + $0x58] sm:$0xff]
  %v2901 = vld [vmem:[%s5 + $0x60] sm:$0xff]
  %v2902 = vld [vmem:[%s5 + $0x68] sm:$0xff]
  %v2903 = vld [vmem:[%s5 + $0x70] sm:$0xff]
  %v2904 = vld [vmem:[%s5 + $0x78] sm:$0xff]
  %2906 = vrot.lane.b32.xlu0 %v2741, 96
  %v2907 = vpop.permute.xlu0 %2906
  %2909 = vmatprep.subr.mxu0 0.0
  %2910 = vmatpush1.msra.mxu0 %v2889
  %2911 = vmatprep.subr.mxu0 0.0
  %2912 = vmatpush1.msra.mxu0 %v2890
  %2913 = vmatprep.subr.mxu0 0.0
  %2914 = vmatpush1.msra.mxu0 %v2891
  %2915 = vmatprep.subr.mxu0 0.0
  %2916 = vmatpush1.msra.mxu0 %v2892
  %2917 = vmatprep.subr.mxu0 0.0
  %2918 = vmatpush1.msra.mxu0 %v2893
  %2919 = vmatprep.subr.mxu0 0.0
  %2920 = vmatpush1.msra.mxu0 %v2894
  %2921 = vmatprep.subr.mxu0 0.0
  %2922 = vmatpush1.msra.mxu0 %v2895
  %2923 = vmatprep.subr.mxu0 0.0
  %2924 = vmatpush1.msra.mxu0 %v2896
  %2925 = vmatprep.subr.mxu0 0.0
  %2926 = vmatpush1.msra.mxu0 %v2897
  %2927 = vmatprep.subr.mxu0 0.0
  %2928 = vmatpush1.msra.mxu0 %v2898
  %2929 = vmatprep.subr.mxu0 0.0
  %2930 = vmatpush1.msra.mxu0 %v2899
  %2931 = vmatprep.subr.mxu0 0.0
  %2932 = vmatpush1.msra.mxu0 %v2900
  %2933 = vmatprep.subr.mxu0 0.0
  %2934 = vmatpush1.msra.mxu0 %v2901
  %2935 = vmatprep.subr.mxu0 0.0
  %2936 = vmatpush1.msra.mxu0 %v2902
  %2937 = vmatprep.subr.mxu0 0.0
  %2938 = vmatpush1.msra.mxu0 %v2903
  %2939 = vmatprep.subr.mxu0 0.0
  %2940 = vmatpush1.msra.mxu0 %v2904
  %2941 = vmatprep.subr.mxu0 0.0
  %2942 = vmatpush1.msra.mxu0 0.0
  %2943 = vmatprep.subr.mxu0 0.0
  %2944 = vmatpush1.msra.mxu0 0.0
  %2945 = vmatprep.subr.mxu0 0.0
  %2946 = vmatpush1.msra.mxu0 0.0
  %2947 = vmatprep.subr.mxu0 0.0
  %2948 = vmatpush1.msra.mxu0 0.0
  %2949 = vmatprep.subr.mxu0 0.0
  %2950 = vmatpush1.msra.mxu0 0.0
  %2951 = vmatprep.subr.mxu0 0.0
  %2952 = vmatpush1.msra.mxu0 0.0
  %2953 = vmatprep.subr.mxu0 0.0
  %2954 = vmatpush1.msra.mxu0 0.0
  %2955 = vmatprep.subr.mxu0 0.0
  %2956 = vmatpush1.msra.mxu0 0.0
  %2957 = vmatprep.subr.mxu0 0.0
  %2958 = vmatpush1.msra.mxu0 0.0
  %2959 = vmatprep.subr.mxu0 0.0
  %2960 = vmatpush1.msra.mxu0 0.0
  %2961 = vmatprep.subr.mxu0 0.0
  %2962 = vmatpush1.msra.mxu0 0.0
  %2963 = vmatprep.subr.mxu0 0.0
  %2964 = vmatpush1.msra.mxu0 0.0
  %2965 = vmatprep.subr.mxu0 0.0
  %2966 = vmatpush1.msra.mxu0 0.0
  %2967 = vmatprep.subr.mxu0 0.0
  %2968 = vmatpush1.msra.mxu0 0.0
  %2969 = vmatprep.subr.mxu0 0.0
  %2970 = vmatpush1.msra.mxu0 0.0
  %2971 = vmatprep.subr.mxu0 0.0
  %2972 = vmatpush1.msra.mxu0 0.0
  %2973 = vmatprep.mubr.f32.mxu0 0.0
  %2974 = vmatmul.mubr.f32.gmra.mrb[0].mxu0 %v2887
  %v2975 = vpop.f32.mrb[0].mxu0
  %v2976 = vadd.f32 %v2907, %v2975
  %v2977 = vpop.f32.mrb[0].mxu0
  %2978 = vmatprep.mubr.f32.mxu0 0.0
  %2979 = vmatmul.mubr.f32.gmra.mrb[0].mxu0 %v2888
  %v2980 = vpop.f32.mrb[0].mxu0
  %v2981 = vadd.f32 %v2907, %v2980
  %v2982 = vpop.f32.mrb[0].mxu0
  %2983 = vdwg.mxu0
  %v2984 = vadd.f32 %v2744, %v2976
  %v2985 = vadd.f32 %v2745, %v2981
  %v2986 = vld [vmem:[%s6 + $0x3] sm:$0x1]
  %v2987 = vld [vmem:[%s6 + $0x4] sm:$0x1]
  %v2988 = vld [vmem:[%s6 + $0x5] sm:$0x1]
  %v2989 = vsel %vm39, %v2984, 0.0
  %2990 = vadd.xlane.f32.xlu0 %v2989
  %v2991 = vpop.xlane.xlu0 %2990
  %v2992 = vsel %vm39, %v2985, 0.0
  %2993 = vadd.xlane.f32.xlu0 %v2992
  %v2994 = vpop.xlane.xlu0 %2993
  %v2995 = vmul.f32 %v2991, %v46
  %v2996 = vmul.f32 %v2994, %v46
  %v2997 = vsub.f32 %v2984, %v2995
  %v2998 = vsub.f32 %v2985, %v2996
  %v2999 = vmul.f32 %v2997, %v2997
  %v3000 = vmul.f32 %v2998, %v2998
  %v3001 = vsel %vm39, %v2999, 0.0
  %3002 = vadd.xlane.f32.xlu0 %v3001
  %v3003 = vpop.xlane.xlu0 %3002
  %v3004 = vsel %vm39, %v3000, 0.0
  %3005 = vadd.xlane.f32.xlu0 %v3004
  %v3006 = vpop.xlane.xlu0 %3005
  %v3007 = vmul.f32 %v3003, %v46
  %v3008 = vmul.f32 %v3006, %v46
  %v3009 = vadd.f32 %v3007, 1e-05
  %v3010 = vadd.f32 %v3008, 1e-05
  %v3011 = vrsqrt.pop %v3009
  %v3012 = vrsqrt.pop %v3010
  %v3013 = vmul.f32 %v2997, %v3011
  %v3014 = vmul.f32 %v2998, %v3012
  %v3015 = vlaneseq
  %v3016 = vshrl.u32 %v3015, 7
  %v3017 = vsub.s32 0, %v3016
  %v3018 = vrot.slane %v2986, %v3017
  %v3019 = vmul.f32 %v3013, %v3018
  %v3020 = vmul.f32 %v3014, %v3018
  %3022 = vrot.lane.b32.xlu0 %v3018, 96
  %v3023 = vpop.permute.xlu0 %3022
  %v3025 = vadd.f32 %v3019, %v3023
  %v3026 = vadd.f32 %v3020, %v3023
  %s3027 = scalar_lea.vmem %s2, 480
  %v3028 = vld [vmem:[%s3027] sm:$0xff]
  %v3029 = vld [vmem:[%s3027 + $0x8] sm:$0xff]
  %v3030 = vld [vmem:[%s3027 + $0x10] sm:$0xff]
  %v3031 = vld [vmem:[%s3027 + $0x18] sm:$0xff]
  %v3032 = vld [vmem:[%s3027 + $0x20] sm:$0x1]
  %v3033 = vlaneseq
  %v3034 = vshrl.u32 %v3033, 7
  %v3035 = vsub.s32 0, %v3034
  %v3036 = vrot.slane %v3032, %v3035
  %v3038 = vsel %vm39, %v3025, 0
  %v3041 = vsel %vm39, %v3026, 0
  %3043 = vmatprep.subr.mxu0 0.0
  %3044 = vmatpush1.msra.mxu0 %v3028
  %3045 = vmatprep.subr.mxu0 0.0
  %3046 = vmatpush1.msra.mxu0 %v3029
  %3047 = vmatprep.subr.mxu0 0.0
  %3048 = vmatpush1.msra.mxu0 %v3030
  %3049 = vmatprep.subr.mxu0 0.0
  %3050 = vmatpush1.msra.mxu0 %v3031
  %3051 = vmatprep.subr.mxu0 0.0
  %3052 = vmatpush1.msra.mxu0 0.0
  %3053 = vmatprep.subr.mxu0 0.0
  %3054 = vmatpush1.msra.mxu0 0.0
  %3055 = vmatprep.subr.mxu0 0.0
  %3056 = vmatpush1.msra.mxu0 0.0
  %3057 = vmatprep.subr.mxu0 0.0
  %3058 = vmatpush1.msra.mxu0 0.0
  %3059 = vmatprep.subr.mxu0 0.0
  %3060 = vmatpush1.msra.mxu0 0.0
  %3061 = vmatprep.subr.mxu0 0.0
  %3062 = vmatpush1.msra.mxu0 0.0
  %3063 = vmatprep.subr.mxu0 0.0
  %3064 = vmatpush1.msra.mxu0 0.0
  %3065 = vmatprep.subr.mxu0 0.0
  %3066 = vmatpush1.msra.mxu0 0.0
  %3067 = vmatprep.subr.mxu0 0.0
  %3068 = vmatpush1.msra.mxu0 0.0
  %3069 = vmatprep.subr.mxu0 0.0
  %3070 = vmatpush1.msra.mxu0 0.0
  %3071 = vmatprep.subr.mxu0 0.0
  %3072 = vmatpush1.msra.mxu0 0.0
  %3073 = vmatprep.subr.mxu0 0.0
  %3074 = vmatpush1.msra.mxu0 0.0
  %3075 = vmatprep.subr.mxu0 0.0
  %3076 = vmatpush1.msra.mxu0 0.0
  %3077 = vmatprep.subr.mxu0 0.0
  %3078 = vmatpush1.msra.mxu0 0.0
  %3079 = vmatprep.subr.mxu0 0.0
  %3080 = vmatpush1.msra.mxu0 0.0
  %3081 = vmatprep.subr.mxu0 0.0
  %3082 = vmatpush1.msra.mxu0 0.0
  %3083 = vmatprep.subr.mxu0 0.0
  %3084 = vmatpush1.msra.mxu0 0.0
  %3085 = vmatprep.subr.mxu0 0.0
  %3086 = vmatpush1.msra.mxu0 0.0
  %3087 = vmatprep.subr.mxu0 0.0
  %3088 = vmatpush1.msra.mxu0 0.0
  %3089 = vmatprep.subr.mxu0 0.0
  %3090 = vmatpush1.msra.mxu0 0.0
  %3091 = vmatprep.subr.mxu0 0.0
  %3092 = vmatpush1.msra.mxu0 0.0
  %3093 = vmatprep.subr.mxu0 0.0
  %3094 = vmatpush1.msra.mxu0 0.0
  %3095 = vmatprep.subr.mxu0 0.0
  %3096 = vmatpush1.msra.mxu0 0.0
  %3097 = vmatprep.subr.mxu0 0.0
  %3098 = vmatpush1.msra.mxu0 0.0
  %3099 = vmatprep.subr.mxu0 0.0
  %3100 = vmatpush1.msra.mxu0 0.0
  %3101 = vmatprep.subr.mxu0 0.0
  %3102 = vmatpush1.msra.mxu0 0.0
  %3103 = vmatprep.subr.mxu0 0.0
  %3104 = vmatpush1.msra.mxu0 0.0
  %3105 = vmatprep.subr.mxu0 0.0
  %3106 = vmatpush1.msra.mxu0 0.0
  %3107 = vmatprep.mubr.f32.mxu0 0.0
  %3108 = vmatmul.mubr.f32.gmra.mrb[0].mxu0 %v3038
  %v3109 = vpop.f32.mrb[0].mxu0
  %v3110 = vadd.f32 %v3036, %v3109
  %v3111 = vpop.f32.mrb[0].mxu0
  %3112 = vmatprep.mubr.f32.mxu0 0.0
  %3113 = vmatmul.mubr.f32.gmra.mrb[0].mxu0 %v3041
  %v3114 = vpop.f32.mrb[0].mxu0
  %v3115 = vadd.f32 %v3036, %v3114
  %v3116 = vpop.f32.mrb[0].mxu0
  %3117 = vdwg.mxu0
  %s3118 = scalar_lea.vmem %s2, 640
  %v3119 = vld [vmem:[%s3118] sm:$0xff]
  %v3120 = vld [vmem:[%s3118 + $0x8] sm:$0xff]
  %v3121 = vld [vmem:[%s3118 + $0x10] sm:$0xff]
  %v3122 = vld [vmem:[%s3118 + $0x18] sm:$0xff]
  %v3123 = vld [vmem:[%s3118 + $0x20] sm:$0x1]
  %v3124 = vlaneseq
  %v3125 = vshrl.u32 %v3124, 7
  %v3126 = vsub.s32 0, %v3125
  %v3127 = vrot.slane %v3123, %v3126
  %3128 = vmatprep.subr.mxu0 0.0
  %3129 = vmatpush1.msra.mxu0 %v3119
  %3130 = vmatprep.subr.mxu0 0.0
  %3131 = vmatpush1.msra.mxu0 %v3120
  %3132 = vmatprep.subr.mxu0 0.0
  %3133 = vmatpush1.msra.mxu0 %v3121
  %3134 = vmatprep.subr.mxu0 0.0
  %3135 = vmatpush1.msra.mxu0 %v3122
  %3136 = vmatprep.subr.mxu0 0.0
  %3137 = vmatpush1.msra.mxu0 0.0
  %3138 = vmatprep.subr.mxu0 0.0
  %3139 = vmatpush1.msra.mxu0 0.0
  %3140 = vmatprep.subr.mxu0 0.0
  %3141 = vmatpush1.msra.mxu0 0.0
  %3142 = vmatprep.subr.mxu0 0.0
  %3143 = vmatpush1.msra.mxu0 0.0
  %3144 = vmatprep.subr.mxu0 0.0
  %3145 = vmatpush1.msra.mxu0 0.0
  %3146 = vmatprep.subr.mxu0 0.0
  %3147 = vmatpush1.msra.mxu0 0.0
  %3148 = vmatprep.subr.mxu0 0.0
  %3149 = vmatpush1.msra.mxu0 0.0
  %3150 = vmatprep.subr.mxu0 0.0
  %3151 = vmatpush1.msra.mxu0 0.0
  %3152 = vmatprep.subr.mxu0 0.0
  %3153 = vmatpush1.msra.mxu0 0.0
  %3154 = vmatprep.subr.mxu0 0.0
  %3155 = vmatpush1.msra.mxu0 0.0
  %3156 = vmatprep.subr.mxu0 0.0
  %3157 = vmatpush1.msra.mxu0 0.0
  %3158 = vmatprep.subr.mxu0 0.0
  %3159 = vmatpush1.msra.mxu0 0.0
  %3160 = vmatprep.subr.mxu0 0.0
  %3161 = vmatpush1.msra.mxu0 0.0
  %3162 = vmatprep.subr.mxu0 0.0
  %3163 = vmatpush1.msra.mxu0 0.0
  %3164 = vmatprep.subr.mxu0 0.0
  %3165 = vmatpush1.msra.mxu0 0.0
  %3166 = vmatprep.subr.mxu0 0.0
  %3167 = vmatpush1.msra.mxu0 0.0
  %3168 = vmatprep.subr.mxu0 0.0
  %3169 = vmatpush1.msra.mxu0 0.0
  %3170 = vmatprep.subr.mxu0 0.0
  %3171 = vmatpush1.msra.mxu0 0.0
  %3172 = vmatprep.subr.mxu0 0.0
  %3173 = vmatpush1.msra.mxu0 0.0
  %3174 = vmatprep.subr.mxu0 0.0
  %3175 = vmatpush1.msra.mxu0 0.0
  %3176 = vmatprep.subr.mxu0 0.0
  %3177 = vmatpush1.msra.mxu0 0.0
  %3178 = vmatprep.subr.mxu0 0.0
  %3179 = vmatpush1.msra.mxu0 0.0
  %3180 = vmatprep.subr.mxu0 0.0
  %3181 = vmatpush1.msra.mxu0 0.0
  %3182 = vmatprep.subr.mxu0 0.0
  %3183 = vmatpush1.msra.mxu0 0.0
  %3184 = vmatprep.subr.mxu0 0.0
  %3185 = vmatpush1.msra.mxu0 0.0
  %3186 = vmatprep.subr.mxu0 0.0
  %3187 = vmatpush1.msra.mxu0 0.0
  %3188 = vmatprep.subr.mxu0 0.0
  %3189 = vmatpush1.msra.mxu0 0.0
  %3190 = vmatprep.subr.mxu0 0.0
  %3191 = vmatpush1.msra.mxu0 0.0
  %3192 = vmatprep.mubr.f32.mxu0 0.0
  %3193 = vmatmul.mubr.f32.gmra.mrb[0].mxu0 %v3038
  %v3194 = vpop.f32.mrb[0].mxu0
  %v3195 = vadd.f32 %v3127, %v3194
  %v3196 = vpop.f32.mrb[0].mxu0
  %3197 = vmatprep.mubr.f32.mxu0 0.0
  %3198 = vmatmul.mubr.f32.gmra.mrb[0].mxu0 %v3041
  %v3199 = vpop.f32.mrb[0].mxu0
  %v3200 = vadd.f32 %v3127, %v3199
  %v3201 = vpop.f32.mrb[0].mxu0
  %3202 = vdwg.mxu0
  %s3203 = scalar_lea.vmem %s2, 800
  %v3204 = vld [vmem:[%s3203] sm:$0xff]
  %v3205 = vld [vmem:[%s3203 + $0x8] sm:$0xff]
  %v3206 = vld [vmem:[%s3203 + $0x10] sm:$0xff]
  %v3207 = vld [vmem:[%s3203 + $0x18] sm:$0xff]
  %v3208 = vld [vmem:[%s3203 + $0x20] sm:$0x1]
  %v3209 = vlaneseq
  %v3210 = vshrl.u32 %v3209, 7
  %v3211 = vsub.s32 0, %v3210
  %v3212 = vrot.slane %v3208, %v3211
  %3213 = vmatprep.subr.mxu0 0.0
  %3214 = vmatpush1.msra.mxu0 %v3204
  %3215 = vmatprep.subr.mxu0 0.0
  %3216 = vmatpush1.msra.mxu0 %v3205
  %3217 = vmatprep.subr.mxu0 0.0
  %3218 = vmatpush1.msra.mxu0 %v3206
  %3219 = vmatprep.subr.mxu0 0.0
  %3220 = vmatpush1.msra.mxu0 %v3207
  %3221 = vmatprep.subr.mxu0 0.0
  %3222 = vmatpush1.msra.mxu0 0.0
  %3223 = vmatprep.subr.mxu0 0.0
  %3224 = vmatpush1.msra.mxu0 0.0
  %3225 = vmatprep.subr.mxu0 0.0
  %3226 = vmatpush1.msra.mxu0 0.0
  %3227 = vmatprep.subr.mxu0 0.0
  %3228 = vmatpush1.msra.mxu0 0.0
  %3229 = vmatprep.subr.mxu0 0.0
  %3230 = vmatpush1.msra.mxu0 0.0
  %3231 = vmatprep.subr.mxu0 0.0
  %3232 = vmatpush1.msra.mxu0 0.0
  %3233 = vmatprep.subr.mxu0 0.0
  %3234 = vmatpush1.msra.mxu0 0.0
  %3235 = vmatprep.subr.mxu0 0.0
  %3236 = vmatpush1.msra.mxu0 0.0
  %3237 = vmatprep.subr.mxu0 0.0
  %3238 = vmatpush1.msra.mxu0 0.0
  %3239 = vmatprep.subr.mxu0 0.0
  %3240 = vmatpush1.msra.mxu0 0.0
  %3241 = vmatprep.subr.mxu0 0.0
  %3242 = vmatpush1.msra.mxu0 0.0
  %3243 = vmatprep.subr.mxu0 0.0
  %3244 = vmatpush1.msra.mxu0 0.0
  %3245 = vmatprep.subr.mxu0 0.0
  %3246 = vmatpush1.msra.mxu0 0.0
  %3247 = vmatprep.subr.mxu0 0.0
  %3248 = vmatpush1.msra.mxu0 0.0
  %3249 = vmatprep.subr.mxu0 0.0
  %3250 = vmatpush1.msra.mxu0 0.0
  %3251 = vmatprep.subr.mxu0 0.0
  %3252 = vmatpush1.msra.mxu0 0.0
  %3253 = vmatprep.subr.mxu0 0.0
  %3254 = vmatpush1.msra.mxu0 0.0
  %3255 = vmatprep.subr.mxu0 0.0
  %3256 = vmatpush1.msra.mxu0 0.0
  %3257 = vmatprep.subr.mxu0 0.0
  %3258 = vmatpush1.msra.mxu0 0.0
  %3259 = vmatprep.subr.mxu0 0.0
  %3260 = vmatpush1.msra.mxu0 0.0
  %3261 = vmatprep.subr.mxu0 0.0
  %3262 = vmatpush1.msra.mxu0 0.0
  %3263 = vmatprep.subr.mxu0 0.0
  %3264 = vmatpush1.msra.mxu0 0.0
  %3265 = vmatprep.subr.mxu0 0.0
  %3266 = vmatpush1.msra.mxu0 0.0
  %3267 = vmatprep.subr.mxu0 0.0
  %3268 = vmatpush1.msra.mxu0 0.0
  %3269 = vmatprep.subr.mxu0 0.0
  %3270 = vmatpush1.msra.mxu0 0.0
  %3271 = vmatprep.subr.mxu0 0.0
  %3272 = vmatpush1.msra.mxu0 0.0
  %3273 = vmatprep.subr.mxu0 0.0
  %3274 = vmatpush1.msra.mxu0 0.0
  %3275 = vmatprep.subr.mxu0 0.0
  %3276 = vmatpush1.msra.mxu0 0.0
  %3277 = vmatprep.mubr.f32.mxu0 0.0
  %3278 = vmatmul.mubr.f32.gmra.mrb[0].mxu0 %v3038
  %v3279 = vpop.f32.mrb[0].mxu0
  %v3280 = vadd.f32 %v3212, %v3279
  %v3281 = vpop.f32.mrb[0].mxu0
  %3282 = vmatprep.mubr.f32.mxu0 0.0
  %3283 = vmatmul.mubr.f32.gmra.mrb[0].mxu0 %v3041
  %v3284 = vpop.f32.mrb[0].mxu0
  %v3285 = vadd.f32 %v3212, %v3284
  %v3286 = vpop.f32.mrb[0].mxu0
  %3287 = vdwg.mxu0
  %v3289 = vsel %vm339, %v3110, 0
  %v3292 = vsel %vm339, %v3195, 0
  %3294 = vmatprep.subr.mxu0 0.0
  %3295 = vmatpush1.xpose.msra.mxu0 %v3292
  %3296 = vmatprep.subr.mxu0 0.0
  %3297 = vmatpush1.xpose.msra.mxu0 0.0
  %3298 = vmatprep.subr.mxu0 0.0
  %3299 = vmatpush1.xpose.msra.mxu0 0.0
  %3300 = vmatprep.subr.mxu0 0.0
  %3301 = vmatpush1.xpose.msra.mxu0 0.0
  %3302 = vmatprep.subr.mxu0 0.0
  %3303 = vmatpush1.xpose.msra.mxu0 0.0
  %3304 = vmatprep.subr.mxu0 0.0
  %3305 = vmatpush1.xpose.msra.mxu0 0.0
  %3306 = vmatprep.subr.mxu0 0.0
  %3307 = vmatpush1.xpose.msra.mxu0 0.0
  %3308 = vmatprep.subr.mxu0 0.0
  %3309 = vmatpush1.xpose.msra.mxu0 0.0
  %3310 = vmatprep.subr.mxu0 0.0
  %3311 = vmatpush1.xpose.msra.mxu0 0.0
  %3312 = vmatprep.subr.mxu0 0.0
  %3313 = vmatpush1.xpose.msra.mxu0 0.0
  %3314 = vmatprep.subr.mxu0 0.0
  %3315 = vmatpush1.xpose.msra.mxu0 0.0
  %3316 = vmatprep.subr.mxu0 0.0
  %3317 = vmatpush1.xpose.msra.mxu0 0.0
  %3318 = vmatprep.subr.mxu0 0.0
  %3319 = vmatpush1.xpose.msra.mxu0 0.0
  %3320 = vmatprep.subr.mxu0 0.0
  %3321 = vmatpush1.xpose.msra.mxu0 0.0
  %3322 = vmatprep.subr.mxu0 0.0
  %3323 = vmatpush1.xpose.msra.mxu0 0.0
  %3324 = vmatprep.subr.mxu0 0.0
  %3325 = vmatpush1.xpose.msra.mxu0 0.0
  %3326 = vmatprep.subr.mxu0 0.0
  %3327 = vmatpush1.xpose.msra.mxu0 0.0
  %3328 = vmatprep.subr.mxu0 0.0
  %3329 = vmatpush1.xpose.msra.mxu0 0.0
  %3330 = vmatprep.subr.mxu0 0.0
  %3331 = vmatpush1.xpose.msra.mxu0 0.0
  %3332 = vmatprep.subr.mxu0 0.0
  %3333 = vmatpush1.xpose.msra.mxu0 0.0
  %3334 = vmatprep.subr.mxu0 0.0
  %3335 = vmatpush1.xpose.msra.mxu0 0.0
  %3336 = vmatprep.subr.mxu0 0.0
  %3337 = vmatpush1.xpose.msra.mxu0 0.0
  %3338 = vmatprep.subr.mxu0 0.0
  %3339 = vmatpush1.xpose.msra.mxu0 0.0
  %3340 = vmatprep.subr.mxu0 0.0
  %3341 = vmatpush1.xpose.msra.mxu0 0.0
  %3342 = vmatprep.subr.mxu0 0.0
  %3343 = vmatpush1.xpose.msra.mxu0 0.0
  %3344 = vmatprep.subr.mxu0 0.0
  %3345 = vmatpush1.xpose.msra.mxu0 0.0
  %3346 = vmatprep.subr.mxu0 0.0
  %3347 = vmatpush1.xpose.msra.mxu0 0.0
  %3348 = vmatprep.subr.mxu0 0.0
  %3349 = vmatpush1.xpose.msra.mxu0 0.0
  %3350 = vmatprep.subr.mxu0 0.0
  %3351 = vmatpush1.xpose.msra.mxu0 0.0
  %3352 = vmatprep.subr.mxu0 0.0
  %3353 = vmatpush1.xpose.msra.mxu0 0.0
  %3354 = vmatprep.subr.mxu0 0.0
  %3355 = vmatpush1.xpose.msra.mxu0 0.0
  %3356 = vmatprep.subr.mxu0 0.0
  %3357 = vmatpush1.xpose.msra.mxu0 0.0
  %3358 = vmatprep.mubr.f32.mxu0 0.0
  %3359 = vmatmul.mubr.f32.gmra.mrb[0].mxu0 %v3289
  %v3360 = vpop.f32.mrb[0].mxu0
  %v3361 = vadd.f32 0.0, %v3360
  %v3362 = vpop.f32.mrb[0].mxu0
  %3363 = vdwg.mxu0
  %v3365 = vsel %vm339, %v3115, 0
  %v3368 = vsel %vm339, %v3200, 0
  %3370 = vmatprep.subr.mxu0 0.0
  %3371 = vmatpush1.xpose.msra.mxu0 %v3368
  %3372 = vmatprep.subr.mxu0 0.0
  %3373 = vmatpush1.xpose.msra.mxu0 0.0
  %3374 = vmatprep.subr.mxu0 0.0
  %3375 = vmatpush1.xpose.msra.mxu0 0.0
  %3376 = vmatprep.subr.mxu0 0.0
  %3377 = vmatpush1.xpose.msra.mxu0 0.0
  %3378 = vmatprep.subr.mxu0 0.0
  %3379 = vmatpush1.xpose.msra.mxu0 0.0
  %3380 = vmatprep.subr.mxu0 0.0
  %3381 = vmatpush1.xpose.msra.mxu0 0.0
  %3382 = vmatprep.subr.mxu0 0.0
  %3383 = vmatpush1.xpose.msra.mxu0 0.0
  %3384 = vmatprep.subr.mxu0 0.0
  %3385 = vmatpush1.xpose.msra.mxu0 0.0
  %3386 = vmatprep.subr.mxu0 0.0
  %3387 = vmatpush1.xpose.msra.mxu0 0.0
  %3388 = vmatprep.subr.mxu0 0.0
  %3389 = vmatpush1.xpose.msra.mxu0 0.0
  %3390 = vmatprep.subr.mxu0 0.0
  %3391 = vmatpush1.xpose.msra.mxu0 0.0
  %3392 = vmatprep.subr.mxu0 0.0
  %3393 = vmatpush1.xpose.msra.mxu0 0.0
  %3394 = vmatprep.subr.mxu0 0.0
  %3395 = vmatpush1.xpose.msra.mxu0 0.0
  %3396 = vmatprep.subr.mxu0 0.0
  %3397 = vmatpush1.xpose.msra.mxu0 0.0
  %3398 = vmatprep.subr.mxu0 0.0
  %3399 = vmatpush1.xpose.msra.mxu0 0.0
  %3400 = vmatprep.subr.mxu0 0.0
  %3401 = vmatpush1.xpose.msra.mxu0 0.0
  %3402 = vmatprep.subr.mxu0 0.0
  %3403 = vmatpush1.xpose.msra.mxu0 0.0
  %3404 = vmatprep.subr.mxu0 0.0
  %3405 = vmatpush1.xpose.msra.mxu0 0.0
  %3406 = vmatprep.subr.mxu0 0.0
  %3407 = vmatpush1.xpose.msra.mxu0 0.0
  %3408 = vmatprep.subr.mxu0 0.0
  %3409 = vmatpush1.xpose.msra.mxu0 0.0
  %3410 = vmatprep.subr.mxu0 0.0
  %3411 = vmatpush1.xpose.msra.mxu0 0.0
  %3412 = vmatprep.subr.mxu0 0.0
  %3413 = vmatpush1.xpose.msra.mxu0 0.0
  %3414 = vmatprep.subr.mxu0 0.0
  %3415 = vmatpush1.xpose.msra.mxu0 0.0
  %3416 = vmatprep.subr.mxu0 0.0
  %3417 = vmatpush1.xpose.msra.mxu0 0.0
  %3418 = vmatprep.subr.mxu0 0.0
  %3419 = vmatpush1.xpose.msra.mxu0 0.0
  %3420 = vmatprep.subr.mxu0 0.0
  %3421 = vmatpush1.xpose.msra.mxu0 0.0
  %3422 = vmatprep.subr.mxu0 0.0
  %3423 = vmatpush1.xpose.msra.mxu0 0.0
  %3424 = vmatprep.subr.mxu0 0.0
  %3425 = vmatpush1.xpose.msra.mxu0 0.0
  %3426 = vmatprep.subr.mxu0 0.0
  %3427 = vmatpush1.xpose.msra.mxu0 0.0
  %3428 = vmatprep.subr.mxu0 0.0
  %3429 = vmatpush1.xpose.msra.mxu0 0.0
  %3430 = vmatprep.subr.mxu0 0.0
  %3431 = vmatpush1.xpose.msra.mxu0 0.0
  %3432 = vmatprep.subr.mxu0 0.0
  %3433 = vmatpush1.xpose.msra.mxu0 0.0
  %3434 = vmatprep.mubr.f32.mxu0 0.0
  %3435 = vmatmul.mubr.f32.gmra.mrb[0].mxu0 %v3365
  %v3436 = vpop.f32.mrb[0].mxu0
  %v3437 = vadd.f32 0.0, %v3436
  %v3438 = vpop.f32.mrb[0].mxu0
  %3439 = vdwg.mxu0
  %v3440 = vmul.f32 %v3361, 0.35355338
  %v3441 = vmul.f32 %v3437, 0.35355338
  %v3442 = vsel %vm495, %v3440, -1e+30
  %v3443 = vsel %vm495, %v3441, -1e+30
  %v3444 = vsel %vm339, %v3442, -inf
  %3445 = vmax.xlane.f32.xlu0 %v3444
  %v3446 = vpop.xlane.xlu0 %3445
  %v3447 = vsel %vm339, %v3443, -inf
  %3448 = vmax.xlane.f32.xlu0 %v3447
  %v3449 = vpop.xlane.xlu0 %3448
  %v3450 = vsub.f32 %v3442, %v3446
  %v3451 = vsub.f32 %v3443, %v3449
  %v3452 = vmul.f32 %v3450, 1.442695
  %v3453 = vpow.pop %v3452
  %v3454 = vmul.f32 %v3451, 1.442695
  %v3455 = vpow.pop %v3454
  %v3456 = vsel %vm339, %v3453, 0.0
  %3457 = vadd.xlane.f32.xlu0 %v3456
  %v3458 = vpop.xlane.xlu0 %3457
  %v3459 = vsel %vm339, %v3455, 0.0
  %3460 = vadd.xlane.f32.xlu0 %v3459
  %v3461 = vpop.xlane.xlu0 %3460
  %v3462 = vrcp.pop %v3458
  %v3463 = vrcp.pop %v3461
  %v3464 = vmul.f32 %v3453, %v3462
  %v3465 = vmul.f32 %v3455, %v3463
  %v3467 = vsel %vm339, %v3464, 0
  %3469 = vmatprep.subr.mxu0 0.0
  %3470 = vmatpush1.msra.mxu0 %v3280
  %3471 = vmatprep.subr.mxu0 0.0
  %3472 = vmatpush1.msra.mxu0 0.0
  %3473 = vmatprep.subr.mxu0 0.0
  %3474 = vmatpush1.msra.mxu0 0.0
  %3475 = vmatprep.subr.mxu0 0.0
  %3476 = vmatpush1.msra.mxu0 0.0
  %3477 = vmatprep.subr.mxu0 0.0
  %3478 = vmatpush1.msra.mxu0 0.0
  %3479 = vmatprep.subr.mxu0 0.0
  %3480 = vmatpush1.msra.mxu0 0.0
  %3481 = vmatprep.subr.mxu0 0.0
  %3482 = vmatpush1.msra.mxu0 0.0
  %3483 = vmatprep.subr.mxu0 0.0
  %3484 = vmatpush1.msra.mxu0 0.0
  %3485 = vmatprep.subr.mxu0 0.0
  %3486 = vmatpush1.msra.mxu0 0.0
  %3487 = vmatprep.subr.mxu0 0.0
  %3488 = vmatpush1.msra.mxu0 0.0
  %3489 = vmatprep.subr.mxu0 0.0
  %3490 = vmatpush1.msra.mxu0 0.0
  %3491 = vmatprep.subr.mxu0 0.0
  %3492 = vmatpush1.msra.mxu0 0.0
  %3493 = vmatprep.subr.mxu0 0.0
  %3494 = vmatpush1.msra.mxu0 0.0
  %3495 = vmatprep.subr.mxu0 0.0
  %3496 = vmatpush1.msra.mxu0 0.0
  %3497 = vmatprep.subr.mxu0 0.0
  %3498 = vmatpush1.msra.mxu0 0.0
  %3499 = vmatprep.subr.mxu0 0.0
  %3500 = vmatpush1.msra.mxu0 0.0
  %3501 = vmatprep.subr.mxu0 0.0
  %3502 = vmatpush1.msra.mxu0 0.0
  %3503 = vmatprep.subr.mxu0 0.0
  %3504 = vmatpush1.msra.mxu0 0.0
  %3505 = vmatprep.subr.mxu0 0.0
  %3506 = vmatpush1.msra.mxu0 0.0
  %3507 = vmatprep.subr.mxu0 0.0
  %3508 = vmatpush1.msra.mxu0 0.0
  %3509 = vmatprep.subr.mxu0 0.0
  %3510 = vmatpush1.msra.mxu0 0.0
  %3511 = vmatprep.subr.mxu0 0.0
  %3512 = vmatpush1.msra.mxu0 0.0
  %3513 = vmatprep.subr.mxu0 0.0
  %3514 = vmatpush1.msra.mxu0 0.0
  %3515 = vmatprep.subr.mxu0 0.0
  %3516 = vmatpush1.msra.mxu0 0.0
  %3517 = vmatprep.subr.mxu0 0.0
  %3518 = vmatpush1.msra.mxu0 0.0
  %3519 = vmatprep.subr.mxu0 0.0
  %3520 = vmatpush1.msra.mxu0 0.0
  %3521 = vmatprep.subr.mxu0 0.0
  %3522 = vmatpush1.msra.mxu0 0.0
  %3523 = vmatprep.subr.mxu0 0.0
  %3524 = vmatpush1.msra.mxu0 0.0
  %3525 = vmatprep.subr.mxu0 0.0
  %3526 = vmatpush1.msra.mxu0 0.0
  %3527 = vmatprep.subr.mxu0 0.0
  %3528 = vmatpush1.msra.mxu0 0.0
  %3529 = vmatprep.subr.mxu0 0.0
  %3530 = vmatpush1.msra.mxu0 0.0
  %3531 = vmatprep.subr.mxu0 0.0
  %3532 = vmatpush1.msra.mxu0 0.0
  %3533 = vmatprep.mubr.f32.mxu0 0.0
  %3534 = vmatmul.mubr.f32.gmra.mrb[0].mxu0 %v3467
  %v3535 = vpop.f32.mrb[0].mxu0
  %v3536 = vadd.f32 0.0, %v3535
  %v3537 = vpop.f32.mrb[0].mxu0
  %3538 = vdwg.mxu0
  %v3540 = vsel %vm339, %v3465, 0
  %3542 = vmatprep.subr.mxu0 0.0
  %3543 = vmatpush1.msra.mxu0 %v3285
  %3544 = vmatprep.subr.mxu0 0.0
  %3545 = vmatpush1.msra.mxu0 0.0
  %3546 = vmatprep.subr.mxu0 0.0
  %3547 = vmatpush1.msra.mxu0 0.0
  %3548 = vmatprep.subr.mxu0 0.0
  %3549 = vmatpush1.msra.mxu0 0.0
  %3550 = vmatprep.subr.mxu0 0.0
  %3551 = vmatpush1.msra.mxu0 0.0
  %3552 = vmatprep.subr.mxu0 0.0
  %3553 = vmatpush1.msra.mxu0 0.0
  %3554 = vmatprep.subr.mxu0 0.0
  %3555 = vmatpush1.msra.mxu0 0.0
  %3556 = vmatprep.subr.mxu0 0.0
  %3557 = vmatpush1.msra.mxu0 0.0
  %3558 = vmatprep.subr.mxu0 0.0
  %3559 = vmatpush1.msra.mxu0 0.0
  %3560 = vmatprep.subr.mxu0 0.0
  %3561 = vmatpush1.msra.mxu0 0.0
  %3562 = vmatprep.subr.mxu0 0.0
  %3563 = vmatpush1.msra.mxu0 0.0
  %3564 = vmatprep.subr.mxu0 0.0
  %3565 = vmatpush1.msra.mxu0 0.0
  %3566 = vmatprep.subr.mxu0 0.0
  %3567 = vmatpush1.msra.mxu0 0.0
  %3568 = vmatprep.subr.mxu0 0.0
  %3569 = vmatpush1.msra.mxu0 0.0
  %3570 = vmatprep.subr.mxu0 0.0
  %3571 = vmatpush1.msra.mxu0 0.0
  %3572 = vmatprep.subr.mxu0 0.0
  %3573 = vmatpush1.msra.mxu0 0.0
  %3574 = vmatprep.subr.mxu0 0.0
  %3575 = vmatpush1.msra.mxu0 0.0
  %3576 = vmatprep.subr.mxu0 0.0
  %3577 = vmatpush1.msra.mxu0 0.0
  %3578 = vmatprep.subr.mxu0 0.0
  %3579 = vmatpush1.msra.mxu0 0.0
  %3580 = vmatprep.subr.mxu0 0.0
  %3581 = vmatpush1.msra.mxu0 0.0
  %3582 = vmatprep.subr.mxu0 0.0
  %3583 = vmatpush1.msra.mxu0 0.0
  %3584 = vmatprep.subr.mxu0 0.0
  %3585 = vmatpush1.msra.mxu0 0.0
  %3586 = vmatprep.subr.mxu0 0.0
  %3587 = vmatpush1.msra.mxu0 0.0
  %3588 = vmatprep.subr.mxu0 0.0
  %3589 = vmatpush1.msra.mxu0 0.0
  %3590 = vmatprep.subr.mxu0 0.0
  %3591 = vmatpush1.msra.mxu0 0.0
  %3592 = vmatprep.subr.mxu0 0.0
  %3593 = vmatpush1.msra.mxu0 0.0
  %3594 = vmatprep.subr.mxu0 0.0
  %3595 = vmatpush1.msra.mxu0 0.0
  %3596 = vmatprep.subr.mxu0 0.0
  %3597 = vmatpush1.msra.mxu0 0.0
  %3598 = vmatprep.subr.mxu0 0.0
  %3599 = vmatpush1.msra.mxu0 0.0
  %3600 = vmatprep.subr.mxu0 0.0
  %3601 = vmatpush1.msra.mxu0 0.0
  %3602 = vmatprep.subr.mxu0 0.0
  %3603 = vmatpush1.msra.mxu0 0.0
  %3604 = vmatprep.subr.mxu0 0.0
  %3605 = vmatpush1.msra.mxu0 0.0
  %3606 = vmatprep.mubr.f32.mxu0 0.0
  %3607 = vmatmul.mubr.f32.gmra.mrb[0].mxu0 %v3540
  %v3608 = vpop.f32.mrb[0].mxu0
  %v3609 = vadd.f32 0.0, %v3608
  %v3610 = vpop.f32.mrb[0].mxu0
  %3611 = vdwg.mxu0
  %s3612 = scalar_lea.vmem %s3, 32
  %v3613 = vld [vmem:[%s3612] sm:$0xff]
  %s3614 = scalar_lea.vmem %s2, 520
  %v3615 = vld [vmem:[%s3614] sm:$0xff]
  %v3616 = vld [vmem:[%s3614 + $0x8] sm:$0xff]
  %v3617 = vld [vmem:[%s3614 + $0x10] sm:$0xff]
  %v3618 = vld [vmem:[%s3614 + $0x18] sm:$0xff]
  %v3619 = vld [vmem:[%s3614 + $0x20] sm:$0x1]
  %v3620 = vlaneseq
  %v3621 = vshrl.u32 %v3620, 7
  %v3622 = vsub.s32 0, %v3621
  %v3623 = vrot.slane %v3619, %v3622
  %3624 = vmatprep.subr.mxu0 0.0
  %3625 = vmatpush1.msra.mxu0 %v3615
  %3626 = vmatprep.subr.mxu0 0.0
  %3627 = vmatpush1.msra.mxu0 %v3616
  %3628 = vmatprep.subr.mxu0 0.0
  %3629 = vmatpush1.msra.mxu0 %v3617
  %3630 = vmatprep.subr.mxu0 0.0
  %3631 = vmatpush1.msra.mxu0 %v3618
  %3632 = vmatprep.subr.mxu0 0.0
  %3633 = vmatpush1.msra.mxu0 0.0
  %3634 = vmatprep.subr.mxu0 0.0
  %3635 = vmatpush1.msra.mxu0 0.0
  %3636 = vmatprep.subr.mxu0 0.0
  %3637 = vmatpush1.msra.mxu0 0.0
  %3638 = vmatprep.subr.mxu0 0.0
  %3639 = vmatpush1.msra.mxu0 0.0
  %3640 = vmatprep.subr.mxu0 0.0
  %3641 = vmatpush1.msra.mxu0 0.0
  %3642 = vmatprep.subr.mxu0 0.0
  %3643 = vmatpush1.msra.mxu0 0.0
  %3644 = vmatprep.subr.mxu0 0.0
  %3645 = vmatpush1.msra.mxu0 0.0
  %3646 = vmatprep.subr.mxu0 0.0
  %3647 = vmatpush1.msra.mxu0 0.0
  %3648 = vmatprep.subr.mxu0 0.0
  %3649 = vmatpush1.msra.mxu0 0.0
  %3650 = vmatprep.subr.mxu0 0.0
  %3651 = vmatpush1.msra.mxu0 0.0
  %3652 = vmatprep.subr.mxu0 0.0
  %3653 = vmatpush1.msra.mxu0 0.0
  %3654 = vmatprep.subr.mxu0 0.0
  %3655 = vmatpush1.msra.mxu0 0.0
  %3656 = vmatprep.subr.mxu0 0.0
  %3657 = vmatpush1.msra.mxu0 0.0
  %3658 = vmatprep.subr.mxu0 0.0
  %3659 = vmatpush1.msra.mxu0 0.0
  %3660 = vmatprep.subr.mxu0 0.0
  %3661 = vmatpush1.msra.mxu0 0.0
  %3662 = vmatprep.subr.mxu0 0.0
  %3663 = vmatpush1.msra.mxu0 0.0
  %3664 = vmatprep.subr.mxu0 0.0
  %3665 = vmatpush1.msra.mxu0 0.0
  %3666 = vmatprep.subr.mxu0 0.0
  %3667 = vmatpush1.msra.mxu0 0.0
  %3668 = vmatprep.subr.mxu0 0.0
  %3669 = vmatpush1.msra.mxu0 0.0
  %3670 = vmatprep.subr.mxu0 0.0
  %3671 = vmatpush1.msra.mxu0 0.0
  %3672 = vmatprep.subr.mxu0 0.0
  %3673 = vmatpush1.msra.mxu0 0.0
  %3674 = vmatprep.subr.mxu0 0.0
  %3675 = vmatpush1.msra.mxu0 0.0
  %3676 = vmatprep.subr.mxu0 0.0
  %3677 = vmatpush1.msra.mxu0 0.0
  %3678 = vmatprep.subr.mxu0 0.0
  %3679 = vmatpush1.msra.mxu0 0.0
  %3680 = vmatprep.subr.mxu0 0.0
  %3681 = vmatpush1.msra.mxu0 0.0
  %3682 = vmatprep.subr.mxu0 0.0
  %3683 = vmatpush1.msra.mxu0 0.0
  %3684 = vmatprep.subr.mxu0 0.0
  %3685 = vmatpush1.msra.mxu0 0.0
  %3686 = vmatprep.subr.mxu0 0.0
  %3687 = vmatpush1.msra.mxu0 0.0
  %3688 = vmatprep.mubr.f32.mxu0 0.0
  %3689 = vmatmul.mubr.f32.gmra.mrb[0].mxu0 %v3038
  %v3690 = vpop.f32.mrb[0].mxu0
  %v3691 = vadd.f32 %v3623, %v3690
  %v3692 = vpop.f32.mrb[0].mxu0
  %3693 = vmatprep.mubr.f32.mxu0 0.0
  %3694 = vmatmul.mubr.f32.gmra.mrb[0].mxu0 %v3041
  %v3695 = vpop.f32.mrb[0].mxu0
  %v3696 = vadd.f32 %v3623, %v3695
  %v3697 = vpop.f32.mrb[0].mxu0
  %3698 = vdwg.mxu0
  %s3699 = scalar_lea.vmem %s2, 680
  %v3700 = vld [vmem:[%s3699] sm:$0xff]
  %v3701 = vld [vmem:[%s3699 + $0x8] sm:$0xff]
  %v3702 = vld [vmem:[%s3699 + $0x10] sm:$0xff]
  %v3703 = vld [vmem:[%s3699 + $0x18] sm:$0xff]
  %v3704 = vld [vmem:[%s3699 + $0x20] sm:$0x1]
  %v3705 = vlaneseq
  %v3706 = vshrl.u32 %v3705, 7
  %v3707 = vsub.s32 0, %v3706
  %v3708 = vrot.slane %v3704, %v3707
  %3709 = vmatprep.subr.mxu0 0.0
  %3710 = vmatpush1.msra.mxu0 %v3700
  %3711 = vmatprep.subr.mxu0 0.0
  %3712 = vmatpush1.msra.mxu0 %v3701
  %3713 = vmatprep.subr.mxu0 0.0
  %3714 = vmatpush1.msra.mxu0 %v3702
  %3715 = vmatprep.subr.mxu0 0.0
  %3716 = vmatpush1.msra.mxu0 %v3703
  %3717 = vmatprep.subr.mxu0 0.0
  %3718 = vmatpush1.msra.mxu0 0.0
  %3719 = vmatprep.subr.mxu0 0.0
  %3720 = vmatpush1.msra.mxu0 0.0
  %3721 = vmatprep.subr.mxu0 0.0
  %3722 = vmatpush1.msra.mxu0 0.0
  %3723 = vmatprep.subr.mxu0 0.0
  %3724 = vmatpush1.msra.mxu0 0.0
  %3725 = vmatprep.subr.mxu0 0.0
  %3726 = vmatpush1.msra.mxu0 0.0
  %3727 = vmatprep.subr.mxu0 0.0
  %3728 = vmatpush1.msra.mxu0 0.0
  %3729 = vmatprep.subr.mxu0 0.0
  %3730 = vmatpush1.msra.mxu0 0.0
  %3731 = vmatprep.subr.mxu0 0.0
  %3732 = vmatpush1.msra.mxu0 0.0
  %3733 = vmatprep.subr.mxu0 0.0
  %3734 = vmatpush1.msra.mxu0 0.0
  %3735 = vmatprep.subr.mxu0 0.0
  %3736 = vmatpush1.msra.mxu0 0.0
  %3737 = vmatprep.subr.mxu0 0.0
  %3738 = vmatpush1.msra.mxu0 0.0
  %3739 = vmatprep.subr.mxu0 0.0
  %3740 = vmatpush1.msra.mxu0 0.0
  %3741 = vmatprep.subr.mxu0 0.0
  %3742 = vmatpush1.msra.mxu0 0.0
  %3743 = vmatprep.subr.mxu0 0.0
  %3744 = vmatpush1.msra.mxu0 0.0
  %3745 = vmatprep.subr.mxu0 0.0
  %3746 = vmatpush1.msra.mxu0 0.0
  %3747 = vmatprep.subr.mxu0 0.0
  %3748 = vmatpush1.msra.mxu0 0.0
  %3749 = vmatprep.subr.mxu0 0.0
  %3750 = vmatpush1.msra.mxu0 0.0
  %3751 = vmatprep.subr.mxu0 0.0
  %3752 = vmatpush1.msra.mxu0 0.0
  %3753 = vmatprep.subr.mxu0 0.0
  %3754 = vmatpush1.msra.mxu0 0.0
  %3755 = vmatprep.subr.mxu0 0.0
  %3756 = vmatpush1.msra.mxu0 0.0
  %3757 = vmatprep.subr.mxu0 0.0
  %3758 = vmatpush1.msra.mxu0 0.0
  %3759 = vmatprep.subr.mxu0 0.0
  %3760 = vmatpush1.msra.mxu0 0.0
  %3761 = vmatprep.subr.mxu0 0.0
  %3762 = vmatpush1.msra.mxu0 0.0
  %3763 = vmatprep.subr.mxu0 0.0
  %3764 = vmatpush1.msra.mxu0 0.0
  %3765 = vmatprep.subr.mxu0 0.0
  %3766 = vmatpush1.msra.mxu0 0.0
  %3767 = vmatprep.subr.mxu0 0.0
  %3768 = vmatpush1.msra.mxu0 0.0
  %3769 = vmatprep.subr.mxu0 0.0
  %3770 = vmatpush1.msra.mxu0 0.0
  %3771 = vmatprep.subr.mxu0 0.0
  %3772 = vmatpush1.msra.mxu0 0.0
  %3773 = vmatprep.mubr.f32.mxu0 0.0
  %3774 = vmatmul.mubr.f32.gmra.mrb[0].mxu0 %v3038
  %v3775 = vpop.f32.mrb[0].mxu0
  %v3776 = vadd.f32 %v3708, %v3775
  %v3777 = vpop.f32.mrb[0].mxu0
  %3778 = vmatprep.mubr.f32.mxu0 0.0
  %3779 = vmatmul.mubr.f32.gmra.mrb[0].mxu0 %v3041
  %v3780 = vpop.f32.mrb[0].mxu0
  %v3781 = vadd.f32 %v3708, %v3780
  %v3782 = vpop.f32.mrb[0].mxu0
  %3783 = vdwg.mxu0
  %s3784 = scalar_lea.vmem %s2, 840
  %v3785 = vld [vmem:[%s3784] sm:$0xff]
  %v3786 = vld [vmem:[%s3784 + $0x8] sm:$0xff]
  %v3787 = vld [vmem:[%s3784 + $0x10] sm:$0xff]
  %v3788 = vld [vmem:[%s3784 + $0x18] sm:$0xff]
  %v3789 = vld [vmem:[%s3784 + $0x20] sm:$0x1]
  %v3790 = vlaneseq
  %v3791 = vshrl.u32 %v3790, 7
  %v3792 = vsub.s32 0, %v3791
  %v3793 = vrot.slane %v3789, %v3792
  %3794 = vmatprep.subr.mxu0 0.0
  %3795 = vmatpush1.msra.mxu0 %v3785
  %3796 = vmatprep.subr.mxu0 0.0
  %3797 = vmatpush1.msra.mxu0 %v3786
  %3798 = vmatprep.subr.mxu0 0.0
  %3799 = vmatpush1.msra.mxu0 %v3787
  %3800 = vmatprep.subr.mxu0 0.0
  %3801 = vmatpush1.msra.mxu0 %v3788
  %3802 = vmatprep.subr.mxu0 0.0
  %3803 = vmatpush1.msra.mxu0 0.0
  %3804 = vmatprep.subr.mxu0 0.0
  %3805 = vmatpush1.msra.mxu0 0.0
  %3806 = vmatprep.subr.mxu0 0.0
  %3807 = vmatpush1.msra.mxu0 0.0
  %3808 = vmatprep.subr.mxu0 0.0
  %3809 = vmatpush1.msra.mxu0 0.0
  %3810 = vmatprep.subr.mxu0 0.0
  %3811 = vmatpush1.msra.mxu0 0.0
  %3812 = vmatprep.subr.mxu0 0.0
  %3813 = vmatpush1.msra.mxu0 0.0
  %3814 = vmatprep.subr.mxu0 0.0
  %3815 = vmatpush1.msra.mxu0 0.0
  %3816 = vmatprep.subr.mxu0 0.0
  %3817 = vmatpush1.msra.mxu0 0.0
  %3818 = vmatprep.subr.mxu0 0.0
  %3819 = vmatpush1.msra.mxu0 0.0
  %3820 = vmatprep.subr.mxu0 0.0
  %3821 = vmatpush1.msra.mxu0 0.0
  %3822 = vmatprep.subr.mxu0 0.0
  %3823 = vmatpush1.msra.mxu0 0.0
  %3824 = vmatprep.subr.mxu0 0.0
  %3825 = vmatpush1.msra.mxu0 0.0
  %3826 = vmatprep.subr.mxu0 0.0
  %3827 = vmatpush1.msra.mxu0 0.0
  %3828 = vmatprep.subr.mxu0 0.0
  %3829 = vmatpush1.msra.mxu0 0.0
  %3830 = vmatprep.subr.mxu0 0.0
  %3831 = vmatpush1.msra.mxu0 0.0
  %3832 = vmatprep.subr.mxu0 0.0
  %3833 = vmatpush1.msra.mxu0 0.0
  %3834 = vmatprep.subr.mxu0 0.0
  %3835 = vmatpush1.msra.mxu0 0.0
  %3836 = vmatprep.subr.mxu0 0.0
  %3837 = vmatpush1.msra.mxu0 0.0
  %3838 = vmatprep.subr.mxu0 0.0
  %3839 = vmatpush1.msra.mxu0 0.0
  %3840 = vmatprep.subr.mxu0 0.0
  %3841 = vmatpush1.msra.mxu0 0.0
  %3842 = vmatprep.subr.mxu0 0.0
  %3843 = vmatpush1.msra.mxu0 0.0
  %3844 = vmatprep.subr.mxu0 0.0
  %3845 = vmatpush1.msra.mxu0 0.0
  %3846 = vmatprep.subr.mxu0 0.0
  %3847 = vmatpush1.msra.mxu0 0.0
  %3848 = vmatprep.subr.mxu0 0.0
  %3849 = vmatpush1.msra.mxu0 0.0
  %3850 = vmatprep.subr.mxu0 0.0
  %3851 = vmatpush1.msra.mxu0 0.0
  %3852 = vmatprep.subr.mxu0 0.0
  %3853 = vmatpush1.msra.mxu0 0.0
  %3854 = vmatprep.subr.mxu0 0.0
  %3855 = vmatpush1.msra.mxu0 0.0
  %3856 = vmatprep.subr.mxu0 0.0
  %3857 = vmatpush1.msra.mxu0 0.0
  %3858 = vmatprep.mubr.f32.mxu0 0.0
  %3859 = vmatmul.mubr.f32.gmra.mrb[0].mxu0 %v3038
  %v3860 = vpop.f32.mrb[0].mxu0
  %v3861 = vadd.f32 %v3793, %v3860
  %v3862 = vpop.f32.mrb[0].mxu0
  %3863 = vmatprep.mubr.f32.mxu0 0.0
  %3864 = vmatmul.mubr.f32.gmra.mrb[0].mxu0 %v3041
  %v3865 = vpop.f32.mrb[0].mxu0
  %v3866 = vadd.f32 %v3793, %v3865
  %v3867 = vpop.f32.mrb[0].mxu0
  %3868 = vdwg.mxu0
  %v3870 = vsel %vm339, %v3691, 0
  %v3873 = vsel %vm339, %v3776, 0
  %3875 = vmatprep.subr.mxu0 0.0
  %3876 = vmatpush1.xpose.msra.mxu0 %v3873
  %3877 = vmatprep.subr.mxu0 0.0
  %3878 = vmatpush1.xpose.msra.mxu0 0.0
  %3879 = vmatprep.subr.mxu0 0.0
  %3880 = vmatpush1.xpose.msra.mxu0 0.0
  %3881 = vmatprep.subr.mxu0 0.0
  %3882 = vmatpush1.xpose.msra.mxu0 0.0
  %3883 = vmatprep.subr.mxu0 0.0
  %3884 = vmatpush1.xpose.msra.mxu0 0.0
  %3885 = vmatprep.subr.mxu0 0.0
  %3886 = vmatpush1.xpose.msra.mxu0 0.0
  %3887 = vmatprep.subr.mxu0 0.0
  %3888 = vmatpush1.xpose.msra.mxu0 0.0
  %3889 = vmatprep.subr.mxu0 0.0
  %3890 = vmatpush1.xpose.msra.mxu0 0.0
  %3891 = vmatprep.subr.mxu0 0.0
  %3892 = vmatpush1.xpose.msra.mxu0 0.0
  %3893 = vmatprep.subr.mxu0 0.0
  %3894 = vmatpush1.xpose.msra.mxu0 0.0
  %3895 = vmatprep.subr.mxu0 0.0
  %3896 = vmatpush1.xpose.msra.mxu0 0.0
  %3897 = vmatprep.subr.mxu0 0.0
  %3898 = vmatpush1.xpose.msra.mxu0 0.0
  %3899 = vmatprep.subr.mxu0 0.0
  %3900 = vmatpush1.xpose.msra.mxu0 0.0
  %3901 = vmatprep.subr.mxu0 0.0
  %3902 = vmatpush1.xpose.msra.mxu0 0.0
  %3903 = vmatprep.subr.mxu0 0.0
  %3904 = vmatpush1.xpose.msra.mxu0 0.0
  %3905 = vmatprep.subr.mxu0 0.0
  %3906 = vmatpush1.xpose.msra.mxu0 0.0
  %3907 = vmatprep.subr.mxu0 0.0
  %3908 = vmatpush1.xpose.msra.mxu0 0.0
  %3909 = vmatprep.subr.mxu0 0.0
  %3910 = vmatpush1.xpose.msra.mxu0 0.0
  %3911 = vmatprep.subr.mxu0 0.0
  %3912 = vmatpush1.xpose.msra.mxu0 0.0
  %3913 = vmatprep.subr.mxu0 0.0
  %3914 = vmatpush1.xpose.msra.mxu0 0.0
  %3915 = vmatprep.subr.mxu0 0.0
  %3916 = vmatpush1.xpose.msra.mxu0 0.0
  %3917 = vmatprep.subr.mxu0 0.0
  %3918 = vmatpush1.xpose.msra.mxu0 0.0
  %3919 = vmatprep.subr.mxu0 0.0
  %3920 = vmatpush1.xpose.msra.mxu0 0.0
  %3921 = vmatprep.subr.mxu0 0.0
  %3922 = vmatpush1.xpose.msra.mxu0 0.0
  %3923 = vmatprep.subr.mxu0 0.0
  %3924 = vmatpush1.xpose.msra.mxu0 0.0
  %3925 = vmatprep.subr.mxu0 0.0
  %3926 = vmatpush1.xpose.msra.mxu0 0.0
  %3927 = vmatprep.subr.mxu0 0.0
  %3928 = vmatpush1.xpose.msra.mxu0 0.0
  %3929 = vmatprep.subr.mxu0 0.0
  %3930 = vmatpush1.xpose.msra.mxu0 0.0
  %3931 = vmatprep.subr.mxu0 0.0
  %3932 = vmatpush1.xpose.msra.mxu0 0.0
  %3933 = vmatprep.subr.mxu0 0.0
  %3934 = vmatpush1.xpose.msra.mxu0 0.0
  %3935 = vmatprep.subr.mxu0 0.0
  %3936 = vmatpush1.xpose.msra.mxu0 0.0
  %3937 = vmatprep.subr.mxu0 0.0
  %3938 = vmatpush1.xpose.msra.mxu0 0.0
  %3939 = vmatprep.mubr.f32.mxu0 0.0
  %3940 = vmatmul.mubr.f32.gmra.mrb[0].mxu0 %v3870
  %v3941 = vpop.f32.mrb[0].mxu0
  %v3942 = vadd.f32 0.0, %v3941
  %v3943 = vpop.f32.mrb[0].mxu0
  %3944 = vdwg.mxu0
  %v3946 = vsel %vm339, %v3696, 0
  %v3949 = vsel %vm339, %v3781, 0
  %3951 = vmatprep.subr.mxu0 0.0
  %3952 = vmatpush1.xpose.msra.mxu0 %v3949
  %3953 = vmatprep.subr.mxu0 0.0
  %3954 = vmatpush1.xpose.msra.mxu0 0.0
  %3955 = vmatprep.subr.mxu0 0.0
  %3956 = vmatpush1.xpose.msra.mxu0 0.0
  %3957 = vmatprep.subr.mxu0 0.0
  %3958 = vmatpush1.xpose.msra.mxu0 0.0
  %3959 = vmatprep.subr.mxu0 0.0
  %3960 = vmatpush1.xpose.msra.mxu0 0.0
  %3961 = vmatprep.subr.mxu0 0.0
  %3962 = vmatpush1.xpose.msra.mxu0 0.0
  %3963 = vmatprep.subr.mxu0 0.0
  %3964 = vmatpush1.xpose.msra.mxu0 0.0
  %3965 = vmatprep.subr.mxu0 0.0
  %3966 = vmatpush1.xpose.msra.mxu0 0.0
  %3967 = vmatprep.subr.mxu0 0.0
  %3968 = vmatpush1.xpose.msra.mxu0 0.0
  %3969 = vmatprep.subr.mxu0 0.0
  %3970 = vmatpush1.xpose.msra.mxu0 0.0
  %3971 = vmatprep.subr.mxu0 0.0
  %3972 = vmatpush1.xpose.msra.mxu0 0.0
  %3973 = vmatprep.subr.mxu0 0.0
  %3974 = vmatpush1.xpose.msra.mxu0 0.0
  %3975 = vmatprep.subr.mxu0 0.0
  %3976 = vmatpush1.xpose.msra.mxu0 0.0
  %3977 = vmatprep.subr.mxu0 0.0
  %3978 = vmatpush1.xpose.msra.mxu0 0.0
  %3979 = vmatprep.subr.mxu0 0.0
  %3980 = vmatpush1.xpose.msra.mxu0 0.0
  %3981 = vmatprep.subr.mxu0 0.0
  %3982 = vmatpush1.xpose.msra.mxu0 0.0
  %3983 = vmatprep.subr.mxu0 0.0
  %3984 = vmatpush1.xpose.msra.mxu0 0.0
  %3985 = vmatprep.subr.mxu0 0.0
  %3986 = vmatpush1.xpose.msra.mxu0 0.0
  %3987 = vmatprep.subr.mxu0 0.0
  %3988 = vmatpush1.xpose.msra.mxu0 0.0
  %3989 = vmatprep.subr.mxu0 0.0
  %3990 = vmatpush1.xpose.msra.mxu0 0.0
  %3991 = vmatprep.subr.mxu0 0.0
  %3992 = vmatpush1.xpose.msra.mxu0 0.0
  %3993 = vmatprep.subr.mxu0 0.0
  %3994 = vmatpush1.xpose.msra.mxu0 0.0
  %3995 = vmatprep.subr.mxu0 0.0
  %3996 = vmatpush1.xpose.msra.mxu0 0.0
  %3997 = vmatprep.subr.mxu0 0.0
  %3998 = vmatpush1.xpose.msra.mxu0 0.0
  %3999 = vmatprep.subr.mxu0 0.0
  %4000 = vmatpush1.xpose.msra.mxu0 0.0
  %4001 = vmatprep.subr.mxu0 0.0
  %4002 = vmatpush1.xpose.msra.mxu0 0.0
  %4003 = vmatprep.subr.mxu0 0.0
  %4004 = vmatpush1.xpose.msra.mxu0 0.0
  %4005 = vmatprep.subr.mxu0 0.0
  %4006 = vmatpush1.xpose.msra.mxu0 0.0
  %4007 = vmatprep.subr.mxu0 0.0
  %4008 = vmatpush1.xpose.msra.mxu0 0.0
  %4009 = vmatprep.subr.mxu0 0.0
  %4010 = vmatpush1.xpose.msra.mxu0 0.0
  %4011 = vmatprep.subr.mxu0 0.0
  %4012 = vmatpush1.xpose.msra.mxu0 0.0
  %4013 = vmatprep.subr.mxu0 0.0
  %4014 = vmatpush1.xpose.msra.mxu0 0.0
  %4015 = vmatprep.mubr.f32.mxu0 0.0
  %4016 = vmatmul.mubr.f32.gmra.mrb[0].mxu0 %v3946
  %v4017 = vpop.f32.mrb[0].mxu0
  %v4018 = vadd.f32 0.0, %v4017
  %v4019 = vpop.f32.mrb[0].mxu0
  %4020 = vdwg.mxu0
  %v4021 = vmul.f32 %v3942, 0.35355338
  %v4022 = vmul.f32 %v4018, 0.35355338
  %v4023 = vsel %vm495, %v4021, -1e+30
  %v4024 = vsel %vm495, %v4022, -1e+30
  %v4025 = vsel %vm339, %v4023, -inf
  %4026 = vmax.xlane.f32.xlu0 %v4025
  %v4027 = vpop.xlane.xlu0 %4026
  %v4028 = vsel %vm339, %v4024, -inf
  %4029 = vmax.xlane.f32.xlu0 %v4028
  %v4030 = vpop.xlane.xlu0 %4029
  %v4031 = vsub.f32 %v4023, %v4027
  %v4032 = vsub.f32 %v4024, %v4030
  %v4033 = vmul.f32 %v4031, 1.442695
  %v4034 = vpow.pop %v4033
  %v4035 = vmul.f32 %v4032, 1.442695
  %v4036 = vpow.pop %v4035
  %v4037 = vsel %vm339, %v4034, 0.0
  %4038 = vadd.xlane.f32.xlu0 %v4037
  %v4039 = vpop.xlane.xlu0 %4038
  %v4040 = vsel %vm339, %v4036, 0.0
  %4041 = vadd.xlane.f32.xlu0 %v4040
  %v4042 = vpop.xlane.xlu0 %4041
  %v4043 = vrcp.pop %v4039
  %v4044 = vrcp.pop %v4042
  %v4045 = vmul.f32 %v4034, %v4043
  %v4046 = vmul.f32 %v4036, %v4044
  %v4048 = vsel %vm339, %v4045, 0
  %4050 = vmatprep.subr.mxu0 0.0
  %4051 = vmatpush1.msra.mxu0 %v3861
  %4052 = vmatprep.subr.mxu0 0.0
  %4053 = vmatpush1.msra.mxu0 0.0
  %4054 = vmatprep.subr.mxu0 0.0
  %4055 = vmatpush1.msra.mxu0 0.0
  %4056 = vmatprep.subr.mxu0 0.0
  %4057 = vmatpush1.msra.mxu0 0.0
  %4058 = vmatprep.subr.mxu0 0.0
  %4059 = vmatpush1.msra.mxu0 0.0
  %4060 = vmatprep.subr.mxu0 0.0
  %4061 = vmatpush1.msra.mxu0 0.0
  %4062 = vmatprep.subr.mxu0 0.0
  %4063 = vmatpush1.msra.mxu0 0.0
  %4064 = vmatprep.subr.mxu0 0.0
  %4065 = vmatpush1.msra.mxu0 0.0
  %4066 = vmatprep.subr.mxu0 0.0
  %4067 = vmatpush1.msra.mxu0 0.0
  %4068 = vmatprep.subr.mxu0 0.0
  %4069 = vmatpush1.msra.mxu0 0.0
  %4070 = vmatprep.subr.mxu0 0.0
  %4071 = vmatpush1.msra.mxu0 0.0
  %4072 = vmatprep.subr.mxu0 0.0
  %4073 = vmatpush1.msra.mxu0 0.0
  %4074 = vmatprep.subr.mxu0 0.0
  %4075 = vmatpush1.msra.mxu0 0.0
  %4076 = vmatprep.subr.mxu0 0.0
  %4077 = vmatpush1.msra.mxu0 0.0
  %4078 = vmatprep.subr.mxu0 0.0
  %4079 = vmatpush1.msra.mxu0 0.0
  %4080 = vmatprep.subr.mxu0 0.0
  %4081 = vmatpush1.msra.mxu0 0.0
  %4082 = vmatprep.subr.mxu0 0.0
  %4083 = vmatpush1.msra.mxu0 0.0
  %4084 = vmatprep.subr.mxu0 0.0
  %4085 = vmatpush1.msra.mxu0 0.0
  %4086 = vmatprep.subr.mxu0 0.0
  %4087 = vmatpush1.msra.mxu0 0.0
  %4088 = vmatprep.subr.mxu0 0.0
  %4089 = vmatpush1.msra.mxu0 0.0
  %4090 = vmatprep.subr.mxu0 0.0
  %4091 = vmatpush1.msra.mxu0 0.0
  %4092 = vmatprep.subr.mxu0 0.0
  %4093 = vmatpush1.msra.mxu0 0.0
  %4094 = vmatprep.subr.mxu0 0.0
  %4095 = vmatpush1.msra.mxu0 0.0
  %4096 = vmatprep.subr.mxu0 0.0
  %4097 = vmatpush1.msra.mxu0 0.0
  %4098 = vmatprep.subr.mxu0 0.0
  %4099 = vmatpush1.msra.mxu0 0.0
  %4100 = vmatprep.subr.mxu0 0.0
  %4101 = vmatpush1.msra.mxu0 0.0
  %4102 = vmatprep.subr.mxu0 0.0
  %4103 = vmatpush1.msra.mxu0 0.0
  %4104 = vmatprep.subr.mxu0 0.0
  %4105 = vmatpush1.msra.mxu0 0.0
  %4106 = vmatprep.subr.mxu0 0.0
  %4107 = vmatpush1.msra.mxu0 0.0
  %4108 = vmatprep.subr.mxu0 0.0
  %4109 = vmatpush1.msra.mxu0 0.0
  %4110 = vmatprep.subr.mxu0 0.0
  %4111 = vmatpush1.msra.mxu0 0.0
  %4112 = vmatprep.subr.mxu0 0.0
  %4113 = vmatpush1.msra.mxu0 0.0
  %4114 = vmatprep.mubr.f32.mxu0 0.0
  %4115 = vmatmul.mubr.f32.gmra.mrb[0].mxu0 %v4048
  %v4116 = vpop.f32.mrb[0].mxu0
  %v4117 = vadd.f32 0.0, %v4116
  %v4118 = vpop.f32.mrb[0].mxu0
  %4119 = vdwg.mxu0
  %v4121 = vsel %vm339, %v4046, 0
  %4123 = vmatprep.subr.mxu0 0.0
  %4124 = vmatpush1.msra.mxu0 %v3866
  %4125 = vmatprep.subr.mxu0 0.0
  %4126 = vmatpush1.msra.mxu0 0.0
  %4127 = vmatprep.subr.mxu0 0.0
  %4128 = vmatpush1.msra.mxu0 0.0
  %4129 = vmatprep.subr.mxu0 0.0
  %4130 = vmatpush1.msra.mxu0 0.0
  %4131 = vmatprep.subr.mxu0 0.0
  %4132 = vmatpush1.msra.mxu0 0.0
  %4133 = vmatprep.subr.mxu0 0.0
  %4134 = vmatpush1.msra.mxu0 0.0
  %4135 = vmatprep.subr.mxu0 0.0
  %4136 = vmatpush1.msra.mxu0 0.0
  %4137 = vmatprep.subr.mxu0 0.0
  %4138 = vmatpush1.msra.mxu0 0.0
  %4139 = vmatprep.subr.mxu0 0.0
  %4140 = vmatpush1.msra.mxu0 0.0
  %4141 = vmatprep.subr.mxu0 0.0
  %4142 = vmatpush1.msra.mxu0 0.0
  %4143 = vmatprep.subr.mxu0 0.0
  %4144 = vmatpush1.msra.mxu0 0.0
  %4145 = vmatprep.subr.mxu0 0.0
  %4146 = vmatpush1.msra.mxu0 0.0
  %4147 = vmatprep.subr.mxu0 0.0
  %4148 = vmatpush1.msra.mxu0 0.0
  %4149 = vmatprep.subr.mxu0 0.0
  %4150 = vmatpush1.msra.mxu0 0.0
  %4151 = vmatprep.subr.mxu0 0.0
  %4152 = vmatpush1.msra.mxu0 0.0
  %4153 = vmatprep.subr.mxu0 0.0
  %4154 = vmatpush1.msra.mxu0 0.0
  %4155 = vmatprep.subr.mxu0 0.0
  %4156 = vmatpush1.msra.mxu0 0.0
  %4157 = vmatprep.subr.mxu0 0.0
  %4158 = vmatpush1.msra.mxu0 0.0
  %4159 = vmatprep.subr.mxu0 0.0
  %4160 = vmatpush1.msra.mxu0 0.0
  %4161 = vmatprep.subr.mxu0 0.0
  %4162 = vmatpush1.msra.mxu0 0.0
  %4163 = vmatprep.subr.mxu0 0.0
  %4164 = vmatpush1.msra.mxu0 0.0
  %4165 = vmatprep.subr.mxu0 0.0
  %4166 = vmatpush1.msra.mxu0 0.0
  %4167 = vmatprep.subr.mxu0 0.0
  %4168 = vmatpush1.msra.mxu0 0.0
  %4169 = vmatprep.subr.mxu0 0.0
  %4170 = vmatpush1.msra.mxu0 0.0
  %4171 = vmatprep.subr.mxu0 0.0
  %4172 = vmatpush1.msra.mxu0 0.0
  %4173 = vmatprep.subr.mxu0 0.0
  %4174 = vmatpush1.msra.mxu0 0.0
  %4175 = vmatprep.subr.mxu0 0.0
  %4176 = vmatpush1.msra.mxu0 0.0
  %4177 = vmatprep.subr.mxu0 0.0
  %4178 = vmatpush1.msra.mxu0 0.0
  %4179 = vmatprep.subr.mxu0 0.0
  %4180 = vmatpush1.msra.mxu0 0.0
  %4181 = vmatprep.subr.mxu0 0.0
  %4182 = vmatpush1.msra.mxu0 0.0
  %4183 = vmatprep.subr.mxu0 0.0
  %4184 = vmatpush1.msra.mxu0 0.0
  %4185 = vmatprep.subr.mxu0 0.0
  %4186 = vmatpush1.msra.mxu0 0.0
  %4187 = vmatprep.mubr.f32.mxu0 0.0
  %4188 = vmatmul.mubr.f32.gmra.mrb[0].mxu0 %v4121
  %v4189 = vpop.f32.mrb[0].mxu0
  %v4190 = vadd.f32 0.0, %v4189
  %v4191 = vpop.f32.mrb[0].mxu0
  %4192 = vdwg.mxu0
  %s4193 = scalar_lea.vmem %s3, 40
  %v4194 = vld [vmem:[%s4193] sm:$0xff]
  %v4196 = vsel %vm339, %v4117, 0
  %v4199 = vsel %vm339, %v4190, 0
  %4201 = vmatprep.subr.mxu0 0.0
  %4202 = vmatpush1.msra.mxu0 %v4194
  %4203 = vmatprep.subr.mxu0 0.0
  %4204 = vmatpush1.msra.mxu0 0.0
  %4205 = vmatprep.subr.mxu0 0.0
  %4206 = vmatpush1.msra.mxu0 0.0
  %4207 = vmatprep.subr.mxu0 0.0
  %4208 = vmatpush1.msra.mxu0 0.0
  %4209 = vmatprep.subr.mxu0 0.0
  %4210 = vmatpush1.msra.mxu0 0.0
  %4211 = vmatprep.subr.mxu0 0.0
  %4212 = vmatpush1.msra.mxu0 0.0
  %4213 = vmatprep.subr.mxu0 0.0
  %4214 = vmatpush1.msra.mxu0 0.0
  %4215 = vmatprep.subr.mxu0 0.0
  %4216 = vmatpush1.msra.mxu0 0.0
  %4217 = vmatprep.subr.mxu0 0.0
  %4218 = vmatpush1.msra.mxu0 0.0
  %4219 = vmatprep.subr.mxu0 0.0
  %4220 = vmatpush1.msra.mxu0 0.0
  %4221 = vmatprep.subr.mxu0 0.0
  %4222 = vmatpush1.msra.mxu0 0.0
  %4223 = vmatprep.subr.mxu0 0.0
  %4224 = vmatpush1.msra.mxu0 0.0
  %4225 = vmatprep.subr.mxu0 0.0
  %4226 = vmatpush1.msra.mxu0 0.0
  %4227 = vmatprep.subr.mxu0 0.0
  %4228 = vmatpush1.msra.mxu0 0.0
  %4229 = vmatprep.subr.mxu0 0.0
  %4230 = vmatpush1.msra.mxu0 0.0
  %4231 = vmatprep.subr.mxu0 0.0
  %4232 = vmatpush1.msra.mxu0 0.0
  %4233 = vmatprep.subr.mxu0 0.0
  %4234 = vmatpush1.msra.mxu0 0.0
  %4235 = vmatprep.subr.mxu0 0.0
  %4236 = vmatpush1.msra.mxu0 0.0
  %4237 = vmatprep.subr.mxu0 0.0
  %4238 = vmatpush1.msra.mxu0 0.0
  %4239 = vmatprep.subr.mxu0 0.0
  %4240 = vmatpush1.msra.mxu0 0.0
  %4241 = vmatprep.subr.mxu0 0.0
  %4242 = vmatpush1.msra.mxu0 0.0
  %4243 = vmatprep.subr.mxu0 0.0
  %4244 = vmatpush1.msra.mxu0 0.0
  %4245 = vmatprep.subr.mxu0 0.0
  %4246 = vmatpush1.msra.mxu0 0.0
  %4247 = vmatprep.subr.mxu0 0.0
  %4248 = vmatpush1.msra.mxu0 0.0
  %4249 = vmatprep.subr.mxu0 0.0
  %4250 = vmatpush1.msra.mxu0 0.0
  %4251 = vmatprep.subr.mxu0 0.0
  %4252 = vmatpush1.msra.mxu0 0.0
  %4253 = vmatprep.subr.mxu0 0.0
  %4254 = vmatpush1.msra.mxu0 0.0
  %4255 = vmatprep.subr.mxu0 0.0
  %4256 = vmatpush1.msra.mxu0 0.0
  %4257 = vmatprep.subr.mxu0 0.0
  %4258 = vmatpush1.msra.mxu0 0.0
  %4259 = vmatprep.subr.mxu0 0.0
  %4260 = vmatpush1.msra.mxu0 0.0
  %4261 = vmatprep.subr.mxu0 0.0
  %4262 = vmatpush1.msra.mxu0 0.0
  %4263 = vmatprep.subr.mxu0 0.0
  %4264 = vmatpush1.msra.mxu0 0.0
  %4265 = vmatprep.mubr.f32.mxu0 0.0
  %4266 = vmatmul.mubr.f32.gmra.mrb[0].mxu0 %v4196
  %v4267 = vpop.f32.mrb[0].mxu0
  %v4268 = vadd.f32 0.0, %v4267
  %v4269 = vpop.f32.mrb[0].mxu0
  %4270 = vmatprep.mubr.f32.mxu0 0.0
  %4271 = vmatmul.mubr.f32.gmra.mrb[0].mxu0 %v4199
  %v4272 = vpop.f32.mrb[0].mxu0
  %v4273 = vadd.f32 0.0, %v4272
  %v4274 = vpop.f32.mrb[0].mxu0
  %4275 = vdwg.mxu0
  %v4277 = vsel %vm339, %v3536, 0
  %v4280 = vsel %vm339, %v3609, 0
  %4282 = vmatprep.subr.mxu0 0.0
  %4283 = vmatpush1.msra.mxu0 %v3613
  %4284 = vmatprep.subr.mxu0 0.0
  %4285 = vmatpush1.msra.mxu0 0.0
  %4286 = vmatprep.subr.mxu0 0.0
  %4287 = vmatpush1.msra.mxu0 0.0
  %4288 = vmatprep.subr.mxu0 0.0
  %4289 = vmatpush1.msra.mxu0 0.0
  %4290 = vmatprep.subr.mxu0 0.0
  %4291 = vmatpush1.msra.mxu0 0.0
  %4292 = vmatprep.subr.mxu0 0.0
  %4293 = vmatpush1.msra.mxu0 0.0
  %4294 = vmatprep.subr.mxu0 0.0
  %4295 = vmatpush1.msra.mxu0 0.0
  %4296 = vmatprep.subr.mxu0 0.0
  %4297 = vmatpush1.msra.mxu0 0.0
  %4298 = vmatprep.subr.mxu0 0.0
  %4299 = vmatpush1.msra.mxu0 0.0
  %4300 = vmatprep.subr.mxu0 0.0
  %4301 = vmatpush1.msra.mxu0 0.0
  %4302 = vmatprep.subr.mxu0 0.0
  %4303 = vmatpush1.msra.mxu0 0.0
  %4304 = vmatprep.subr.mxu0 0.0
  %4305 = vmatpush1.msra.mxu0 0.0
  %4306 = vmatprep.subr.mxu0 0.0
  %4307 = vmatpush1.msra.mxu0 0.0
  %4308 = vmatprep.subr.mxu0 0.0
  %4309 = vmatpush1.msra.mxu0 0.0
  %4310 = vmatprep.subr.mxu0 0.0
  %4311 = vmatpush1.msra.mxu0 0.0
  %4312 = vmatprep.subr.mxu0 0.0
  %4313 = vmatpush1.msra.mxu0 0.0
  %4314 = vmatprep.subr.mxu0 0.0
  %4315 = vmatpush1.msra.mxu0 0.0
  %4316 = vmatprep.subr.mxu0 0.0
  %4317 = vmatpush1.msra.mxu0 0.0
  %4318 = vmatprep.subr.mxu0 0.0
  %4319 = vmatpush1.msra.mxu0 0.0
  %4320 = vmatprep.subr.mxu0 0.0
  %4321 = vmatpush1.msra.mxu0 0.0
  %4322 = vmatprep.subr.mxu0 0.0
  %4323 = vmatpush1.msra.mxu0 0.0
  %4324 = vmatprep.subr.mxu0 0.0
  %4325 = vmatpush1.msra.mxu0 0.0
  %4326 = vmatprep.subr.mxu0 0.0
  %4327 = vmatpush1.msra.mxu0 0.0
  %4328 = vmatprep.subr.mxu0 0.0
  %4329 = vmatpush1.msra.mxu0 0.0
  %4330 = vmatprep.subr.mxu0 0.0
  %4331 = vmatpush1.msra.mxu0 0.0
  %4332 = vmatprep.subr.mxu0 0.0
  %4333 = vmatpush1.msra.mxu0 0.0
  %4334 = vmatprep.subr.mxu0 0.0
  %4335 = vmatpush1.msra.mxu0 0.0
  %4336 = vmatprep.subr.mxu0 0.0
  %4337 = vmatpush1.msra.mxu0 0.0
  %4338 = vmatprep.subr.mxu0 0.0
  %4339 = vmatpush1.msra.mxu0 0.0
  %4340 = vmatprep.subr.mxu0 0.0
  %4341 = vmatpush1.msra.mxu0 0.0
  %4342 = vmatprep.subr.mxu0 0.0
  %4343 = vmatpush1.msra.mxu0 0.0
  %4344 = vmatprep.subr.mxu0 0.0
  %4345 = vmatpush1.msra.mxu0 0.0
  %4346 = vmatprep.mubr.f32.mxu0 0.0
  %4347 = vmatmul.mubr.f32.gmra.mrb[0].mxu0 %v4277
  %v4348 = vpop.f32.mrb[0].mxu0
  %v4349 = vadd.f32 %v4268, %v4348
  %v4350 = vpop.f32.mrb[0].mxu0
  %4351 = vmatprep.mubr.f32.mxu0 0.0
  %4352 = vmatmul.mubr.f32.gmra.mrb[0].mxu0 %v4280
  %v4353 = vpop.f32.mrb[0].mxu0
  %v4354 = vadd.f32 %v4273, %v4353
  %v4355 = vpop.f32.mrb[0].mxu0
  %4356 = vdwg.mxu0
  %s4357 = scalar_lea.vmem %s2, 560
  %v4358 = vld [vmem:[%s4357] sm:$0xff]
  %v4359 = vld [vmem:[%s4357 + $0x8] sm:$0xff]
  %v4360 = vld [vmem:[%s4357 + $0x10] sm:$0xff]
  %v4361 = vld [vmem:[%s4357 + $0x18] sm:$0xff]
  %v4362 = vld [vmem:[%s4357 + $0x20] sm:$0x1]
  %v4363 = vlaneseq
  %v4364 = vshrl.u32 %v4363, 7
  %v4365 = vsub.s32 0, %v4364
  %v4366 = vrot.slane %v4362, %v4365
  %4367 = vmatprep.subr.mxu0 0.0
  %4368 = vmatpush1.msra.mxu0 %v4358
  %4369 = vmatprep.subr.mxu0 0.0
  %4370 = vmatpush1.msra.mxu0 %v4359
  %4371 = vmatprep.subr.mxu0 0.0
  %4372 = vmatpush1.msra.mxu0 %v4360
  %4373 = vmatprep.subr.mxu0 0.0
  %4374 = vmatpush1.msra.mxu0 %v4361
  %4375 = vmatprep.subr.mxu0 0.0
  %4376 = vmatpush1.msra.mxu0 0.0
  %4377 = vmatprep.subr.mxu0 0.0
  %4378 = vmatpush1.msra.mxu0 0.0
  %4379 = vmatprep.subr.mxu0 0.0
  %4380 = vmatpush1.msra.mxu0 0.0
  %4381 = vmatprep.subr.mxu0 0.0
  %4382 = vmatpush1.msra.mxu0 0.0
  %4383 = vmatprep.subr.mxu0 0.0
  %4384 = vmatpush1.msra.mxu0 0.0
  %4385 = vmatprep.subr.mxu0 0.0
  %4386 = vmatpush1.msra.mxu0 0.0
  %4387 = vmatprep.subr.mxu0 0.0
  %4388 = vmatpush1.msra.mxu0 0.0
  %4389 = vmatprep.subr.mxu0 0.0
  %4390 = vmatpush1.msra.mxu0 0.0
  %4391 = vmatprep.subr.mxu0 0.0
  %4392 = vmatpush1.msra.mxu0 0.0
  %4393 = vmatprep.subr.mxu0 0.0
  %4394 = vmatpush1.msra.mxu0 0.0
  %4395 = vmatprep.subr.mxu0 0.0
  %4396 = vmatpush1.msra.mxu0 0.0
  %4397 = vmatprep.subr.mxu0 0.0
  %4398 = vmatpush1.msra.mxu0 0.0
  %4399 = vmatprep.subr.mxu0 0.0
  %4400 = vmatpush1.msra.mxu0 0.0
  %4401 = vmatprep.subr.mxu0 0.0
  %4402 = vmatpush1.msra.mxu0 0.0
  %4403 = vmatprep.subr.mxu0 0.0
  %4404 = vmatpush1.msra.mxu0 0.0
  %4405 = vmatprep.subr.mxu0 0.0
  %4406 = vmatpush1.msra.mxu0 0.0
  %4407 = vmatprep.subr.mxu0 0.0
  %4408 = vmatpush1.msra.mxu0 0.0
  %4409 = vmatprep.subr.mxu0 0.0
  %4410 = vmatpush1.msra.mxu0 0.0
  %4411 = vmatprep.subr.mxu0 0.0
  %4412 = vmatpush1.msra.mxu0 0.0
  %4413 = vmatprep.subr.mxu0 0.0
  %4414 = vmatpush1.msra.mxu0 0.0
  %4415 = vmatprep.subr.mxu0 0.0
  %4416 = vmatpush1.msra.mxu0 0.0
  %4417 = vmatprep.subr.mxu0 0.0
  %4418 = vmatpush1.msra.mxu0 0.0
  %4419 = vmatprep.subr.mxu0 0.0
  %4420 = vmatpush1.msra.mxu0 0.0
  %4421 = vmatprep.subr.mxu0 0.0
  %4422 = vmatpush1.msra.mxu0 0.0
  %4423 = vmatprep.subr.mxu0 0.0
  %4424 = vmatpush1.msra.mxu0 0.0
  %4425 = vmatprep.subr.mxu0 0.0
  %4426 = vmatpush1.msra.mxu0 0.0
  %4427 = vmatprep.subr.mxu0 0.0
  %4428 = vmatpush1.msra.mxu0 0.0
  %4429 = vmatprep.subr.mxu0 0.0
  %4430 = vmatpush1.msra.mxu0 0.0
  %4431 = vmatprep.mubr.f32.mxu0 0.0
  %4432 = vmatmul.mubr.f32.gmra.mrb[0].mxu0 %v3038
  %v4433 = vpop.f32.mrb[0].mxu0
  %v4434 = vadd.f32 %v4366, %v4433
  %v4435 = vpop.f32.mrb[0].mxu0
  %4436 = vmatprep.mubr.f32.mxu0 0.0
  %4437 = vmatmul.mubr.f32.gmra.mrb[0].mxu0 %v3041
  %v4438 = vpop.f32.mrb[0].mxu0
  %v4439 = vadd.f32 %v4366, %v4438
  %v4440 = vpop.f32.mrb[0].mxu0
  %4441 = vdwg.mxu0
  %s4442 = scalar_lea.vmem %s2, 720
  %v4443 = vld [vmem:[%s4442] sm:$0xff]
  %v4444 = vld [vmem:[%s4442 + $0x8] sm:$0xff]
  %v4445 = vld [vmem:[%s4442 + $0x10] sm:$0xff]
  %v4446 = vld [vmem:[%s4442 + $0x18] sm:$0xff]
  %v4447 = vld [vmem:[%s4442 + $0x20] sm:$0x1]
  %v4448 = vlaneseq
  %v4449 = vshrl.u32 %v4448, 7
  %v4450 = vsub.s32 0, %v4449
  %v4451 = vrot.slane %v4447, %v4450
  %4452 = vmatprep.subr.mxu0 0.0
  %4453 = vmatpush1.msra.mxu0 %v4443
  %4454 = vmatprep.subr.mxu0 0.0
  %4455 = vmatpush1.msra.mxu0 %v4444
  %4456 = vmatprep.subr.mxu0 0.0
  %4457 = vmatpush1.msra.mxu0 %v4445
  %4458 = vmatprep.subr.mxu0 0.0
  %4459 = vmatpush1.msra.mxu0 %v4446
  %4460 = vmatprep.subr.mxu0 0.0
  %4461 = vmatpush1.msra.mxu0 0.0
  %4462 = vmatprep.subr.mxu0 0.0
  %4463 = vmatpush1.msra.mxu0 0.0
  %4464 = vmatprep.subr.mxu0 0.0
  %4465 = vmatpush1.msra.mxu0 0.0
  %4466 = vmatprep.subr.mxu0 0.0
  %4467 = vmatpush1.msra.mxu0 0.0
  %4468 = vmatprep.subr.mxu0 0.0
  %4469 = vmatpush1.msra.mxu0 0.0
  %4470 = vmatprep.subr.mxu0 0.0
  %4471 = vmatpush1.msra.mxu0 0.0
  %4472 = vmatprep.subr.mxu0 0.0
  %4473 = vmatpush1.msra.mxu0 0.0
  %4474 = vmatprep.subr.mxu0 0.0
  %4475 = vmatpush1.msra.mxu0 0.0
  %4476 = vmatprep.subr.mxu0 0.0
  %4477 = vmatpush1.msra.mxu0 0.0
  %4478 = vmatprep.subr.mxu0 0.0
  %4479 = vmatpush1.msra.mxu0 0.0
  %4480 = vmatprep.subr.mxu0 0.0
  %4481 = vmatpush1.msra.mxu0 0.0
  %4482 = vmatprep.subr.mxu0 0.0
  %4483 = vmatpush1.msra.mxu0 0.0
  %4484 = vmatprep.subr.mxu0 0.0
  %4485 = vmatpush1.msra.mxu0 0.0
  %4486 = vmatprep.subr.mxu0 0.0
  %4487 = vmatpush1.msra.mxu0 0.0
  %4488 = vmatprep.subr.mxu0 0.0
  %4489 = vmatpush1.msra.mxu0 0.0
  %4490 = vmatprep.subr.mxu0 0.0
  %4491 = vmatpush1.msra.mxu0 0.0
  %4492 = vmatprep.subr.mxu0 0.0
  %4493 = vmatpush1.msra.mxu0 0.0
  %4494 = vmatprep.subr.mxu0 0.0
  %4495 = vmatpush1.msra.mxu0 0.0
  %4496 = vmatprep.subr.mxu0 0.0
  %4497 = vmatpush1.msra.mxu0 0.0
  %4498 = vmatprep.subr.mxu0 0.0
  %4499 = vmatpush1.msra.mxu0 0.0
  %4500 = vmatprep.subr.mxu0 0.0
  %4501 = vmatpush1.msra.mxu0 0.0
  %4502 = vmatprep.subr.mxu0 0.0
  %4503 = vmatpush1.msra.mxu0 0.0
  %4504 = vmatprep.subr.mxu0 0.0
  %4505 = vmatpush1.msra.mxu0 0.0
  %4506 = vmatprep.subr.mxu0 0.0
  %4507 = vmatpush1.msra.mxu0 0.0
  %4508 = vmatprep.subr.mxu0 0.0
  %4509 = vmatpush1.msra.mxu0 0.0
  %4510 = vmatprep.subr.mxu0 0.0
  %4511 = vmatpush1.msra.mxu0 0.0
  %4512 = vmatprep.subr.mxu0 0.0
  %4513 = vmatpush1.msra.mxu0 0.0
  %4514 = vmatprep.subr.mxu0 0.0
  %4515 = vmatpush1.msra.mxu0 0.0
  %4516 = vmatprep.mubr.f32.mxu0 0.0
  %4517 = vmatmul.mubr.f32.gmra.mrb[0].mxu0 %v3038
  %v4518 = vpop.f32.mrb[0].mxu0
  %v4519 = vadd.f32 %v4451, %v4518
  %v4520 = vpop.f32.mrb[0].mxu0
  %4521 = vmatprep.mubr.f32.mxu0 0.0
  %4522 = vmatmul.mubr.f32.gmra.mrb[0].mxu0 %v3041
  %v4523 = vpop.f32.mrb[0].mxu0
  %v4524 = vadd.f32 %v4451, %v4523
  %v4525 = vpop.f32.mrb[0].mxu0
  %4526 = vdwg.mxu0
  %s4527 = scalar_lea.vmem %s2, 880
  %v4528 = vld [vmem:[%s4527] sm:$0xff]
  %v4529 = vld [vmem:[%s4527 + $0x8] sm:$0xff]
  %v4530 = vld [vmem:[%s4527 + $0x10] sm:$0xff]
  %v4531 = vld [vmem:[%s4527 + $0x18] sm:$0xff]
  %v4532 = vld [vmem:[%s4527 + $0x20] sm:$0x1]
  %v4533 = vlaneseq
  %v4534 = vshrl.u32 %v4533, 7
  %v4535 = vsub.s32 0, %v4534
  %v4536 = vrot.slane %v4532, %v4535
  %4537 = vmatprep.subr.mxu0 0.0
  %4538 = vmatpush1.msra.mxu0 %v4528
  %4539 = vmatprep.subr.mxu0 0.0
  %4540 = vmatpush1.msra.mxu0 %v4529
  %4541 = vmatprep.subr.mxu0 0.0
  %4542 = vmatpush1.msra.mxu0 %v4530
  %4543 = vmatprep.subr.mxu0 0.0
  %4544 = vmatpush1.msra.mxu0 %v4531
  %4545 = vmatprep.subr.mxu0 0.0
  %4546 = vmatpush1.msra.mxu0 0.0
  %4547 = vmatprep.subr.mxu0 0.0
  %4548 = vmatpush1.msra.mxu0 0.0
  %4549 = vmatprep.subr.mxu0 0.0
  %4550 = vmatpush1.msra.mxu0 0.0
  %4551 = vmatprep.subr.mxu0 0.0
  %4552 = vmatpush1.msra.mxu0 0.0
  %4553 = vmatprep.subr.mxu0 0.0
  %4554 = vmatpush1.msra.mxu0 0.0
  %4555 = vmatprep.subr.mxu0 0.0
  %4556 = vmatpush1.msra.mxu0 0.0
  %4557 = vmatprep.subr.mxu0 0.0
  %4558 = vmatpush1.msra.mxu0 0.0
  %4559 = vmatprep.subr.mxu0 0.0
  %4560 = vmatpush1.msra.mxu0 0.0
  %4561 = vmatprep.subr.mxu0 0.0
  %4562 = vmatpush1.msra.mxu0 0.0
  %4563 = vmatprep.subr.mxu0 0.0
  %4564 = vmatpush1.msra.mxu0 0.0
  %4565 = vmatprep.subr.mxu0 0.0
  %4566 = vmatpush1.msra.mxu0 0.0
  %4567 = vmatprep.subr.mxu0 0.0
  %4568 = vmatpush1.msra.mxu0 0.0
  %4569 = vmatprep.subr.mxu0 0.0
  %4570 = vmatpush1.msra.mxu0 0.0
  %4571 = vmatprep.subr.mxu0 0.0
  %4572 = vmatpush1.msra.mxu0 0.0
  %4573 = vmatprep.subr.mxu0 0.0
  %4574 = vmatpush1.msra.mxu0 0.0
  %4575 = vmatprep.subr.mxu0 0.0
  %4576 = vmatpush1.msra.mxu0 0.0
  %4577 = vmatprep.subr.mxu0 0.0
  %4578 = vmatpush1.msra.mxu0 0.0
  %4579 = vmatprep.subr.mxu0 0.0
  %4580 = vmatpush1.msra.mxu0 0.0
  %4581 = vmatprep.subr.mxu0 0.0
  %4582 = vmatpush1.msra.mxu0 0.0
  %4583 = vmatprep.subr.mxu0 0.0
  %4584 = vmatpush1.msra.mxu0 0.0
  %4585 = vmatprep.subr.mxu0 0.0
  %4586 = vmatpush1.msra.mxu0 0.0
  %4587 = vmatprep.subr.mxu0 0.0
  %4588 = vmatpush1.msra.mxu0 0.0
  %4589 = vmatprep.subr.mxu0 0.0
  %4590 = vmatpush1.msra.mxu0 0.0
  %4591 = vmatprep.subr.mxu0 0.0
  %4592 = vmatpush1.msra.mxu0 0.0
  %4593 = vmatprep.subr.mxu0 0.0
  %4594 = vmatpush1.msra.mxu0 0.0
  %4595 = vmatprep.subr.mxu0 0.0
  %4596 = vmatpush1.msra.mxu0 0.0
  %4597 = vmatprep.subr.mxu0 0.0
  %4598 = vmatpush1.msra.mxu0 0.0
  %4599 = vmatprep.subr.mxu0 0.0
  %4600 = vmatpush1.msra.mxu0 0.0
  %4601 = vmatprep.mubr.f32.mxu0 0.0
  %4602 = vmatmul.mubr.f32.gmra.mrb[0].mxu0 %v3038
  %v4603 = vpop.f32.mrb[0].mxu0
  %v4604 = vadd.f32 %v4536, %v4603
  %v4605 = vpop.f32.mrb[0].mxu0
  %4606 = vmatprep.mubr.f32.mxu0 0.0
  %4607 = vmatmul.mubr.f32.gmra.mrb[0].mxu0 %v3041
  %v4608 = vpop.f32.mrb[0].mxu0
  %v4609 = vadd.f32 %v4536, %v4608
  %v4610 = vpop.f32.mrb[0].mxu0
  %4611 = vdwg.mxu0
  %v4613 = vsel %vm339, %v4434, 0
  %v4616 = vsel %vm339, %v4519, 0
  %4618 = vmatprep.subr.mxu0 0.0
  %4619 = vmatpush1.xpose.msra.mxu0 %v4616
  %4620 = vmatprep.subr.mxu0 0.0
  %4621 = vmatpush1.xpose.msra.mxu0 0.0
  %4622 = vmatprep.subr.mxu0 0.0
  %4623 = vmatpush1.xpose.msra.mxu0 0.0
  %4624 = vmatprep.subr.mxu0 0.0
  %4625 = vmatpush1.xpose.msra.mxu0 0.0
  %4626 = vmatprep.subr.mxu0 0.0
  %4627 = vmatpush1.xpose.msra.mxu0 0.0
  %4628 = vmatprep.subr.mxu0 0.0
  %4629 = vmatpush1.xpose.msra.mxu0 0.0
  %4630 = vmatprep.subr.mxu0 0.0
  %4631 = vmatpush1.xpose.msra.mxu0 0.0
  %4632 = vmatprep.subr.mxu0 0.0
  %4633 = vmatpush1.xpose.msra.mxu0 0.0
  %4634 = vmatprep.subr.mxu0 0.0
  %4635 = vmatpush1.xpose.msra.mxu0 0.0
  %4636 = vmatprep.subr.mxu0 0.0
  %4637 = vmatpush1.xpose.msra.mxu0 0.0
  %4638 = vmatprep.subr.mxu0 0.0
  %4639 = vmatpush1.xpose.msra.mxu0 0.0
  %4640 = vmatprep.subr.mxu0 0.0
  %4641 = vmatpush1.xpose.msra.mxu0 0.0
  %4642 = vmatprep.subr.mxu0 0.0
  %4643 = vmatpush1.xpose.msra.mxu0 0.0
  %4644 = vmatprep.subr.mxu0 0.0
  %4645 = vmatpush1.xpose.msra.mxu0 0.0
  %4646 = vmatprep.subr.mxu0 0.0
  %4647 = vmatpush1.xpose.msra.mxu0 0.0
  %4648 = vmatprep.subr.mxu0 0.0
  %4649 = vmatpush1.xpose.msra.mxu0 0.0
  %4650 = vmatprep.subr.mxu0 0.0
  %4651 = vmatpush1.xpose.msra.mxu0 0.0
  %4652 = vmatprep.subr.mxu0 0.0
  %4653 = vmatpush1.xpose.msra.mxu0 0.0
  %4654 = vmatprep.subr.mxu0 0.0
  %4655 = vmatpush1.xpose.msra.mxu0 0.0
  %4656 = vmatprep.subr.mxu0 0.0
  %4657 = vmatpush1.xpose.msra.mxu0 0.0
  %4658 = vmatprep.subr.mxu0 0.0
  %4659 = vmatpush1.xpose.msra.mxu0 0.0
  %4660 = vmatprep.subr.mxu0 0.0
  %4661 = vmatpush1.xpose.msra.mxu0 0.0
  %4662 = vmatprep.subr.mxu0 0.0
  %4663 = vmatpush1.xpose.msra.mxu0 0.0
  %4664 = vmatprep.subr.mxu0 0.0
  %4665 = vmatpush1.xpose.msra.mxu0 0.0
  %4666 = vmatprep.subr.mxu0 0.0
  %4667 = vmatpush1.xpose.msra.mxu0 0.0
  %4668 = vmatprep.subr.mxu0 0.0
  %4669 = vmatpush1.xpose.msra.mxu0 0.0
  %4670 = vmatprep.subr.mxu0 0.0
  %4671 = vmatpush1.xpose.msra.mxu0 0.0
  %4672 = vmatprep.subr.mxu0 0.0
  %4673 = vmatpush1.xpose.msra.mxu0 0.0
  %4674 = vmatprep.subr.mxu0 0.0
  %4675 = vmatpush1.xpose.msra.mxu0 0.0
  %4676 = vmatprep.subr.mxu0 0.0
  %4677 = vmatpush1.xpose.msra.mxu0 0.0
  %4678 = vmatprep.subr.mxu0 0.0
  %4679 = vmatpush1.xpose.msra.mxu0 0.0
  %4680 = vmatprep.subr.mxu0 0.0
  %4681 = vmatpush1.xpose.msra.mxu0 0.0
  %4682 = vmatprep.mubr.f32.mxu0 0.0
  %4683 = vmatmul.mubr.f32.gmra.mrb[0].mxu0 %v4613
  %v4684 = vpop.f32.mrb[0].mxu0
  %v4685 = vadd.f32 0.0, %v4684
  %v4686 = vpop.f32.mrb[0].mxu0
  %4687 = vdwg.mxu0
  %v4689 = vsel %vm339, %v4439, 0
  %v4692 = vsel %vm339, %v4524, 0
  %4694 = vmatprep.subr.mxu0 0.0
  %4695 = vmatpush1.xpose.msra.mxu0 %v4692
  %4696 = vmatprep.subr.mxu0 0.0
  %4697 = vmatpush1.xpose.msra.mxu0 0.0
  %4698 = vmatprep.subr.mxu0 0.0
  %4699 = vmatpush1.xpose.msra.mxu0 0.0
  %4700 = vmatprep.subr.mxu0 0.0
  %4701 = vmatpush1.xpose.msra.mxu0 0.0
  %4702 = vmatprep.subr.mxu0 0.0
  %4703 = vmatpush1.xpose.msra.mxu0 0.0
  %4704 = vmatprep.subr.mxu0 0.0
  %4705 = vmatpush1.xpose.msra.mxu0 0.0
  %4706 = vmatprep.subr.mxu0 0.0
  %4707 = vmatpush1.xpose.msra.mxu0 0.0
  %4708 = vmatprep.subr.mxu0 0.0
  %4709 = vmatpush1.xpose.msra.mxu0 0.0
  %4710 = vmatprep.subr.mxu0 0.0
  %4711 = vmatpush1.xpose.msra.mxu0 0.0
  %4712 = vmatprep.subr.mxu0 0.0
  %4713 = vmatpush1.xpose.msra.mxu0 0.0
  %4714 = vmatprep.subr.mxu0 0.0
  %4715 = vmatpush1.xpose.msra.mxu0 0.0
  %4716 = vmatprep.subr.mxu0 0.0
  %4717 = vmatpush1.xpose.msra.mxu0 0.0
  %4718 = vmatprep.subr.mxu0 0.0
  %4719 = vmatpush1.xpose.msra.mxu0 0.0
  %4720 = vmatprep.subr.mxu0 0.0
  %4721 = vmatpush1.xpose.msra.mxu0 0.0
  %4722 = vmatprep.subr.mxu0 0.0
  %4723 = vmatpush1.xpose.msra.mxu0 0.0
  %4724 = vmatprep.subr.mxu0 0.0
  %4725 = vmatpush1.xpose.msra.mxu0 0.0
  %4726 = vmatprep.subr.mxu0 0.0
  %4727 = vmatpush1.xpose.msra.mxu0 0.0
  %4728 = vmatprep.subr.mxu0 0.0
  %4729 = vmatpush1.xpose.msra.mxu0 0.0
  %4730 = vmatprep.subr.mxu0 0.0
  %4731 = vmatpush1.xpose.msra.mxu0 0.0
  %4732 = vmatprep.subr.mxu0 0.0
  %4733 = vmatpush1.xpose.msra.mxu0 0.0
  %4734 = vmatprep.subr.mxu0 0.0
  %4735 = vmatpush1.xpose.msra.mxu0 0.0
  %4736 = vmatprep.subr.mxu0 0.0
  %4737 = vmatpush1.xpose.msra.mxu0 0.0
  %4738 = vmatprep.subr.mxu0 0.0
  %4739 = vmatpush1.xpose.msra.mxu0 0.0
  %4740 = vmatprep.subr.mxu0 0.0
  %4741 = vmatpush1.xpose.msra.mxu0 0.0
  %4742 = vmatprep.subr.mxu0 0.0
  %4743 = vmatpush1.xpose.msra.mxu0 0.0
  %4744 = vmatprep.subr.mxu0 0.0
  %4745 = vmatpush1.xpose.msra.mxu0 0.0
  %4746 = vmatprep.subr.mxu0 0.0
  %4747 = vmatpush1.xpose.msra.mxu0 0.0
  %4748 = vmatprep.subr.mxu0 0.0
  %4749 = vmatpush1.xpose.msra.mxu0 0.0
  %4750 = vmatprep.subr.mxu0 0.0
  %4751 = vmatpush1.xpose.msra.mxu0 0.0
  %4752 = vmatprep.subr.mxu0 0.0
  %4753 = vmatpush1.xpose.msra.mxu0 0.0
  %4754 = vmatprep.subr.mxu0 0.0
  %4755 = vmatpush1.xpose.msra.mxu0 0.0
  %4756 = vmatprep.subr.mxu0 0.0
  %4757 = vmatpush1.xpose.msra.mxu0 0.0
  %4758 = vmatprep.mubr.f32.mxu0 0.0
  %4759 = vmatmul.mubr.f32.gmra.mrb[0].mxu0 %v4689
  %v4760 = vpop.f32.mrb[0].mxu0
  %v4761 = vadd.f32 0.0, %v4760
  %v4762 = vpop.f32.mrb[0].mxu0
  %4763 = vdwg.mxu0
  %v4764 = vmul.f32 %v4685, 0.35355338
  %v4765 = vmul.f32 %v4761, 0.35355338
  %v4766 = vsel %vm495, %v4764, -1e+30
  %v4767 = vsel %vm495, %v4765, -1e+30
  %v4768 = vsel %vm339, %v4766, -inf
  %4769 = vmax.xlane.f32.xlu0 %v4768
  %v4770 = vpop.xlane.xlu0 %4769
  %v4771 = vsel %vm339, %v4767, -inf
  %4772 = vmax.xlane.f32.xlu0 %v4771
  %v4773 = vpop.xlane.xlu0 %4772
  %v4774 = vsub.f32 %v4766, %v4770
  %v4775 = vsub.f32 %v4767, %v4773
  %v4776 = vmul.f32 %v4774, 1.442695
  %v4777 = vpow.pop %v4776
  %v4778 = vmul.f32 %v4775, 1.442695
  %v4779 = vpow.pop %v4778
  %v4780 = vsel %vm339, %v4777, 0.0
  %4781 = vadd.xlane.f32.xlu0 %v4780
  %v4782 = vpop.xlane.xlu0 %4781
  %v4783 = vsel %vm339, %v4779, 0.0
  %4784 = vadd.xlane.f32.xlu0 %v4783
  %v4785 = vpop.xlane.xlu0 %4784
  %v4786 = vrcp.pop %v4782
  %v4787 = vrcp.pop %v4785
  %v4788 = vmul.f32 %v4777, %v4786
  %v4789 = vmul.f32 %v4779, %v4787
  %v4791 = vsel %vm339, %v4788, 0
  %4793 = vmatprep.subr.mxu0 0.0
  %4794 = vmatpush1.msra.mxu0 %v4604
  %4795 = vmatprep.subr.mxu0 0.0
  %4796 = vmatpush1.msra.mxu0 0.0
  %4797 = vmatprep.subr.mxu0 0.0
  %4798 = vmatpush1.msra.mxu0 0.0
  %4799 = vmatprep.subr.mxu0 0.0
  %4800 = vmatpush1.msra.mxu0 0.0
  %4801 = vmatprep.subr.mxu0 0.0
  %4802 = vmatpush1.msra.mxu0 0.0
  %4803 = vmatprep.subr.mxu0 0.0
  %4804 = vmatpush1.msra.mxu0 0.0
  %4805 = vmatprep.subr.mxu0 0.0
  %4806 = vmatpush1.msra.mxu0 0.0
  %4807 = vmatprep.subr.mxu0 0.0
  %4808 = vmatpush1.msra.mxu0 0.0
  %4809 = vmatprep.subr.mxu0 0.0
  %4810 = vmatpush1.msra.mxu0 0.0
  %4811 = vmatprep.subr.mxu0 0.0
  %4812 = vmatpush1.msra.mxu0 0.0
  %4813 = vmatprep.subr.mxu0 0.0
  %4814 = vmatpush1.msra.mxu0 0.0
  %4815 = vmatprep.subr.mxu0 0.0
  %4816 = vmatpush1.msra.mxu0 0.0
  %4817 = vmatprep.subr.mxu0 0.0
  %4818 = vmatpush1.msra.mxu0 0.0
  %4819 = vmatprep.subr.mxu0 0.0
  %4820 = vmatpush1.msra.mxu0 0.0
  %4821 = vmatprep.subr.mxu0 0.0
  %4822 = vmatpush1.msra.mxu0 0.0
  %4823 = vmatprep.subr.mxu0 0.0
  %4824 = vmatpush1.msra.mxu0 0.0
  %4825 = vmatprep.subr.mxu0 0.0
  %4826 = vmatpush1.msra.mxu0 0.0
  %4827 = vmatprep.subr.mxu0 0.0
  %4828 = vmatpush1.msra.mxu0 0.0
  %4829 = vmatprep.subr.mxu0 0.0
  %4830 = vmatpush1.msra.mxu0 0.0
  %4831 = vmatprep.subr.mxu0 0.0
  %4832 = vmatpush1.msra.mxu0 0.0
  %4833 = vmatprep.subr.mxu0 0.0
  %4834 = vmatpush1.msra.mxu0 0.0
  %4835 = vmatprep.subr.mxu0 0.0
  %4836 = vmatpush1.msra.mxu0 0.0
  %4837 = vmatprep.subr.mxu0 0.0
  %4838 = vmatpush1.msra.mxu0 0.0
  %4839 = vmatprep.subr.mxu0 0.0
  %4840 = vmatpush1.msra.mxu0 0.0
  %4841 = vmatprep.subr.mxu0 0.0
  %4842 = vmatpush1.msra.mxu0 0.0
  %4843 = vmatprep.subr.mxu0 0.0
  %4844 = vmatpush1.msra.mxu0 0.0
  %4845 = vmatprep.subr.mxu0 0.0
  %4846 = vmatpush1.msra.mxu0 0.0
  %4847 = vmatprep.subr.mxu0 0.0
  %4848 = vmatpush1.msra.mxu0 0.0
  %4849 = vmatprep.subr.mxu0 0.0
  %4850 = vmatpush1.msra.mxu0 0.0
  %4851 = vmatprep.subr.mxu0 0.0
  %4852 = vmatpush1.msra.mxu0 0.0
  %4853 = vmatprep.subr.mxu0 0.0
  %4854 = vmatpush1.msra.mxu0 0.0
  %4855 = vmatprep.subr.mxu0 0.0
  %4856 = vmatpush1.msra.mxu0 0.0
  %4857 = vmatprep.mubr.f32.mxu0 0.0
  %4858 = vmatmul.mubr.f32.gmra.mrb[0].mxu0 %v4791
  %v4859 = vpop.f32.mrb[0].mxu0
  %v4860 = vadd.f32 0.0, %v4859
  %v4861 = vpop.f32.mrb[0].mxu0
  %4862 = vdwg.mxu0
  %v4864 = vsel %vm339, %v4789, 0
  %4866 = vmatprep.subr.mxu0 0.0
  %4867 = vmatpush1.msra.mxu0 %v4609
  %4868 = vmatprep.subr.mxu0 0.0
  %4869 = vmatpush1.msra.mxu0 0.0
  %4870 = vmatprep.subr.mxu0 0.0
  %4871 = vmatpush1.msra.mxu0 0.0
  %4872 = vmatprep.subr.mxu0 0.0
  %4873 = vmatpush1.msra.mxu0 0.0
  %4874 = vmatprep.subr.mxu0 0.0
  %4875 = vmatpush1.msra.mxu0 0.0
  %4876 = vmatprep.subr.mxu0 0.0
  %4877 = vmatpush1.msra.mxu0 0.0
  %4878 = vmatprep.subr.mxu0 0.0
  %4879 = vmatpush1.msra.mxu0 0.0
  %4880 = vmatprep.subr.mxu0 0.0
  %4881 = vmatpush1.msra.mxu0 0.0
  %4882 = vmatprep.subr.mxu0 0.0
  %4883 = vmatpush1.msra.mxu0 0.0
  %4884 = vmatprep.subr.mxu0 0.0
  %4885 = vmatpush1.msra.mxu0 0.0
  %4886 = vmatprep.subr.mxu0 0.0
  %4887 = vmatpush1.msra.mxu0 0.0
  %4888 = vmatprep.subr.mxu0 0.0
  %4889 = vmatpush1.msra.mxu0 0.0
  %4890 = vmatprep.subr.mxu0 0.0
  %4891 = vmatpush1.msra.mxu0 0.0
  %4892 = vmatprep.subr.mxu0 0.0
  %4893 = vmatpush1.msra.mxu0 0.0
  %4894 = vmatprep.subr.mxu0 0.0
  %4895 = vmatpush1.msra.mxu0 0.0
  %4896 = vmatprep.subr.mxu0 0.0
  %4897 = vmatpush1.msra.mxu0 0.0
  %4898 = vmatprep.subr.mxu0 0.0
  %4899 = vmatpush1.msra.mxu0 0.0
  %4900 = vmatprep.subr.mxu0 0.0
  %4901 = vmatpush1.msra.mxu0 0.0
  %4902 = vmatprep.subr.mxu0 0.0
  %4903 = vmatpush1.msra.mxu0 0.0
  %4904 = vmatprep.subr.mxu0 0.0
  %4905 = vmatpush1.msra.mxu0 0.0
  %4906 = vmatprep.subr.mxu0 0.0
  %4907 = vmatpush1.msra.mxu0 0.0
  %4908 = vmatprep.subr.mxu0 0.0
  %4909 = vmatpush1.msra.mxu0 0.0
  %4910 = vmatprep.subr.mxu0 0.0
  %4911 = vmatpush1.msra.mxu0 0.0
  %4912 = vmatprep.subr.mxu0 0.0
  %4913 = vmatpush1.msra.mxu0 0.0
  %4914 = vmatprep.subr.mxu0 0.0
  %4915 = vmatpush1.msra.mxu0 0.0
  %4916 = vmatprep.subr.mxu0 0.0
  %4917 = vmatpush1.msra.mxu0 0.0
  %4918 = vmatprep.subr.mxu0 0.0
  %4919 = vmatpush1.msra.mxu0 0.0
  %4920 = vmatprep.subr.mxu0 0.0
  %4921 = vmatpush1.msra.mxu0 0.0
  %4922 = vmatprep.subr.mxu0 0.0
  %4923 = vmatpush1.msra.mxu0 0.0
  %4924 = vmatprep.subr.mxu0 0.0
  %4925 = vmatpush1.msra.mxu0 0.0
  %4926 = vmatprep.subr.mxu0 0.0
  %4927 = vmatpush1.msra.mxu0 0.0
  %4928 = vmatprep.subr.mxu0 0.0
  %4929 = vmatpush1.msra.mxu0 0.0
  %4930 = vmatprep.mubr.f32.mxu0 0.0
  %4931 = vmatmul.mubr.f32.gmra.mrb[0].mxu0 %v4864
  %v4932 = vpop.f32.mrb[0].mxu0
  %v4933 = vadd.f32 0.0, %v4932
  %v4934 = vpop.f32.mrb[0].mxu0
  %4935 = vdwg.mxu0
  %s4936 = scalar_lea.vmem %s3, 48
  %v4937 = vld [vmem:[%s4936] sm:$0xff]
  %v4939 = vsel %vm339, %v4860, 0
  %v4942 = vsel %vm339, %v4933, 0
  %4944 = vmatprep.subr.mxu0 0.0
  %4945 = vmatpush1.msra.mxu0 %v4937
  %4946 = vmatprep.subr.mxu0 0.0
  %4947 = vmatpush1.msra.mxu0 0.0
  %4948 = vmatprep.subr.mxu0 0.0
  %4949 = vmatpush1.msra.mxu0 0.0
  %4950 = vmatprep.subr.mxu0 0.0
  %4951 = vmatpush1.msra.mxu0 0.0
  %4952 = vmatprep.subr.mxu0 0.0
  %4953 = vmatpush1.msra.mxu0 0.0
  %4954 = vmatprep.subr.mxu0 0.0
  %4955 = vmatpush1.msra.mxu0 0.0
  %4956 = vmatprep.subr.mxu0 0.0
  %4957 = vmatpush1.msra.mxu0 0.0
  %4958 = vmatprep.subr.mxu0 0.0
  %4959 = vmatpush1.msra.mxu0 0.0
  %4960 = vmatprep.subr.mxu0 0.0
  %4961 = vmatpush1.msra.mxu0 0.0
  %4962 = vmatprep.subr.mxu0 0.0
  %4963 = vmatpush1.msra.mxu0 0.0
  %4964 = vmatprep.subr.mxu0 0.0
  %4965 = vmatpush1.msra.mxu0 0.0
  %4966 = vmatprep.subr.mxu0 0.0
  %4967 = vmatpush1.msra.mxu0 0.0
  %4968 = vmatprep.subr.mxu0 0.0
  %4969 = vmatpush1.msra.mxu0 0.0
  %4970 = vmatprep.subr.mxu0 0.0
  %4971 = vmatpush1.msra.mxu0 0.0
  %4972 = vmatprep.subr.mxu0 0.0
  %4973 = vmatpush1.msra.mxu0 0.0
  %4974 = vmatprep.subr.mxu0 0.0
  %4975 = vmatpush1.msra.mxu0 0.0
  %4976 = vmatprep.subr.mxu0 0.0
  %4977 = vmatpush1.msra.mxu0 0.0
  %4978 = vmatprep.subr.mxu0 0.0
  %4979 = vmatpush1.msra.mxu0 0.0
  %4980 = vmatprep.subr.mxu0 0.0
  %4981 = vmatpush1.msra.mxu0 0.0
  %4982 = vmatprep.subr.mxu0 0.0
  %4983 = vmatpush1.msra.mxu0 0.0
  %4984 = vmatprep.subr.mxu0 0.0
  %4985 = vmatpush1.msra.mxu0 0.0
  %4986 = vmatprep.subr.mxu0 0.0
  %4987 = vmatpush1.msra.mxu0 0.0
  %4988 = vmatprep.subr.mxu0 0.0
  %4989 = vmatpush1.msra.mxu0 0.0
  %4990 = vmatprep.subr.mxu0 0.0
  %4991 = vmatpush1.msra.mxu0 0.0
  %4992 = vmatprep.subr.mxu0 0.0
  %4993 = vmatpush1.msra.mxu0 0.0
  %4994 = vmatprep.subr.mxu0 0.0
  %4995 = vmatpush1.msra.mxu0 0.0
  %4996 = vmatprep.subr.mxu0 0.0
  %4997 = vmatpush1.msra.mxu0 0.0
  %4998 = vmatprep.subr.mxu0 0.0
  %4999 = vmatpush1.msra.mxu0 0.0
  %5000 = vmatprep.subr.mxu0 0.0
  %5001 = vmatpush1.msra.mxu0 0.0
  %5002 = vmatprep.subr.mxu0 0.0
  %5003 = vmatpush1.msra.mxu0 0.0
  %5004 = vmatprep.subr.mxu0 0.0
  %5005 = vmatpush1.msra.mxu0 0.0
  %5006 = vmatprep.subr.mxu0 0.0
  %5007 = vmatpush1.msra.mxu0 0.0
  %5008 = vmatprep.mubr.f32.mxu0 0.0
  %5009 = vmatmul.mubr.f32.gmra.mrb[0].mxu0 %v4939
  %v5010 = vpop.f32.mrb[0].mxu0
  %v5011 = vadd.f32 0.0, %v5010
  %v5012 = vpop.f32.mrb[0].mxu0
  %5013 = vmatprep.mubr.f32.mxu0 0.0
  %5014 = vmatmul.mubr.f32.gmra.mrb[0].mxu0 %v4942
  %v5015 = vpop.f32.mrb[0].mxu0
  %v5016 = vadd.f32 0.0, %v5015
  %v5017 = vpop.f32.mrb[0].mxu0
  %5018 = vdwg.mxu0
  %v5019 = vadd.f32 %v4349, %v5011
  %v5020 = vadd.f32 %v4354, %v5016
  %s5021 = scalar_lea.vmem %s2, 600
  %v5022 = vld [vmem:[%s5021] sm:$0xff]
  %v5023 = vld [vmem:[%s5021 + $0x8] sm:$0xff]
  %v5024 = vld [vmem:[%s5021 + $0x10] sm:$0xff]
  %v5025 = vld [vmem:[%s5021 + $0x18] sm:$0xff]
  %v5026 = vld [vmem:[%s5021 + $0x20] sm:$0x1]
  %v5027 = vlaneseq
  %v5028 = vshrl.u32 %v5027, 7
  %v5029 = vsub.s32 0, %v5028
  %v5030 = vrot.slane %v5026, %v5029
  %5031 = vmatprep.subr.mxu0 0.0
  %5032 = vmatpush1.msra.mxu0 %v5022
  %5033 = vmatprep.subr.mxu0 0.0
  %5034 = vmatpush1.msra.mxu0 %v5023
  %5035 = vmatprep.subr.mxu0 0.0
  %5036 = vmatpush1.msra.mxu0 %v5024
  %5037 = vmatprep.subr.mxu0 0.0
  %5038 = vmatpush1.msra.mxu0 %v5025
  %5039 = vmatprep.subr.mxu0 0.0
  %5040 = vmatpush1.msra.mxu0 0.0
  %5041 = vmatprep.subr.mxu0 0.0
  %5042 = vmatpush1.msra.mxu0 0.0
  %5043 = vmatprep.subr.mxu0 0.0
  %5044 = vmatpush1.msra.mxu0 0.0
  %5045 = vmatprep.subr.mxu0 0.0
  %5046 = vmatpush1.msra.mxu0 0.0
  %5047 = vmatprep.subr.mxu0 0.0
  %5048 = vmatpush1.msra.mxu0 0.0
  %5049 = vmatprep.subr.mxu0 0.0
  %5050 = vmatpush1.msra.mxu0 0.0
  %5051 = vmatprep.subr.mxu0 0.0
  %5052 = vmatpush1.msra.mxu0 0.0
  %5053 = vmatprep.subr.mxu0 0.0
  %5054 = vmatpush1.msra.mxu0 0.0
  %5055 = vmatprep.subr.mxu0 0.0
  %5056 = vmatpush1.msra.mxu0 0.0
  %5057 = vmatprep.subr.mxu0 0.0
  %5058 = vmatpush1.msra.mxu0 0.0
  %5059 = vmatprep.subr.mxu0 0.0
  %5060 = vmatpush1.msra.mxu0 0.0
  %5061 = vmatprep.subr.mxu0 0.0
  %5062 = vmatpush1.msra.mxu0 0.0
  %5063 = vmatprep.subr.mxu0 0.0
  %5064 = vmatpush1.msra.mxu0 0.0
  %5065 = vmatprep.subr.mxu0 0.0
  %5066 = vmatpush1.msra.mxu0 0.0
  %5067 = vmatprep.subr.mxu0 0.0
  %5068 = vmatpush1.msra.mxu0 0.0
  %5069 = vmatprep.subr.mxu0 0.0
  %5070 = vmatpush1.msra.mxu0 0.0
  %5071 = vmatprep.subr.mxu0 0.0
  %5072 = vmatpush1.msra.mxu0 0.0
  %5073 = vmatprep.subr.mxu0 0.0
  %5074 = vmatpush1.msra.mxu0 0.0
  %5075 = vmatprep.subr.mxu0 0.0
  %5076 = vmatpush1.msra.mxu0 0.0
  %5077 = vmatprep.subr.mxu0 0.0
  %5078 = vmatpush1.msra.mxu0 0.0
  %5079 = vmatprep.subr.mxu0 0.0
  %5080 = vmatpush1.msra.mxu0 0.0
  %5081 = vmatprep.subr.mxu0 0.0
  %5082 = vmatpush1.msra.mxu0 0.0
  %5083 = vmatprep.subr.mxu0 0.0
  %5084 = vmatpush1.msra.mxu0 0.0
  %5085 = vmatprep.subr.mxu0 0.0
  %5086 = vmatpush1.msra.mxu0 0.0
  %5087 = vmatprep.subr.mxu0 0.0
  %5088 = vmatpush1.msra.mxu0 0.0
  %5089 = vmatprep.subr.mxu0 0.0
  %5090 = vmatpush1.msra.mxu0 0.0
  %5091 = vmatprep.subr.mxu0 0.0
  %5092 = vmatpush1.msra.mxu0 0.0
  %5093 = vmatprep.subr.mxu0 0.0
  %5094 = vmatpush1.msra.mxu0 0.0
  %5095 = vmatprep.mubr.f32.mxu0 0.0
  %5096 = vmatmul.mubr.f32.gmra.mrb[0].mxu0 %v3038
  %v5097 = vpop.f32.mrb[0].mxu0
  %v5098 = vadd.f32 %v5030, %v5097
  %v5099 = vpop.f32.mrb[0].mxu0
  %5100 = vmatprep.mubr.f32.mxu0 0.0
  %5101 = vmatmul.mubr.f32.gmra.mrb[0].mxu0 %v3041
  %v5102 = vpop.f32.mrb[0].mxu0
  %v5103 = vadd.f32 %v5030, %v5102
  %v5104 = vpop.f32.mrb[0].mxu0
  %5105 = vdwg.mxu0
  %s5106 = scalar_lea.vmem %s2, 760
  %v5107 = vld [vmem:[%s5106] sm:$0xff]
  %v5108 = vld [vmem:[%s5106 + $0x8] sm:$0xff]
  %v5109 = vld [vmem:[%s5106 + $0x10] sm:$0xff]
  %v5110 = vld [vmem:[%s5106 + $0x18] sm:$0xff]
  %v5111 = vld [vmem:[%s5106 + $0x20] sm:$0x1]
  %v5112 = vlaneseq
  %v5113 = vshrl.u32 %v5112, 7
  %v5114 = vsub.s32 0, %v5113
  %v5115 = vrot.slane %v5111, %v5114
  %5116 = vmatprep.subr.mxu0 0.0
  %5117 = vmatpush1.msra.mxu0 %v5107
  %5118 = vmatprep.subr.mxu0 0.0
  %5119 = vmatpush1.msra.mxu0 %v5108
  %5120 = vmatprep.subr.mxu0 0.0
  %5121 = vmatpush1.msra.mxu0 %v5109
  %5122 = vmatprep.subr.mxu0 0.0
  %5123 = vmatpush1.msra.mxu0 %v5110
  %5124 = vmatprep.subr.mxu0 0.0
  %5125 = vmatpush1.msra.mxu0 0.0
  %5126 = vmatprep.subr.mxu0 0.0
  %5127 = vmatpush1.msra.mxu0 0.0
  %5128 = vmatprep.subr.mxu0 0.0
  %5129 = vmatpush1.msra.mxu0 0.0
  %5130 = vmatprep.subr.mxu0 0.0
  %5131 = vmatpush1.msra.mxu0 0.0
  %5132 = vmatprep.subr.mxu0 0.0
  %5133 = vmatpush1.msra.mxu0 0.0
  %5134 = vmatprep.subr.mxu0 0.0
  %5135 = vmatpush1.msra.mxu0 0.0
  %5136 = vmatprep.subr.mxu0 0.0
  %5137 = vmatpush1.msra.mxu0 0.0
  %5138 = vmatprep.subr.mxu0 0.0
  %5139 = vmatpush1.msra.mxu0 0.0
  %5140 = vmatprep.subr.mxu0 0.0
  %5141 = vmatpush1.msra.mxu0 0.0
  %5142 = vmatprep.subr.mxu0 0.0
  %5143 = vmatpush1.msra.mxu0 0.0
  %5144 = vmatprep.subr.mxu0 0.0
  %5145 = vmatpush1.msra.mxu0 0.0
  %5146 = vmatprep.subr.mxu0 0.0
  %5147 = vmatpush1.msra.mxu0 0.0
  %5148 = vmatprep.subr.mxu0 0.0
  %5149 = vmatpush1.msra.mxu0 0.0
  %5150 = vmatprep.subr.mxu0 0.0
  %5151 = vmatpush1.msra.mxu0 0.0
  %5152 = vmatprep.subr.mxu0 0.0
  %5153 = vmatpush1.msra.mxu0 0.0
  %5154 = vmatprep.subr.mxu0 0.0
  %5155 = vmatpush1.msra.mxu0 0.0
  %5156 = vmatprep.subr.mxu0 0.0
  %5157 = vmatpush1.msra.mxu0 0.0
  %5158 = vmatprep.subr.mxu0 0.0
  %5159 = vmatpush1.msra.mxu0 0.0
  %5160 = vmatprep.subr.mxu0 0.0
  %5161 = vmatpush1.msra.mxu0 0.0
  %5162 = vmatprep.subr.mxu0 0.0
  %5163 = vmatpush1.msra.mxu0 0.0
  %5164 = vmatprep.subr.mxu0 0.0
  %5165 = vmatpush1.msra.mxu0 0.0
  %5166 = vmatprep.subr.mxu0 0.0
  %5167 = vmatpush1.msra.mxu0 0.0
  %5168 = vmatprep.subr.mxu0 0.0
  %5169 = vmatpush1.msra.mxu0 0.0
  %5170 = vmatprep.subr.mxu0 0.0
  %5171 = vmatpush1.msra.mxu0 0.0
  %5172 = vmatprep.subr.mxu0 0.0
  %5173 = vmatpush1.msra.mxu0 0.0
  %5174 = vmatprep.subr.mxu0 0.0
  %5175 = vmatpush1.msra.mxu0 0.0
  %5176 = vmatprep.subr.mxu0 0.0
  %5177 = vmatpush1.msra.mxu0 0.0
  %5178 = vmatprep.subr.mxu0 0.0
  %5179 = vmatpush1.msra.mxu0 0.0
  %5180 = vmatprep.mubr.f32.mxu0 0.0
  %5181 = vmatmul.mubr.f32.gmra.mrb[0].mxu0 %v3038
  %v5182 = vpop.f32.mrb[0].mxu0
  %v5183 = vadd.f32 %v5115, %v5182
  %v5184 = vpop.f32.mrb[0].mxu0
  %5185 = vmatprep.mubr.f32.mxu0 0.0
  %5186 = vmatmul.mubr.f32.gmra.mrb[0].mxu0 %v3041
  %v5187 = vpop.f32.mrb[0].mxu0
  %v5188 = vadd.f32 %v5115, %v5187
  %v5189 = vpop.f32.mrb[0].mxu0
  %5190 = vdwg.mxu0
  %s5191 = scalar_lea.vmem %s2, 920
  %v5192 = vld [vmem:[%s5191] sm:$0xff]
  %v5193 = vld [vmem:[%s5191 + $0x8] sm:$0xff]
  %v5194 = vld [vmem:[%s5191 + $0x10] sm:$0xff]
  %v5195 = vld [vmem:[%s5191 + $0x18] sm:$0xff]
  %v5196 = vld [vmem:[%s5191 + $0x20] sm:$0x1]
  %v5197 = vlaneseq
  %v5198 = vshrl.u32 %v5197, 7
  %v5199 = vsub.s32 0, %v5198
  %v5200 = vrot.slane %v5196, %v5199
  %5201 = vmatprep.subr.mxu0 0.0
  %5202 = vmatpush1.msra.mxu0 %v5192
  %5203 = vmatprep.subr.mxu0 0.0
  %5204 = vmatpush1.msra.mxu0 %v5193
  %5205 = vmatprep.subr.mxu0 0.0
  %5206 = vmatpush1.msra.mxu0 %v5194
  %5207 = vmatprep.subr.mxu0 0.0
  %5208 = vmatpush1.msra.mxu0 %v5195
  %5209 = vmatprep.subr.mxu0 0.0
  %5210 = vmatpush1.msra.mxu0 0.0
  %5211 = vmatprep.subr.mxu0 0.0
  %5212 = vmatpush1.msra.mxu0 0.0
  %5213 = vmatprep.subr.mxu0 0.0
  %5214 = vmatpush1.msra.mxu0 0.0
  %5215 = vmatprep.subr.mxu0 0.0
  %5216 = vmatpush1.msra.mxu0 0.0
  %5217 = vmatprep.subr.mxu0 0.0
  %5218 = vmatpush1.msra.mxu0 0.0
  %5219 = vmatprep.subr.mxu0 0.0
  %5220 = vmatpush1.msra.mxu0 0.0
  %5221 = vmatprep.subr.mxu0 0.0
  %5222 = vmatpush1.msra.mxu0 0.0
  %5223 = vmatprep.subr.mxu0 0.0
  %5224 = vmatpush1.msra.mxu0 0.0
  %5225 = vmatprep.subr.mxu0 0.0
  %5226 = vmatpush1.msra.mxu0 0.0
  %5227 = vmatprep.subr.mxu0 0.0
  %5228 = vmatpush1.msra.mxu0 0.0
  %5229 = vmatprep.subr.mxu0 0.0
  %5230 = vmatpush1.msra.mxu0 0.0
  %5231 = vmatprep.subr.mxu0 0.0
  %5232 = vmatpush1.msra.mxu0 0.0
  %5233 = vmatprep.subr.mxu0 0.0
  %5234 = vmatpush1.msra.mxu0 0.0
  %5235 = vmatprep.subr.mxu0 0.0
  %5236 = vmatpush1.msra.mxu0 0.0
  %5237 = vmatprep.subr.mxu0 0.0
  %5238 = vmatpush1.msra.mxu0 0.0
  %5239 = vmatprep.subr.mxu0 0.0
  %5240 = vmatpush1.msra.mxu0 0.0
  %5241 = vmatprep.subr.mxu0 0.0
  %5242 = vmatpush1.msra.mxu0 0.0
  %5243 = vmatprep.subr.mxu0 0.0
  %5244 = vmatpush1.msra.mxu0 0.0
  %5245 = vmatprep.subr.mxu0 0.0
  %5246 = vmatpush1.msra.mxu0 0.0
  %5247 = vmatprep.subr.mxu0 0.0
  %5248 = vmatpush1.msra.mxu0 0.0
  %5249 = vmatprep.subr.mxu0 0.0
  %5250 = vmatpush1.msra.mxu0 0.0
  %5251 = vmatprep.subr.mxu0 0.0
  %5252 = vmatpush1.msra.mxu0 0.0
  %5253 = vmatprep.subr.mxu0 0.0
  %5254 = vmatpush1.msra.mxu0 0.0
  %5255 = vmatprep.subr.mxu0 0.0
  %5256 = vmatpush1.msra.mxu0 0.0
  %5257 = vmatprep.subr.mxu0 0.0
  %5258 = vmatpush1.msra.mxu0 0.0
  %5259 = vmatprep.subr.mxu0 0.0
  %5260 = vmatpush1.msra.mxu0 0.0
  %5261 = vmatprep.subr.mxu0 0.0
  %5262 = vmatpush1.msra.mxu0 0.0
  %5263 = vmatprep.subr.mxu0 0.0
  %5264 = vmatpush1.msra.mxu0 0.0
  %5265 = vmatprep.mubr.f32.mxu0 0.0
  %5266 = vmatmul.mubr.f32.gmra.mrb[0].mxu0 %v3038
  %v5267 = vpop.f32.mrb[0].mxu0
  %v5268 = vadd.f32 %v5200, %v5267
  %v5269 = vpop.f32.mrb[0].mxu0
  %5270 = vmatprep.mubr.f32.mxu0 0.0
  %5271 = vmatmul.mubr.f32.gmra.mrb[0].mxu0 %v3041
  %v5272 = vpop.f32.mrb[0].mxu0
  %v5273 = vadd.f32 %v5200, %v5272
  %v5274 = vpop.f32.mrb[0].mxu0
  %5275 = vdwg.mxu0
  %v5277 = vsel %vm339, %v5098, 0
  %v5280 = vsel %vm339, %v5183, 0
  %5282 = vmatprep.subr.mxu0 0.0
  %5283 = vmatpush1.xpose.msra.mxu0 %v5280
  %5284 = vmatprep.subr.mxu0 0.0
  %5285 = vmatpush1.xpose.msra.mxu0 0.0
  %5286 = vmatprep.subr.mxu0 0.0
  %5287 = vmatpush1.xpose.msra.mxu0 0.0
  %5288 = vmatprep.subr.mxu0 0.0
  %5289 = vmatpush1.xpose.msra.mxu0 0.0
  %5290 = vmatprep.subr.mxu0 0.0
  %5291 = vmatpush1.xpose.msra.mxu0 0.0
  %5292 = vmatprep.subr.mxu0 0.0
  %5293 = vmatpush1.xpose.msra.mxu0 0.0
  %5294 = vmatprep.subr.mxu0 0.0
  %5295 = vmatpush1.xpose.msra.mxu0 0.0
  %5296 = vmatprep.subr.mxu0 0.0
  %5297 = vmatpush1.xpose.msra.mxu0 0.0
  %5298 = vmatprep.subr.mxu0 0.0
  %5299 = vmatpush1.xpose.msra.mxu0 0.0
  %5300 = vmatprep.subr.mxu0 0.0
  %5301 = vmatpush1.xpose.msra.mxu0 0.0
  %5302 = vmatprep.subr.mxu0 0.0
  %5303 = vmatpush1.xpose.msra.mxu0 0.0
  %5304 = vmatprep.subr.mxu0 0.0
  %5305 = vmatpush1.xpose.msra.mxu0 0.0
  %5306 = vmatprep.subr.mxu0 0.0
  %5307 = vmatpush1.xpose.msra.mxu0 0.0
  %5308 = vmatprep.subr.mxu0 0.0
  %5309 = vmatpush1.xpose.msra.mxu0 0.0
  %5310 = vmatprep.subr.mxu0 0.0
  %5311 = vmatpush1.xpose.msra.mxu0 0.0
  %5312 = vmatprep.subr.mxu0 0.0
  %5313 = vmatpush1.xpose.msra.mxu0 0.0
  %5314 = vmatprep.subr.mxu0 0.0
  %5315 = vmatpush1.xpose.msra.mxu0 0.0
  %5316 = vmatprep.subr.mxu0 0.0
  %5317 = vmatpush1.xpose.msra.mxu0 0.0
  %5318 = vmatprep.subr.mxu0 0.0
  %5319 = vmatpush1.xpose.msra.mxu0 0.0
  %5320 = vmatprep.subr.mxu0 0.0
  %5321 = vmatpush1.xpose.msra.mxu0 0.0
  %5322 = vmatprep.subr.mxu0 0.0
  %5323 = vmatpush1.xpose.msra.mxu0 0.0
  %5324 = vmatprep.subr.mxu0 0.0
  %5325 = vmatpush1.xpose.msra.mxu0 0.0
  %5326 = vmatprep.subr.mxu0 0.0
  %5327 = vmatpush1.xpose.msra.mxu0 0.0
  %5328 = vmatprep.subr.mxu0 0.0
  %5329 = vmatpush1.xpose.msra.mxu0 0.0
  %5330 = vmatprep.subr.mxu0 0.0
  %5331 = vmatpush1.xpose.msra.mxu0 0.0
  %5332 = vmatprep.subr.mxu0 0.0
  %5333 = vmatpush1.xpose.msra.mxu0 0.0
  %5334 = vmatprep.subr.mxu0 0.0
  %5335 = vmatpush1.xpose.msra.mxu0 0.0
  %5336 = vmatprep.subr.mxu0 0.0
  %5337 = vmatpush1.xpose.msra.mxu0 0.0
  %5338 = vmatprep.subr.mxu0 0.0
  %5339 = vmatpush1.xpose.msra.mxu0 0.0
  %5340 = vmatprep.subr.mxu0 0.0
  %5341 = vmatpush1.xpose.msra.mxu0 0.0
  %5342 = vmatprep.subr.mxu0 0.0
  %5343 = vmatpush1.xpose.msra.mxu0 0.0
  %5344 = vmatprep.subr.mxu0 0.0
  %5345 = vmatpush1.xpose.msra.mxu0 0.0
  %5346 = vmatprep.mubr.f32.mxu0 0.0
  %5347 = vmatmul.mubr.f32.gmra.mrb[0].mxu0 %v5277
  %v5348 = vpop.f32.mrb[0].mxu0
  %v5349 = vadd.f32 0.0, %v5348
  %v5350 = vpop.f32.mrb[0].mxu0
  %5351 = vdwg.mxu0
  %v5353 = vsel %vm339, %v5103, 0
  %v5356 = vsel %vm339, %v5188, 0
  %5358 = vmatprep.subr.mxu0 0.0
  %5359 = vmatpush1.xpose.msra.mxu0 %v5356
  %5360 = vmatprep.subr.mxu0 0.0
  %5361 = vmatpush1.xpose.msra.mxu0 0.0
  %5362 = vmatprep.subr.mxu0 0.0
  %5363 = vmatpush1.xpose.msra.mxu0 0.0
  %5364 = vmatprep.subr.mxu0 0.0
  %5365 = vmatpush1.xpose.msra.mxu0 0.0
  %5366 = vmatprep.subr.mxu0 0.0
  %5367 = vmatpush1.xpose.msra.mxu0 0.0
  %5368 = vmatprep.subr.mxu0 0.0
  %5369 = vmatpush1.xpose.msra.mxu0 0.0
  %5370 = vmatprep.subr.mxu0 0.0
  %5371 = vmatpush1.xpose.msra.mxu0 0.0
  %5372 = vmatprep.subr.mxu0 0.0
  %5373 = vmatpush1.xpose.msra.mxu0 0.0
  %5374 = vmatprep.subr.mxu0 0.0
  %5375 = vmatpush1.xpose.msra.mxu0 0.0
  %5376 = vmatprep.subr.mxu0 0.0
  %5377 = vmatpush1.xpose.msra.mxu0 0.0
  %5378 = vmatprep.subr.mxu0 0.0
  %5379 = vmatpush1.xpose.msra.mxu0 0.0
  %5380 = vmatprep.subr.mxu0 0.0
  %5381 = vmatpush1.xpose.msra.mxu0 0.0
  %5382 = vmatprep.subr.mxu0 0.0
  %5383 = vmatpush1.xpose.msra.mxu0 0.0
  %5384 = vmatprep.subr.mxu0 0.0
  %5385 = vmatpush1.xpose.msra.mxu0 0.0
  %5386 = vmatprep.subr.mxu0 0.0
  %5387 = vmatpush1.xpose.msra.mxu0 0.0
  %5388 = vmatprep.subr.mxu0 0.0
  %5389 = vmatpush1.xpose.msra.mxu0 0.0
  %5390 = vmatprep.subr.mxu0 0.0
  %5391 = vmatpush1.xpose.msra.mxu0 0.0
  %5392 = vmatprep.subr.mxu0 0.0
  %5393 = vmatpush1.xpose.msra.mxu0 0.0
  %5394 = vmatprep.subr.mxu0 0.0
  %5395 = vmatpush1.xpose.msra.mxu0 0.0
  %5396 = vmatprep.subr.mxu0 0.0
  %5397 = vmatpush1.xpose.msra.mxu0 0.0
  %5398 = vmatprep.subr.mxu0 0.0
  %5399 = vmatpush1.xpose.msra.mxu0 0.0
  %5400 = vmatprep.subr.mxu0 0.0
  %5401 = vmatpush1.xpose.msra.mxu0 0.0
  %5402 = vmatprep.subr.mxu0 0.0
  %5403 = vmatpush1.xpose.msra.mxu0 0.0
  %5404 = vmatprep.subr.mxu0 0.0
  %5405 = vmatpush1.xpose.msra.mxu0 0.0
  %5406 = vmatprep.subr.mxu0 0.0
  %5407 = vmatpush1.xpose.msra.mxu0 0.0
  %5408 = vmatprep.subr.mxu0 0.0
  %5409 = vmatpush1.xpose.msra.mxu0 0.0
  %5410 = vmatprep.subr.mxu0 0.0
  %5411 = vmatpush1.xpose.msra.mxu0 0.0
  %5412 = vmatprep.subr.mxu0 0.0
  %5413 = vmatpush1.xpose.msra.mxu0 0.0
  %5414 = vmatprep.subr.mxu0 0.0
  %5415 = vmatpush1.xpose.msra.mxu0 0.0
  %5416 = vmatprep.subr.mxu0 0.0
  %5417 = vmatpush1.xpose.msra.mxu0 0.0
  %5418 = vmatprep.subr.mxu0 0.0
  %5419 = vmatpush1.xpose.msra.mxu0 0.0
  %5420 = vmatprep.subr.mxu0 0.0
  %5421 = vmatpush1.xpose.msra.mxu0 0.0
  %5422 = vmatprep.mubr.f32.mxu0 0.0
  %5423 = vmatmul.mubr.f32.gmra.mrb[0].mxu0 %v5353
  %v5424 = vpop.f32.mrb[0].mxu0
  %v5425 = vadd.f32 0.0, %v5424
  %v5426 = vpop.f32.mrb[0].mxu0
  %5427 = vdwg.mxu0
  %v5428 = vmul.f32 %v5349, 0.35355338
  %v5429 = vmul.f32 %v5425, 0.35355338
  %v5430 = vsel %vm495, %v5428, -1e+30
  %v5431 = vsel %vm495, %v5429, -1e+30
  %v5432 = vsel %vm339, %v5430, -inf
  %5433 = vmax.xlane.f32.xlu0 %v5432
  %v5434 = vpop.xlane.xlu0 %5433
  %v5435 = vsel %vm339, %v5431, -inf
  %5436 = vmax.xlane.f32.xlu0 %v5435
  %v5437 = vpop.xlane.xlu0 %5436
  %v5438 = vsub.f32 %v5430, %v5434
  %v5439 = vsub.f32 %v5431, %v5437
  %v5440 = vmul.f32 %v5438, 1.442695
  %v5441 = vpow.pop %v5440
  %v5442 = vmul.f32 %v5439, 1.442695
  %v5443 = vpow.pop %v5442
  %v5444 = vsel %vm339, %v5441, 0.0
  %5445 = vadd.xlane.f32.xlu0 %v5444
  %v5446 = vpop.xlane.xlu0 %5445
  %v5447 = vsel %vm339, %v5443, 0.0
  %5448 = vadd.xlane.f32.xlu0 %v5447
  %v5449 = vpop.xlane.xlu0 %5448
  %v5450 = vrcp.pop %v5446
  %v5451 = vrcp.pop %v5449
  %v5452 = vmul.f32 %v5441, %v5450
  %v5453 = vmul.f32 %v5443, %v5451
  %v5455 = vsel %vm339, %v5452, 0
  %5457 = vmatprep.subr.mxu0 0.0
  %5458 = vmatpush1.msra.mxu0 %v5268
  %5459 = vmatprep.subr.mxu0 0.0
  %5460 = vmatpush1.msra.mxu0 0.0
  %5461 = vmatprep.subr.mxu0 0.0
  %5462 = vmatpush1.msra.mxu0 0.0
  %5463 = vmatprep.subr.mxu0 0.0
  %5464 = vmatpush1.msra.mxu0 0.0
  %5465 = vmatprep.subr.mxu0 0.0
  %5466 = vmatpush1.msra.mxu0 0.0
  %5467 = vmatprep.subr.mxu0 0.0
  %5468 = vmatpush1.msra.mxu0 0.0
  %5469 = vmatprep.subr.mxu0 0.0
  %5470 = vmatpush1.msra.mxu0 0.0
  %5471 = vmatprep.subr.mxu0 0.0
  %5472 = vmatpush1.msra.mxu0 0.0
  %5473 = vmatprep.subr.mxu0 0.0
  %5474 = vmatpush1.msra.mxu0 0.0
  %5475 = vmatprep.subr.mxu0 0.0
  %5476 = vmatpush1.msra.mxu0 0.0
  %5477 = vmatprep.subr.mxu0 0.0
  %5478 = vmatpush1.msra.mxu0 0.0
  %5479 = vmatprep.subr.mxu0 0.0
  %5480 = vmatpush1.msra.mxu0 0.0
  %5481 = vmatprep.subr.mxu0 0.0
  %5482 = vmatpush1.msra.mxu0 0.0
  %5483 = vmatprep.subr.mxu0 0.0
  %5484 = vmatpush1.msra.mxu0 0.0
  %5485 = vmatprep.subr.mxu0 0.0
  %5486 = vmatpush1.msra.mxu0 0.0
  %5487 = vmatprep.subr.mxu0 0.0
  %5488 = vmatpush1.msra.mxu0 0.0
  %5489 = vmatprep.subr.mxu0 0.0
  %5490 = vmatpush1.msra.mxu0 0.0
  %5491 = vmatprep.subr.mxu0 0.0
  %5492 = vmatpush1.msra.mxu0 0.0
  %5493 = vmatprep.subr.mxu0 0.0
  %5494 = vmatpush1.msra.mxu0 0.0
  %5495 = vmatprep.subr.mxu0 0.0
  %5496 = vmatpush1.msra.mxu0 0.0
  %5497 = vmatprep.subr.mxu0 0.0
  %5498 = vmatpush1.msra.mxu0 0.0
  %5499 = vmatprep.subr.mxu0 0.0
  %5500 = vmatpush1.msra.mxu0 0.0
  %5501 = vmatprep.subr.mxu0 0.0
  %5502 = vmatpush1.msra.mxu0 0.0
  %5503 = vmatprep.subr.mxu0 0.0
  %5504 = vmatpush1.msra.mxu0 0.0
  %5505 = vmatprep.subr.mxu0 0.0
  %5506 = vmatpush1.msra.mxu0 0.0
  %5507 = vmatprep.subr.mxu0 0.0
  %5508 = vmatpush1.msra.mxu0 0.0
  %5509 = vmatprep.subr.mxu0 0.0
  %5510 = vmatpush1.msra.mxu0 0.0
  %5511 = vmatprep.subr.mxu0 0.0
  %5512 = vmatpush1.msra.mxu0 0.0
  %5513 = vmatprep.subr.mxu0 0.0
  %5514 = vmatpush1.msra.mxu0 0.0
  %5515 = vmatprep.subr.mxu0 0.0
  %5516 = vmatpush1.msra.mxu0 0.0
  %5517 = vmatprep.subr.mxu0 0.0
  %5518 = vmatpush1.msra.mxu0 0.0
  %5519 = vmatprep.subr.mxu0 0.0
  %5520 = vmatpush1.msra.mxu0 0.0
  %5521 = vmatprep.mubr.f32.mxu0 0.0
  %5522 = vmatmul.mubr.f32.gmra.mrb[0].mxu0 %v5455
  %v5523 = vpop.f32.mrb[0].mxu0
  %v5524 = vadd.f32 0.0, %v5523
  %v5525 = vpop.f32.mrb[0].mxu0
  %5526 = vdwg.mxu0
  %v5528 = vsel %vm339, %v5453, 0
  %5530 = vmatprep.subr.mxu0 0.0
  %5531 = vmatpush1.msra.mxu0 %v5273
  %5532 = vmatprep.subr.mxu0 0.0
  %5533 = vmatpush1.msra.mxu0 0.0
  %5534 = vmatprep.subr.mxu0 0.0
  %5535 = vmatpush1.msra.mxu0 0.0
  %5536 = vmatprep.subr.mxu0 0.0
  %5537 = vmatpush1.msra.mxu0 0.0
  %5538 = vmatprep.subr.mxu0 0.0
  %5539 = vmatpush1.msra.mxu0 0.0
  %5540 = vmatprep.subr.mxu0 0.0
  %5541 = vmatpush1.msra.mxu0 0.0
  %5542 = vmatprep.subr.mxu0 0.0
  %5543 = vmatpush1.msra.mxu0 0.0
  %5544 = vmatprep.subr.mxu0 0.0
  %5545 = vmatpush1.msra.mxu0 0.0
  %5546 = vmatprep.subr.mxu0 0.0
  %5547 = vmatpush1.msra.mxu0 0.0
  %5548 = vmatprep.subr.mxu0 0.0
  %5549 = vmatpush1.msra.mxu0 0.0
  %5550 = vmatprep.subr.mxu0 0.0
  %5551 = vmatpush1.msra.mxu0 0.0
  %5552 = vmatprep.subr.mxu0 0.0
  %5553 = vmatpush1.msra.mxu0 0.0
  %5554 = vmatprep.subr.mxu0 0.0
  %5555 = vmatpush1.msra.mxu0 0.0
  %5556 = vmatprep.subr.mxu0 0.0
  %5557 = vmatpush1.msra.mxu0 0.0
  %5558 = vmatprep.subr.mxu0 0.0
  %5559 = vmatpush1.msra.mxu0 0.0
  %5560 = vmatprep.subr.mxu0 0.0
  %5561 = vmatpush1.msra.mxu0 0.0
  %5562 = vmatprep.subr.mxu0 0.0
  %5563 = vmatpush1.msra.mxu0 0.0
  %5564 = vmatprep.subr.mxu0 0.0
  %5565 = vmatpush1.msra.mxu0 0.0
  %5566 = vmatprep.subr.mxu0 0.0
  %5567 = vmatpush1.msra.mxu0 0.0
  %5568 = vmatprep.subr.mxu0 0.0
  %5569 = vmatpush1.msra.mxu0 0.0
  %5570 = vmatprep.subr.mxu0 0.0
  %5571 = vmatpush1.msra.mxu0 0.0
  %5572 = vmatprep.subr.mxu0 0.0
  %5573 = vmatpush1.msra.mxu0 0.0
  %5574 = vmatprep.subr.mxu0 0.0
  %5575 = vmatpush1.msra.mxu0 0.0
  %5576 = vmatprep.subr.mxu0 0.0
  %5577 = vmatpush1.msra.mxu0 0.0
  %5578 = vmatprep.subr.mxu0 0.0
  %5579 = vmatpush1.msra.mxu0 0.0
  %5580 = vmatprep.subr.mxu0 0.0
  %5581 = vmatpush1.msra.mxu0 0.0
  %5582 = vmatprep.subr.mxu0 0.0
  %5583 = vmatpush1.msra.mxu0 0.0
  %5584 = vmatprep.subr.mxu0 0.0
  %5585 = vmatpush1.msra.mxu0 0.0
  %5586 = vmatprep.subr.mxu0 0.0
  %5587 = vmatpush1.msra.mxu0 0.0
  %5588 = vmatprep.subr.mxu0 0.0
  %5589 = vmatpush1.msra.mxu0 0.0
  %5590 = vmatprep.subr.mxu0 0.0
  %5591 = vmatpush1.msra.mxu0 0.0
  %5592 = vmatprep.subr.mxu0 0.0
  %5593 = vmatpush1.msra.mxu0 0.0
  %5594 = vmatprep.mubr.f32.mxu0 0.0
  %5595 = vmatmul.mubr.f32.gmra.mrb[0].mxu0 %v5528
  %v5596 = vpop.f32.mrb[0].mxu0
  %v5597 = vadd.f32 0.0, %v5596
  %v5598 = vpop.f32.mrb[0].mxu0
  %5599 = vdwg.mxu0
  %s5600 = scalar_lea.vmem %s3, 56
  %v5601 = vld [vmem:[%s5600] sm:$0xff]
  %v5603 = vsel %vm339, %v5524, 0
  %v5606 = vsel %vm339, %v5597, 0
  %5608 = vmatprep.subr.mxu0 0.0
  %5609 = vmatpush1.msra.mxu0 %v5601
  %5610 = vmatprep.subr.mxu0 0.0
  %5611 = vmatpush1.msra.mxu0 0.0
  %5612 = vmatprep.subr.mxu0 0.0
  %5613 = vmatpush1.msra.mxu0 0.0
  %5614 = vmatprep.subr.mxu0 0.0
  %5615 = vmatpush1.msra.mxu0 0.0
  %5616 = vmatprep.subr.mxu0 0.0
  %5617 = vmatpush1.msra.mxu0 0.0
  %5618 = vmatprep.subr.mxu0 0.0
  %5619 = vmatpush1.msra.mxu0 0.0
  %5620 = vmatprep.subr.mxu0 0.0
  %5621 = vmatpush1.msra.mxu0 0.0
  %5622 = vmatprep.subr.mxu0 0.0
  %5623 = vmatpush1.msra.mxu0 0.0
  %5624 = vmatprep.subr.mxu0 0.0
  %5625 = vmatpush1.msra.mxu0 0.0
  %5626 = vmatprep.subr.mxu0 0.0
  %5627 = vmatpush1.msra.mxu0 0.0
  %5628 = vmatprep.subr.mxu0 0.0
  %5629 = vmatpush1.msra.mxu0 0.0
  %5630 = vmatprep.subr.mxu0 0.0
  %5631 = vmatpush1.msra.mxu0 0.0
  %5632 = vmatprep.subr.mxu0 0.0
  %5633 = vmatpush1.msra.mxu0 0.0
  %5634 = vmatprep.subr.mxu0 0.0
  %5635 = vmatpush1.msra.mxu0 0.0
  %5636 = vmatprep.subr.mxu0 0.0
  %5637 = vmatpush1.msra.mxu0 0.0
  %5638 = vmatprep.subr.mxu0 0.0
  %5639 = vmatpush1.msra.mxu0 0.0
  %5640 = vmatprep.subr.mxu0 0.0
  %5641 = vmatpush1.msra.mxu0 0.0
  %5642 = vmatprep.subr.mxu0 0.0
  %5643 = vmatpush1.msra.mxu0 0.0
  %5644 = vmatprep.subr.mxu0 0.0
  %5645 = vmatpush1.msra.mxu0 0.0
  %5646 = vmatprep.subr.mxu0 0.0
  %5647 = vmatpush1.msra.mxu0 0.0
  %5648 = vmatprep.subr.mxu0 0.0
  %5649 = vmatpush1.msra.mxu0 0.0
  %5650 = vmatprep.subr.mxu0 0.0
  %5651 = vmatpush1.msra.mxu0 0.0
  %5652 = vmatprep.subr.mxu0 0.0
  %5653 = vmatpush1.msra.mxu0 0.0
  %5654 = vmatprep.subr.mxu0 0.0
  %5655 = vmatpush1.msra.mxu0 0.0
  %5656 = vmatprep.subr.mxu0 0.0
  %5657 = vmatpush1.msra.mxu0 0.0
  %5658 = vmatprep.subr.mxu0 0.0
  %5659 = vmatpush1.msra.mxu0 0.0
  %5660 = vmatprep.subr.mxu0 0.0
  %5661 = vmatpush1.msra.mxu0 0.0
  %5662 = vmatprep.subr.mxu0 0.0
  %5663 = vmatpush1.msra.mxu0 0.0
  %5664 = vmatprep.subr.mxu0 0.0
  %5665 = vmatpush1.msra.mxu0 0.0
  %5666 = vmatprep.subr.mxu0 0.0
  %5667 = vmatpush1.msra.mxu0 0.0
  %5668 = vmatprep.subr.mxu0 0.0
  %5669 = vmatpush1.msra.mxu0 0.0
  %5670 = vmatprep.subr.mxu0 0.0
  %5671 = vmatpush1.msra.mxu0 0.0
  %5672 = vmatprep.mubr.f32.mxu0 0.0
  %5673 = vmatmul.mubr.f32.gmra.mrb[0].mxu0 %v5603
  %v5674 = vpop.f32.mrb[0].mxu0
  %v5675 = vadd.f32 0.0, %v5674
  %v5676 = vpop.f32.mrb[0].mxu0
  %5677 = vmatprep.mubr.f32.mxu0 0.0
  %5678 = vmatmul.mubr.f32.gmra.mrb[0].mxu0 %v5606
  %v5679 = vpop.f32.mrb[0].mxu0
  %v5680 = vadd.f32 0.0, %v5679
  %v5681 = vpop.f32.mrb[0].mxu0
  %5682 = vdwg.mxu0
  %v5683 = vadd.f32 %v5019, %v5675
  %v5684 = vadd.f32 %v5020, %v5680
  %v5685 = vlaneseq
  %v5686 = vshrl.u32 %v5685, 7
  %v5687 = vsub.s32 0, %v5686
  %v5688 = vrot.slane %v2987, %v5687
  %v5689 = vadd.f32 %v5683, %v5688
  %v5690 = vadd.f32 %v5684, %v5688
  %v5691 = vadd.f32 %v2984, %v5689
  %v5692 = vadd.f32 %v2985, %v5690
  %v5693 = vsel %vm39, %v5691, 0.0
  %5694 = vadd.xlane.f32.xlu0 %v5693
  %v5695 = vpop.xlane.xlu0 %5694
  %v5696 = vsel %vm39, %v5692, 0.0
  %5697 = vadd.xlane.f32.xlu0 %v5696
  %v5698 = vpop.xlane.xlu0 %5697
  %v5699 = vmul.f32 %v5695, %v46
  %v5700 = vmul.f32 %v5698, %v46
  %v5701 = vsub.f32 %v5691, %v5699
  %v5702 = vsub.f32 %v5692, %v5700
  %v5703 = vmul.f32 %v5701, %v5701
  %v5704 = vmul.f32 %v5702, %v5702
  %v5705 = vsel %vm39, %v5703, 0.0
  %5706 = vadd.xlane.f32.xlu0 %v5705
  %v5707 = vpop.xlane.xlu0 %5706
  %v5708 = vsel %vm39, %v5704, 0.0
  %5709 = vadd.xlane.f32.xlu0 %v5708
  %v5710 = vpop.xlane.xlu0 %5709
  %v5711 = vmul.f32 %v5707, %v46
  %v5712 = vmul.f32 %v5710, %v46
  %v5713 = vadd.f32 %v5711, 1e-05
  %v5714 = vadd.f32 %v5712, 1e-05
  %v5715 = vrsqrt.pop %v5713
  %v5716 = vrsqrt.pop %v5714
  %v5717 = vmul.f32 %v5701, %v5715
  %v5718 = vmul.f32 %v5702, %v5716
  %5719 = vrot.lane.b32.xlu0 %v3018, 64
  %v5720 = vpop.permute.xlu0 %5719
  %v5722 = vmul.f32 %v5717, %v5720
  %v5723 = vmul.f32 %v5718, %v5720
  %5724 = vrot.lane.b32.xlu0 %v3018, 32
  %v5725 = vpop.permute.xlu0 %5724
  %v5727 = vadd.f32 %v5722, %v5725
  %v5728 = vadd.f32 %v5723, %v5725
  %s5729 = scalar_lea.vmem %s4, 32
  %v5730 = vld [vmem:[%s5729] sm:$0xff]
  %v5731 = vld [vmem:[%s5729 + $0x8] sm:$0xff]
  %v5732 = vld [vmem:[%s5729 + $0x10] sm:$0xff]
  %v5733 = vld [vmem:[%s5729 + $0x18] sm:$0xff]
  %v5734 = vlaneseq
  %v5735 = vshrl.u32 %v5734, 7
  %v5736 = vsub.s32 0, %v5735
  %v5737 = vrot.slane %v2988, %v5736
  %v5739 = vsel %vm39, %v5727, 0
  %v5742 = vsel %vm39, %v5728, 0
  %5744 = vmatprep.subr.mxu0 0.0
  %5745 = vmatpush1.msra.mxu0 %v5730
  %5746 = vmatprep.subr.mxu0 0.0
  %5747 = vmatpush1.msra.mxu0 %v5731
  %5748 = vmatprep.subr.mxu0 0.0
  %5749 = vmatpush1.msra.mxu0 %v5732
  %5750 = vmatprep.subr.mxu0 0.0
  %5751 = vmatpush1.msra.mxu0 %v5733
  %5752 = vmatprep.subr.mxu0 0.0
  %5753 = vmatpush1.msra.mxu0 0.0
  %5754 = vmatprep.subr.mxu0 0.0
  %5755 = vmatpush1.msra.mxu0 0.0
  %5756 = vmatprep.subr.mxu0 0.0
  %5757 = vmatpush1.msra.mxu0 0.0
  %5758 = vmatprep.subr.mxu0 0.0
  %5759 = vmatpush1.msra.mxu0 0.0
  %5760 = vmatprep.subr.mxu0 0.0
  %5761 = vmatpush1.msra.mxu0 0.0
  %5762 = vmatprep.subr.mxu0 0.0
  %5763 = vmatpush1.msra.mxu0 0.0
  %5764 = vmatprep.subr.mxu0 0.0
  %5765 = vmatpush1.msra.mxu0 0.0
  %5766 = vmatprep.subr.mxu0 0.0
  %5767 = vmatpush1.msra.mxu0 0.0
  %5768 = vmatprep.subr.mxu0 0.0
  %5769 = vmatpush1.msra.mxu0 0.0
  %5770 = vmatprep.subr.mxu0 0.0
  %5771 = vmatpush1.msra.mxu0 0.0
  %5772 = vmatprep.subr.mxu0 0.0
  %5773 = vmatpush1.msra.mxu0 0.0
  %5774 = vmatprep.subr.mxu0 0.0
  %5775 = vmatpush1.msra.mxu0 0.0
  %5776 = vmatprep.subr.mxu0 0.0
  %5777 = vmatpush1.msra.mxu0 0.0
  %5778 = vmatprep.subr.mxu0 0.0
  %5779 = vmatpush1.msra.mxu0 0.0
  %5780 = vmatprep.subr.mxu0 0.0
  %5781 = vmatpush1.msra.mxu0 0.0
  %5782 = vmatprep.subr.mxu0 0.0
  %5783 = vmatpush1.msra.mxu0 0.0
  %5784 = vmatprep.subr.mxu0 0.0
  %5785 = vmatpush1.msra.mxu0 0.0
  %5786 = vmatprep.subr.mxu0 0.0
  %5787 = vmatpush1.msra.mxu0 0.0
  %5788 = vmatprep.subr.mxu0 0.0
  %5789 = vmatpush1.msra.mxu0 0.0
  %5790 = vmatprep.subr.mxu0 0.0
  %5791 = vmatpush1.msra.mxu0 0.0
  %5792 = vmatprep.subr.mxu0 0.0
  %5793 = vmatpush1.msra.mxu0 0.0
  %5794 = vmatprep.subr.mxu0 0.0
  %5795 = vmatpush1.msra.mxu0 0.0
  %5796 = vmatprep.subr.mxu0 0.0
  %5797 = vmatpush1.msra.mxu0 0.0
  %5798 = vmatprep.subr.mxu0 0.0
  %5799 = vmatpush1.msra.mxu0 0.0
  %5800 = vmatprep.subr.mxu0 0.0
  %5801 = vmatpush1.msra.mxu0 0.0
  %5802 = vmatprep.subr.mxu0 0.0
  %5803 = vmatpush1.msra.mxu0 0.0
  %5804 = vmatprep.subr.mxu0 0.0
  %5805 = vmatpush1.msra.mxu0 0.0
  %5806 = vmatprep.subr.mxu0 0.0
  %5807 = vmatpush1.msra.mxu0 0.0
  %5808 = vmatprep.mubr.f32.mxu0 0.0
  %5809 = vmatmul.mubr.f32.gmra.mrb[0].mxu0 %v5739
  %v5810 = vpop.f32.mrb[0].mxu0
  %v5811 = vadd.f32 %v5737, %v5810
  %v5812 = vpop.f32.mrb[0].mxu0
  %5813 = vmatprep.mubr.f32.mxu0 0.0
  %5814 = vmatmul.mubr.f32.gmra.mrb[0].mxu0 %v5742
  %v5815 = vpop.f32.mrb[0].mxu0
  %v5816 = vadd.f32 %v5737, %v5815
  %v5817 = vpop.f32.mrb[0].mxu0
  %5818 = vdwg.mxu0
  %v5819 = vmul.f32 %v5811, 0.5
  %v5820 = vmul.f32 %v5816, 0.5
  %v5821 = vmul.f32 %v5811, 0.044715
  %v5822 = vmul.f32 %v5816, 0.044715
  %v5823 = vmul.f32 %v5821, %v5811
  %v5824 = vmul.f32 %v5822, %v5816
  %v5825 = vmul.f32 %v5823, %v5811
  %v5826 = vmul.f32 %v5824, %v5816
  %v5827 = vadd.f32 %v5811, %v5825
  %v5828 = vadd.f32 %v5816, %v5826
  %v5829 = vmul.f32 %v5827, 0.7978846
  %v5830 = vmul.f32 %v5828, 0.7978846
  %v5831 = vtanh.pop %v5829
  %v5832 = vtanh.pop %v5830
  %v5833 = vadd.f32 %v5831, 1.0
  %v5834 = vadd.f32 %v5832, 1.0
  %v5835 = vmul.f32 %v5819, %v5833
  %v5836 = vmul.f32 %v5820, %v5834
  %s5837 = scalar_lea.vmem %s5, 128
  %v5838 = vld [vmem:[%s5837] sm:$0xff]
  %v5839 = vld [vmem:[%s5837 + $0x8] sm:$0xff]
  %v5840 = vld [vmem:[%s5837 + $0x10] sm:$0xff]
  %v5841 = vld [vmem:[%s5837 + $0x18] sm:$0xff]
  %v5842 = vld [vmem:[%s5837 + $0x20] sm:$0xff]
  %v5843 = vld [vmem:[%s5837 + $0x28] sm:$0xff]
  %v5844 = vld [vmem:[%s5837 + $0x30] sm:$0xff]
  %v5845 = vld [vmem:[%s5837 + $0x38] sm:$0xff]
  %v5846 = vld [vmem:[%s5837 + $0x40] sm:$0xff]
  %v5847 = vld [vmem:[%s5837 + $0x48] sm:$0xff]
  %v5848 = vld [vmem:[%s5837 + $0x50] sm:$0xff]
  %v5849 = vld [vmem:[%s5837 + $0x58] sm:$0xff]
  %v5850 = vld [vmem:[%s5837 + $0x60] sm:$0xff]
  %v5851 = vld [vmem:[%s5837 + $0x68] sm:$0xff]
  %v5852 = vld [vmem:[%s5837 + $0x70] sm:$0xff]
  %v5853 = vld [vmem:[%s5837 + $0x78] sm:$0xff]
  %5855 = vrot.lane.b32.xlu0 %v5688, 96
  %v5856 = vpop.permute.xlu0 %5855
  %5858 = vmatprep.subr.mxu0 0.0
  %5859 = vmatpush1.msra.mxu0 %v5838
  %5860 = vmatprep.subr.mxu0 0.0
  %5861 = vmatpush1.msra.mxu0 %v5839
  %5862 = vmatprep.subr.mxu0 0.0
  %5863 = vmatpush1.msra.mxu0 %v5840
  %5864 = vmatprep.subr.mxu0 0.0
  %5865 = vmatpush1.msra.mxu0 %v5841
  %5866 = vmatprep.subr.mxu0 0.0
  %5867 = vmatpush1.msra.mxu0 %v5842
  %5868 = vmatprep.subr.mxu0 0.0
  %5869 = vmatpush1.msra.mxu0 %v5843
  %5870 = vmatprep.subr.mxu0 0.0
  %5871 = vmatpush1.msra.mxu0 %v5844
  %5872 = vmatprep.subr.mxu0 0.0
  %5873 = vmatpush1.msra.mxu0 %v5845
  %5874 = vmatprep.subr.mxu0 0.0
  %5875 = vmatpush1.msra.mxu0 %v5846
  %5876 = vmatprep.subr.mxu0 0.0
  %5877 = vmatpush1.msra.mxu0 %v5847
  %5878 = vmatprep.subr.mxu0 0.0
  %5879 = vmatpush1.msra.mxu0 %v5848
  %5880 = vmatprep.subr.mxu0 0.0
  %5881 = vmatpush1.msra.mxu0 %v5849
  %5882 = vmatprep.subr.mxu0 0.0
  %5883 = vmatpush1.msra.mxu0 %v5850
  %5884 = vmatprep.subr.mxu0 0.0
  %5885 = vmatpush1.msra.mxu0 %v5851
  %5886 = vmatprep.subr.mxu0 0.0
  %5887 = vmatpush1.msra.mxu0 %v5852
  %5888 = vmatprep.subr.mxu0 0.0
  %5889 = vmatpush1.msra.mxu0 %v5853
  %5890 = vmatprep.subr.mxu0 0.0
  %5891 = vmatpush1.msra.mxu0 0.0
  %5892 = vmatprep.subr.mxu0 0.0
  %5893 = vmatpush1.msra.mxu0 0.0
  %5894 = vmatprep.subr.mxu0 0.0
  %5895 = vmatpush1.msra.mxu0 0.0
  %5896 = vmatprep.subr.mxu0 0.0
  %5897 = vmatpush1.msra.mxu0 0.0
  %5898 = vmatprep.subr.mxu0 0.0
  %5899 = vmatpush1.msra.mxu0 0.0
  %5900 = vmatprep.subr.mxu0 0.0
  %5901 = vmatpush1.msra.mxu0 0.0
  %5902 = vmatprep.subr.mxu0 0.0
  %5903 = vmatpush1.msra.mxu0 0.0
  %5904 = vmatprep.subr.mxu0 0.0
  %5905 = vmatpush1.msra.mxu0 0.0
  %5906 = vmatprep.subr.mxu0 0.0
  %5907 = vmatpush1.msra.mxu0 0.0
  %5908 = vmatprep.subr.mxu0 0.0
  %5909 = vmatpush1.msra.mxu0 0.0
  %5910 = vmatprep.subr.mxu0 0.0
  %5911 = vmatpush1.msra.mxu0 0.0
  %5912 = vmatprep.subr.mxu0 0.0
  %5913 = vmatpush1.msra.mxu0 0.0
  %5914 = vmatprep.subr.mxu0 0.0
  %5915 = vmatpush1.msra.mxu0 0.0
  %5916 = vmatprep.subr.mxu0 0.0
  %5917 = vmatpush1.msra.mxu0 0.0
  %5918 = vmatprep.subr.mxu0 0.0
  %5919 = vmatpush1.msra.mxu0 0.0
  %5920 = vmatprep.subr.mxu0 0.0
  %5921 = vmatpush1.msra.mxu0 0.0
  %5922 = vmatprep.mubr.f32.mxu0 0.0
  %5923 = vmatmul.mubr.f32.gmra.mrb[0].mxu0 %v5835
  %v5924 = vpop.f32.mrb[0].mxu0
  %v5925 = vadd.f32 %v5856, %v5924
  %v5926 = vpop.f32.mrb[0].mxu0
  %5927 = vmatprep.mubr.f32.mxu0 0.0
  %5928 = vmatmul.mubr.f32.gmra.mrb[0].mxu0 %v5836
  %v5929 = vpop.f32.mrb[0].mxu0
  %v5930 = vadd.f32 %v5856, %v5929
  %v5931 = vpop.f32.mrb[0].mxu0
  %5932 = vdwg.mxu0
  %v5933 = vadd.f32 %v5691, %v5925
  %v5934 = vadd.f32 %v5692, %v5930
  %v5935 = vld [vmem:[%s6 + $0x6] sm:$0x1]
  %v5936 = vsel %vm39, %v5933, 0.0
  %5937 = vadd.xlane.f32.xlu0 %v5936
  %v5938 = vpop.xlane.xlu0 %5937
  %v5939 = vsel %vm39, %v5934, 0.0
  %5940 = vadd.xlane.f32.xlu0 %v5939
  %v5941 = vpop.xlane.xlu0 %5940
  %v5942 = vmul.f32 %v5938, %v46
  %v5943 = vmul.f32 %v5941, %v46
  %v5944 = vsub.f32 %v5933, %v5942
  %v5945 = vsub.f32 %v5934, %v5943
  %v5946 = vmul.f32 %v5944, %v5944
  %v5947 = vmul.f32 %v5945, %v5945
  %v5948 = vsel %vm39, %v5946, 0.0
  %5949 = vadd.xlane.f32.xlu0 %v5948
  %v5950 = vpop.xlane.xlu0 %5949
  %v5951 = vsel %vm39, %v5947, 0.0
  %5952 = vadd.xlane.f32.xlu0 %v5951
  %v5953 = vpop.xlane.xlu0 %5952
  %v5954 = vmul.f32 %v5950, %v46
  %v5955 = vmul.f32 %v5953, %v46
  %v5956 = vadd.f32 %v5954, 1e-05
  %v5957 = vadd.f32 %v5955, 1e-05
  %v5958 = vrsqrt.pop %v5956
  %v5959 = vrsqrt.pop %v5957
  %v5960 = vmul.f32 %v5944, %v5958
  %v5961 = vmul.f32 %v5945, %v5959
  %v5962 = vlaneseq
  %v5963 = vshrl.u32 %v5962, 7
  %v5964 = vsub.s32 0, %v5963
  %v5965 = vrot.slane %v5935, %v5964
  %v5966 = vmul.f32 %v5960, %v5965
  %v5967 = vmul.f32 %v5961, %v5965
  %5969 = vrot.lane.b32.xlu0 %v5965, 96
  %v5970 = vpop.permute.xlu0 %5969
  %v5972 = vadd.f32 %v5966, %v5970
  %v5973 = vadd.f32 %v5967, %v5970
  %s5974 = scalar_lea.vmem %s4, 64
  %v5975 = vld [vmem:[%s5974] sm:$0xff]
  %v5976 = vld [vmem:[%s5974 + $0x8] sm:$0xff]
  %v5977 = vld [vmem:[%s5974 + $0x10] sm:$0xff]
  %v5978 = vld [vmem:[%s5974 + $0x18] sm:$0xff]
  %5979 = vrot.lane.b32.xlu0 %v5965, 64
  %v5980 = vpop.permute.xlu0 %5979
  %v5983 = vsel %vm39, %v5933, 0
  %v5986 = vsel %vm39, %v5934, 0
  %5988 = vmatprep.subr.mxu0 0.0
  %5989 = vmatpush1.msra.mxu0 %v5975
  %5990 = vmatprep.subr.mxu0 0.0
  %5991 = vmatpush1.msra.mxu0 %v5976
  %5992 = vmatprep.subr.mxu0 0.0
  %5993 = vmatpush1.msra.mxu0 %v5977
  %5994 = vmatprep.subr.mxu0 0.0
  %5995 = vmatpush1.msra.mxu0 %v5978
  %5996 = vmatprep.subr.mxu0 0.0
  %5997 = vmatpush1.msra.mxu0 0.0
  %5998 = vmatprep.subr.mxu0 0.0
  %5999 = vmatpush1.msra.mxu0 0.0
  %6000 = vmatprep.subr.mxu0 0.0
  %6001 = vmatpush1.msra.mxu0 0.0
  %6002 = vmatprep.subr.mxu0 0.0
  %6003 = vmatpush1.msra.mxu0 0.0
  %6004 = vmatprep.subr.mxu0 0.0
  %6005 = vmatpush1.msra.mxu0 0.0
  %6006 = vmatprep.subr.mxu0 0.0
  %6007 = vmatpush1.msra.mxu0 0.0
  %6008 = vmatprep.subr.mxu0 0.0
  %6009 = vmatpush1.msra.mxu0 0.0
  %6010 = vmatprep.subr.mxu0 0.0
  %6011 = vmatpush1.msra.mxu0 0.0
  %6012 = vmatprep.subr.mxu0 0.0
  %6013 = vmatpush1.msra.mxu0 0.0
  %6014 = vmatprep.subr.mxu0 0.0
  %6015 = vmatpush1.msra.mxu0 0.0
  %6016 = vmatprep.subr.mxu0 0.0
  %6017 = vmatpush1.msra.mxu0 0.0
  %6018 = vmatprep.subr.mxu0 0.0
  %6019 = vmatpush1.msra.mxu0 0.0
  %6020 = vmatprep.subr.mxu0 0.0
  %6021 = vmatpush1.msra.mxu0 0.0
  %6022 = vmatprep.subr.mxu0 0.0
  %6023 = vmatpush1.msra.mxu0 0.0
  %6024 = vmatprep.subr.mxu0 0.0
  %6025 = vmatpush1.msra.mxu0 0.0
  %6026 = vmatprep.subr.mxu0 0.0
  %6027 = vmatpush1.msra.mxu0 0.0
  %6028 = vmatprep.subr.mxu0 0.0
  %6029 = vmatpush1.msra.mxu0 0.0
  %6030 = vmatprep.subr.mxu0 0.0
  %6031 = vmatpush1.msra.mxu0 0.0
  %6032 = vmatprep.subr.mxu0 0.0
  %6033 = vmatpush1.msra.mxu0 0.0
  %6034 = vmatprep.subr.mxu0 0.0
  %6035 = vmatpush1.msra.mxu0 0.0
  %6036 = vmatprep.subr.mxu0 0.0
  %6037 = vmatpush1.msra.mxu0 0.0
  %6038 = vmatprep.subr.mxu0 0.0
  %6039 = vmatpush1.msra.mxu0 0.0
  %6040 = vmatprep.subr.mxu0 0.0
  %6041 = vmatpush1.msra.mxu0 0.0
  %6042 = vmatprep.subr.mxu0 0.0
  %6043 = vmatpush1.msra.mxu0 0.0
  %6044 = vmatprep.subr.mxu0 0.0
  %6045 = vmatpush1.msra.mxu0 0.0
  %6046 = vmatprep.subr.mxu0 0.0
  %6047 = vmatpush1.msra.mxu0 0.0
  %6048 = vmatprep.subr.mxu0 0.0
  %6049 = vmatpush1.msra.mxu0 0.0
  %6050 = vmatprep.subr.mxu0 0.0
  %6051 = vmatpush1.msra.mxu0 0.0
  %6052 = vmatprep.mubr.f32.mxu0 0.0
  %6053 = vmatmul.mubr.f32.gmra.mrb[0].mxu0 %v5983
  %v6054 = vpop.f32.mrb[0].mxu0
  %v6055 = vadd.f32 %v5980, %v6054
  %v6056 = vpop.f32.mrb[0].mxu0
  %6057 = vmatprep.mubr.f32.mxu0 0.0
  %6058 = vmatmul.mubr.f32.gmra.mrb[0].mxu0 %v5986
  %v6059 = vpop.f32.mrb[0].mxu0
  %v6060 = vadd.f32 %v5980, %v6059
  %v6061 = vpop.f32.mrb[0].mxu0
  %6062 = vdwg.mxu0
  %6065 = vrot.lane.b32.xlu0 %v5972, 16
  %v6066 = vpop.permute.xlu0 %6065
  %6067 = vrot.lane.b32.xlu0 %v5973, 16
  %v6068 = vpop.permute.xlu0 %6067
  %6071 = vrot.lane.b32.xlu0 %v518, 48
  %v6072 = vpop.permute.xlu0 %6071
  %6073 = vrot.lane.b32.xlu0 %v519, 48
  %v6074 = vpop.permute.xlu0 %6073
  %6077 = vrot.lane.b32.xlu0 %v1098, 56
  %v6078 = vpop.permute.xlu0 %6077
  %6079 = vrot.lane.b32.xlu0 %v1099, 56
  %v6080 = vpop.permute.xlu0 %6079
  %6083 = vrot.lane.b32.xlu0 %v1841, 64
  %v6084 = vpop.permute.xlu0 %6083
  %6085 = vrot.lane.b32.xlu0 %v1842, 64
  %v6086 = vpop.permute.xlu0 %6085
  %6089 = vrot.lane.b32.xlu0 %v2505, 72
  %v6090 = vpop.permute.xlu0 %6089
  %6091 = vrot.lane.b32.xlu0 %v2506, 72
  %v6092 = vpop.permute.xlu0 %6091
  %6095 = vrot.lane.b32.xlu0 %v3464, 80
  %v6096 = vpop.permute.xlu0 %6095
  %6097 = vrot.lane.b32.xlu0 %v3465, 80
  %v6098 = vpop.permute.xlu0 %6097
  %6101 = vrot.lane.b32.xlu0 %v4045, 88
  %v6102 = vpop.permute.xlu0 %6101
  %6103 = vrot.lane.b32.xlu0 %v4046, 88
  %v6104 = vpop.permute.xlu0 %6103
  %6107 = vrot.lane.b32.xlu0 %v4788, 96
  %v6108 = vpop.permute.xlu0 %6107
  %6109 = vrot.lane.b32.xlu0 %v4789, 96
  %v6110 = vpop.permute.xlu0 %6109
  %6113 = vrot.lane.b32.xlu0 %v5452, 104
  %v6114 = vpop.permute.xlu0 %6113
  %6115 = vrot.lane.b32.xlu0 %v5453, 104
  %v6116 = vpop.permute.xlu0 %6115
  %vm6119 = vcmask 130048
  %v6120 = vsel %vm6119, %v6055, %v6066
  %v6121 = vsel %vm6119, %v6060, %v6068
  %vm6122 = vcmask 392192
  %v6123 = vsel %vm6122, %v6120, %v6072
  %v6124 = vsel %vm6122, %v6121, %v6074
  %vm6125 = vcmask 457728
  %v6126 = vsel %vm6125, %v6123, %v6078
  %v6127 = vsel %vm6125, %v6124, %v6080
  %vm6128 = vcmask 523264
  %v6129 = vsel %vm6128, %v6126, %v6084
  %v6130 = vsel %vm6128, %v6127, %v6086
  %vm6131 = vcmask 588800
  %v6132 = vsel %vm6131, %v6129, %v6090
  %v6133 = vsel %vm6131, %v6130, %v6092
  %vm6134 = vcmask 654336
  %v6135 = vsel %vm6134, %v6132, %v6096
  %v6136 = vsel %vm6134, %v6133, %v6098
  %vm6137 = vcmask 719872
  %v6138 = vsel %vm6137, %v6135, %v6102
  %v6139 = vsel %vm6137, %v6136, %v6104
  %vm6140 = vcmask 785408
  %v6141 = vsel %vm6140, %v6138, %v6108
  %v6142 = vsel %vm6140, %v6139, %v6110
  %vm6143 = vcmask 850944
  %v6144 = vsel %vm6143, %v6141, %v6114
  %v6145 = vsel %vm6143, %v6142, %v6116
  %vm6146 = vcmask 916480
  %v6147 = vsel %vm6146, %v6144, 0.0
  %v6148 = vsel %vm6146, %v6145, 0.0
  %6149 = vst [vmem:[%s7] sm:$0xff] %v6147
  %6150 = vst [vmem:[%s7 + $0x8] sm:$0xff] %v6148
  // Predicated region
  $region30: #{trans_decoder_forward.1} parent=0 // pred_check
    _
  $region31: #{trans_decoder_forward.1} parent=0 // pred_check_branch
    %6152 = sbr.rel (0) target = $region33
  $region32: #{trans_decoder_forward.1} parent=0 // pred_region
    _
  $region33: #{trans_decoder_forward.1} parent=0 // pred_fallthru
    _
  // Predicated region
  $region34: #{trans_decoder_forward.1} parent=0 // pred_check
    _
  $region35: #{trans_decoder_forward.1} parent=0 // pred_check_branch
    %6154 = sbr.rel (0) target = $region37
  $region36: #{trans_decoder_forward.1} parent=0 // pred_region
    _
  $region37: #{trans_decoder_forward.1} parent=0 // pred_fallthru
    _

</llo_original>
